<compile_context>
chip_gen: v7x
topology: tpu7x:2x2x1
jax: 0.10.0
libtpu: 0.0.40
codegen_flags: <defaults>
</compile_context>

<pallas_src>
import math
import functools

import jax
import jax.numpy as jnp
from jax.experimental import pallas as pl
from jax.experimental.pallas import tpu as pltpu

_EPS = 1e-5
_KPAD = 16   # pad contraction dim to a multiple of 16 (bf16 sublane packing)


# ----------------------------------------------------------------------------
# pallas_call helper (single full-array block; working sets here are ~1 MB)
# ----------------------------------------------------------------------------
def _zero_map(n):
    return lambda i, n=n: (0,) * n


def _call(kernel, args, out_shapes):
    single = isinstance(out_shapes, jax.ShapeDtypeStruct)
    outs = (out_shapes,) if single else tuple(out_shapes)
    in_specs = [pl.BlockSpec(a.shape, _zero_map(a.ndim)) for a in args]
    out_specs = tuple(pl.BlockSpec(o.shape, _zero_map(len(o.shape))) for o in outs)
    return pl.pallas_call(
        kernel,
        grid=(1,),
        in_specs=in_specs,
        out_specs=out_specs[0] if single else out_specs,
        out_shape=outs[0] if single else outs,
        compiler_params=pltpu.CompilerParams(dimension_semantics=("arbitrary",)),
    )(*args)


# ----------------------------------------------------------------------------
# Kernels (all operate on the transposed, lane-dense (C, N*H*W) layout)
# ----------------------------------------------------------------------------
def _mm(a_ref, b_ref):
    # bf16-stored operands, upcast in-register, f32 x f32 = f32 contraction.
    return jnp.dot(a_ref[...].astype(jnp.float32),
                   b_ref[...].astype(jnp.float32),
                   preferred_element_type=jnp.float32)


def _bn_relu(x, g, b, eps):
    # Training-mode BatchNorm2d: per-channel batch mean / biased variance,
    # reduced along the (dense) lane axis, then scale/shift + ReLU.  f32 math.
    mean = jnp.mean(x, axis=1, keepdims=True)
    var = jnp.mean(jnp.square(x - mean), axis=1, keepdims=True)
    y = (x - mean) * jax.lax.rsqrt(var + eps) * g + b
    return jnp.maximum(y, 0.0)


def _conv_bn_relu_kernel(a_ref, b_ref, g_ref, be_ref, o_ref, *, eps):
    # conv (as im2col matmul) + BN + ReLU epilogue.
    acc = _mm(a_ref, b_ref)
    o_ref[...] = _bn_relu(acc, g_ref[...], be_ref[...], eps)


def _conv_raw_bn_relu_kernel(a_ref, b_ref, g_ref, be_ref, raw_ref, o_ref, *, eps):
    # Same, but also emit the raw (pre-BN) conv output -- the residual input
    # of the following equalInOut BasicBlock.
    acc = _mm(a_ref, b_ref)
    raw_ref[...] = acc
    o_ref[...] = _bn_relu(acc, g_ref[...], be_ref[...], eps)


def _conv_add_bn_relu_kernel(a_ref, b_ref, r_ref, g_ref, be_ref, o_ref, *, eps):
    # conv2 matmul + residual add (torch.add) + next block's BN1 + ReLU.
    acc = r_ref[...] + _mm(a_ref, b_ref)
    o_ref[...] = _bn_relu(acc, g_ref[...], be_ref[...], eps)


def _conv_split_bn_relu_kernel(a_ref, b_ref, g_ref, be_ref, h_ref, sc_ref,
                               *, cout, eps):
    # Fused [3x3 conv1 ; 1x1 convShortcut] matmul (weights concatenated along
    # the output-channel/sublane axis).  BN2+ReLU applies to the conv1 half,
    # the shortcut half is emitted raw as the residual.
    acc = _mm(a_ref, b_ref)
    sc_ref[...] = acc[cout:, :]
    h_ref[...] = _bn_relu(acc[:cout, :], g_ref[...], be_ref[...], eps)


def _conv_add_bn_relu_pool_fc_kernel(a_ref, b_ref, r_ref, g_ref, be_ref,
                                     pool_ref, fct_ref, fcb_ref, o_ref, *, eps):
    # Last conv2 + residual + final BN + ReLU + avg_pool2d(8) + Linear.
    acc = r_ref[...] + _mm(a_ref, b_ref)
    y = _bn_relu(acc, g_ref[...], be_ref[...], eps)          # (C, N*8*8)
    pooled = jnp.dot(y, pool_ref[...],
                     preferred_element_type=jnp.float32)     # (C, N)  global mean
    o_ref[...] = jnp.dot(fct_ref[...], pooled,
                         preferred_element_type=jnp.float32) + fcb_ref[...]  # (cls, N)


# ----------------------------------------------------------------------------
# Thin wrappers
# ----------------------------------------------------------------------------
def conv_bn_relu(a, b, g, be):
    out = jax.ShapeDtypeStruct((a.shape[0], b.shape[1]), jnp.float32)
    return _call(functools.partial(_conv_bn_relu_kernel, eps=_EPS),
                 [a, b, g, be], out)


def conv_raw_bn_relu(a, b, g, be):
    s = jax.ShapeDtypeStruct((a.shape[0], b.shape[1]), jnp.float32)
    return _call(functools.partial(_conv_raw_bn_relu_kernel, eps=_EPS),
                 [a, b, g, be], (s, s))


def conv_add_bn_relu(a, b, r, g, be):
    out = jax.ShapeDtypeStruct((a.shape[0], b.shape[1]), jnp.float32)
    return _call(functools.partial(_conv_add_bn_relu_kernel, eps=_EPS),
                 [a, b, r, g, be], out)


def conv_split_bn_relu(a, b, g, be, cout):
    s = jax.ShapeDtypeStruct((cout, b.shape[1]), jnp.float32)
    return _call(functools.partial(_conv_split_bn_relu_kernel, cout=cout, eps=_EPS),
                 [a, b, g, be], (s, s))


def conv_add_bn_relu_pool_fc(a, b, r, g, be, pool, fct, fcb):
    out = jax.ShapeDtypeStruct((fct.shape[0], pool.shape[1]), jnp.float32)
    return _call(functools.partial(_conv_add_bn_relu_pool_fc_kernel, eps=_EPS),
                 [a, b, r, g, be, pool, fct, fcb], out)


# ----------------------------------------------------------------------------
# Plain-JAX glue: transposed im2col (data movement only) and weight packing
# ----------------------------------------------------------------------------
def _padded_k(cin):
    k = 9 * cin
    return k + (-k) % _KPAD


def _im2col_t(x_cnhw, stride):
    """(C, N, H, W) f32 -> (Kpad, N*Hout*Wout) bf16 patch matrix (3x3, pad=1)."""
    c, n, h, w = x_cnhw.shape
    hout = (h + 2 - 3) // stride + 1
    wout = (w + 2 - 3) // stride + 1
    xp = jnp.pad(x_cnhw, ((0, 0), (0, 0), (1, 1), (1, 1)))
    taps = []
    for di in range(3):
        for dj in range(3):
            taps.append(xp[:, :,
                           di:di + (hout - 1) * stride + 1:stride,
                           dj:dj + (wout - 1) * stride + 1:stride])
    b = jnp.stack(taps, axis=0)                       # (9, C, N, Hout, Wout)
    b = b.reshape(9 * c, n * hout * wout)
    kpad = _padded_k(c)
    if kpad != 9 * c:
        b = jnp.pad(b, ((0, kpad - 9 * c), (0, 0)))
    return b.astype(jnp.bfloat16), hout, wout


def _wmat(w):
    """(3,3,Cin,Cout) -> (Cout, Kpad) bf16, row/col order matching _im2col_t."""
    kh, kw, cin, cout = w.shape
    m = w.reshape(kh * kw * cin, cout).T
    kpad = _padded_k(cin)
    if kpad != kh * kw * cin:
        m = jnp.pad(m, ((0, 0), (0, kpad - kh * kw * cin)))
    return m.astype(jnp.bfloat16)


def _wmat_combined(w3, w1):
    """Stack 3x3 conv1 and 1x1 convShortcut into one (2*Cout, Kpad) operand.

    The 1x1 stride-s pad-0 shortcut reads exactly the center tap (tap index 4)
    of the 3x3 stride-s pad-1 patch matrix, so its weights go into columns
    [4*Cin, 5*Cin) and zeros elsewhere."""
    kh, kw, cin, cout = w3.shape
    a3 = w3.reshape(kh * kw * cin, cout).T
    a1 = jnp.zeros((cout, kh * kw * cin), jnp.float32)
    a1 = a1.at[:, 4 * cin:5 * cin].set(w1.reshape(cin, cout).T)
    m = jnp.concatenate([a3, a1], axis=0)
    kpad = _padded_k(cin)
    if kpad != kh * kw * cin:
        m = jnp.pad(m, ((0, 0), (0, kpad - kh * kw * cin)))
    return m.astype(jnp.bfloat16)


def _colv(v):
    return v.reshape(-1, 1).astype(jnp.float32)


# ----------------------------------------------------------------------------
# WideResNet forward (depth=10 / widen=1: block1 equalInOut, block2/3 not)
# ----------------------------------------------------------------------------
def wide_resnet_forward(params, x_nchw, pos=0):
    # normalize is None, eot is False, dropRate == 0.0 -> nothing to do.
    n = x_nchw.shape[0]
    x = x_nchw.astype(jnp.float32)
    if pos == 0:
        # pos==0 reweight folded into the input glue (fuses with im2col load).
        x = x * (params['rand_w'] * params['SD'] + params['Mu'])
    # TODO(synk): pos>0 reweight positions are not wired into the fused kernels.
    x = jnp.transpose(x, (1, 0, 2, 3))                        # (3, N, 32, 32)

    p1, p2, p3 = params['block1'], params['block2'], params['block3']
    h_sp, w_sp = 32, 32

    # K1: net conv1 (3->16) ; epilogue block1.bn1+ReLU ; raw output = residual
    b, h_sp, w_sp = _im2col_t(x, 1)
    raw1, h1 = conv_raw_bn_relu(_wmat(params['conv1_w']), b,
                                _colv(p1['bn1_g']), _colv(p1['bn1_b']))

    # K2: block1.conv1 (16->16, s1) ; epilogue block1.bn2+ReLU
    b, _, _ = _im2col_t(h1.reshape(16, n, h_sp, w_sp), 1)
    h2 = conv_bn_relu(_wmat(p1['conv1_w']), b,
                      _colv(p1['bn2_g']), _colv(p1['bn2_b']))

    # K3: block1.conv2 + residual add ; epilogue block2.bn1+ReLU
    b, _, _ = _im2col_t(h2.reshape(16, n, h_sp, w_sp), 1)
    h3 = conv_add_bn_relu(_wmat(p1['conv2_w']), b, raw1,
                          _colv(p2['bn1_g']), _colv(p2['bn1_b']))

    # K4: block2.conv1 (16->32, s2) fused with 1x1 shortcut ; block2.bn2+ReLU
    b, h_sp, w_sp = _im2col_t(h3.reshape(16, n, h_sp, w_sp), 2)
    h4, sc2 = conv_split_bn_relu(_wmat_combined(p2['conv1_w'], p2['sc_w']), b,
                                 _colv(p2['bn2_g']), _colv(p2['bn2_b']), cout=32)

    # K5: block2.conv2 + shortcut add ; epilogue block3.bn1+ReLU
    b, _, _ = _im2col_t(h4.reshape(32, n, h_sp, w_sp), 1)
    h5 = conv_add_bn_relu(_wmat(p2['conv2_w']), b, sc2,
                          _colv(p3['bn1_g']), _colv(p3['bn1_b']))

    # K6: block3.conv1 (32->64, s2) fused with 1x1 shortcut ; block3.bn2+ReLU
    b, h_sp, w_sp = _im2col_t(h5.reshape(32, n, h_sp, w_sp), 2)
    h6, sc3 = conv_split_bn_relu(_wmat_combined(p3['conv1_w'], p3['sc_w']), b,
                                 _colv(p3['bn2_g']), _colv(p3['bn2_b']), cout=64)

    # K7: block3.conv2 + add + net bn1 + ReLU + avg_pool2d(8) + Linear
    b, _, _ = _im2col_t(h6.reshape(64, n, h_sp, w_sp), 1)
    pool = (jnp.repeat(jnp.eye(n, dtype=jnp.float32), h_sp * w_sp, axis=0)
            / float(h_sp * w_sp))                             # (N*64, N)
    logits_t = conv_add_bn_relu_pool_fc(
        _wmat(p3['conv2_w']), b, sc3,
        _colv(params['bn1_g']), _colv(params['bn1_b']),
        pool,
        params['fc_w'].T.astype(jnp.float32),
        params['fc_b'].reshape(-1, 1).astype(jnp.float32))
    return jnp.transpose(logits_t)                            # (N, num_classes)


# ----------------------------------------------------------------------------
# Deterministic parameter init (matches the module's init scheme)
# ----------------------------------------------------------------------------
def init_params(key, depth=10, widen=1, num_classes=10):
    assert (depth - 4) % 6 == 0
    # Small config: one BasicBlock per NetworkBlock (n = (depth-4)//6 == 1).
    nch = [16, 16 * widen, 32 * widen, 64 * widen]
    ks = iter(jax.random.split(key, 32))

    def conv_w(kh, kw, cin, cout):
        std = math.sqrt(2.0 / (kh * kw * cout))               # normal_(0, sqrt(2/n))
        return std * jax.random.normal(next(ks), (kh, kw, cin, cout), jnp.float32)

    def block_params(cin, cout, equal):
        p = {
            'bn1_g': jnp.ones((cin,), jnp.float32),
            'bn1_b': jnp.zeros((cin,), jnp.float32),
            'conv1_w': conv_w(3, 3, cin, cout),
            'bn2_g': jnp.ones((cout,), jnp.float32),
            'bn2_b': jnp.zeros((cout,), jnp.float32),
            'conv2_w': conv_w(3, 3, cout, cout),
        }
        if not equal:
            p['sc_w'] = conv_w(1, 1, cin, cout)
        return p

    bound = 1.0 / math.sqrt(nch[3])
    return {
        # pos == 0 reweighting parameters, NCHW (1, 3, 32, 32) as in the module
        'rand_w': jax.random.normal(next(ks), (1, 3, 32, 32), jnp.float32),
        'Mu': jnp.ones((1, 3, 32, 32), jnp.float32),
        'SD': jnp.ones((1, 3, 32, 32), jnp.float32),
        'conv1_w': conv_w(3, 3, 3, nch[0]),
        'block1': block_params(nch[0], nch[1], nch[0] == nch[1]),
        'block2': block_params(nch[1], nch[2], nch[1] == nch[2]),
        'block3': block_params(nch[2], nch[3], nch[2] == nch[3]),
        'bn1_g': jnp.ones((nch[3],), jnp.float32),
        'bn1_b': jnp.zeros((nch[3],), jnp.float32),
        'fc_w': jax.random.uniform(next(ks), (nch[3], num_classes),
                                   jnp.float32, -bound, bound),
        'fc_b': jnp.zeros((num_classes,), jnp.float32),
    }


if __name__ == "__main__":
    key = jax.random.PRNGKey(0)
    pkey, xkey = jax.random.split(key)
    params = init_params(pkey, depth=10, widen=1, num_classes=10)

    # PyTorch-convention NCHW input, batch=2, 3x32x32 (matches pos=0 shape).
    x = jax.random.normal(xkey, (2, 3, 32, 32), jnp.float32)

    fwd = jax.jit(functools.partial(wide_resnet_forward, pos=0))
    logits = fwd(params, x)
    jax.block_until_ready(logits)
    assert logits.shape == (2, 10) and logits.dtype == jnp.float32
    print("KERNEL_OK")
</pallas_src>

<mosaic_0001>
module attributes {stable_mosaic.version = 11 : i64} {
  func.func @_conv_raw_bn_relu_kernel(%arg0: i32, %arg1: memref<16x32xbf16, #tpu.memory_space<vmem>>, %arg2: memref<32x2048xbf16, #tpu.memory_space<vmem>>, %arg3: memref<16x1xf32, #tpu.memory_space<vmem>>, %arg4: memref<16x1xf32, #tpu.memory_space<vmem>>, %arg5: memref<16x2048xf32, #tpu.memory_space<vmem>>, %arg6: memref<16x2048xf32, #tpu.memory_space<vmem>>) attributes {dimension_semantics = [#tpu.dimension_semantics<arbitrary>], iteration_bounds = array<i64: 1>, scalar_prefetch = 0 : i64, scratch_operands = 0 : i64, tpu.core_type = #tpu.core_type<tc>, window_params = [{pipeline_mode = #tpu.pipeline_mode<synchronous>, transform_indices = @transform_0, window_bounds = array<i64: 16, 32>}, {pipeline_mode = #tpu.pipeline_mode<synchronous>, transform_indices = @transform_1, window_bounds = array<i64: 32, 2048>}, {pipeline_mode = #tpu.pipeline_mode<synchronous>, transform_indices = @transform_2, window_bounds = array<i64: 16, 1>}, {pipeline_mode = #tpu.pipeline_mode<synchronous>, transform_indices = @transform_3, window_bounds = array<i64: 16, 1>}, {pipeline_mode = #tpu.pipeline_mode<synchronous>, transform_indices = @transform_4, window_bounds = array<i64: 16, 2048>}, {pipeline_mode = #tpu.pipeline_mode<synchronous>, transform_indices = @transform_5, window_bounds = array<i64: 16, 2048>}]} {
    %c0 = arith.constant 0 : index
    %c0_0 = arith.constant 0 : index
    %0 = vector.load %arg1[%c0, %c0_0] : memref<16x32xbf16, #tpu.memory_space<vmem>>, vector<16x32xbf16>
    %1 = arith.extf %0 : vector<16x32xbf16> to vector<16x32xf32>
    %c0_1 = arith.constant 0 : index
    %c0_2 = arith.constant 0 : index
    %2 = vector.load %arg2[%c0_1, %c0_2] : memref<32x2048xbf16, #tpu.memory_space<vmem>>, vector<32x2048xbf16>
    %3 = arith.extf %2 : vector<32x2048xbf16> to vector<32x2048xf32>
    %cst = arith.constant dense<0.000000e+00> : vector<16x2048xf32>
    %4 = tpu.matmul %1, %3, %cst {dimension_numbers = #tpu.dot_dimension_numbers<[1], [0], [0], [1], [0, 0, 1, 1], [], []>} : vector<16x32xf32>, vector<32x2048xf32>, vector<16x2048xf32> -> vector<16x2048xf32>
    %c0_3 = arith.constant 0 : index
    %c0_4 = arith.constant 0 : index
    %5 = vector.load %arg5[%c0_3, %c0_4] : memref<16x2048xf32, #tpu.memory_space<vmem>>, vector<16x2048xf32>
    tpu.vector_store %arg5[%c0_3, %c0_4], %4 {strides = array<i32>} : memref<16x2048xf32, #tpu.memory_space<vmem>>, vector<16x2048xf32>,
    %c0_5 = arith.constant 0 : index
    %c0_6 = arith.constant 0 : index
    %6 = vector.load %arg3[%c0_5, %c0_6] : memref<16x1xf32, #tpu.memory_space<vmem>>, vector<16x1xf32>
    %c0_7 = arith.constant 0 : index
    %c0_8 = arith.constant 0 : index
    %7 = vector.load %arg4[%c0_7, %c0_8] : memref<16x1xf32, #tpu.memory_space<vmem>>, vector<16x1xf32>
    %cst_9 = arith.constant dense<0.000000e+00> : vector<16xf32>
    %8 = vector.multi_reduction <add>, %4, %cst_9 [1] : vector<16x2048xf32> to vector<16xf32>
    %9 = vector.shape_cast %8 : vector<16xf32> to vector<16x1xf32>
    %cst_10 = arith.constant 2.048000e+03 : f32
    %10 = vector.broadcast %cst_10 : f32 to vector<16x1xf32>
    %11 = arith.divf %9, %10 : vector<16x1xf32>
    %12 = vector.broadcast %11 : vector<16x1xf32> to vector<16x2048xf32>
    %13 = arith.subf %4, %12 : vector<16x2048xf32>
    %14 = arith.mulf %13, %13 : vector<16x2048xf32>
    %cst_11 = arith.constant dense<0.000000e+00> : vector<16xf32>
    %15 = vector.multi_reduction <add>, %14, %cst_11 [1] : vector<16x2048xf32> to vector<16xf32>
    %16 = vector.shape_cast %15 : vector<16xf32> to vector<16x1xf32>
    %cst_12 = arith.constant 2.048000e+03 : f32
    %17 = vector.broadcast %cst_12 : f32 to vector<16x1xf32>
    %18 = arith.divf %16, %17 : vector<16x1xf32>
    %19 = vector.broadcast %11 : vector<16x1xf32> to vector<16x2048xf32>
    %20 = arith.subf %4, %19 : vector<16x2048xf32>
    %cst_13 = arith.constant 9.99999974E-6 : f32
    %21 = vector.broadcast %cst_13 : f32 to vector<16x1xf32>
    %22 = arith.addf %18, %21 : vector<16x1xf32>
    %23 = math.rsqrt %22 : vector<16x1xf32>
    %24 = vector.broadcast %23 : vector<16x1xf32> to vector<16x2048xf32>
    %25 = arith.mulf %20, %24 : vector<16x2048xf32>
    %26 = vector.broadcast %6 : vector<16x1xf32> to vector<16x2048xf32>
    %27 = arith.mulf %25, %26 : vector<16x2048xf32>
    %28 = vector.broadcast %7 : vector<16x1xf32> to vector<16x2048xf32>
    %29 = arith.addf %27, %28 : vector<16x2048xf32>
    %cst_14 = arith.constant 0.000000e+00 : f32
    %30 = vector.broadcast %cst_14 : f32 to vector<16x2048xf32>
    %31 = arith.maximumf %29, %30 : vector<16x2048xf32>
    %c0_15 = arith.constant 0 : index
    %c0_16 = arith.constant 0 : index
    %32 = vector.load %arg6[%c0_15, %c0_16] : memref<16x2048xf32, #tpu.memory_space<vmem>>, vector<16x2048xf32>
    tpu.vector_store %arg6[%c0_15, %c0_16], %31 {strides = array<i32>} : memref<16x2048xf32, #tpu.memory_space<vmem>>, vector<16x2048xf32>,
    return
  }
  func.func @transform_0(%arg0: i32) -> (i32, i32) {
    %c0_i32 = arith.constant 0 : i32
    %c0_i32_0 = arith.constant 0 : i32
    %c0_i32_1 = arith.constant 0 : i32
    return %c0_i32, %c0_i32_0 : i32, i32
  }
  func.func @transform_1(%arg0: i32) -> (i32, i32) {
    %c0_i32 = arith.constant 0 : i32
    %c0_i32_0 = arith.constant 0 : i32
    %c0_i32_1 = arith.constant 0 : i32
    return %c0_i32, %c0_i32_0 : i32, i32
  }
  func.func @transform_2(%arg0: i32) -> (i32, i32) {
    %c0_i32 = arith.constant 0 : i32
    %c0_i32_0 = arith.constant 0 : i32
    %c0_i32_1 = arith.constant 0 : i32
    return %c0_i32, %c0_i32_0 : i32, i32
  }
  func.func @transform_3(%arg0: i32) -> (i32, i32) {
    %c0_i32 = arith.constant 0 : i32
    %c0_i32_0 = arith.constant 0 : i32
    %c0_i32_1 = arith.constant 0 : i32
    return %c0_i32, %c0_i32_0 : i32, i32
  }
  func.func @transform_4(%arg0: i32) -> (i32, i32) {
    %c0_i32 = arith.constant 0 : i32
    %c0_i32_0 = arith.constant 0 : i32
    %c0_i32_1 = arith.constant 0 : i32
    return %c0_i32, %c0_i32_0 : i32, i32
  }
  func.func @transform_5(%arg0: i32) -> (i32, i32) {
    %c0_i32 = arith.constant 0 : i32
    %c0_i32_0 = arith.constant 0 : i32
    %c0_i32_1 = arith.constant 0 : i32
    return %c0_i32, %c0_i32_0 : i32, i32
  }
}

module attributes {stable_mosaic.version = 11 : i64} {
  func.func @_conv_bn_relu_kernel(%arg0: i32, %arg1: memref<16x144xbf16, #tpu.memory_space<vmem>>, %arg2: memref<144x2048xbf16, #tpu.memory_space<vmem>>, %arg3: memref<16x1xf32, #tpu.memory_space<vmem>>, %arg4: memref<16x1xf32, #tpu.memory_space<vmem>>, %arg5: memref<16x2048xf32, #tpu.memory_space<vmem>>) attributes {dimension_semantics = [#tpu.dimension_semantics<arbitrary>], iteration_bounds = array<i64: 1>, scalar_prefetch = 0 : i64, scratch_operands = 0 : i64, tpu.core_type = #tpu.core_type<tc>, window_params = [{pipeline_mode = #tpu.pipeline_mode<synchronous>, transform_indices = @transform_0, window_bounds = array<i64: 16, 144>}, {pipeline_mode = #tpu.pipeline_mode<synchronous>, transform_indices = @transform_1, window_bounds = array<i64: 144, 2048>}, {pipeline_mode = #tpu.pipeline_mode<synchronous>, transform_indices = @transform_2, window_bounds = array<i64: 16, 1>}, {pipeline_mode = #tpu.pipeline_mode<synchronous>, transform_indices = @transform_3, window_bounds = array<i64: 16, 1>}, {pipeline_mode = #tpu.pipeline_mode<synchronous>, transform_indices = @transform_4, window_bounds = array<i64: 16, 2048>}]} {
    %c0 = arith.constant 0 : index
    %c0_0 = arith.constant 0 : index
    %0 = vector.load %arg1[%c0, %c0_0] : memref<16x144xbf16, #tpu.memory_space<vmem>>, vector<16x144xbf16>
    %1 = arith.extf %0 : vector<16x144xbf16> to vector<16x144xf32>
    %c0_1 = arith.constant 0 : index
    %c0_2 = arith.constant 0 : index
    %2 = vector.load %arg2[%c0_1, %c0_2] : memref<144x2048xbf16, #tpu.memory_space<vmem>>, vector<144x2048xbf16>
    %3 = arith.extf %2 : vector<144x2048xbf16> to vector<144x2048xf32>
    %cst = arith.constant dense<0.000000e+00> : vector<16x2048xf32>
    %4 = tpu.matmul %1, %3, %cst {dimension_numbers = #tpu.dot_dimension_numbers<[1], [0], [0], [1], [0, 0, 1, 1], [], []>} : vector<16x144xf32>, vector<144x2048xf32>, vector<16x2048xf32> -> vector<16x2048xf32>
    %c0_3 = arith.constant 0 : index
    %c0_4 = arith.constant 0 : index
    %5 = vector.load %arg3[%c0_3, %c0_4] : memref<16x1xf32, #tpu.memory_space<vmem>>, vector<16x1xf32>
    %c0_5 = arith.constant 0 : index
    %c0_6 = arith.constant 0 : index
    %6 = vector.load %arg4[%c0_5, %c0_6] : memref<16x1xf32, #tpu.memory_space<vmem>>, vector<16x1xf32>
    %cst_7 = arith.constant dense<0.000000e+00> : vector<16xf32>
    %7 = vector.multi_reduction <add>, %4, %cst_7 [1] : vector<16x2048xf32> to vector<16xf32>
    %8 = vector.shape_cast %7 : vector<16xf32> to vector<16x1xf32>
    %cst_8 = arith.constant 2.048000e+03 : f32
    %9 = vector.broadcast %cst_8 : f32 to vector<16x1xf32>
    %10 = arith.divf %8, %9 : vector<16x1xf32>
    %11 = vector.broadcast %10 : vector<16x1xf32> to vector<16x2048xf32>
    %12 = arith.subf %4, %11 : vector<16x2048xf32>
    %13 = arith.mulf %12, %12 : vector<16x2048xf32>
    %cst_9 = arith.constant dense<0.000000e+00> : vector<16xf32>
    %14 = vector.multi_reduction <add>, %13, %cst_9 [1] : vector<16x2048xf32> to vector<16xf32>
    %15 = vector.shape_cast %14 : vector<16xf32> to vector<16x1xf32>
    %cst_10 = arith.constant 2.048000e+03 : f32
    %16 = vector.broadcast %cst_10 : f32 to vector<16x1xf32>
    %17 = arith.divf %15, %16 : vector<16x1xf32>
    %18 = vector.broadcast %10 : vector<16x1xf32> to vector<16x2048xf32>
    %19 = arith.subf %4, %18 : vector<16x2048xf32>
    %cst_11 = arith.constant 9.99999974E-6 : f32
    %20 = vector.broadcast %cst_11 : f32 to vector<16x1xf32>
    %21 = arith.addf %17, %20 : vector<16x1xf32>
    %22 = math.rsqrt %21 : vector<16x1xf32>
    %23 = vector.broadcast %22 : vector<16x1xf32> to vector<16x2048xf32>
    %24 = arith.mulf %19, %23 : vector<16x2048xf32>
    %25 = vector.broadcast %5 : vector<16x1xf32> to vector<16x2048xf32>
    %26 = arith.mulf %24, %25 : vector<16x2048xf32>
    %27 = vector.broadcast %6 : vector<16x1xf32> to vector<16x2048xf32>
    %28 = arith.addf %26, %27 : vector<16x2048xf32>
    %cst_12 = arith.constant 0.000000e+00 : f32
    %29 = vector.broadcast %cst_12 : f32 to vector<16x2048xf32>
    %30 = arith.maximumf %28, %29 : vector<16x2048xf32>
    %c0_13 = arith.constant 0 : index
    %c0_14 = arith.constant 0 : index
    %31 = vector.load %arg5[%c0_13, %c0_14] : memref<16x2048xf32, #tpu.memory_space<vmem>>, vector<16x2048xf32>
    tpu.vector_store %arg5[%c0_13, %c0_14], %30 {strides = array<i32>} : memref<16x2048xf32, #tpu.memory_space<vmem>>, vector<16x2048xf32>,
    return
  }
  func.func @transform_0(%arg0: i32) -> (i32, i32) {
    %c0_i32 = arith.constant 0 : i32
    %c0_i32_0 = arith.constant 0 : i32
    %c0_i32_1 = arith.constant 0 : i32
    return %c0_i32, %c0_i32_0 : i32, i32
  }
  func.func @transform_1(%arg0: i32) -> (i32, i32) {
    %c0_i32 = arith.constant 0 : i32
    %c0_i32_0 = arith.constant 0 : i32
    %c0_i32_1 = arith.constant 0 : i32
    return %c0_i32, %c0_i32_0 : i32, i32
  }
  func.func @transform_2(%arg0: i32) -> (i32, i32) {
    %c0_i32 = arith.constant 0 : i32
    %c0_i32_0 = arith.constant 0 : i32
    %c0_i32_1 = arith.constant 0 : i32
    return %c0_i32, %c0_i32_0 : i32, i32
  }
  func.func @transform_3(%arg0: i32) -> (i32, i32) {
    %c0_i32 = arith.constant 0 : i32
    %c0_i32_0 = arith.constant 0 : i32
    %c0_i32_1 = arith.constant 0 : i32
    return %c0_i32, %c0_i32_0 : i32, i32
  }
  func.func @transform_4(%arg0: i32) -> (i32, i32) {
    %c0_i32 = arith.constant 0 : i32
    %c0_i32_0 = arith.constant 0 : i32
    %c0_i32_1 = arith.constant 0 : i32
    return %c0_i32, %c0_i32_0 : i32, i32
  }
}

module attributes {stable_mosaic.version = 11 : i64} {
  func.func @_conv_add_bn_relu_kernel(%arg0: i32, %arg1: memref<16x144xbf16, #tpu.memory_space<vmem>>, %arg2: memref<144x2048xbf16, #tpu.memory_space<vmem>>, %arg3: memref<16x2048xf32, #tpu.memory_space<vmem>>, %arg4: memref<16x1xf32, #tpu.memory_space<vmem>>, %arg5: memref<16x1xf32, #tpu.memory_space<vmem>>, %arg6: memref<16x2048xf32, #tpu.memory_space<vmem>>) attributes {dimension_semantics = [#tpu.dimension_semantics<arbitrary>], iteration_bounds = array<i64: 1>, scalar_prefetch = 0 : i64, scratch_operands = 0 : i64, tpu.core_type = #tpu.core_type<tc>, window_params = [{pipeline_mode = #tpu.pipeline_mode<synchronous>, transform_indices = @transform_0, window_bounds = array<i64: 16, 144>}, {pipeline_mode = #tpu.pipeline_mode<synchronous>, transform_indices = @transform_1, window_bounds = array<i64: 144, 2048>}, {pipeline_mode = #tpu.pipeline_mode<synchronous>, transform_indices = @transform_2, window_bounds = array<i64: 16, 2048>}, {pipeline_mode = #tpu.pipeline_mode<synchronous>, transform_indices = @transform_3, window_bounds = array<i64: 16, 1>}, {pipeline_mode = #tpu.pipeline_mode<synchronous>, transform_indices = @transform_4, window_bounds = array<i64: 16, 1>}, {pipeline_mode = #tpu.pipeline_mode<synchronous>, transform_indices = @transform_5, window_bounds = array<i64: 16, 2048>}]} {
    %c0 = arith.constant 0 : index
    %c0_0 = arith.constant 0 : index
    %0 = vector.load %arg3[%c0, %c0_0] : memref<16x2048xf32, #tpu.memory_space<vmem>>, vector<16x2048xf32>
    %c0_1 = arith.constant 0 : index
    %c0_2 = arith.constant 0 : index
    %1 = vector.load %arg1[%c0_1, %c0_2] : memref<16x144xbf16, #tpu.memory_space<vmem>>, vector<16x144xbf16>
    %2 = arith.extf %1 : vector<16x144xbf16> to vector<16x144xf32>
    %c0_3 = arith.constant 0 : index
    %c0_4 = arith.constant 0 : index
    %3 = vector.load %arg2[%c0_3, %c0_4] : memref<144x2048xbf16, #tpu.memory_space<vmem>>, vector<144x2048xbf16>
    %4 = arith.extf %3 : vector<144x2048xbf16> to vector<144x2048xf32>
    %cst = arith.constant dense<0.000000e+00> : vector<16x2048xf32>
    %5 = tpu.matmul %2, %4, %cst {dimension_numbers = #tpu.dot_dimension_numbers<[1], [0], [0], [1], [0, 0, 1, 1], [], []>} : vector<16x144xf32>, vector<144x2048xf32>, vector<16x2048xf32> -> vector<16x2048xf32>
    %6 = arith.addf %0, %5 : vector<16x2048xf32>
    %c0_5 = arith.constant 0 : index
    %c0_6 = arith.constant 0 : index
    %7 = vector.load %arg4[%c0_5, %c0_6] : memref<16x1xf32, #tpu.memory_space<vmem>>, vector<16x1xf32>
    %c0_7 = arith.constant 0 : index
    %c0_8 = arith.constant 0 : index
    %8 = vector.load %arg5[%c0_7, %c0_8] : memref<16x1xf32, #tpu.memory_space<vmem>>, vector<16x1xf32>
    %cst_9 = arith.constant dense<0.000000e+00> : vector<16xf32>
    %9 = vector.multi_reduction <add>, %6, %cst_9 [1] : vector<16x2048xf32> to vector<16xf32>
    %10 = vector.shape_cast %9 : vector<16xf32> to vector<16x1xf32>
    %cst_10 = arith.constant 2.048000e+03 : f32
    %11 = vector.broadcast %cst_10 : f32 to vector<16x1xf32>
    %12 = arith.divf %10, %11 : vector<16x1xf32>
    %13 = vector.broadcast %12 : vector<16x1xf32> to vector<16x2048xf32>
    %14 = arith.subf %6, %13 : vector<16x2048xf32>
    %15 = arith.mulf %14, %14 : vector<16x2048xf32>
    %cst_11 = arith.constant dense<0.000000e+00> : vector<16xf32>
    %16 = vector.multi_reduction <add>, %15, %cst_11 [1] : vector<16x2048xf32> to vector<16xf32>
    %17 = vector.shape_cast %16 : vector<16xf32> to vector<16x1xf32>
    %cst_12 = arith.constant 2.048000e+03 : f32
    %18 = vector.broadcast %cst_12 : f32 to vector<16x1xf32>
    %19 = arith.divf %17, %18 : vector<16x1xf32>
    %20 = vector.broadcast %12 : vector<16x1xf32> to vector<16x2048xf32>
    %21 = arith.subf %6, %20 : vector<16x2048xf32>
    %cst_13 = arith.constant 9.99999974E-6 : f32
    %22 = vector.broadcast %cst_13 : f32 to vector<16x1xf32>
    %23 = arith.addf %19, %22 : vector<16x1xf32>
    %24 = math.rsqrt %23 : vector<16x1xf32>
    %25 = vector.broadcast %24 : vector<16x1xf32> to vector<16x2048xf32>
    %26 = arith.mulf %21, %25 : vector<16x2048xf32>
    %27 = vector.broadcast %7 : vector<16x1xf32> to vector<16x2048xf32>
    %28 = arith.mulf %26, %27 : vector<16x2048xf32>
    %29 = vector.broadcast %8 : vector<16x1xf32> to vector<16x2048xf32>
    %30 = arith.addf %28, %29 : vector<16x2048xf32>
    %cst_14 = arith.constant 0.000000e+00 : f32
    %31 = vector.broadcast %cst_14 : f32 to vector<16x2048xf32>
    %32 = arith.maximumf %30, %31 : vector<16x2048xf32>
    %c0_15 = arith.constant 0 : index
    %c0_16 = arith.constant 0 : index
    %33 = vector.load %arg6[%c0_15, %c0_16] : memref<16x2048xf32, #tpu.memory_space<vmem>>, vector<16x2048xf32>
    tpu.vector_store %arg6[%c0_15, %c0_16], %32 {strides = array<i32>} : memref<16x2048xf32, #tpu.memory_space<vmem>>, vector<16x2048xf32>,
    return
  }
  func.func @transform_0(%arg0: i32) -> (i32, i32) {
    %c0_i32 = arith.constant 0 : i32
    %c0_i32_0 = arith.constant 0 : i32
    %c0_i32_1 = arith.constant 0 : i32
    return %c0_i32, %c0_i32_0 : i32, i32
  }
  func.func @transform_1(%arg0: i32) -> (i32, i32) {
    %c0_i32 = arith.constant 0 : i32
    %c0_i32_0 = arith.constant 0 : i32
    %c0_i32_1 = arith.constant 0 : i32
    return %c0_i32, %c0_i32_0 : i32, i32
  }
  func.func @transform_2(%arg0: i32) -> (i32, i32) {
    %c0_i32 = arith.constant 0 : i32
    %c0_i32_0 = arith.constant 0 : i32
    %c0_i32_1 = arith.constant 0 : i32
    return %c0_i32, %c0_i32_0 : i32, i32
  }
  func.func @transform_3(%arg0: i32) -> (i32, i32) {
    %c0_i32 = arith.constant 0 : i32
    %c0_i32_0 = arith.constant 0 : i32
    %c0_i32_1 = arith.constant 0 : i32
    return %c0_i32, %c0_i32_0 : i32, i32
  }
  func.func @transform_4(%arg0: i32) -> (i32, i32) {
    %c0_i32 = arith.constant 0 : i32
    %c0_i32_0 = arith.constant 0 : i32
    %c0_i32_1 = arith.constant 0 : i32
    return %c0_i32, %c0_i32_0 : i32, i32
  }
  func.func @transform_5(%arg0: i32) -> (i32, i32) {
    %c0_i32 = arith.constant 0 : i32
    %c0_i32_0 = arith.constant 0 : i32
    %c0_i32_1 = arith.constant 0 : i32
    return %c0_i32, %c0_i32_0 : i32, i32
  }
}

module attributes {stable_mosaic.version = 11 : i64} {
  func.func @_conv_split_bn_relu_kernel(%arg0: i32, %arg1: memref<64x144xbf16, #tpu.memory_space<vmem>>, %arg2: memref<144x512xbf16, #tpu.memory_space<vmem>>, %arg3: memref<32x1xf32, #tpu.memory_space<vmem>>, %arg4: memref<32x1xf32, #tpu.memory_space<vmem>>, %arg5: memref<32x512xf32, #tpu.memory_space<vmem>>, %arg6: memref<32x512xf32, #tpu.memory_space<vmem>>) attributes {dimension_semantics = [#tpu.dimension_semantics<arbitrary>], iteration_bounds = array<i64: 1>, scalar_prefetch = 0 : i64, scratch_operands = 0 : i64, tpu.core_type = #tpu.core_type<tc>, window_params = [{pipeline_mode = #tpu.pipeline_mode<synchronous>, transform_indices = @transform_0, window_bounds = array<i64: 64, 144>}, {pipeline_mode = #tpu.pipeline_mode<synchronous>, transform_indices = @transform_1, window_bounds = array<i64: 144, 512>}, {pipeline_mode = #tpu.pipeline_mode<synchronous>, transform_indices = @transform_2, window_bounds = array<i64: 32, 1>}, {pipeline_mode = #tpu.pipeline_mode<synchronous>, transform_indices = @transform_3, window_bounds = array<i64: 32, 1>}, {pipeline_mode = #tpu.pipeline_mode<synchronous>, transform_indices = @transform_4, window_bounds = array<i64: 32, 512>}, {pipeline_mode = #tpu.pipeline_mode<synchronous>, transform_indices = @transform_5, window_bounds = array<i64: 32, 512>}]} {
    %c0 = arith.constant 0 : index
    %c0_0 = arith.constant 0 : index
    %0 = vector.load %arg1[%c0, %c0_0] : memref<64x144xbf16, #tpu.memory_space<vmem>>, vector<64x144xbf16>
    %1 = arith.extf %0 : vector<64x144xbf16> to vector<64x144xf32>
    %c0_1 = arith.constant 0 : index
    %c0_2 = arith.constant 0 : index
    %2 = vector.load %arg2[%c0_1, %c0_2] : memref<144x512xbf16, #tpu.memory_space<vmem>>, vector<144x512xbf16>
    %3 = arith.extf %2 : vector<144x512xbf16> to vector<144x512xf32>
    %cst = arith.constant dense<0.000000e+00> : vector<64x512xf32>
    %4 = tpu.matmul %1, %3, %cst {dimension_numbers = #tpu.dot_dimension_numbers<[1], [0], [0], [1], [0, 0, 1, 1], [], []>} : vector<64x144xf32>, vector<144x512xf32>, vector<64x512xf32> -> vector<64x512xf32>
    %5 = vector.extract_strided_slice %4 {offsets = [32, 0], sizes = [32, 512], strides = [1, 1]} : vector<64x512xf32> to vector<32x512xf32>
    %c0_3 = arith.constant 0 : index
    %c0_4 = arith.constant 0 : index
    %6 = vector.load %arg6[%c0_3, %c0_4] : memref<32x512xf32, #tpu.memory_space<vmem>>, vector<32x512xf32>
    tpu.vector_store %arg6[%c0_3, %c0_4], %5 {strides = array<i32>} : memref<32x512xf32, #tpu.memory_space<vmem>>, vector<32x512xf32>,
    %7 = vector.extract_strided_slice %4 {offsets = [0, 0], sizes = [32, 512], strides = [1, 1]} : vector<64x512xf32> to vector<32x512xf32>
    %c0_5 = arith.constant 0 : index
    %c0_6 = arith.constant 0 : index
    %8 = vector.load %arg3[%c0_5, %c0_6] : memref<32x1xf32, #tpu.memory_space<vmem>>, vector<32x1xf32>
    %c0_7 = arith.constant 0 : index
    %c0_8 = arith.constant 0 : index
    %9 = vector.load %arg4[%c0_7, %c0_8] : memref<32x1xf32, #tpu.memory_space<vmem>>, vector<32x1xf32>
    %cst_9 = arith.constant dense<0.000000e+00> : vector<32xf32>
    %10 = vector.multi_reduction <add>, %7, %cst_9 [1] : vector<32x512xf32> to vector<32xf32>
    %11 = vector.shape_cast %10 : vector<32xf32> to vector<32x1xf32>
    %cst_10 = arith.constant 5.120000e+02 : f32
    %12 = vector.broadcast %cst_10 : f32 to vector<32x1xf32>
    %13 = arith.divf %11, %12 : vector<32x1xf32>
    %14 = vector.broadcast %13 : vector<32x1xf32> to vector<32x512xf32>
    %15 = arith.subf %7, %14 : vector<32x512xf32>
    %16 = arith.mulf %15, %15 : vector<32x512xf32>
    %cst_11 = arith.constant dense<0.000000e+00> : vector<32xf32>
    %17 = vector.multi_reduction <add>, %16, %cst_11 [1] : vector<32x512xf32> to vector<32xf32>
    %18 = vector.shape_cast %17 : vector<32xf32> to vector<32x1xf32>
    %cst_12 = arith.constant 5.120000e+02 : f32
    %19 = vector.broadcast %cst_12 : f32 to vector<32x1xf32>
    %20 = arith.divf %18, %19 : vector<32x1xf32>
    %21 = vector.broadcast %13 : vector<32x1xf32> to vector<32x512xf32>
    %22 = arith.subf %7, %21 : vector<32x512xf32>
    %cst_13 = arith.constant 9.99999974E-6 : f32
    %23 = vector.broadcast %cst_13 : f32 to vector<32x1xf32>
    %24 = arith.addf %20, %23 : vector<32x1xf32>
    %25 = math.rsqrt %24 : vector<32x1xf32>
    %26 = vector.broadcast %25 : vector<32x1xf32> to vector<32x512xf32>
    %27 = arith.mulf %22, %26 : vector<32x512xf32>
    %28 = vector.broadcast %8 : vector<32x1xf32> to vector<32x512xf32>
    %29 = arith.mulf %27, %28 : vector<32x512xf32>
    %30 = vector.broadcast %9 : vector<32x1xf32> to vector<32x512xf32>
    %31 = arith.addf %29, %30 : vector<32x512xf32>
    %cst_14 = arith.constant 0.000000e+00 : f32
    %32 = vector.broadcast %cst_14 : f32 to vector<32x512xf32>
    %33 = arith.maximumf %31, %32 : vector<32x512xf32>
    %c0_15 = arith.constant 0 : index
    %c0_16 = arith.constant 0 : index
    %34 = vector.load %arg5[%c0_15, %c0_16] : memref<32x512xf32, #tpu.memory_space<vmem>>, vector<32x512xf32>
    tpu.vector_store %arg5[%c0_15, %c0_16], %33 {strides = array<i32>} : memref<32x512xf32, #tpu.memory_space<vmem>>, vector<32x512xf32>,
    return
  }
  func.func @transform_0(%arg0: i32) -> (i32, i32) {
    %c0_i32 = arith.constant 0 : i32
    %c0_i32_0 = arith.constant 0 : i32
    %c0_i32_1 = arith.constant 0 : i32
    return %c0_i32, %c0_i32_0 : i32, i32
  }
  func.func @transform_1(%arg0: i32) -> (i32, i32) {
    %c0_i32 = arith.constant 0 : i32
    %c0_i32_0 = arith.constant 0 : i32
    %c0_i32_1 = arith.constant 0 : i32
    return %c0_i32, %c0_i32_0 : i32, i32
  }
  func.func @transform_2(%arg0: i32) -> (i32, i32) {
    %c0_i32 = arith.constant 0 : i32
    %c0_i32_0 = arith.constant 0 : i32
    %c0_i32_1 = arith.constant 0 : i32
    return %c0_i32, %c0_i32_0 : i32, i32
  }
  func.func @transform_3(%arg0: i32) -> (i32, i32) {
    %c0_i32 = arith.constant 0 : i32
    %c0_i32_0 = arith.constant 0 : i32
    %c0_i32_1 = arith.constant 0 : i32
    return %c0_i32, %c0_i32_0 : i32, i32
  }
  func.func @transform_4(%arg0: i32) -> (i32, i32) {
    %c0_i32 = arith.constant 0 : i32
    %c0_i32_0 = arith.constant 0 : i32
    %c0_i32_1 = arith.constant 0 : i32
    return %c0_i32, %c0_i32_0 : i32, i32
  }
  func.func @transform_5(%arg0: i32) -> (i32, i32) {
    %c0_i32 = arith.constant 0 : i32
    %c0_i32_0 = arith.constant 0 : i32
    %c0_i32_1 = arith.constant 0 : i32
    return %c0_i32, %c0_i32_0 : i32, i32
  }
}

module attributes {stable_mosaic.version = 11 : i64} {
  func.func @_conv_add_bn_relu_kernel(%arg0: i32, %arg1: memref<32x288xbf16, #tpu.memory_space<vmem>>, %arg2: memref<288x512xbf16, #tpu.memory_space<vmem>>, %arg3: memref<32x512xf32, #tpu.memory_space<vmem>>, %arg4: memref<32x1xf32, #tpu.memory_space<vmem>>, %arg5: memref<32x1xf32, #tpu.memory_space<vmem>>, %arg6: memref<32x512xf32, #tpu.memory_space<vmem>>) attributes {dimension_semantics = [#tpu.dimension_semantics<arbitrary>], iteration_bounds = array<i64: 1>, scalar_prefetch = 0 : i64, scratch_operands = 0 : i64, tpu.core_type = #tpu.core_type<tc>, window_params = [{pipeline_mode = #tpu.pipeline_mode<synchronous>, transform_indices = @transform_0, window_bounds = array<i64: 32, 288>}, {pipeline_mode = #tpu.pipeline_mode<synchronous>, transform_indices = @transform_1, window_bounds = array<i64: 288, 512>}, {pipeline_mode = #tpu.pipeline_mode<synchronous>, transform_indices = @transform_2, window_bounds = array<i64: 32, 512>}, {pipeline_mode = #tpu.pipeline_mode<synchronous>, transform_indices = @transform_3, window_bounds = array<i64: 32, 1>}, {pipeline_mode = #tpu.pipeline_mode<synchronous>, transform_indices = @transform_4, window_bounds = array<i64: 32, 1>}, {pipeline_mode = #tpu.pipeline_mode<synchronous>, transform_indices = @transform_5, window_bounds = array<i64: 32, 512>}]} {
    %c0 = arith.constant 0 : index
    %c0_0 = arith.constant 0 : index
    %0 = vector.load %arg3[%c0, %c0_0] : memref<32x512xf32, #tpu.memory_space<vmem>>, vector<32x512xf32>
    %c0_1 = arith.constant 0 : index
    %c0_2 = arith.constant 0 : index
    %1 = vector.load %arg1[%c0_1, %c0_2] : memref<32x288xbf16, #tpu.memory_space<vmem>>, vector<32x288xbf16>
    %2 = arith.extf %1 : vector<32x288xbf16> to vector<32x288xf32>
    %c0_3 = arith.constant 0 : index
    %c0_4 = arith.constant 0 : index
    %3 = vector.load %arg2[%c0_3, %c0_4] : memref<288x512xbf16, #tpu.memory_space<vmem>>, vector<288x512xbf16>
    %4 = arith.extf %3 : vector<288x512xbf16> to vector<288x512xf32>
    %cst = arith.constant dense<0.000000e+00> : vector<32x512xf32>
    %5 = tpu.matmul %2, %4, %cst {dimension_numbers = #tpu.dot_dimension_numbers<[1], [0], [0], [1], [0, 0, 1, 1], [], []>} : vector<32x288xf32>, vector<288x512xf32>, vector<32x512xf32> -> vector<32x512xf32>
    %6 = arith.addf %0, %5 : vector<32x512xf32>
    %c0_5 = arith.constant 0 : index
    %c0_6 = arith.constant 0 : index
    %7 = vector.load %arg4[%c0_5, %c0_6] : memref<32x1xf32, #tpu.memory_space<vmem>>, vector<32x1xf32>
    %c0_7 = arith.constant 0 : index
    %c0_8 = arith.constant 0 : index
    %8 = vector.load %arg5[%c0_7, %c0_8] : memref<32x1xf32, #tpu.memory_space<vmem>>, vector<32x1xf32>
    %cst_9 = arith.constant dense<0.000000e+00> : vector<32xf32>
    %9 = vector.multi_reduction <add>, %6, %cst_9 [1] : vector<32x512xf32> to vector<32xf32>
    %10 = vector.shape_cast %9 : vector<32xf32> to vector<32x1xf32>
    %cst_10 = arith.constant 5.120000e+02 : f32
    %11 = vector.broadcast %cst_10 : f32 to vector<32x1xf32>
    %12 = arith.divf %10, %11 : vector<32x1xf32>
    %13 = vector.broadcast %12 : vector<32x1xf32> to vector<32x512xf32>
    %14 = arith.subf %6, %13 : vector<32x512xf32>
    %15 = arith.mulf %14, %14 : vector<32x512xf32>
    %cst_11 = arith.constant dense<0.000000e+00> : vector<32xf32>
    %16 = vector.multi_reduction <add>, %15, %cst_11 [1] : vector<32x512xf32> to vector<32xf32>
    %17 = vector.shape_cast %16 : vector<32xf32> to vector<32x1xf32>
    %cst_12 = arith.constant 5.120000e+02 : f32
    %18 = vector.broadcast %cst_12 : f32 to vector<32x1xf32>
    %19 = arith.divf %17, %18 : vector<32x1xf32>
    %20 = vector.broadcast %12 : vector<32x1xf32> to vector<32x512xf32>
    %21 = arith.subf %6, %20 : vector<32x512xf32>
    %cst_13 = arith.constant 9.99999974E-6 : f32
    %22 = vector.broadcast %cst_13 : f32 to vector<32x1xf32>
    %23 = arith.addf %19, %22 : vector<32x1xf32>
    %24 = math.rsqrt %23 : vector<32x1xf32>
    %25 = vector.broadcast %24 : vector<32x1xf32> to vector<32x512xf32>
    %26 = arith.mulf %21, %25 : vector<32x512xf32>
    %27 = vector.broadcast %7 : vector<32x1xf32> to vector<32x512xf32>
    %28 = arith.mulf %26, %27 : vector<32x512xf32>
    %29 = vector.broadcast %8 : vector<32x1xf32> to vector<32x512xf32>
    %30 = arith.addf %28, %29 : vector<32x512xf32>
    %cst_14 = arith.constant 0.000000e+00 : f32
    %31 = vector.broadcast %cst_14 : f32 to vector<32x512xf32>
    %32 = arith.maximumf %30, %31 : vector<32x512xf32>
    %c0_15 = arith.constant 0 : index
    %c0_16 = arith.constant 0 : index
    %33 = vector.load %arg6[%c0_15, %c0_16] : memref<32x512xf32, #tpu.memory_space<vmem>>, vector<32x512xf32>
    tpu.vector_store %arg6[%c0_15, %c0_16], %32 {strides = array<i32>} : memref<32x512xf32, #tpu.memory_space<vmem>>, vector<32x512xf32>,
    return
  }
  func.func @transform_0(%arg0: i32) -> (i32, i32) {
    %c0_i32 = arith.constant 0 : i32
    %c0_i32_0 = arith.constant 0 : i32
    %c0_i32_1 = arith.constant 0 : i32
    return %c0_i32, %c0_i32_0 : i32, i32
  }
  func.func @transform_1(%arg0: i32) -> (i32, i32) {
    %c0_i32 = arith.constant 0 : i32
    %c0_i32_0 = arith.constant 0 : i32
    %c0_i32_1 = arith.constant 0 : i32
    return %c0_i32, %c0_i32_0 : i32, i32
  }
  func.func @transform_2(%arg0: i32) -> (i32, i32) {
    %c0_i32 = arith.constant 0 : i32
    %c0_i32_0 = arith.constant 0 : i32
    %c0_i32_1 = arith.constant 0 : i32
    return %c0_i32, %c0_i32_0 : i32, i32
  }
  func.func @transform_3(%arg0: i32) -> (i32, i32) {
    %c0_i32 = arith.constant 0 : i32
    %c0_i32_0 = arith.constant 0 : i32
    %c0_i32_1 = arith.constant 0 : i32
    return %c0_i32, %c0_i32_0 : i32, i32
  }
  func.func @transform_4(%arg0: i32) -> (i32, i32) {
    %c0_i32 = arith.constant 0 : i32
    %c0_i32_0 = arith.constant 0 : i32
    %c0_i32_1 = arith.constant 0 : i32
    return %c0_i32, %c0_i32_0 : i32, i32
  }
  func.func @transform_5(%arg0: i32) -> (i32, i32) {
    %c0_i32 = arith.constant 0 : i32
    %c0_i32_0 = arith.constant 0 : i32
    %c0_i32_1 = arith.constant 0 : i32
    return %c0_i32, %c0_i32_0 : i32, i32
  }
}

module attributes {stable_mosaic.version = 11 : i64} {
  func.func @_conv_split_bn_relu_kernel(%arg0: i32, %arg1: memref<128x288xbf16, #tpu.memory_space<vmem>>, %arg2: memref<288x128xbf16, #tpu.memory_space<vmem>>, %arg3: memref<64x1xf32, #tpu.memory_space<vmem>>, %arg4: memref<64x1xf32, #tpu.memory_space<vmem>>, %arg5: memref<64x128xf32, #tpu.memory_space<vmem>>, %arg6: memref<64x128xf32, #tpu.memory_space<vmem>>) attributes {dimension_semantics = [#tpu.dimension_semantics<arbitrary>], iteration_bounds = array<i64: 1>, scalar_prefetch = 0 : i64, scratch_operands = 0 : i64, tpu.core_type = #tpu.core_type<tc>, window_params = [{pipeline_mode = #tpu.pipeline_mode<synchronous>, transform_indices = @transform_0, window_bounds = array<i64: 128, 288>}, {pipeline_mode = #tpu.pipeline_mode<synchronous>, transform_indices = @transform_1, window_bounds = array<i64: 288, 128>}, {pipeline_mode = #tpu.pipeline_mode<synchronous>, transform_indices = @transform_2, window_bounds = array<i64: 64, 1>}, {pipeline_mode = #tpu.pipeline_mode<synchronous>, transform_indices = @transform_3, window_bounds = array<i64: 64, 1>}, {pipeline_mode = #tpu.pipeline_mode<synchronous>, transform_indices = @transform_4, window_bounds = array<i64: 64, 128>}, {pipeline_mode = #tpu.pipeline_mode<synchronous>, transform_indices = @transform_5, window_bounds = array<i64: 64, 128>}]} {
    %c0 = arith.constant 0 : index
    %c0_0 = arith.constant 0 : index
    %0 = vector.load %arg1[%c0, %c0_0] : memref<128x288xbf16, #tpu.memory_space<vmem>>, vector<128x288xbf16>
    %1 = arith.extf %0 : vector<128x288xbf16> to vector<128x288xf32>
    %c0_1 = arith.constant 0 : index
    %c0_2 = arith.constant 0 : index
    %2 = vector.load %arg2[%c0_1, %c0_2] : memref<288x128xbf16, #tpu.memory_space<vmem>>, vector<288x128xbf16>
    %3 = arith.extf %2 : vector<288x128xbf16> to vector<288x128xf32>
    %cst = arith.constant dense<0.000000e+00> : vector<128x128xf32>
    %4 = tpu.matmul %1, %3, %cst {dimension_numbers = #tpu.dot_dimension_numbers<[1], [0], [0], [1], [0, 0, 1, 1], [], []>} : vector<128x288xf32>, vector<288x128xf32>, vector<128x128xf32> -> vector<128x128xf32>
    %5 = vector.extract_strided_slice %4 {offsets = [64, 0], sizes = [64, 128], strides = [1, 1]} : vector<128x128xf32> to vector<64x128xf32>
    %c0_3 = arith.constant 0 : index
    %c0_4 = arith.constant 0 : index
    %6 = vector.load %arg6[%c0_3, %c0_4] : memref<64x128xf32, #tpu.memory_space<vmem>>, vector<64x128xf32>
    tpu.vector_store %arg6[%c0_3, %c0_4], %5 {strides = array<i32>} : memref<64x128xf32, #tpu.memory_space<vmem>>, vector<64x128xf32>,
    %7 = vector.extract_strided_slice %4 {offsets = [0, 0], sizes = [64, 128], strides = [1, 1]} : vector<128x128xf32> to vector<64x128xf32>
    %c0_5 = arith.constant 0 : index
    %c0_6 = arith.constant 0 : index
    %8 = vector.load %arg3[%c0_5, %c0_6] : memref<64x1xf32, #tpu.memory_space<vmem>>, vector<64x1xf32>
    %c0_7 = arith.constant 0 : index
    %c0_8 = arith.constant 0 : index
    %9 = vector.load %arg4[%c0_7, %c0_8] : memref<64x1xf32, #tpu.memory_space<vmem>>, vector<64x1xf32>
    %cst_9 = arith.constant dense<0.000000e+00> : vector<64xf32>
    %10 = vector.multi_reduction <add>, %7, %cst_9 [1] : vector<64x128xf32> to vector<64xf32>
    %11 = vector.shape_cast %10 : vector<64xf32> to vector<64x1xf32>
    %cst_10 = arith.constant 1.280000e+02 : f32
    %12 = vector.broadcast %cst_10 : f32 to vector<64x1xf32>
    %13 = arith.divf %11, %12 : vector<64x1xf32>
    %14 = vector.broadcast %13 : vector<64x1xf32> to vector<64x128xf32>
    %15 = arith.subf %7, %14 : vector<64x128xf32>
    %16 = arith.mulf %15, %15 : vector<64x128xf32>
    %cst_11 = arith.constant dense<0.000000e+00> : vector<64xf32>
    %17 = vector.multi_reduction <add>, %16, %cst_11 [1] : vector<64x128xf32> to vector<64xf32>
    %18 = vector.shape_cast %17 : vector<64xf32> to vector<64x1xf32>
    %cst_12 = arith.constant 1.280000e+02 : f32
    %19 = vector.broadcast %cst_12 : f32 to vector<64x1xf32>
    %20 = arith.divf %18, %19 : vector<64x1xf32>
    %21 = vector.broadcast %13 : vector<64x1xf32> to vector<64x128xf32>
    %22 = arith.subf %7, %21 : vector<64x128xf32>
    %cst_13 = arith.constant 9.99999974E-6 : f32
    %23 = vector.broadcast %cst_13 : f32 to vector<64x1xf32>
    %24 = arith.addf %20, %23 : vector<64x1xf32>
    %25 = math.rsqrt %24 : vector<64x1xf32>
    %26 = vector.broadcast %25 : vector<64x1xf32> to vector<64x128xf32>
    %27 = arith.mulf %22, %26 : vector<64x128xf32>
    %28 = vector.broadcast %8 : vector<64x1xf32> to vector<64x128xf32>
    %29 = arith.mulf %27, %28 : vector<64x128xf32>
    %30 = vector.broadcast %9 : vector<64x1xf32> to vector<64x128xf32>
    %31 = arith.addf %29, %30 : vector<64x128xf32>
    %cst_14 = arith.constant 0.000000e+00 : f32
    %32 = vector.broadcast %cst_14 : f32 to vector<64x128xf32>
    %33 = arith.maximumf %31, %32 : vector<64x128xf32>
    %c0_15 = arith.constant 0 : index
    %c0_16 = arith.constant 0 : index
    %34 = vector.load %arg5[%c0_15, %c0_16] : memref<64x128xf32, #tpu.memory_space<vmem>>, vector<64x128xf32>
    tpu.vector_store %arg5[%c0_15, %c0_16], %33 {strides = array<i32>} : memref<64x128xf32, #tpu.memory_space<vmem>>, vector<64x128xf32>,
    return
  }
  func.func @transform_0(%arg0: i32) -> (i32, i32) {
    %c0_i32 = arith.constant 0 : i32
    %c0_i32_0 = arith.constant 0 : i32
    %c0_i32_1 = arith.constant 0 : i32
    return %c0_i32, %c0_i32_0 : i32, i32
  }
  func.func @transform_1(%arg0: i32) -> (i32, i32) {
    %c0_i32 = arith.constant 0 : i32
    %c0_i32_0 = arith.constant 0 : i32
    %c0_i32_1 = arith.constant 0 : i32
    return %c0_i32, %c0_i32_0 : i32, i32
  }
  func.func @transform_2(%arg0: i32) -> (i32, i32) {
    %c0_i32 = arith.constant 0 : i32
    %c0_i32_0 = arith.constant 0 : i32
    %c0_i32_1 = arith.constant 0 : i32
    return %c0_i32, %c0_i32_0 : i32, i32
  }
  func.func @transform_3(%arg0: i32) -> (i32, i32) {
    %c0_i32 = arith.constant 0 : i32
    %c0_i32_0 = arith.constant 0 : i32
    %c0_i32_1 = arith.constant 0 : i32
    return %c0_i32, %c0_i32_0 : i32, i32
  }
  func.func @transform_4(%arg0: i32) -> (i32, i32) {
    %c0_i32 = arith.constant 0 : i32
    %c0_i32_0 = arith.constant 0 : i32
    %c0_i32_1 = arith.constant 0 : i32
    return %c0_i32, %c0_i32_0 : i32, i32
  }
  func.func @transform_5(%arg0: i32) -> (i32, i32) {
    %c0_i32 = arith.constant 0 : i32
    %c0_i32_0 = arith.constant 0 : i32
    %c0_i32_1 = arith.constant 0 : i32
    return %c0_i32, %c0_i32_0 : i32, i32
  }
}

module attributes {stable_mosaic.version = 11 : i64} {
  func.func @_conv_add_bn_relu_pool_fc_kernel(%arg0: i32, %arg1: memref<64x576xbf16, #tpu.memory_space<vmem>>, %arg2: memref<576x128xbf16, #tpu.memory_space<vmem>>, %arg3: memref<64x128xf32, #tpu.memory_space<vmem>>, %arg4: memref<64x1xf32, #tpu.memory_space<vmem>>, %arg5: memref<64x1xf32, #tpu.memory_space<vmem>>, %arg6: memref<128x2xf32, #tpu.memory_space<vmem>>, %arg7: memref<10x64xf32, #tpu.memory_space<vmem>>, %arg8: memref<10x1xf32, #tpu.memory_space<vmem>>, %arg9: memref<10x2xf32, #tpu.memory_space<vmem>>) attributes {dimension_semantics = [#tpu.dimension_semantics<arbitrary>], iteration_bounds = array<i64: 1>, scalar_prefetch = 0 : i64, scratch_operands = 0 : i64, tpu.core_type = #tpu.core_type<tc>, window_params = [{pipeline_mode = #tpu.pipeline_mode<synchronous>, transform_indices = @transform_0, window_bounds = array<i64: 64, 576>}, {pipeline_mode = #tpu.pipeline_mode<synchronous>, transform_indices = @transform_1, window_bounds = array<i64: 576, 128>}, {pipeline_mode = #tpu.pipeline_mode<synchronous>, transform_indices = @transform_2, window_bounds = array<i64: 64, 128>}, {pipeline_mode = #tpu.pipeline_mode<synchronous>, transform_indices = @transform_3, window_bounds = array<i64: 64, 1>}, {pipeline_mode = #tpu.pipeline_mode<synchronous>, transform_indices = @transform_4, window_bounds = array<i64: 64, 1>}, {pipeline_mode = #tpu.pipeline_mode<synchronous>, transform_indices = @transform_5, window_bounds = array<i64: 128, 2>}, {pipeline_mode = #tpu.pipeline_mode<synchronous>, transform_indices = @transform_6, window_bounds = array<i64: 10, 64>}, {pipeline_mode = #tpu.pipeline_mode<synchronous>, transform_indices = @transform_7, window_bounds = array<i64: 10, 1>}, {pipeline_mode = #tpu.pipeline_mode<synchronous>, transform_indices = @transform_8, window_bounds = array<i64: 10, 2>}]} {
    %c0 = arith.constant 0 : index
    %c0_0 = arith.constant 0 : index
    %0 = vector.load %arg3[%c0, %c0_0] : memref<64x128xf32, #tpu.memory_space<vmem>>, vector<64x128xf32>
    %c0_1 = arith.constant 0 : index
    %c0_2 = arith.constant 0 : index
    %1 = vector.load %arg1[%c0_1, %c0_2] : memref<64x576xbf16, #tpu.memory_space<vmem>>, vector<64x576xbf16>
    %2 = arith.extf %1 : vector<64x576xbf16> to vector<64x576xf32>
    %c0_3 = arith.constant 0 : index
    %c0_4 = arith.constant 0 : index
    %3 = vector.load %arg2[%c0_3, %c0_4] : memref<576x128xbf16, #tpu.memory_space<vmem>>, vector<576x128xbf16>
    %4 = arith.extf %3 : vector<576x128xbf16> to vector<576x128xf32>
    %cst = arith.constant dense<0.000000e+00> : vector<64x128xf32>
    %5 = tpu.matmul %2, %4, %cst {dimension_numbers = #tpu.dot_dimension_numbers<[1], [0], [0], [1], [0, 0, 1, 1], [], []>} : vector<64x576xf32>, vector<576x128xf32>, vector<64x128xf32> -> vector<64x128xf32>
    %6 = arith.addf %0, %5 : vector<64x128xf32>
    %c0_5 = arith.constant 0 : index
    %c0_6 = arith.constant 0 : index
    %7 = vector.load %arg4[%c0_5, %c0_6] : memref<64x1xf32, #tpu.memory_space<vmem>>, vector<64x1xf32>
    %c0_7 = arith.constant 0 : index
    %c0_8 = arith.constant 0 : index
    %8 = vector.load %arg5[%c0_7, %c0_8] : memref<64x1xf32, #tpu.memory_space<vmem>>, vector<64x1xf32>
    %cst_9 = arith.constant dense<0.000000e+00> : vector<64xf32>
    %9 = vector.multi_reduction <add>, %6, %cst_9 [1] : vector<64x128xf32> to vector<64xf32>
    %10 = vector.shape_cast %9 : vector<64xf32> to vector<64x1xf32>
    %cst_10 = arith.constant 1.280000e+02 : f32
    %11 = vector.broadcast %cst_10 : f32 to vector<64x1xf32>
    %12 = arith.divf %10, %11 : vector<64x1xf32>
    %13 = vector.broadcast %12 : vector<64x1xf32> to vector<64x128xf32>
    %14 = arith.subf %6, %13 : vector<64x128xf32>
    %15 = arith.mulf %14, %14 : vector<64x128xf32>
    %cst_11 = arith.constant dense<0.000000e+00> : vector<64xf32>
    %16 = vector.multi_reduction <add>, %15, %cst_11 [1] : vector<64x128xf32> to vector<64xf32>
    %17 = vector.shape_cast %16 : vector<64xf32> to vector<64x1xf32>
    %cst_12 = arith.constant 1.280000e+02 : f32
    %18 = vector.broadcast %cst_12 : f32 to vector<64x1xf32>
    %19 = arith.divf %17, %18 : vector<64x1xf32>
    %20 = vector.broadcast %12 : vector<64x1xf32> to vector<64x128xf32>
    %21 = arith.subf %6, %20 : vector<64x128xf32>
    %cst_13 = arith.constant 9.99999974E-6 : f32
    %22 = vector.broadcast %cst_13 : f32 to vector<64x1xf32>
    %23 = arith.addf %19, %22 : vector<64x1xf32>
    %24 = math.rsqrt %23 : vector<64x1xf32>
    %25 = vector.broadcast %24 : vector<64x1xf32> to vector<64x128xf32>
    %26 = arith.mulf %21, %25 : vector<64x128xf32>
    %27 = vector.broadcast %7 : vector<64x1xf32> to vector<64x128xf32>
    %28 = arith.mulf %26, %27 : vector<64x128xf32>
    %29 = vector.broadcast %8 : vector<64x1xf32> to vector<64x128xf32>
    %30 = arith.addf %28, %29 : vector<64x128xf32>
    %cst_14 = arith.constant 0.000000e+00 : f32
    %31 = vector.broadcast %cst_14 : f32 to vector<64x128xf32>
    %32 = arith.maximumf %30, %31 : vector<64x128xf32>
    %c0_15 = arith.constant 0 : index
    %c0_16 = arith.constant 0 : index
    %33 = vector.load %arg6[%c0_15, %c0_16] : memref<128x2xf32, #tpu.memory_space<vmem>>, vector<128x2xf32>
    %cst_17 = arith.constant dense<0.000000e+00> : vector<64x2xf32>
    %34 = tpu.matmul %32, %33, %cst_17 {dimension_numbers = #tpu.dot_dimension_numbers<[1], [0], [0], [1], [0, 0, 1, 1], [], []>} : vector<64x128xf32>, vector<128x2xf32>, vector<64x2xf32> -> vector<64x2xf32>
    %c0_18 = arith.constant 0 : index
    %c0_19 = arith.constant 0 : index
    %35 = vector.load %arg7[%c0_18, %c0_19] : memref<10x64xf32, #tpu.memory_space<vmem>>, vector<10x64xf32>
    %cst_20 = arith.constant dense<0.000000e+00> : vector<10x2xf32>
    %36 = tpu.matmul %35, %34, %cst_20 {dimension_numbers = #tpu.dot_dimension_numbers<[1], [0], [0], [1], [0, 0, 1, 1], [], []>} : vector<10x64xf32>, vector<64x2xf32>, vector<10x2xf32> -> vector<10x2xf32>
    %c0_21 = arith.constant 0 : index
    %c0_22 = arith.constant 0 : index
    %37 = vector.load %arg8[%c0_21, %c0_22] : memref<10x1xf32, #tpu.memory_space<vmem>>, vector<10x1xf32>
    %38 = vector.broadcast %37 : vector<10x1xf32> to vector<10x2xf32>
    %39 = arith.addf %36, %38 : vector<10x2xf32>
    %c0_23 = arith.constant 0 : index
    %c0_24 = arith.constant 0 : index
    %40 = vector.load %arg9[%c0_23, %c0_24] : memref<10x2xf32, #tpu.memory_space<vmem>>, vector<10x2xf32>
    tpu.vector_store %arg9[%c0_23, %c0_24], %39 {strides = array<i32>} : memref<10x2xf32, #tpu.memory_space<vmem>>, vector<10x2xf32>,
    return
  }
  func.func @transform_0(%arg0: i32) -> (i32, i32) {
    %c0_i32 = arith.constant 0 : i32
    %c0_i32_0 = arith.constant 0 : i32
    %c0_i32_1 = arith.constant 0 : i32
    return %c0_i32, %c0_i32_0 : i32, i32
  }
  func.func @transform_1(%arg0: i32) -> (i32, i32) {
    %c0_i32 = arith.constant 0 : i32
    %c0_i32_0 = arith.constant 0 : i32
    %c0_i32_1 = arith.constant 0 : i32
    return %c0_i32, %c0_i32_0 : i32, i32
  }
  func.func @transform_2(%arg0: i32) -> (i32, i32) {
    %c0_i32 = arith.constant 0 : i32
    %c0_i32_0 = arith.constant 0 : i32
    %c0_i32_1 = arith.constant 0 : i32
    return %c0_i32, %c0_i32_0 : i32, i32
  }
  func.func @transform_3(%arg0: i32) -> (i32, i32) {
    %c0_i32 = arith.constant 0 : i32
    %c0_i32_0 = arith.constant 0 : i32
    %c0_i32_1 = arith.constant 0 : i32
    return %c0_i32, %c0_i32_0 : i32, i32
  }
  func.func @transform_4(%arg0: i32) -> (i32, i32) {
    %c0_i32 = arith.constant 0 : i32
    %c0_i32_0 = arith.constant 0 : i32
    %c0_i32_1 = arith.constant 0 : i32
    return %c0_i32, %c0_i32_0 : i32, i32
  }
  func.func @transform_5(%arg0: i32) -> (i32, i32) {
    %c0_i32 = arith.constant 0 : i32
    %c0_i32_0 = arith.constant 0 : i32
    %c0_i32_1 = arith.constant 0 : i32
    return %c0_i32, %c0_i32_0 : i32, i32
  }
  func.func @transform_6(%arg0: i32) -> (i32, i32) {
    %c0_i32 = arith.constant 0 : i32
    %c0_i32_0 = arith.constant 0 : i32
    %c0_i32_1 = arith.constant 0 : i32
    return %c0_i32, %c0_i32_0 : i32, i32
  }
  func.func @transform_7(%arg0: i32) -> (i32, i32) {
    %c0_i32 = arith.constant 0 : i32
    %c0_i32_0 = arith.constant 0 : i32
    %c0_i32_1 = arith.constant 0 : i32
    return %c0_i32, %c0_i32_0 : i32, i32
  }
  func.func @transform_8(%arg0: i32) -> (i32, i32) {
    %c0_i32 = arith.constant 0 : i32
    %c0_i32_0 = arith.constant 0 : i32
    %c0_i32_1 = arith.constant 0 : i32
    return %c0_i32, %c0_i32_0 : i32, i32
  }
}

</mosaic_0001>

<llo_original>
// kernel: wide_resnet_forward.7
$region0: #{wide_resnet_forward.7}
  #allocation0 [shape = 'u32[]', space=smem, size = 0x4, offset = 0x4, fixed_abs, tag = 'smem constant byte address 0x4 - core index']
  #allocation1 [shape = 'u32[144,128]{1,0:T(1,128)}', space=vmem, size = 0x12000, scoped, tag = 'internal scratch']
  %s0 = inlined_call_operand.vmem [shape: bf16[16,32], index: 0, kind: input, shape index: {}]
  %s1 = inlined_call_operand.vmem [shape: bf16[32,2048], index: 1, kind: input, shape index: {}]
  %s2 = inlined_call_operand.vmem [shape: f32[16,1], index: 2, kind: input, shape index: {}]
  %s3 = inlined_call_operand.vmem [shape: f32[16,1], index: 3, kind: input, shape index: {}]
  %s4 = inlined_call_operand.vmem [shape: f32[16,2048], index: 4, kind: output, shape index: {0}]
  %s5 = inlined_call_operand.vmem [shape: f32[16,2048], index: 5, kind: output, shape index: {1}]
  %6 = xla_tuple %s4, %s5
  %s7 = sld [smem:[#allocation0]]
  $region34: #{wide_resnet_forward.7} parent=0
    _
  %s9 = ssub.s32 1, %s7
  %s10 = scalar_select 0, %s9, %s7
  // Predicated region
  $region2: #{wide_resnet_forward.7} parent=0 // pred_check
    _
  $region3: #{wide_resnet_forward.7} parent=0 // pred_check_branch
    %12 = sbr.rel (0) target = $region5
  $region4: #{wide_resnet_forward.7} parent=0 // pred_region
    _
  $region5: #{wide_resnet_forward.7} parent=0 // pred_fallthru
    _
  // Predicated region
  $region6: #{wide_resnet_forward.7} parent=0 // pred_check
    _
  $region7: #{wide_resnet_forward.7} parent=0 // pred_check_branch
    %14 = sbr.rel (0) target = $region9
  $region8: #{wide_resnet_forward.7} parent=0 // pred_region
    _
  $region9: #{wide_resnet_forward.7} parent=0 // pred_fallthru
    _
  // Predicated region
  $region10: #{wide_resnet_forward.7} parent=0 // pred_check
    _
  $region11: #{wide_resnet_forward.7} parent=0 // pred_check_branch
    %16 = sbr.rel (0) target = $region13
  $region12: #{wide_resnet_forward.7} parent=0 // pred_region
    _
  $region13: #{wide_resnet_forward.7} parent=0 // pred_fallthru
    _
  // Predicated region
  $region14: #{wide_resnet_forward.7} parent=0 // pred_check
    _
  $region15: #{wide_resnet_forward.7} parent=0 // pred_check_branch
    %18 = sbr.rel (0) target = $region17
  $region16: #{wide_resnet_forward.7} parent=0 // pred_region
    _
  $region17: #{wide_resnet_forward.7} parent=0 // pred_fallthru
    _
  %v19 = vld [vmem:[%s0] sm:$0xf]
  %v20 = vld [vmem:[%s0 + $0x4] sm:$0xf]
  %v21 = vunpack.c.l.bf16 %v19
  %v22 = vunpack.c.l.bf16 %v20
  %v23 = vld [vmem:[%s1] sm:$0xff]
  %v24 = vld [vmem:[%s1 + $0x8] sm:$0xff]
  %v25 = vld [vmem:[%s1 + $0x10] sm:$0xff]
  %v26 = vld [vmem:[%s1 + $0x18] sm:$0xff]
  %v27 = vld [vmem:[%s1 + $0x20] sm:$0xff]
  %v28 = vld [vmem:[%s1 + $0x28] sm:$0xff]
  %v29 = vld [vmem:[%s1 + $0x30] sm:$0xff]
  %v30 = vld [vmem:[%s1 + $0x38] sm:$0xff]
  %v31 = vld [vmem:[%s1 + $0x40] sm:$0xff]
  %v32 = vld [vmem:[%s1 + $0x48] sm:$0xff]
  %v33 = vld [vmem:[%s1 + $0x50] sm:$0xff]
  %v34 = vld [vmem:[%s1 + $0x58] sm:$0xff]
  %v35 = vld [vmem:[%s1 + $0x60] sm:$0xff]
  %v36 = vld [vmem:[%s1 + $0x68] sm:$0xff]
  %v37 = vld [vmem:[%s1 + $0x70] sm:$0xff]
  %v38 = vld [vmem:[%s1 + $0x78] sm:$0xff]
  %v39 = vld [vmem:[%s1 + $0x80] sm:$0xff]
  %v40 = vld [vmem:[%s1 + $0x88] sm:$0xff]
  %v41 = vld [vmem:[%s1 + $0x90] sm:$0xff]
  %v42 = vld [vmem:[%s1 + $0x98] sm:$0xff]
  %v43 = vld [vmem:[%s1 + $0xa0] sm:$0xff]
  %v44 = vld [vmem:[%s1 + $0xa8] sm:$0xff]
  %v45 = vld [vmem:[%s1 + $0xb0] sm:$0xff]
  %v46 = vld [vmem:[%s1 + $0xb8] sm:$0xff]
  %v47 = vld [vmem:[%s1 + $0xc0] sm:$0xff]
  %v48 = vld [vmem:[%s1 + $0xc8] sm:$0xff]
  %v49 = vld [vmem:[%s1 + $0xd0] sm:$0xff]
  %v50 = vld [vmem:[%s1 + $0xd8] sm:$0xff]
  %v51 = vld [vmem:[%s1 + $0xe0] sm:$0xff]
  %v52 = vld [vmem:[%s1 + $0xe8] sm:$0xff]
  %v53 = vld [vmem:[%s1 + $0xf0] sm:$0xff]
  %v54 = vld [vmem:[%s1 + $0xf8] sm:$0xff]
  %v55 = vunpack.c.l.bf16 %v23
  %v56 = vunpack.c.h.bf16 %v23
  %v57 = vunpack.c.l.bf16 %v24
  %v58 = vunpack.c.h.bf16 %v24
  %v59 = vunpack.c.l.bf16 %v25
  %v60 = vunpack.c.h.bf16 %v25
  %v61 = vunpack.c.l.bf16 %v26
  %v62 = vunpack.c.h.bf16 %v26
  %v63 = vunpack.c.l.bf16 %v27
  %v64 = vunpack.c.h.bf16 %v27
  %v65 = vunpack.c.l.bf16 %v28
  %v66 = vunpack.c.h.bf16 %v28
  %v67 = vunpack.c.l.bf16 %v29
  %v68 = vunpack.c.h.bf16 %v29
  %v69 = vunpack.c.l.bf16 %v30
  %v70 = vunpack.c.h.bf16 %v30
  %v71 = vunpack.c.l.bf16 %v31
  %v72 = vunpack.c.h.bf16 %v31
  %v73 = vunpack.c.l.bf16 %v32
  %v74 = vunpack.c.h.bf16 %v32
  %v75 = vunpack.c.l.bf16 %v33
  %v76 = vunpack.c.h.bf16 %v33
  %v77 = vunpack.c.l.bf16 %v34
  %v78 = vunpack.c.h.bf16 %v34
  %v79 = vunpack.c.l.bf16 %v35
  %v80 = vunpack.c.h.bf16 %v35
  %v81 = vunpack.c.l.bf16 %v36
  %v82 = vunpack.c.h.bf16 %v36
  %v83 = vunpack.c.l.bf16 %v37
  %v84 = vunpack.c.h.bf16 %v37
  %v85 = vunpack.c.l.bf16 %v38
  %v86 = vunpack.c.h.bf16 %v38
  %v87 = vunpack.c.l.bf16 %v39
  %v88 = vunpack.c.h.bf16 %v39
  %v89 = vunpack.c.l.bf16 %v40
  %v90 = vunpack.c.h.bf16 %v40
  %v91 = vunpack.c.l.bf16 %v41
  %v92 = vunpack.c.h.bf16 %v41
  %v93 = vunpack.c.l.bf16 %v42
  %v94 = vunpack.c.h.bf16 %v42
  %v95 = vunpack.c.l.bf16 %v43
  %v96 = vunpack.c.h.bf16 %v43
  %v97 = vunpack.c.l.bf16 %v44
  %v98 = vunpack.c.h.bf16 %v44
  %v99 = vunpack.c.l.bf16 %v45
  %v100 = vunpack.c.h.bf16 %v45
  %v101 = vunpack.c.l.bf16 %v46
  %v102 = vunpack.c.h.bf16 %v46
  %v103 = vunpack.c.l.bf16 %v47
  %v104 = vunpack.c.h.bf16 %v47
  %v105 = vunpack.c.l.bf16 %v48
  %v106 = vunpack.c.h.bf16 %v48
  %v107 = vunpack.c.l.bf16 %v49
  %v108 = vunpack.c.h.bf16 %v49
  %v109 = vunpack.c.l.bf16 %v50
  %v110 = vunpack.c.h.bf16 %v50
  %v111 = vunpack.c.l.bf16 %v51
  %v112 = vunpack.c.h.bf16 %v51
  %v113 = vunpack.c.l.bf16 %v52
  %v114 = vunpack.c.h.bf16 %v52
  %v115 = vunpack.c.l.bf16 %v53
  %v116 = vunpack.c.h.bf16 %v53
  %v117 = vunpack.c.l.bf16 %v54
  %v118 = vunpack.c.h.bf16 %v54
  %vm119 = vcmask 261120
  %v121 = vsel %vm119, %v21, 0
  %v124 = vsel %vm119, %v22, 0
  %126 = vmatprep.subr.mxu0 %v56
  %127 = vmatpush1.msra.mxu0 %v55
  %128 = vmatprep.subr.mxu0 %v72
  %129 = vmatpush1.msra.mxu0 %v71
  %130 = vmatprep.subr.mxu0 %v88
  %131 = vmatpush1.msra.mxu0 %v87
  %132 = vmatprep.subr.mxu0 %v104
  %133 = vmatpush1.msra.mxu0 %v103
  %134 = vmatprep.subr.mxu0 0.0
  %135 = vmatpush1.msra.mxu0 0.0
  %136 = vmatprep.subr.mxu0 0.0
  %137 = vmatpush1.msra.mxu0 0.0
  %138 = vmatprep.subr.mxu0 0.0
  %139 = vmatpush1.msra.mxu0 0.0
  %140 = vmatprep.subr.mxu0 0.0
  %141 = vmatpush1.msra.mxu0 0.0
  %142 = vmatprep.subr.mxu0 0.0
  %143 = vmatpush1.msra.mxu0 0.0
  %144 = vmatprep.subr.mxu0 0.0
  %145 = vmatpush1.msra.mxu0 0.0
  %146 = vmatprep.subr.mxu0 0.0
  %147 = vmatpush1.msra.mxu0 0.0
  %148 = vmatprep.subr.mxu0 0.0
  %149 = vmatpush1.msra.mxu0 0.0
  %150 = vmatprep.subr.mxu0 0.0
  %151 = vmatpush1.msra.mxu0 0.0
  %152 = vmatprep.subr.mxu0 0.0
  %153 = vmatpush1.msra.mxu0 0.0
  %154 = vmatprep.subr.mxu0 0.0
  %155 = vmatpush1.msra.mxu0 0.0
  %156 = vmatprep.subr.mxu0 0.0
  %157 = vmatpush1.msra.mxu0 0.0
  %158 = vmatprep.subr.mxu0 0.0
  %159 = vmatpush1.msra.mxu0 0.0
  %160 = vmatprep.subr.mxu0 0.0
  %161 = vmatpush1.msra.mxu0 0.0
  %162 = vmatprep.subr.mxu0 0.0
  %163 = vmatpush1.msra.mxu0 0.0
  %164 = vmatprep.subr.mxu0 0.0
  %165 = vmatpush1.msra.mxu0 0.0
  %166 = vmatprep.subr.mxu0 0.0
  %167 = vmatpush1.msra.mxu0 0.0
  %168 = vmatprep.subr.mxu0 0.0
  %169 = vmatpush1.msra.mxu0 0.0
  %170 = vmatprep.subr.mxu0 0.0
  %171 = vmatpush1.msra.mxu0 0.0
  %172 = vmatprep.subr.mxu0 0.0
  %173 = vmatpush1.msra.mxu0 0.0
  %174 = vmatprep.subr.mxu0 0.0
  %175 = vmatpush1.msra.mxu0 0.0
  %176 = vmatprep.subr.mxu0 0.0
  %177 = vmatpush1.msra.mxu0 0.0
  %178 = vmatprep.subr.mxu0 0.0
  %179 = vmatpush1.msra.mxu0 0.0
  %180 = vmatprep.subr.mxu0 0.0
  %181 = vmatpush1.msra.mxu0 0.0
  %182 = vmatprep.subr.mxu0 0.0
  %183 = vmatpush1.msra.mxu0 0.0
  %184 = vmatprep.subr.mxu0 0.0
  %185 = vmatpush1.msra.mxu0 0.0
  %186 = vmatprep.subr.mxu0 0.0
  %187 = vmatpush1.msra.mxu0 0.0
  %188 = vmatprep.subr.mxu0 0.0
  %189 = vmatpush1.msra.mxu0 0.0
  %190 = vmatprep.mubr.f32.mxu0 0.0
  %191 = vmatmul.mubr.f32.gmra.mrb[0].mxu0 %v121
  %v192 = vpop.f32.mrb[0].mxu0
  %v193 = vadd.f32 0.0, %v192
  %v194 = vpop.f32.mrb[0].mxu0
  %v195 = vadd.f32 0.0, %v194
  %196 = vmatprep.mubr.f32.mxu0 0.0
  %197 = vmatmul.mubr.f32.gmra.mrb[0].mxu0 %v124
  %v198 = vpop.f32.mrb[0].mxu0
  %v199 = vadd.f32 0.0, %v198
  %v200 = vpop.f32.mrb[0].mxu0
  %v201 = vadd.f32 0.0, %v200
  %202 = vdwg.mxu0
  %203 = vmatprep.subr.mxu0 %v58
  %204 = vmatpush1.msra.mxu0 %v57
  %205 = vmatprep.subr.mxu0 %v74
  %206 = vmatpush1.msra.mxu0 %v73
  %207 = vmatprep.subr.mxu0 %v90
  %208 = vmatpush1.msra.mxu0 %v89
  %209 = vmatprep.subr.mxu0 %v106
  %210 = vmatpush1.msra.mxu0 %v105
  %211 = vmatprep.subr.mxu0 0.0
  %212 = vmatpush1.msra.mxu0 0.0
  %213 = vmatprep.subr.mxu0 0.0
  %214 = vmatpush1.msra.mxu0 0.0
  %215 = vmatprep.subr.mxu0 0.0
  %216 = vmatpush1.msra.mxu0 0.0
  %217 = vmatprep.subr.mxu0 0.0
  %218 = vmatpush1.msra.mxu0 0.0
  %219 = vmatprep.subr.mxu0 0.0
  %220 = vmatpush1.msra.mxu0 0.0
  %221 = vmatprep.subr.mxu0 0.0
  %222 = vmatpush1.msra.mxu0 0.0
  %223 = vmatprep.subr.mxu0 0.0
  %224 = vmatpush1.msra.mxu0 0.0
  %225 = vmatprep.subr.mxu0 0.0
  %226 = vmatpush1.msra.mxu0 0.0
  %227 = vmatprep.subr.mxu0 0.0
  %228 = vmatpush1.msra.mxu0 0.0
  %229 = vmatprep.subr.mxu0 0.0
  %230 = vmatpush1.msra.mxu0 0.0
  %231 = vmatprep.subr.mxu0 0.0
  %232 = vmatpush1.msra.mxu0 0.0
  %233 = vmatprep.subr.mxu0 0.0
  %234 = vmatpush1.msra.mxu0 0.0
  %235 = vmatprep.subr.mxu0 0.0
  %236 = vmatpush1.msra.mxu0 0.0
  %237 = vmatprep.subr.mxu0 0.0
  %238 = vmatpush1.msra.mxu0 0.0
  %239 = vmatprep.subr.mxu0 0.0
  %240 = vmatpush1.msra.mxu0 0.0
  %241 = vmatprep.subr.mxu0 0.0
  %242 = vmatpush1.msra.mxu0 0.0
  %243 = vmatprep.subr.mxu0 0.0
  %244 = vmatpush1.msra.mxu0 0.0
  %245 = vmatprep.subr.mxu0 0.0
  %246 = vmatpush1.msra.mxu0 0.0
  %247 = vmatprep.subr.mxu0 0.0
  %248 = vmatpush1.msra.mxu0 0.0
  %249 = vmatprep.subr.mxu0 0.0
  %250 = vmatpush1.msra.mxu0 0.0
  %251 = vmatprep.subr.mxu0 0.0
  %252 = vmatpush1.msra.mxu0 0.0
  %253 = vmatprep.subr.mxu0 0.0
  %254 = vmatpush1.msra.mxu0 0.0
  %255 = vmatprep.subr.mxu0 0.0
  %256 = vmatpush1.msra.mxu0 0.0
  %257 = vmatprep.subr.mxu0 0.0
  %258 = vmatpush1.msra.mxu0 0.0
  %259 = vmatprep.subr.mxu0 0.0
  %260 = vmatpush1.msra.mxu0 0.0
  %261 = vmatprep.subr.mxu0 0.0
  %262 = vmatpush1.msra.mxu0 0.0
  %263 = vmatprep.subr.mxu0 0.0
  %264 = vmatpush1.msra.mxu0 0.0
  %265 = vmatprep.subr.mxu0 0.0
  %266 = vmatpush1.msra.mxu0 0.0
  %267 = vmatprep.mubr.f32.mxu0 0.0
  %268 = vmatmul.mubr.f32.gmra.mrb[0].mxu0 %v121
  %v269 = vpop.f32.mrb[0].mxu0
  %v270 = vadd.f32 0.0, %v269
  %v271 = vpop.f32.mrb[0].mxu0
  %v272 = vadd.f32 0.0, %v271
  %273 = vmatprep.mubr.f32.mxu0 0.0
  %274 = vmatmul.mubr.f32.gmra.mrb[0].mxu0 %v124
  %v275 = vpop.f32.mrb[0].mxu0
  %v276 = vadd.f32 0.0, %v275
  %v277 = vpop.f32.mrb[0].mxu0
  %v278 = vadd.f32 0.0, %v277
  %279 = vdwg.mxu0
  %280 = vmatprep.subr.mxu0 %v60
  %281 = vmatpush1.msra.mxu0 %v59
  %282 = vmatprep.subr.mxu0 %v76
  %283 = vmatpush1.msra.mxu0 %v75
  %284 = vmatprep.subr.mxu0 %v92
  %285 = vmatpush1.msra.mxu0 %v91
  %286 = vmatprep.subr.mxu0 %v108
  %287 = vmatpush1.msra.mxu0 %v107
  %288 = vmatprep.subr.mxu0 0.0
  %289 = vmatpush1.msra.mxu0 0.0
  %290 = vmatprep.subr.mxu0 0.0
  %291 = vmatpush1.msra.mxu0 0.0
  %292 = vmatprep.subr.mxu0 0.0
  %293 = vmatpush1.msra.mxu0 0.0
  %294 = vmatprep.subr.mxu0 0.0
  %295 = vmatpush1.msra.mxu0 0.0
  %296 = vmatprep.subr.mxu0 0.0
  %297 = vmatpush1.msra.mxu0 0.0
  %298 = vmatprep.subr.mxu0 0.0
  %299 = vmatpush1.msra.mxu0 0.0
  %300 = vmatprep.subr.mxu0 0.0
  %301 = vmatpush1.msra.mxu0 0.0
  %302 = vmatprep.subr.mxu0 0.0
  %303 = vmatpush1.msra.mxu0 0.0
  %304 = vmatprep.subr.mxu0 0.0
  %305 = vmatpush1.msra.mxu0 0.0
  %306 = vmatprep.subr.mxu0 0.0
  %307 = vmatpush1.msra.mxu0 0.0
  %308 = vmatprep.subr.mxu0 0.0
  %309 = vmatpush1.msra.mxu0 0.0
  %310 = vmatprep.subr.mxu0 0.0
  %311 = vmatpush1.msra.mxu0 0.0
  %312 = vmatprep.subr.mxu0 0.0
  %313 = vmatpush1.msra.mxu0 0.0
  %314 = vmatprep.subr.mxu0 0.0
  %315 = vmatpush1.msra.mxu0 0.0
  %316 = vmatprep.subr.mxu0 0.0
  %317 = vmatpush1.msra.mxu0 0.0
  %318 = vmatprep.subr.mxu0 0.0
  %319 = vmatpush1.msra.mxu0 0.0
  %320 = vmatprep.subr.mxu0 0.0
  %321 = vmatpush1.msra.mxu0 0.0
  %322 = vmatprep.subr.mxu0 0.0
  %323 = vmatpush1.msra.mxu0 0.0
  %324 = vmatprep.subr.mxu0 0.0
  %325 = vmatpush1.msra.mxu0 0.0
  %326 = vmatprep.subr.mxu0 0.0
  %327 = vmatpush1.msra.mxu0 0.0
  %328 = vmatprep.subr.mxu0 0.0
  %329 = vmatpush1.msra.mxu0 0.0
  %330 = vmatprep.subr.mxu0 0.0
  %331 = vmatpush1.msra.mxu0 0.0
  %332 = vmatprep.subr.mxu0 0.0
  %333 = vmatpush1.msra.mxu0 0.0
  %334 = vmatprep.subr.mxu0 0.0
  %335 = vmatpush1.msra.mxu0 0.0
  %336 = vmatprep.subr.mxu0 0.0
  %337 = vmatpush1.msra.mxu0 0.0
  %338 = vmatprep.subr.mxu0 0.0
  %339 = vmatpush1.msra.mxu0 0.0
  %340 = vmatprep.subr.mxu0 0.0
  %341 = vmatpush1.msra.mxu0 0.0
  %342 = vmatprep.subr.mxu0 0.0
  %343 = vmatpush1.msra.mxu0 0.0
  %344 = vmatprep.mubr.f32.mxu0 0.0
  %345 = vmatmul.mubr.f32.gmra.mrb[0].mxu0 %v121
  %v346 = vpop.f32.mrb[0].mxu0
  %v347 = vadd.f32 0.0, %v346
  %v348 = vpop.f32.mrb[0].mxu0
  %v349 = vadd.f32 0.0, %v348
  %350 = vmatprep.mubr.f32.mxu0 0.0
  %351 = vmatmul.mubr.f32.gmra.mrb[0].mxu0 %v124
  %v352 = vpop.f32.mrb[0].mxu0
  %v353 = vadd.f32 0.0, %v352
  %v354 = vpop.f32.mrb[0].mxu0
  %v355 = vadd.f32 0.0, %v354
  %356 = vdwg.mxu0
  %357 = vmatprep.subr.mxu0 %v62
  %358 = vmatpush1.msra.mxu0 %v61
  %359 = vmatprep.subr.mxu0 %v78
  %360 = vmatpush1.msra.mxu0 %v77
  %361 = vmatprep.subr.mxu0 %v94
  %362 = vmatpush1.msra.mxu0 %v93
  %363 = vmatprep.subr.mxu0 %v110
  %364 = vmatpush1.msra.mxu0 %v109
  %365 = vmatprep.subr.mxu0 0.0
  %366 = vmatpush1.msra.mxu0 0.0
  %367 = vmatprep.subr.mxu0 0.0
  %368 = vmatpush1.msra.mxu0 0.0
  %369 = vmatprep.subr.mxu0 0.0
  %370 = vmatpush1.msra.mxu0 0.0
  %371 = vmatprep.subr.mxu0 0.0
  %372 = vmatpush1.msra.mxu0 0.0
  %373 = vmatprep.subr.mxu0 0.0
  %374 = vmatpush1.msra.mxu0 0.0
  %375 = vmatprep.subr.mxu0 0.0
  %376 = vmatpush1.msra.mxu0 0.0
  %377 = vmatprep.subr.mxu0 0.0
  %378 = vmatpush1.msra.mxu0 0.0
  %379 = vmatprep.subr.mxu0 0.0
  %380 = vmatpush1.msra.mxu0 0.0
  %381 = vmatprep.subr.mxu0 0.0
  %382 = vmatpush1.msra.mxu0 0.0
  %383 = vmatprep.subr.mxu0 0.0
  %384 = vmatpush1.msra.mxu0 0.0
  %385 = vmatprep.subr.mxu0 0.0
  %386 = vmatpush1.msra.mxu0 0.0
  %387 = vmatprep.subr.mxu0 0.0
  %388 = vmatpush1.msra.mxu0 0.0
  %389 = vmatprep.subr.mxu0 0.0
  %390 = vmatpush1.msra.mxu0 0.0
  %391 = vmatprep.subr.mxu0 0.0
  %392 = vmatpush1.msra.mxu0 0.0
  %393 = vmatprep.subr.mxu0 0.0
  %394 = vmatpush1.msra.mxu0 0.0
  %395 = vmatprep.subr.mxu0 0.0
  %396 = vmatpush1.msra.mxu0 0.0
  %397 = vmatprep.subr.mxu0 0.0
  %398 = vmatpush1.msra.mxu0 0.0
  %399 = vmatprep.subr.mxu0 0.0
  %400 = vmatpush1.msra.mxu0 0.0
  %401 = vmatprep.subr.mxu0 0.0
  %402 = vmatpush1.msra.mxu0 0.0
  %403 = vmatprep.subr.mxu0 0.0
  %404 = vmatpush1.msra.mxu0 0.0
  %405 = vmatprep.subr.mxu0 0.0
  %406 = vmatpush1.msra.mxu0 0.0
  %407 = vmatprep.subr.mxu0 0.0
  %408 = vmatpush1.msra.mxu0 0.0
  %409 = vmatprep.subr.mxu0 0.0
  %410 = vmatpush1.msra.mxu0 0.0
  %411 = vmatprep.subr.mxu0 0.0
  %412 = vmatpush1.msra.mxu0 0.0
  %413 = vmatprep.subr.mxu0 0.0
  %414 = vmatpush1.msra.mxu0 0.0
  %415 = vmatprep.subr.mxu0 0.0
  %416 = vmatpush1.msra.mxu0 0.0
  %417 = vmatprep.subr.mxu0 0.0
  %418 = vmatpush1.msra.mxu0 0.0
  %419 = vmatprep.subr.mxu0 0.0
  %420 = vmatpush1.msra.mxu0 0.0
  %421 = vmatprep.mubr.f32.mxu0 0.0
  %422 = vmatmul.mubr.f32.gmra.mrb[0].mxu0 %v121
  %v423 = vpop.f32.mrb[0].mxu0
  %v424 = vadd.f32 0.0, %v423
  %v425 = vpop.f32.mrb[0].mxu0
  %v426 = vadd.f32 0.0, %v425
  %427 = vmatprep.mubr.f32.mxu0 0.0
  %428 = vmatmul.mubr.f32.gmra.mrb[0].mxu0 %v124
  %v429 = vpop.f32.mrb[0].mxu0
  %v430 = vadd.f32 0.0, %v429
  %v431 = vpop.f32.mrb[0].mxu0
  %v432 = vadd.f32 0.0, %v431
  %433 = vdwg.mxu0
  %434 = vmatprep.subr.mxu0 %v64
  %435 = vmatpush1.msra.mxu0 %v63
  %436 = vmatprep.subr.mxu0 %v80
  %437 = vmatpush1.msra.mxu0 %v79
  %438 = vmatprep.subr.mxu0 %v96
  %439 = vmatpush1.msra.mxu0 %v95
  %440 = vmatprep.subr.mxu0 %v112
  %441 = vmatpush1.msra.mxu0 %v111
  %442 = vmatprep.subr.mxu0 0.0
  %443 = vmatpush1.msra.mxu0 0.0
  %444 = vmatprep.subr.mxu0 0.0
  %445 = vmatpush1.msra.mxu0 0.0
  %446 = vmatprep.subr.mxu0 0.0
  %447 = vmatpush1.msra.mxu0 0.0
  %448 = vmatprep.subr.mxu0 0.0
  %449 = vmatpush1.msra.mxu0 0.0
  %450 = vmatprep.subr.mxu0 0.0
  %451 = vmatpush1.msra.mxu0 0.0
  %452 = vmatprep.subr.mxu0 0.0
  %453 = vmatpush1.msra.mxu0 0.0
  %454 = vmatprep.subr.mxu0 0.0
  %455 = vmatpush1.msra.mxu0 0.0
  %456 = vmatprep.subr.mxu0 0.0
  %457 = vmatpush1.msra.mxu0 0.0
  %458 = vmatprep.subr.mxu0 0.0
  %459 = vmatpush1.msra.mxu0 0.0
  %460 = vmatprep.subr.mxu0 0.0
  %461 = vmatpush1.msra.mxu0 0.0
  %462 = vmatprep.subr.mxu0 0.0
  %463 = vmatpush1.msra.mxu0 0.0
  %464 = vmatprep.subr.mxu0 0.0
  %465 = vmatpush1.msra.mxu0 0.0
  %466 = vmatprep.subr.mxu0 0.0
  %467 = vmatpush1.msra.mxu0 0.0
  %468 = vmatprep.subr.mxu0 0.0
  %469 = vmatpush1.msra.mxu0 0.0
  %470 = vmatprep.subr.mxu0 0.0
  %471 = vmatpush1.msra.mxu0 0.0
  %472 = vmatprep.subr.mxu0 0.0
  %473 = vmatpush1.msra.mxu0 0.0
  %474 = vmatprep.subr.mxu0 0.0
  %475 = vmatpush1.msra.mxu0 0.0
  %476 = vmatprep.subr.mxu0 0.0
  %477 = vmatpush1.msra.mxu0 0.0
  %478 = vmatprep.subr.mxu0 0.0
  %479 = vmatpush1.msra.mxu0 0.0
  %480 = vmatprep.subr.mxu0 0.0
  %481 = vmatpush1.msra.mxu0 0.0
  %482 = vmatprep.subr.mxu0 0.0
  %483 = vmatpush1.msra.mxu0 0.0
  %484 = vmatprep.subr.mxu0 0.0
  %485 = vmatpush1.msra.mxu0 0.0
  %486 = vmatprep.subr.mxu0 0.0
  %487 = vmatpush1.msra.mxu0 0.0
  %488 = vmatprep.subr.mxu0 0.0
  %489 = vmatpush1.msra.mxu0 0.0
  %490 = vmatprep.subr.mxu0 0.0
  %491 = vmatpush1.msra.mxu0 0.0
  %492 = vmatprep.subr.mxu0 0.0
  %493 = vmatpush1.msra.mxu0 0.0
  %494 = vmatprep.subr.mxu0 0.0
  %495 = vmatpush1.msra.mxu0 0.0
  %496 = vmatprep.subr.mxu0 0.0
  %497 = vmatpush1.msra.mxu0 0.0
  %498 = vmatprep.mubr.f32.mxu0 0.0
  %499 = vmatmul.mubr.f32.gmra.mrb[0].mxu0 %v121
  %v500 = vpop.f32.mrb[0].mxu0
  %v501 = vadd.f32 0.0, %v500
  %v502 = vpop.f32.mrb[0].mxu0
  %v503 = vadd.f32 0.0, %v502
  %504 = vmatprep.mubr.f32.mxu0 0.0
  %505 = vmatmul.mubr.f32.gmra.mrb[0].mxu0 %v124
  %v506 = vpop.f32.mrb[0].mxu0
  %v507 = vadd.f32 0.0, %v506
  %v508 = vpop.f32.mrb[0].mxu0
  %v509 = vadd.f32 0.0, %v508
  %510 = vdwg.mxu0
  %511 = vmatprep.subr.mxu0 %v66
  %512 = vmatpush1.msra.mxu0 %v65
  %513 = vmatprep.subr.mxu0 %v82
  %514 = vmatpush1.msra.mxu0 %v81
  %515 = vmatprep.subr.mxu0 %v98
  %516 = vmatpush1.msra.mxu0 %v97
  %517 = vmatprep.subr.mxu0 %v114
  %518 = vmatpush1.msra.mxu0 %v113
  %519 = vmatprep.subr.mxu0 0.0
  %520 = vmatpush1.msra.mxu0 0.0
  %521 = vmatprep.subr.mxu0 0.0
  %522 = vmatpush1.msra.mxu0 0.0
  %523 = vmatprep.subr.mxu0 0.0
  %524 = vmatpush1.msra.mxu0 0.0
  %525 = vmatprep.subr.mxu0 0.0
  %526 = vmatpush1.msra.mxu0 0.0
  %527 = vmatprep.subr.mxu0 0.0
  %528 = vmatpush1.msra.mxu0 0.0
  %529 = vmatprep.subr.mxu0 0.0
  %530 = vmatpush1.msra.mxu0 0.0
  %531 = vmatprep.subr.mxu0 0.0
  %532 = vmatpush1.msra.mxu0 0.0
  %533 = vmatprep.subr.mxu0 0.0
  %534 = vmatpush1.msra.mxu0 0.0
  %535 = vmatprep.subr.mxu0 0.0
  %536 = vmatpush1.msra.mxu0 0.0
  %537 = vmatprep.subr.mxu0 0.0
  %538 = vmatpush1.msra.mxu0 0.0
  %539 = vmatprep.subr.mxu0 0.0
  %540 = vmatpush1.msra.mxu0 0.0
  %541 = vmatprep.subr.mxu0 0.0
  %542 = vmatpush1.msra.mxu0 0.0
  %543 = vmatprep.subr.mxu0 0.0
  %544 = vmatpush1.msra.mxu0 0.0
  %545 = vmatprep.subr.mxu0 0.0
  %546 = vmatpush1.msra.mxu0 0.0
  %547 = vmatprep.subr.mxu0 0.0
  %548 = vmatpush1.msra.mxu0 0.0
  %549 = vmatprep.subr.mxu0 0.0
  %550 = vmatpush1.msra.mxu0 0.0
  %551 = vmatprep.subr.mxu0 0.0
  %552 = vmatpush1.msra.mxu0 0.0
  %553 = vmatprep.subr.mxu0 0.0
  %554 = vmatpush1.msra.mxu0 0.0
  %555 = vmatprep.subr.mxu0 0.0
  %556 = vmatpush1.msra.mxu0 0.0
  %557 = vmatprep.subr.mxu0 0.0
  %558 = vmatpush1.msra.mxu0 0.0
  %559 = vmatprep.subr.mxu0 0.0
  %560 = vmatpush1.msra.mxu0 0.0
  %561 = vmatprep.subr.mxu0 0.0
  %562 = vmatpush1.msra.mxu0 0.0
  %563 = vmatprep.subr.mxu0 0.0
  %564 = vmatpush1.msra.mxu0 0.0
  %565 = vmatprep.subr.mxu0 0.0
  %566 = vmatpush1.msra.mxu0 0.0
  %567 = vmatprep.subr.mxu0 0.0
  %568 = vmatpush1.msra.mxu0 0.0
  %569 = vmatprep.subr.mxu0 0.0
  %570 = vmatpush1.msra.mxu0 0.0
  %571 = vmatprep.subr.mxu0 0.0
  %572 = vmatpush1.msra.mxu0 0.0
  %573 = vmatprep.subr.mxu0 0.0
  %574 = vmatpush1.msra.mxu0 0.0
  %575 = vmatprep.mubr.f32.mxu0 0.0
  %576 = vmatmul.mubr.f32.gmra.mrb[0].mxu0 %v121
  %v577 = vpop.f32.mrb[0].mxu0
  %v578 = vadd.f32 0.0, %v577
  %v579 = vpop.f32.mrb[0].mxu0
  %v580 = vadd.f32 0.0, %v579
  %581 = vmatprep.mubr.f32.mxu0 0.0
  %582 = vmatmul.mubr.f32.gmra.mrb[0].mxu0 %v124
  %v583 = vpop.f32.mrb[0].mxu0
  %v584 = vadd.f32 0.0, %v583
  %v585 = vpop.f32.mrb[0].mxu0
  %v586 = vadd.f32 0.0, %v585
  %587 = vdwg.mxu0
  %588 = vmatprep.subr.mxu0 %v68
  %589 = vmatpush1.msra.mxu0 %v67
  %590 = vmatprep.subr.mxu0 %v84
  %591 = vmatpush1.msra.mxu0 %v83
  %592 = vmatprep.subr.mxu0 %v100
  %593 = vmatpush1.msra.mxu0 %v99
  %594 = vmatprep.subr.mxu0 %v116
  %595 = vmatpush1.msra.mxu0 %v115
  %596 = vmatprep.subr.mxu0 0.0
  %597 = vmatpush1.msra.mxu0 0.0
  %598 = vmatprep.subr.mxu0 0.0
  %599 = vmatpush1.msra.mxu0 0.0
  %600 = vmatprep.subr.mxu0 0.0
  %601 = vmatpush1.msra.mxu0 0.0
  %602 = vmatprep.subr.mxu0 0.0
  %603 = vmatpush1.msra.mxu0 0.0
  %604 = vmatprep.subr.mxu0 0.0
  %605 = vmatpush1.msra.mxu0 0.0
  %606 = vmatprep.subr.mxu0 0.0
  %607 = vmatpush1.msra.mxu0 0.0
  %608 = vmatprep.subr.mxu0 0.0
  %609 = vmatpush1.msra.mxu0 0.0
  %610 = vmatprep.subr.mxu0 0.0
  %611 = vmatpush1.msra.mxu0 0.0
  %612 = vmatprep.subr.mxu0 0.0
  %613 = vmatpush1.msra.mxu0 0.0
  %614 = vmatprep.subr.mxu0 0.0
  %615 = vmatpush1.msra.mxu0 0.0
  %616 = vmatprep.subr.mxu0 0.0
  %617 = vmatpush1.msra.mxu0 0.0
  %618 = vmatprep.subr.mxu0 0.0
  %619 = vmatpush1.msra.mxu0 0.0
  %620 = vmatprep.subr.mxu0 0.0
  %621 = vmatpush1.msra.mxu0 0.0
  %622 = vmatprep.subr.mxu0 0.0
  %623 = vmatpush1.msra.mxu0 0.0
  %624 = vmatprep.subr.mxu0 0.0
  %625 = vmatpush1.msra.mxu0 0.0
  %626 = vmatprep.subr.mxu0 0.0
  %627 = vmatpush1.msra.mxu0 0.0
  %628 = vmatprep.subr.mxu0 0.0
  %629 = vmatpush1.msra.mxu0 0.0
  %630 = vmatprep.subr.mxu0 0.0
  %631 = vmatpush1.msra.mxu0 0.0
  %632 = vmatprep.subr.mxu0 0.0
  %633 = vmatpush1.msra.mxu0 0.0
  %634 = vmatprep.subr.mxu0 0.0
  %635 = vmatpush1.msra.mxu0 0.0
  %636 = vmatprep.subr.mxu0 0.0
  %637 = vmatpush1.msra.mxu0 0.0
  %638 = vmatprep.subr.mxu0 0.0
  %639 = vmatpush1.msra.mxu0 0.0
  %640 = vmatprep.subr.mxu0 0.0
  %641 = vmatpush1.msra.mxu0 0.0
  %642 = vmatprep.subr.mxu0 0.0
  %643 = vmatpush1.msra.mxu0 0.0
  %644 = vmatprep.subr.mxu0 0.0
  %645 = vmatpush1.msra.mxu0 0.0
  %646 = vmatprep.subr.mxu0 0.0
  %647 = vmatpush1.msra.mxu0 0.0
  %648 = vmatprep.subr.mxu0 0.0
  %649 = vmatpush1.msra.mxu0 0.0
  %650 = vmatprep.subr.mxu0 0.0
  %651 = vmatpush1.msra.mxu0 0.0
  %652 = vmatprep.mubr.f32.mxu0 0.0
  %653 = vmatmul.mubr.f32.gmra.mrb[0].mxu0 %v121
  %v654 = vpop.f32.mrb[0].mxu0
  %v655 = vadd.f32 0.0, %v654
  %v656 = vpop.f32.mrb[0].mxu0
  %v657 = vadd.f32 0.0, %v656
  %658 = vmatprep.mubr.f32.mxu0 0.0
  %659 = vmatmul.mubr.f32.gmra.mrb[0].mxu0 %v124
  %v660 = vpop.f32.mrb[0].mxu0
  %v661 = vadd.f32 0.0, %v660
  %v662 = vpop.f32.mrb[0].mxu0
  %v663 = vadd.f32 0.0, %v662
  %664 = vdwg.mxu0
  %665 = vmatprep.subr.mxu0 %v70
  %666 = vmatpush1.msra.mxu0 %v69
  %667 = vmatprep.subr.mxu0 %v86
  %668 = vmatpush1.msra.mxu0 %v85
  %669 = vmatprep.subr.mxu0 %v102
  %670 = vmatpush1.msra.mxu0 %v101
  %671 = vmatprep.subr.mxu0 %v118
  %672 = vmatpush1.msra.mxu0 %v117
  %673 = vmatprep.subr.mxu0 0.0
  %674 = vmatpush1.msra.mxu0 0.0
  %675 = vmatprep.subr.mxu0 0.0
  %676 = vmatpush1.msra.mxu0 0.0
  %677 = vmatprep.subr.mxu0 0.0
  %678 = vmatpush1.msra.mxu0 0.0
  %679 = vmatprep.subr.mxu0 0.0
  %680 = vmatpush1.msra.mxu0 0.0
  %681 = vmatprep.subr.mxu0 0.0
  %682 = vmatpush1.msra.mxu0 0.0
  %683 = vmatprep.subr.mxu0 0.0
  %684 = vmatpush1.msra.mxu0 0.0
  %685 = vmatprep.subr.mxu0 0.0
  %686 = vmatpush1.msra.mxu0 0.0
  %687 = vmatprep.subr.mxu0 0.0
  %688 = vmatpush1.msra.mxu0 0.0
  %689 = vmatprep.subr.mxu0 0.0
  %690 = vmatpush1.msra.mxu0 0.0
  %691 = vmatprep.subr.mxu0 0.0
  %692 = vmatpush1.msra.mxu0 0.0
  %693 = vmatprep.subr.mxu0 0.0
  %694 = vmatpush1.msra.mxu0 0.0
  %695 = vmatprep.subr.mxu0 0.0
  %696 = vmatpush1.msra.mxu0 0.0
  %697 = vmatprep.subr.mxu0 0.0
  %698 = vmatpush1.msra.mxu0 0.0
  %699 = vmatprep.subr.mxu0 0.0
  %700 = vmatpush1.msra.mxu0 0.0
  %701 = vmatprep.subr.mxu0 0.0
  %702 = vmatpush1.msra.mxu0 0.0
  %703 = vmatprep.subr.mxu0 0.0
  %704 = vmatpush1.msra.mxu0 0.0
  %705 = vmatprep.subr.mxu0 0.0
  %706 = vmatpush1.msra.mxu0 0.0
  %707 = vmatprep.subr.mxu0 0.0
  %708 = vmatpush1.msra.mxu0 0.0
  %709 = vmatprep.subr.mxu0 0.0
  %710 = vmatpush1.msra.mxu0 0.0
  %711 = vmatprep.subr.mxu0 0.0
  %712 = vmatpush1.msra.mxu0 0.0
  %713 = vmatprep.subr.mxu0 0.0
  %714 = vmatpush1.msra.mxu0 0.0
  %715 = vmatprep.subr.mxu0 0.0
  %716 = vmatpush1.msra.mxu0 0.0
  %717 = vmatprep.subr.mxu0 0.0
  %718 = vmatpush1.msra.mxu0 0.0
  %719 = vmatprep.subr.mxu0 0.0
  %720 = vmatpush1.msra.mxu0 0.0
  %721 = vmatprep.subr.mxu0 0.0
  %722 = vmatpush1.msra.mxu0 0.0
  %723 = vmatprep.subr.mxu0 0.0
  %724 = vmatpush1.msra.mxu0 0.0
  %725 = vmatprep.subr.mxu0 0.0
  %726 = vmatpush1.msra.mxu0 0.0
  %727 = vmatprep.subr.mxu0 0.0
  %728 = vmatpush1.msra.mxu0 0.0
  %729 = vmatprep.mubr.f32.mxu0 0.0
  %730 = vmatmul.mubr.f32.gmra.mrb[0].mxu0 %v121
  %v731 = vpop.f32.mrb[0].mxu0
  %v732 = vadd.f32 0.0, %v731
  %v733 = vpop.f32.mrb[0].mxu0
  %v734 = vadd.f32 0.0, %v733
  %735 = vmatprep.mubr.f32.mxu0 0.0
  %736 = vmatmul.mubr.f32.gmra.mrb[0].mxu0 %v124
  %v737 = vpop.f32.mrb[0].mxu0
  %v738 = vadd.f32 0.0, %v737
  %v739 = vpop.f32.mrb[0].mxu0
  %v740 = vadd.f32 0.0, %v739
  %741 = vdwg.mxu0
  %742 = vst [vmem:[%s4] sm:$0xff] %v193
  %743 = vst [vmem:[%s4 + $0x8] sm:$0xff] %v195
  %744 = vst [vmem:[%s4 + $0x10] sm:$0xff] %v270
  %745 = vst [vmem:[%s4 + $0x18] sm:$0xff] %v272
  %746 = vst [vmem:[%s4 + $0x20] sm:$0xff] %v347
  %747 = vst [vmem:[%s4 + $0x28] sm:$0xff] %v349
  %748 = vst [vmem:[%s4 + $0x30] sm:$0xff] %v424
  %749 = vst [vmem:[%s4 + $0x38] sm:$0xff] %v426
  %750 = vst [vmem:[%s4 + $0x40] sm:$0xff] %v501
  %751 = vst [vmem:[%s4 + $0x48] sm:$0xff] %v503
  %752 = vst [vmem:[%s4 + $0x50] sm:$0xff] %v578
  %753 = vst [vmem:[%s4 + $0x58] sm:$0xff] %v580
  %754 = vst [vmem:[%s4 + $0x60] sm:$0xff] %v655
  %755 = vst [vmem:[%s4 + $0x68] sm:$0xff] %v657
  %756 = vst [vmem:[%s4 + $0x70] sm:$0xff] %v732
  %757 = vst [vmem:[%s4 + $0x78] sm:$0xff] %v734
  %758 = vst [vmem:[%s4 + $0x80] sm:$0xff] %v199
  %759 = vst [vmem:[%s4 + $0x88] sm:$0xff] %v201
  %760 = vst [vmem:[%s4 + $0x90] sm:$0xff] %v276
  %761 = vst [vmem:[%s4 + $0x98] sm:$0xff] %v278
  %762 = vst [vmem:[%s4 + $0xa0] sm:$0xff] %v353
  %763 = vst [vmem:[%s4 + $0xa8] sm:$0xff] %v355
  %764 = vst [vmem:[%s4 + $0xb0] sm:$0xff] %v430
  %765 = vst [vmem:[%s4 + $0xb8] sm:$0xff] %v432
  %766 = vst [vmem:[%s4 + $0xc0] sm:$0xff] %v507
  %767 = vst [vmem:[%s4 + $0xc8] sm:$0xff] %v509
  %768 = vst [vmem:[%s4 + $0xd0] sm:$0xff] %v584
  %769 = vst [vmem:[%s4 + $0xd8] sm:$0xff] %v586
  %770 = vst [vmem:[%s4 + $0xe0] sm:$0xff] %v661
  %771 = vst [vmem:[%s4 + $0xe8] sm:$0xff] %v663
  %772 = vst [vmem:[%s4 + $0xf0] sm:$0xff] %v738
  %773 = vst [vmem:[%s4 + $0xf8] sm:$0xff] %v740
  %v774 = vld [vmem:[%s2] sm:$0xff]
  %v775 = vld [vmem:[%s2 + $0x8] sm:$0xff]
  %v776 = vld [vmem:[%s3] sm:$0xff]
  %v777 = vld [vmem:[%s3 + $0x8] sm:$0xff]
  %v778 = vadd.f32 %v193, %v195
  %v779 = vadd.f32 %v778, %v270
  %v780 = vadd.f32 %v779, %v272
  %v781 = vadd.f32 %v780, %v347
  %v782 = vadd.f32 %v781, %v349
  %v783 = vadd.f32 %v782, %v424
  %v784 = vadd.f32 %v783, %v426
  %v785 = vadd.f32 %v784, %v501
  %v786 = vadd.f32 %v785, %v503
  %v787 = vadd.f32 %v786, %v578
  %v788 = vadd.f32 %v787, %v580
  %v789 = vadd.f32 %v788, %v655
  %v790 = vadd.f32 %v789, %v657
  %v791 = vadd.f32 %v790, %v732
  %v792 = vadd.f32 %v791, %v734
  %793 = vadd.xlane.f32.xlu0 %v792
  %v794 = vpop.xlane.xlu0 %793
  %v795 = vadd.f32 %v199, %v201
  %v796 = vadd.f32 %v795, %v276
  %v797 = vadd.f32 %v796, %v278
  %v798 = vadd.f32 %v797, %v353
  %v799 = vadd.f32 %v798, %v355
  %v800 = vadd.f32 %v799, %v430
  %v801 = vadd.f32 %v800, %v432
  %v802 = vadd.f32 %v801, %v507
  %v803 = vadd.f32 %v802, %v509
  %v804 = vadd.f32 %v803, %v584
  %v805 = vadd.f32 %v804, %v586
  %v806 = vadd.f32 %v805, %v661
  %v807 = vadd.f32 %v806, %v663
  %v808 = vadd.f32 %v807, %v738
  %v809 = vadd.f32 %v808, %v740
  %810 = vadd.xlane.f32.xlu0 %v809
  %v811 = vpop.xlane.xlu0 %810
  %v812 = vrcp.pop 2048.0
  %v813 = vmul.f32 %v794, %v812
  %v814 = vmul.f32 %v811, %v812
  %v815 = vsub.f32 %v193, %v813
  %v816 = vsub.f32 %v195, %v813
  %v817 = vsub.f32 %v270, %v813
  %v818 = vsub.f32 %v272, %v813
  %v819 = vsub.f32 %v347, %v813
  %v820 = vsub.f32 %v349, %v813
  %v821 = vsub.f32 %v424, %v813
  %v822 = vsub.f32 %v426, %v813
  %v823 = vsub.f32 %v501, %v813
  %v824 = vsub.f32 %v503, %v813
  %v825 = vsub.f32 %v578, %v813
  %v826 = vsub.f32 %v580, %v813
  %v827 = vsub.f32 %v655, %v813
  %v828 = vsub.f32 %v657, %v813
  %v829 = vsub.f32 %v732, %v813
  %v830 = vsub.f32 %v734, %v813
  %v831 = vsub.f32 %v199, %v814
  %v832 = vsub.f32 %v201, %v814
  %v833 = vsub.f32 %v276, %v814
  %v834 = vsub.f32 %v278, %v814
  %v835 = vsub.f32 %v353, %v814
  %v836 = vsub.f32 %v355, %v814
  %v837 = vsub.f32 %v430, %v814
  %v838 = vsub.f32 %v432, %v814
  %v839 = vsub.f32 %v507, %v814
  %v840 = vsub.f32 %v509, %v814
  %v841 = vsub.f32 %v584, %v814
  %v842 = vsub.f32 %v586, %v814
  %v843 = vsub.f32 %v661, %v814
  %v844 = vsub.f32 %v663, %v814
  %v845 = vsub.f32 %v738, %v814
  %v846 = vsub.f32 %v740, %v814
  %v847 = vmul.f32 %v815, %v815
  %v848 = vmul.f32 %v816, %v816
  %v849 = vmul.f32 %v817, %v817
  %v850 = vmul.f32 %v818, %v818
  %v851 = vmul.f32 %v819, %v819
  %v852 = vmul.f32 %v820, %v820
  %v853 = vmul.f32 %v821, %v821
  %v854 = vmul.f32 %v822, %v822
  %v855 = vmul.f32 %v823, %v823
  %v856 = vmul.f32 %v824, %v824
  %v857 = vmul.f32 %v825, %v825
  %v858 = vmul.f32 %v826, %v826
  %v859 = vmul.f32 %v827, %v827
  %v860 = vmul.f32 %v828, %v828
  %v861 = vmul.f32 %v829, %v829
  %v862 = vmul.f32 %v830, %v830
  %v863 = vmul.f32 %v831, %v831
  %v864 = vmul.f32 %v832, %v832
  %v865 = vmul.f32 %v833, %v833
  %v866 = vmul.f32 %v834, %v834
  %v867 = vmul.f32 %v835, %v835
  %v868 = vmul.f32 %v836, %v836
  %v869 = vmul.f32 %v837, %v837
  %v870 = vmul.f32 %v838, %v838
  %v871 = vmul.f32 %v839, %v839
  %v872 = vmul.f32 %v840, %v840
  %v873 = vmul.f32 %v841, %v841
  %v874 = vmul.f32 %v842, %v842
  %v875 = vmul.f32 %v843, %v843
  %v876 = vmul.f32 %v844, %v844
  %v877 = vmul.f32 %v845, %v845
  %v878 = vmul.f32 %v846, %v846
  %v879 = vadd.f32 %v847, %v848
  %v880 = vadd.f32 %v879, %v849
  %v881 = vadd.f32 %v880, %v850
  %v882 = vadd.f32 %v881, %v851
  %v883 = vadd.f32 %v882, %v852
  %v884 = vadd.f32 %v883, %v853
  %v885 = vadd.f32 %v884, %v854
  %v886 = vadd.f32 %v885, %v855
  %v887 = vadd.f32 %v886, %v856
  %v888 = vadd.f32 %v887, %v857
  %v889 = vadd.f32 %v888, %v858
  %v890 = vadd.f32 %v889, %v859
  %v891 = vadd.f32 %v890, %v860
  %v892 = vadd.f32 %v891, %v861
  %v893 = vadd.f32 %v892, %v862
  %894 = vadd.xlane.f32.xlu0 %v893
  %v895 = vpop.xlane.xlu0 %894
  %v896 = vadd.f32 %v863, %v864
  %v897 = vadd.f32 %v896, %v865
  %v898 = vadd.f32 %v897, %v866
  %v899 = vadd.f32 %v898, %v867
  %v900 = vadd.f32 %v899, %v868
  %v901 = vadd.f32 %v900, %v869
  %v902 = vadd.f32 %v901, %v870
  %v903 = vadd.f32 %v902, %v871
  %v904 = vadd.f32 %v903, %v872
  %v905 = vadd.f32 %v904, %v873
  %v906 = vadd.f32 %v905, %v874
  %v907 = vadd.f32 %v906, %v875
  %v908 = vadd.f32 %v907, %v876
  %v909 = vadd.f32 %v908, %v877
  %v910 = vadd.f32 %v909, %v878
  %911 = vadd.xlane.f32.xlu0 %v910
  %v912 = vpop.xlane.xlu0 %911
  %v913 = vmul.f32 %v895, %v812
  %v914 = vmul.f32 %v912, %v812
  %v915 = vadd.f32 %v913, 1e-05
  %v916 = vadd.f32 %v914, 1e-05
  %v917 = vrsqrt.pop %v915
  %v918 = vrsqrt.pop %v916
  %v919 = vmul.f32 %v815, %v917
  %v920 = vmul.f32 %v816, %v917
  %v921 = vmul.f32 %v817, %v917
  %v922 = vmul.f32 %v818, %v917
  %v923 = vmul.f32 %v819, %v917
  %v924 = vmul.f32 %v820, %v917
  %v925 = vmul.f32 %v821, %v917
  %v926 = vmul.f32 %v822, %v917
  %v927 = vmul.f32 %v823, %v917
  %v928 = vmul.f32 %v824, %v917
  %v929 = vmul.f32 %v825, %v917
  %v930 = vmul.f32 %v826, %v917
  %v931 = vmul.f32 %v827, %v917
  %v932 = vmul.f32 %v828, %v917
  %v933 = vmul.f32 %v829, %v917
  %v934 = vmul.f32 %v830, %v917
  %v935 = vmul.f32 %v831, %v918
  %v936 = vmul.f32 %v832, %v918
  %v937 = vmul.f32 %v833, %v918
  %v938 = vmul.f32 %v834, %v918
  %v939 = vmul.f32 %v835, %v918
  %v940 = vmul.f32 %v836, %v918
  %v941 = vmul.f32 %v837, %v918
  %v942 = vmul.f32 %v838, %v918
  %v943 = vmul.f32 %v839, %v918
  %v944 = vmul.f32 %v840, %v918
  %v945 = vmul.f32 %v841, %v918
  %v946 = vmul.f32 %v842, %v918
  %v947 = vmul.f32 %v843, %v918
  %v948 = vmul.f32 %v844, %v918
  %v949 = vmul.f32 %v845, %v918
  %v950 = vmul.f32 %v846, %v918
  %952 = vset.pattern.permute.xlu0 0
  %953 = vperm.xlu0 %952, %v774
  %v954 = vpop.permute.xlu0 %953
  %957 = vset.pattern.permute.xlu0 0
  %958 = vperm.xlu0 %957, %v775
  %v959 = vpop.permute.xlu0 %958
  %v961 = vmul.f32 %v919, %v954
  %v962 = vmul.f32 %v920, %v954
  %v963 = vmul.f32 %v921, %v954
  %v964 = vmul.f32 %v922, %v954
  %v965 = vmul.f32 %v923, %v954
  %v966 = vmul.f32 %v924, %v954
  %v967 = vmul.f32 %v925, %v954
  %v968 = vmul.f32 %v926, %v954
  %v969 = vmul.f32 %v927, %v954
  %v970 = vmul.f32 %v928, %v954
  %v971 = vmul.f32 %v929, %v954
  %v972 = vmul.f32 %v930, %v954
  %v973 = vmul.f32 %v931, %v954
  %v974 = vmul.f32 %v932, %v954
  %v975 = vmul.f32 %v933, %v954
  %v976 = vmul.f32 %v934, %v954
  %v977 = vmul.f32 %v935, %v959
  %v978 = vmul.f32 %v936, %v959
  %v979 = vmul.f32 %v937, %v959
  %v980 = vmul.f32 %v938, %v959
  %v981 = vmul.f32 %v939, %v959
  %v982 = vmul.f32 %v940, %v959
  %v983 = vmul.f32 %v941, %v959
  %v984 = vmul.f32 %v942, %v959
  %v985 = vmul.f32 %v943, %v959
  %v986 = vmul.f32 %v944, %v959
  %v987 = vmul.f32 %v945, %v959
  %v988 = vmul.f32 %v946, %v959
  %v989 = vmul.f32 %v947, %v959
  %v990 = vmul.f32 %v948, %v959
  %v991 = vmul.f32 %v949, %v959
  %v992 = vmul.f32 %v950, %v959
  %994 = vset.pattern.permute.xlu0 0
  %995 = vperm.xlu0 %994, %v776
  %v996 = vpop.permute.xlu0 %995
  %999 = vset.pattern.permute.xlu0 0
  %1000 = vperm.xlu0 %999, %v777
  %v1001 = vpop.permute.xlu0 %1000
  %v1003 = vadd.f32 %v961, %v996
  %v1004 = vadd.f32 %v962, %v996
  %v1005 = vadd.f32 %v963, %v996
  %v1006 = vadd.f32 %v964, %v996
  %v1007 = vadd.f32 %v965, %v996
  %v1008 = vadd.f32 %v966, %v996
  %v1009 = vadd.f32 %v967, %v996
  %v1010 = vadd.f32 %v968, %v996
  %v1011 = vadd.f32 %v969, %v996
  %v1012 = vadd.f32 %v970, %v996
  %v1013 = vadd.f32 %v971, %v996
  %v1014 = vadd.f32 %v972, %v996
  %v1015 = vadd.f32 %v973, %v996
  %v1016 = vadd.f32 %v974, %v996
  %v1017 = vadd.f32 %v975, %v996
  %v1018 = vadd.f32 %v976, %v996
  %v1019 = vadd.f32 %v977, %v1001
  %v1020 = vadd.f32 %v978, %v1001
  %v1021 = vadd.f32 %v979, %v1001
  %v1022 = vadd.f32 %v980, %v1001
  %v1023 = vadd.f32 %v981, %v1001
  %v1024 = vadd.f32 %v982, %v1001
  %v1025 = vadd.f32 %v983, %v1001
  %v1026 = vadd.f32 %v984, %v1001
  %v1027 = vadd.f32 %v985, %v1001
  %v1028 = vadd.f32 %v986, %v1001
  %v1029 = vadd.f32 %v987, %v1001
  %v1030 = vadd.f32 %v988, %v1001
  %v1031 = vadd.f32 %v989, %v1001
  %v1032 = vadd.f32 %v990, %v1001
  %v1033 = vadd.f32 %v991, %v1001
  %v1034 = vadd.f32 %v992, %v1001
  %v1035 = vmax.f32 %v1003, 0.0
  %v1036 = vmax.f32 %v1004, 0.0
  %v1037 = vmax.f32 %v1005, 0.0
  %v1038 = vmax.f32 %v1006, 0.0
  %v1039 = vmax.f32 %v1007, 0.0
  %v1040 = vmax.f32 %v1008, 0.0
  %v1041 = vmax.f32 %v1009, 0.0
  %v1042 = vmax.f32 %v1010, 0.0
  %v1043 = vmax.f32 %v1011, 0.0
  %v1044 = vmax.f32 %v1012, 0.0
  %v1045 = vmax.f32 %v1013, 0.0
  %v1046 = vmax.f32 %v1014, 0.0
  %v1047 = vmax.f32 %v1015, 0.0
  %v1048 = vmax.f32 %v1016, 0.0
  %v1049 = vmax.f32 %v1017, 0.0
  %v1050 = vmax.f32 %v1018, 0.0
  %v1051 = vmax.f32 %v1019, 0.0
  %v1052 = vmax.f32 %v1020, 0.0
  %v1053 = vmax.f32 %v1021, 0.0
  %v1054 = vmax.f32 %v1022, 0.0
  %v1055 = vmax.f32 %v1023, 0.0
  %v1056 = vmax.f32 %v1024, 0.0
  %v1057 = vmax.f32 %v1025, 0.0
  %v1058 = vmax.f32 %v1026, 0.0
  %v1059 = vmax.f32 %v1027, 0.0
  %v1060 = vmax.f32 %v1028, 0.0
  %v1061 = vmax.f32 %v1029, 0.0
  %v1062 = vmax.f32 %v1030, 0.0
  %v1063 = vmax.f32 %v1031, 0.0
  %v1064 = vmax.f32 %v1032, 0.0
  %v1065 = vmax.f32 %v1033, 0.0
  %v1066 = vmax.f32 %v1034, 0.0
  %1067 = vst [vmem:[%s5] sm:$0xff] %v1035
  %1068 = vst [vmem:[%s5 + $0x8] sm:$0xff] %v1036
  %1069 = vst [vmem:[%s5 + $0x10] sm:$0xff] %v1037
  %1070 = vst [vmem:[%s5 + $0x18] sm:$0xff] %v1038
  %1071 = vst [vmem:[%s5 + $0x20] sm:$0xff] %v1039
  %1072 = vst [vmem:[%s5 + $0x28] sm:$0xff] %v1040
  %1073 = vst [vmem:[%s5 + $0x30] sm:$0xff] %v1041
  %1074 = vst [vmem:[%s5 + $0x38] sm:$0xff] %v1042
  %1075 = vst [vmem:[%s5 + $0x40] sm:$0xff] %v1043
  %1076 = vst [vmem:[%s5 + $0x48] sm:$0xff] %v1044
  %1077 = vst [vmem:[%s5 + $0x50] sm:$0xff] %v1045
  %1078 = vst [vmem:[%s5 + $0x58] sm:$0xff] %v1046
  %1079 = vst [vmem:[%s5 + $0x60] sm:$0xff] %v1047
  %1080 = vst [vmem:[%s5 + $0x68] sm:$0xff] %v1048
  %1081 = vst [vmem:[%s5 + $0x70] sm:$0xff] %v1049
  %1082 = vst [vmem:[%s5 + $0x78] sm:$0xff] %v1050
  %1083 = vst [vmem:[%s5 + $0x80] sm:$0xff] %v1051
  %1084 = vst [vmem:[%s5 + $0x88] sm:$0xff] %v1052
  %1085 = vst [vmem:[%s5 + $0x90] sm:$0xff] %v1053
  %1086 = vst [vmem:[%s5 + $0x98] sm:$0xff] %v1054
  %1087 = vst [vmem:[%s5 + $0xa0] sm:$0xff] %v1055
  %1088 = vst [vmem:[%s5 + $0xa8] sm:$0xff] %v1056
  %1089 = vst [vmem:[%s5 + $0xb0] sm:$0xff] %v1057
  %1090 = vst [vmem:[%s5 + $0xb8] sm:$0xff] %v1058
  %1091 = vst [vmem:[%s5 + $0xc0] sm:$0xff] %v1059
  %1092 = vst [vmem:[%s5 + $0xc8] sm:$0xff] %v1060
  %1093 = vst [vmem:[%s5 + $0xd0] sm:$0xff] %v1061
  %1094 = vst [vmem:[%s5 + $0xd8] sm:$0xff] %v1062
  %1095 = vst [vmem:[%s5 + $0xe0] sm:$0xff] %v1063
  %1096 = vst [vmem:[%s5 + $0xe8] sm:$0xff] %v1064
  %1097 = vst [vmem:[%s5 + $0xf0] sm:$0xff] %v1065
  %1098 = vst [vmem:[%s5 + $0xf8] sm:$0xff] %v1066
  // Predicated region
  $region18: #{wide_resnet_forward.7} parent=0 // pred_check
    _
  $region19: #{wide_resnet_forward.7} parent=0 // pred_check_branch
    %1100 = sbr.rel (0) target = $region21
  $region20: #{wide_resnet_forward.7} parent=0 // pred_region
    _
  $region21: #{wide_resnet_forward.7} parent=0 // pred_fallthru
    _
  // Predicated region
  $region22: #{wide_resnet_forward.7} parent=0 // pred_check
    _
  $region23: #{wide_resnet_forward.7} parent=0 // pred_check_branch
    %1102 = sbr.rel (0) target = $region25
  $region24: #{wide_resnet_forward.7} parent=0 // pred_region
    _
  $region25: #{wide_resnet_forward.7} parent=0 // pred_fallthru
    _
  // Predicated region
  $region26: #{wide_resnet_forward.7} parent=0 // pred_check
    _
  $region27: #{wide_resnet_forward.7} parent=0 // pred_check_branch
    %1104 = sbr.rel (0) target = $region29
  $region28: #{wide_resnet_forward.7} parent=0 // pred_region
    _
  $region29: #{wide_resnet_forward.7} parent=0 // pred_fallthru
    _
  // Predicated region
  $region30: #{wide_resnet_forward.7} parent=0 // pred_check
    _
  $region31: #{wide_resnet_forward.7} parent=0 // pred_check_branch
    %1106 = sbr.rel (0) target = $region33
  $region32: #{wide_resnet_forward.7} parent=0 // pred_region
    _
  $region33: #{wide_resnet_forward.7} parent=0 // pred_fallthru
    _

// kernel: wide_resnet_forward.8
$region0: #{wide_resnet_forward.8}
  #allocation0 [shape = 'u32[]', space=smem, size = 0x4, offset = 0x4, fixed_abs, tag = 'smem constant byte address 0x4 - core index']
  #allocation1 [shape = 'u32[144,128]{1,0:T(1,128)}', space=vmem, size = 0x12000, scoped, tag = 'internal scratch']
  %s0 = inlined_call_operand.vmem [shape: bf16[16,144], index: 0, kind: input, shape index: {}]
  %s1 = inlined_call_operand.vmem [shape: bf16[144,2048], index: 1, kind: input, shape index: {}]
  %s2 = inlined_call_operand.vmem [shape: f32[16,1], index: 2, kind: input, shape index: {}]
  %s3 = inlined_call_operand.vmem [shape: f32[16,1], index: 3, kind: input, shape index: {}]
  %s4 = inlined_call_operand.vmem [shape: f32[16,2048], index: 4, kind: output, shape index: {}]
  %s5 = sld [smem:[#allocation0]]
  $region26: #{wide_resnet_forward.8} parent=0
    _
  %s7 = ssub.s32 1, %s5
  %s8 = scalar_select 0, %s7, %s5
  // Predicated region
  $region2: #{wide_resnet_forward.8} parent=0 // pred_check
    _
  $region3: #{wide_resnet_forward.8} parent=0 // pred_check_branch
    %10 = sbr.rel (0) target = $region5
  $region4: #{wide_resnet_forward.8} parent=0 // pred_region
    _
  $region5: #{wide_resnet_forward.8} parent=0 // pred_fallthru
    _
  // Predicated region
  $region6: #{wide_resnet_forward.8} parent=0 // pred_check
    _
  $region7: #{wide_resnet_forward.8} parent=0 // pred_check_branch
    %12 = sbr.rel (0) target = $region9
  $region8: #{wide_resnet_forward.8} parent=0 // pred_region
    _
  $region9: #{wide_resnet_forward.8} parent=0 // pred_fallthru
    _
  // Predicated region
  $region10: #{wide_resnet_forward.8} parent=0 // pred_check
    _
  $region11: #{wide_resnet_forward.8} parent=0 // pred_check_branch
    %14 = sbr.rel (0) target = $region13
  $region12: #{wide_resnet_forward.8} parent=0 // pred_region
    _
  $region13: #{wide_resnet_forward.8} parent=0 // pred_fallthru
    _
  // Predicated region
  $region14: #{wide_resnet_forward.8} parent=0 // pred_check
    _
  $region15: #{wide_resnet_forward.8} parent=0 // pred_check_branch
    %16 = sbr.rel (0) target = $region17
  $region16: #{wide_resnet_forward.8} parent=0 // pred_region
    _
  $region17: #{wide_resnet_forward.8} parent=0 // pred_fallthru
    _
  %v17 = vld [vmem:[%s0] sm:$0xff]
  %v18 = vld [vmem:[%s0 + $0x8] sm:$0xff]
  %v19 = vunpack.c.l.bf16 %v17
  %v20 = vunpack.c.h.bf16 %v17
  %v21 = vunpack.c.l.bf16 %v18
  %v22 = vunpack.c.h.bf16 %v18
  %v23 = vld [vmem:[%s1] sm:$0xff]
  %v24 = vld [vmem:[%s1 + $0x8] sm:$0xff]
  %v25 = vld [vmem:[%s1 + $0x10] sm:$0xff]
  %v26 = vld [vmem:[%s1 + $0x18] sm:$0xff]
  %v27 = vld [vmem:[%s1 + $0x20] sm:$0xff]
  %v28 = vld [vmem:[%s1 + $0x28] sm:$0xff]
  %v29 = vld [vmem:[%s1 + $0x30] sm:$0xff]
  %v30 = vld [vmem:[%s1 + $0x38] sm:$0xff]
  %v31 = vld [vmem:[%s1 + $0x40] sm:$0xff]
  %v32 = vld [vmem:[%s1 + $0x48] sm:$0xff]
  %v33 = vld [vmem:[%s1 + $0x50] sm:$0xff]
  %v34 = vld [vmem:[%s1 + $0x58] sm:$0xff]
  %v35 = vld [vmem:[%s1 + $0x60] sm:$0xff]
  %v36 = vld [vmem:[%s1 + $0x68] sm:$0xff]
  %v37 = vld [vmem:[%s1 + $0x70] sm:$0xff]
  %v38 = vld [vmem:[%s1 + $0x78] sm:$0xff]
  %v39 = vld [vmem:[%s1 + $0x80] sm:$0xff]
  %v40 = vld [vmem:[%s1 + $0x88] sm:$0xff]
  %v41 = vld [vmem:[%s1 + $0x90] sm:$0xff]
  %v42 = vld [vmem:[%s1 + $0x98] sm:$0xff]
  %v43 = vld [vmem:[%s1 + $0xa0] sm:$0xff]
  %v44 = vld [vmem:[%s1 + $0xa8] sm:$0xff]
  %v45 = vld [vmem:[%s1 + $0xb0] sm:$0xff]
  %v46 = vld [vmem:[%s1 + $0xb8] sm:$0xff]
  %v47 = vld [vmem:[%s1 + $0xc0] sm:$0xff]
  %v48 = vld [vmem:[%s1 + $0xc8] sm:$0xff]
  %v49 = vld [vmem:[%s1 + $0xd0] sm:$0xff]
  %v50 = vld [vmem:[%s1 + $0xd8] sm:$0xff]
  %v51 = vld [vmem:[%s1 + $0xe0] sm:$0xff]
  %v52 = vld [vmem:[%s1 + $0xe8] sm:$0xff]
  %v53 = vld [vmem:[%s1 + $0xf0] sm:$0xff]
  %v54 = vld [vmem:[%s1 + $0xf8] sm:$0xff]
  %v55 = vld [vmem:[%s1 + $0x100] sm:$0xff]
  %v56 = vld [vmem:[%s1 + $0x108] sm:$0xff]
  %v57 = vld [vmem:[%s1 + $0x110] sm:$0xff]
  %v58 = vld [vmem:[%s1 + $0x118] sm:$0xff]
  %v59 = vld [vmem:[%s1 + $0x120] sm:$0xff]
  %v60 = vld [vmem:[%s1 + $0x128] sm:$0xff]
  %v61 = vld [vmem:[%s1 + $0x130] sm:$0xff]
  %v62 = vld [vmem:[%s1 + $0x138] sm:$0xff]
  %v63 = vld [vmem:[%s1 + $0x140] sm:$0xff]
  %v64 = vld [vmem:[%s1 + $0x148] sm:$0xff]
  %v65 = vld [vmem:[%s1 + $0x150] sm:$0xff]
  %v66 = vld [vmem:[%s1 + $0x158] sm:$0xff]
  %v67 = vld [vmem:[%s1 + $0x160] sm:$0xff]
  %v68 = vld [vmem:[%s1 + $0x168] sm:$0xff]
  %v69 = vld [vmem:[%s1 + $0x170] sm:$0xff]
  %v70 = vld [vmem:[%s1 + $0x178] sm:$0xff]
  %v71 = vld [vmem:[%s1 + $0x180] sm:$0xff]
  %v72 = vld [vmem:[%s1 + $0x188] sm:$0xff]
  %v73 = vld [vmem:[%s1 + $0x190] sm:$0xff]
  %v74 = vld [vmem:[%s1 + $0x198] sm:$0xff]
  %v75 = vld [vmem:[%s1 + $0x1a0] sm:$0xff]
  %v76 = vld [vmem:[%s1 + $0x1a8] sm:$0xff]
  %v77 = vld [vmem:[%s1 + $0x1b0] sm:$0xff]
  %v78 = vld [vmem:[%s1 + $0x1b8] sm:$0xff]
  %v79 = vld [vmem:[%s1 + $0x1c0] sm:$0xff]
  %v80 = vld [vmem:[%s1 + $0x1c8] sm:$0xff]
  %v81 = vld [vmem:[%s1 + $0x1d0] sm:$0xff]
  %v82 = vld [vmem:[%s1 + $0x1d8] sm:$0xff]
  %v83 = vld [vmem:[%s1 + $0x1e0] sm:$0xff]
  %v84 = vld [vmem:[%s1 + $0x1e8] sm:$0xff]
  %v85 = vld [vmem:[%s1 + $0x1f0] sm:$0xff]
  %v86 = vld [vmem:[%s1 + $0x1f8] sm:$0xff]
  %v87 = vld [vmem:[%s1 + $0x200] sm:$0xff]
  %v88 = vld [vmem:[%s1 + $0x208] sm:$0xff]
  %v89 = vld [vmem:[%s1 + $0x210] sm:$0xff]
  %v90 = vld [vmem:[%s1 + $0x218] sm:$0xff]
  %v91 = vld [vmem:[%s1 + $0x220] sm:$0xff]
  %v92 = vld [vmem:[%s1 + $0x228] sm:$0xff]
  %v93 = vld [vmem:[%s1 + $0x230] sm:$0xff]
  %v94 = vld [vmem:[%s1 + $0x238] sm:$0xff]
  %v95 = vld [vmem:[%s1 + $0x240] sm:$0xff]
  %v96 = vld [vmem:[%s1 + $0x248] sm:$0xff]
  %v97 = vld [vmem:[%s1 + $0x250] sm:$0xff]
  %v98 = vld [vmem:[%s1 + $0x258] sm:$0xff]
  %v99 = vld [vmem:[%s1 + $0x260] sm:$0xff]
  %v100 = vld [vmem:[%s1 + $0x268] sm:$0xff]
  %v101 = vld [vmem:[%s1 + $0x270] sm:$0xff]
  %v102 = vld [vmem:[%s1 + $0x278] sm:$0xff]
  %v103 = vld [vmem:[%s1 + $0x280] sm:$0xff]
  %v104 = vld [vmem:[%s1 + $0x288] sm:$0xff]
  %v105 = vld [vmem:[%s1 + $0x290] sm:$0xff]
  %v106 = vld [vmem:[%s1 + $0x298] sm:$0xff]
  %v107 = vld [vmem:[%s1 + $0x2a0] sm:$0xff]
  %v108 = vld [vmem:[%s1 + $0x2a8] sm:$0xff]
  %v109 = vld [vmem:[%s1 + $0x2b0] sm:$0xff]
  %v110 = vld [vmem:[%s1 + $0x2b8] sm:$0xff]
  %v111 = vld [vmem:[%s1 + $0x2c0] sm:$0xff]
  %v112 = vld [vmem:[%s1 + $0x2c8] sm:$0xff]
  %v113 = vld [vmem:[%s1 + $0x2d0] sm:$0xff]
  %v114 = vld [vmem:[%s1 + $0x2d8] sm:$0xff]
  %v115 = vld [vmem:[%s1 + $0x2e0] sm:$0xff]
  %v116 = vld [vmem:[%s1 + $0x2e8] sm:$0xff]
  %v117 = vld [vmem:[%s1 + $0x2f0] sm:$0xff]
  %v118 = vld [vmem:[%s1 + $0x2f8] sm:$0xff]
  %v119 = vld [vmem:[%s1 + $0x300] sm:$0xff]
  %v120 = vld [vmem:[%s1 + $0x308] sm:$0xff]
  %v121 = vld [vmem:[%s1 + $0x310] sm:$0xff]
  %v122 = vld [vmem:[%s1 + $0x318] sm:$0xff]
  %v123 = vld [vmem:[%s1 + $0x320] sm:$0xff]
  %v124 = vld [vmem:[%s1 + $0x328] sm:$0xff]
  %v125 = vld [vmem:[%s1 + $0x330] sm:$0xff]
  %v126 = vld [vmem:[%s1 + $0x338] sm:$0xff]
  %v127 = vld [vmem:[%s1 + $0x340] sm:$0xff]
  %v128 = vld [vmem:[%s1 + $0x348] sm:$0xff]
  %v129 = vld [vmem:[%s1 + $0x350] sm:$0xff]
  %v130 = vld [vmem:[%s1 + $0x358] sm:$0xff]
  %v131 = vld [vmem:[%s1 + $0x360] sm:$0xff]
  %v132 = vld [vmem:[%s1 + $0x368] sm:$0xff]
  %v133 = vld [vmem:[%s1 + $0x370] sm:$0xff]
  %v134 = vld [vmem:[%s1 + $0x378] sm:$0xff]
  %v135 = vld [vmem:[%s1 + $0x380] sm:$0xff]
  %v136 = vld [vmem:[%s1 + $0x388] sm:$0xff]
  %v137 = vld [vmem:[%s1 + $0x390] sm:$0xff]
  %v138 = vld [vmem:[%s1 + $0x398] sm:$0xff]
  %v139 = vld [vmem:[%s1 + $0x3a0] sm:$0xff]
  %v140 = vld [vmem:[%s1 + $0x3a8] sm:$0xff]
  %v141 = vld [vmem:[%s1 + $0x3b0] sm:$0xff]
  %v142 = vld [vmem:[%s1 + $0x3b8] sm:$0xff]
  %v143 = vld [vmem:[%s1 + $0x3c0] sm:$0xff]
  %v144 = vld [vmem:[%s1 + $0x3c8] sm:$0xff]
  %v145 = vld [vmem:[%s1 + $0x3d0] sm:$0xff]
  %v146 = vld [vmem:[%s1 + $0x3d8] sm:$0xff]
  %v147 = vld [vmem:[%s1 + $0x3e0] sm:$0xff]
  %v148 = vld [vmem:[%s1 + $0x3e8] sm:$0xff]
  %v149 = vld [vmem:[%s1 + $0x3f0] sm:$0xff]
  %v150 = vld [vmem:[%s1 + $0x3f8] sm:$0xff]
  %v151 = vld [vmem:[%s1 + $0x400] sm:$0xff]
  %v152 = vld [vmem:[%s1 + $0x408] sm:$0xff]
  %v153 = vld [vmem:[%s1 + $0x410] sm:$0xff]
  %v154 = vld [vmem:[%s1 + $0x418] sm:$0xff]
  %v155 = vld [vmem:[%s1 + $0x420] sm:$0xff]
  %v156 = vld [vmem:[%s1 + $0x428] sm:$0xff]
  %v157 = vld [vmem:[%s1 + $0x430] sm:$0xff]
  %v158 = vld [vmem:[%s1 + $0x438] sm:$0xff]
  %v159 = vld [vmem:[%s1 + $0x440] sm:$0xff]
  %v160 = vld [vmem:[%s1 + $0x448] sm:$0xff]
  %v161 = vld [vmem:[%s1 + $0x450] sm:$0xff]
  %v162 = vld [vmem:[%s1 + $0x458] sm:$0xff]
  %v163 = vld [vmem:[%s1 + $0x460] sm:$0xff]
  %v164 = vld [vmem:[%s1 + $0x468] sm:$0xff]
  %v165 = vld [vmem:[%s1 + $0x470] sm:$0xff]
  %v166 = vld [vmem:[%s1 + $0x478] sm:$0xff]
  %v167 = vunpack.c.l.bf16 %v23
  %v168 = vunpack.c.h.bf16 %v23
  %v169 = vunpack.c.l.bf16 %v24
  %v170 = vunpack.c.h.bf16 %v24
  %v171 = vunpack.c.l.bf16 %v25
  %v172 = vunpack.c.h.bf16 %v25
  %v173 = vunpack.c.l.bf16 %v26
  %v174 = vunpack.c.h.bf16 %v26
  %v175 = vunpack.c.l.bf16 %v27
  %v176 = vunpack.c.h.bf16 %v27
  %v177 = vunpack.c.l.bf16 %v28
  %v178 = vunpack.c.h.bf16 %v28
  %v179 = vunpack.c.l.bf16 %v29
  %v180 = vunpack.c.h.bf16 %v29
  %v181 = vunpack.c.l.bf16 %v30
  %v182 = vunpack.c.h.bf16 %v30
  %v183 = vunpack.c.l.bf16 %v31
  %v184 = vunpack.c.h.bf16 %v31
  %v185 = vunpack.c.l.bf16 %v32
  %v186 = vunpack.c.h.bf16 %v32
  %v187 = vunpack.c.l.bf16 %v33
  %v188 = vunpack.c.h.bf16 %v33
  %v189 = vunpack.c.l.bf16 %v34
  %v190 = vunpack.c.h.bf16 %v34
  %v191 = vunpack.c.l.bf16 %v35
  %v192 = vunpack.c.h.bf16 %v35
  %v193 = vunpack.c.l.bf16 %v36
  %v194 = vunpack.c.h.bf16 %v36
  %v195 = vunpack.c.l.bf16 %v37
  %v196 = vunpack.c.h.bf16 %v37
  %v197 = vunpack.c.l.bf16 %v38
  %v198 = vunpack.c.h.bf16 %v38
  %v199 = vunpack.c.l.bf16 %v39
  %v200 = vunpack.c.h.bf16 %v39
  %v201 = vunpack.c.l.bf16 %v40
  %v202 = vunpack.c.h.bf16 %v40
  %v203 = vunpack.c.l.bf16 %v41
  %v204 = vunpack.c.h.bf16 %v41
  %v205 = vunpack.c.l.bf16 %v42
  %v206 = vunpack.c.h.bf16 %v42
  %v207 = vunpack.c.l.bf16 %v43
  %v208 = vunpack.c.h.bf16 %v43
  %v209 = vunpack.c.l.bf16 %v44
  %v210 = vunpack.c.h.bf16 %v44
  %v211 = vunpack.c.l.bf16 %v45
  %v212 = vunpack.c.h.bf16 %v45
  %v213 = vunpack.c.l.bf16 %v46
  %v214 = vunpack.c.h.bf16 %v46
  %v215 = vunpack.c.l.bf16 %v47
  %v216 = vunpack.c.h.bf16 %v47
  %v217 = vunpack.c.l.bf16 %v48
  %v218 = vunpack.c.h.bf16 %v48
  %v219 = vunpack.c.l.bf16 %v49
  %v220 = vunpack.c.h.bf16 %v49
  %v221 = vunpack.c.l.bf16 %v50
  %v222 = vunpack.c.h.bf16 %v50
  %v223 = vunpack.c.l.bf16 %v51
  %v224 = vunpack.c.h.bf16 %v51
  %v225 = vunpack.c.l.bf16 %v52
  %v226 = vunpack.c.h.bf16 %v52
  %v227 = vunpack.c.l.bf16 %v53
  %v228 = vunpack.c.h.bf16 %v53
  %v229 = vunpack.c.l.bf16 %v54
  %v230 = vunpack.c.h.bf16 %v54
  %v231 = vunpack.c.l.bf16 %v55
  %v232 = vunpack.c.h.bf16 %v55
  %v233 = vunpack.c.l.bf16 %v56
  %v234 = vunpack.c.h.bf16 %v56
  %v235 = vunpack.c.l.bf16 %v57
  %v236 = vunpack.c.h.bf16 %v57
  %v237 = vunpack.c.l.bf16 %v58
  %v238 = vunpack.c.h.bf16 %v58
  %v239 = vunpack.c.l.bf16 %v59
  %v240 = vunpack.c.h.bf16 %v59
  %v241 = vunpack.c.l.bf16 %v60
  %v242 = vunpack.c.h.bf16 %v60
  %v243 = vunpack.c.l.bf16 %v61
  %v244 = vunpack.c.h.bf16 %v61
  %v245 = vunpack.c.l.bf16 %v62
  %v246 = vunpack.c.h.bf16 %v62
  %v247 = vunpack.c.l.bf16 %v63
  %v248 = vunpack.c.h.bf16 %v63
  %v249 = vunpack.c.l.bf16 %v64
  %v250 = vunpack.c.h.bf16 %v64
  %v251 = vunpack.c.l.bf16 %v65
  %v252 = vunpack.c.h.bf16 %v65
  %v253 = vunpack.c.l.bf16 %v66
  %v254 = vunpack.c.h.bf16 %v66
  %v255 = vunpack.c.l.bf16 %v67
  %v256 = vunpack.c.h.bf16 %v67
  %v257 = vunpack.c.l.bf16 %v68
  %v258 = vunpack.c.h.bf16 %v68
  %v259 = vunpack.c.l.bf16 %v69
  %v260 = vunpack.c.h.bf16 %v69
  %v261 = vunpack.c.l.bf16 %v70
  %v262 = vunpack.c.h.bf16 %v70
  %v263 = vunpack.c.l.bf16 %v71
  %v264 = vunpack.c.h.bf16 %v71
  %v265 = vunpack.c.l.bf16 %v72
  %v266 = vunpack.c.h.bf16 %v72
  %v267 = vunpack.c.l.bf16 %v73
  %v268 = vunpack.c.h.bf16 %v73
  %v269 = vunpack.c.l.bf16 %v74
  %v270 = vunpack.c.h.bf16 %v74
  %v271 = vunpack.c.l.bf16 %v75
  %v272 = vunpack.c.h.bf16 %v75
  %v273 = vunpack.c.l.bf16 %v76
  %v274 = vunpack.c.h.bf16 %v76
  %v275 = vunpack.c.l.bf16 %v77
  %v276 = vunpack.c.h.bf16 %v77
  %v277 = vunpack.c.l.bf16 %v78
  %v278 = vunpack.c.h.bf16 %v78
  %v279 = vunpack.c.l.bf16 %v79
  %v280 = vunpack.c.h.bf16 %v79
  %v281 = vunpack.c.l.bf16 %v80
  %v282 = vunpack.c.h.bf16 %v80
  %v283 = vunpack.c.l.bf16 %v81
  %v284 = vunpack.c.h.bf16 %v81
  %v285 = vunpack.c.l.bf16 %v82
  %v286 = vunpack.c.h.bf16 %v82
  %v287 = vunpack.c.l.bf16 %v83
  %v288 = vunpack.c.h.bf16 %v83
  %v289 = vunpack.c.l.bf16 %v84
  %v290 = vunpack.c.h.bf16 %v84
  %v291 = vunpack.c.l.bf16 %v85
  %v292 = vunpack.c.h.bf16 %v85
  %v293 = vunpack.c.l.bf16 %v86
  %v294 = vunpack.c.h.bf16 %v86
  %v295 = vunpack.c.l.bf16 %v87
  %v296 = vunpack.c.h.bf16 %v87
  %v297 = vunpack.c.l.bf16 %v88
  %v298 = vunpack.c.h.bf16 %v88
  %v299 = vunpack.c.l.bf16 %v89
  %v300 = vunpack.c.h.bf16 %v89
  %v301 = vunpack.c.l.bf16 %v90
  %v302 = vunpack.c.h.bf16 %v90
  %v303 = vunpack.c.l.bf16 %v91
  %v304 = vunpack.c.h.bf16 %v91
  %v305 = vunpack.c.l.bf16 %v92
  %v306 = vunpack.c.h.bf16 %v92
  %v307 = vunpack.c.l.bf16 %v93
  %v308 = vunpack.c.h.bf16 %v93
  %v309 = vunpack.c.l.bf16 %v94
  %v310 = vunpack.c.h.bf16 %v94
  %v311 = vunpack.c.l.bf16 %v95
  %v312 = vunpack.c.h.bf16 %v95
  %v313 = vunpack.c.l.bf16 %v96
  %v314 = vunpack.c.h.bf16 %v96
  %v315 = vunpack.c.l.bf16 %v97
  %v316 = vunpack.c.h.bf16 %v97
  %v317 = vunpack.c.l.bf16 %v98
  %v318 = vunpack.c.h.bf16 %v98
  %v319 = vunpack.c.l.bf16 %v99
  %v320 = vunpack.c.h.bf16 %v99
  %v321 = vunpack.c.l.bf16 %v100
  %v322 = vunpack.c.h.bf16 %v100
  %v323 = vunpack.c.l.bf16 %v101
  %v324 = vunpack.c.h.bf16 %v101
  %v325 = vunpack.c.l.bf16 %v102
  %v326 = vunpack.c.h.bf16 %v102
  %v327 = vunpack.c.l.bf16 %v103
  %v328 = vunpack.c.h.bf16 %v103
  %v329 = vunpack.c.l.bf16 %v104
  %v330 = vunpack.c.h.bf16 %v104
  %v331 = vunpack.c.l.bf16 %v105
  %v332 = vunpack.c.h.bf16 %v105
  %v333 = vunpack.c.l.bf16 %v106
  %v334 = vunpack.c.h.bf16 %v106
  %v335 = vunpack.c.l.bf16 %v107
  %v336 = vunpack.c.h.bf16 %v107
  %v337 = vunpack.c.l.bf16 %v108
  %v338 = vunpack.c.h.bf16 %v108
  %v339 = vunpack.c.l.bf16 %v109
  %v340 = vunpack.c.h.bf16 %v109
  %v341 = vunpack.c.l.bf16 %v110
  %v342 = vunpack.c.h.bf16 %v110
  %v343 = vunpack.c.l.bf16 %v111
  %v344 = vunpack.c.h.bf16 %v111
  %v345 = vunpack.c.l.bf16 %v112
  %v346 = vunpack.c.h.bf16 %v112
  %v347 = vunpack.c.l.bf16 %v113
  %v348 = vunpack.c.h.bf16 %v113
  %v349 = vunpack.c.l.bf16 %v114
  %v350 = vunpack.c.h.bf16 %v114
  %v351 = vunpack.c.l.bf16 %v115
  %v352 = vunpack.c.h.bf16 %v115
  %v353 = vunpack.c.l.bf16 %v116
  %v354 = vunpack.c.h.bf16 %v116
  %v355 = vunpack.c.l.bf16 %v117
  %v356 = vunpack.c.h.bf16 %v117
  %v357 = vunpack.c.l.bf16 %v118
  %v358 = vunpack.c.h.bf16 %v118
  %v359 = vunpack.c.l.bf16 %v119
  %v360 = vunpack.c.h.bf16 %v119
  %v361 = vunpack.c.l.bf16 %v120
  %v362 = vunpack.c.h.bf16 %v120
  %v363 = vunpack.c.l.bf16 %v121
  %v364 = vunpack.c.h.bf16 %v121
  %v365 = vunpack.c.l.bf16 %v122
  %v366 = vunpack.c.h.bf16 %v122
  %v367 = vunpack.c.l.bf16 %v123
  %v368 = vunpack.c.h.bf16 %v123
  %v369 = vunpack.c.l.bf16 %v124
  %v370 = vunpack.c.h.bf16 %v124
  %v371 = vunpack.c.l.bf16 %v125
  %v372 = vunpack.c.h.bf16 %v125
  %v373 = vunpack.c.l.bf16 %v126
  %v374 = vunpack.c.h.bf16 %v126
  %v375 = vunpack.c.l.bf16 %v127
  %v376 = vunpack.c.h.bf16 %v127
  %v377 = vunpack.c.l.bf16 %v128
  %v378 = vunpack.c.h.bf16 %v128
  %v379 = vunpack.c.l.bf16 %v129
  %v380 = vunpack.c.h.bf16 %v129
  %v381 = vunpack.c.l.bf16 %v130
  %v382 = vunpack.c.h.bf16 %v130
  %v383 = vunpack.c.l.bf16 %v131
  %v384 = vunpack.c.h.bf16 %v131
  %v385 = vunpack.c.l.bf16 %v132
  %v386 = vunpack.c.h.bf16 %v132
  %v387 = vunpack.c.l.bf16 %v133
  %v388 = vunpack.c.h.bf16 %v133
  %v389 = vunpack.c.l.bf16 %v134
  %v390 = vunpack.c.h.bf16 %v134
  %v391 = vunpack.c.l.bf16 %v135
  %v392 = vunpack.c.h.bf16 %v135
  %v393 = vunpack.c.l.bf16 %v136
  %v394 = vunpack.c.h.bf16 %v136
  %v395 = vunpack.c.l.bf16 %v137
  %v396 = vunpack.c.h.bf16 %v137
  %v397 = vunpack.c.l.bf16 %v138
  %v398 = vunpack.c.h.bf16 %v138
  %v399 = vunpack.c.l.bf16 %v139
  %v400 = vunpack.c.h.bf16 %v139
  %v401 = vunpack.c.l.bf16 %v140
  %v402 = vunpack.c.h.bf16 %v140
  %v403 = vunpack.c.l.bf16 %v141
  %v404 = vunpack.c.h.bf16 %v141
  %v405 = vunpack.c.l.bf16 %v142
  %v406 = vunpack.c.h.bf16 %v142
  %v407 = vunpack.c.l.bf16 %v143
  %v408 = vunpack.c.h.bf16 %v143
  %v409 = vunpack.c.l.bf16 %v144
  %v410 = vunpack.c.h.bf16 %v144
  %v411 = vunpack.c.l.bf16 %v145
  %v412 = vunpack.c.h.bf16 %v145
  %v413 = vunpack.c.l.bf16 %v146
  %v414 = vunpack.c.h.bf16 %v146
  %v415 = vunpack.c.l.bf16 %v147
  %v416 = vunpack.c.h.bf16 %v147
  %v417 = vunpack.c.l.bf16 %v148
  %v418 = vunpack.c.h.bf16 %v148
  %v419 = vunpack.c.l.bf16 %v149
  %v420 = vunpack.c.h.bf16 %v149
  %v421 = vunpack.c.l.bf16 %v150
  %v422 = vunpack.c.h.bf16 %v150
  %v423 = vunpack.c.l.bf16 %v151
  %v424 = vunpack.c.h.bf16 %v151
  %v425 = vunpack.c.l.bf16 %v152
  %v426 = vunpack.c.h.bf16 %v152
  %v427 = vunpack.c.l.bf16 %v153
  %v428 = vunpack.c.h.bf16 %v153
  %v429 = vunpack.c.l.bf16 %v154
  %v430 = vunpack.c.h.bf16 %v154
  %v431 = vunpack.c.l.bf16 %v155
  %v432 = vunpack.c.h.bf16 %v155
  %v433 = vunpack.c.l.bf16 %v156
  %v434 = vunpack.c.h.bf16 %v156
  %v435 = vunpack.c.l.bf16 %v157
  %v436 = vunpack.c.h.bf16 %v157
  %v437 = vunpack.c.l.bf16 %v158
  %v438 = vunpack.c.h.bf16 %v158
  %v439 = vunpack.c.l.bf16 %v159
  %v440 = vunpack.c.h.bf16 %v159
  %v441 = vunpack.c.l.bf16 %v160
  %v442 = vunpack.c.h.bf16 %v160
  %v443 = vunpack.c.l.bf16 %v161
  %v444 = vunpack.c.h.bf16 %v161
  %v445 = vunpack.c.l.bf16 %v162
  %v446 = vunpack.c.h.bf16 %v162
  %v447 = vunpack.c.l.bf16 %v163
  %v448 = vunpack.c.h.bf16 %v163
  %v449 = vunpack.c.l.bf16 %v164
  %v450 = vunpack.c.h.bf16 %v164
  %v451 = vunpack.c.l.bf16 %v165
  %v452 = vunpack.c.h.bf16 %v165
  %v453 = vunpack.c.l.bf16 %v166
  %v454 = vunpack.c.h.bf16 %v166
  %vm455 = vcmask 130048
  %v457 = vsel %vm455, %v20, 0
  %v460 = vsel %vm455, %v22, 0
  %462 = vmatprep.subr.mxu0 %v168
  %463 = vmatpush1.msra.mxu0 %v167
  %464 = vmatprep.subr.mxu0 %v184
  %465 = vmatpush1.msra.mxu0 %v183
  %466 = vmatprep.subr.mxu0 %v200
  %467 = vmatpush1.msra.mxu0 %v199
  %468 = vmatprep.subr.mxu0 %v216
  %469 = vmatpush1.msra.mxu0 %v215
  %470 = vmatprep.subr.mxu0 %v232
  %471 = vmatpush1.msra.mxu0 %v231
  %472 = vmatprep.subr.mxu0 %v248
  %473 = vmatpush1.msra.mxu0 %v247
  %474 = vmatprep.subr.mxu0 %v264
  %475 = vmatpush1.msra.mxu0 %v263
  %476 = vmatprep.subr.mxu0 %v280
  %477 = vmatpush1.msra.mxu0 %v279
  %478 = vmatprep.subr.mxu0 %v296
  %479 = vmatpush1.msra.mxu0 %v295
  %480 = vmatprep.subr.mxu0 %v312
  %481 = vmatpush1.msra.mxu0 %v311
  %482 = vmatprep.subr.mxu0 %v328
  %483 = vmatpush1.msra.mxu0 %v327
  %484 = vmatprep.subr.mxu0 %v344
  %485 = vmatpush1.msra.mxu0 %v343
  %486 = vmatprep.subr.mxu0 %v360
  %487 = vmatpush1.msra.mxu0 %v359
  %488 = vmatprep.subr.mxu0 %v376
  %489 = vmatpush1.msra.mxu0 %v375
  %490 = vmatprep.subr.mxu0 %v392
  %491 = vmatpush1.msra.mxu0 %v391
  %492 = vmatprep.subr.mxu0 %v408
  %493 = vmatpush1.msra.mxu0 %v407
  %494 = vmatprep.subr.mxu0 %v424
  %495 = vmatpush1.msra.mxu0 %v423
  %496 = vmatprep.subr.mxu0 %v440
  %497 = vmatpush1.msra.mxu0 %v439
  %498 = vmatprep.subr.mxu0 0.0
  %499 = vmatpush1.msra.mxu0 0.0
  %500 = vmatprep.subr.mxu0 0.0
  %501 = vmatpush1.msra.mxu0 0.0
  %502 = vmatprep.subr.mxu0 0.0
  %503 = vmatpush1.msra.mxu0 0.0
  %504 = vmatprep.subr.mxu0 0.0
  %505 = vmatpush1.msra.mxu0 0.0
  %506 = vmatprep.subr.mxu0 0.0
  %507 = vmatpush1.msra.mxu0 0.0
  %508 = vmatprep.subr.mxu0 0.0
  %509 = vmatpush1.msra.mxu0 0.0
  %510 = vmatprep.subr.mxu0 0.0
  %511 = vmatpush1.msra.mxu0 0.0
  %512 = vmatprep.subr.mxu0 0.0
  %513 = vmatpush1.msra.mxu0 0.0
  %514 = vmatprep.subr.mxu0 0.0
  %515 = vmatpush1.msra.mxu0 0.0
  %516 = vmatprep.subr.mxu0 0.0
  %517 = vmatpush1.msra.mxu0 0.0
  %518 = vmatprep.subr.mxu0 0.0
  %519 = vmatpush1.msra.mxu0 0.0
  %520 = vmatprep.subr.mxu0 0.0
  %521 = vmatpush1.msra.mxu0 0.0
  %522 = vmatprep.subr.mxu0 0.0
  %523 = vmatpush1.msra.mxu0 0.0
  %524 = vmatprep.subr.mxu0 0.0
  %525 = vmatpush1.msra.mxu0 0.0
  %526 = vmatprep.mubr.f32.mxu0 %v457
  %527 = vmatmul.mubr.f32.gmra.mrb[0].mxu0 %v19
  %v528 = vpop.f32.mrb[0].mxu0
  %v529 = vadd.f32 0.0, %v528
  %v530 = vpop.f32.mrb[0].mxu0
  %v531 = vadd.f32 0.0, %v530
  %532 = vmatprep.mubr.f32.mxu0 %v460
  %533 = vmatmul.mubr.f32.gmra.mrb[0].mxu0 %v21
  %v534 = vpop.f32.mrb[0].mxu0
  %v535 = vadd.f32 0.0, %v534
  %v536 = vpop.f32.mrb[0].mxu0
  %v537 = vadd.f32 0.0, %v536
  %538 = vdwg.mxu0
  %539 = vmatprep.subr.mxu0 %v170
  %540 = vmatpush1.msra.mxu0 %v169
  %541 = vmatprep.subr.mxu0 %v186
  %542 = vmatpush1.msra.mxu0 %v185
  %543 = vmatprep.subr.mxu0 %v202
  %544 = vmatpush1.msra.mxu0 %v201
  %545 = vmatprep.subr.mxu0 %v218
  %546 = vmatpush1.msra.mxu0 %v217
  %547 = vmatprep.subr.mxu0 %v234
  %548 = vmatpush1.msra.mxu0 %v233
  %549 = vmatprep.subr.mxu0 %v250
  %550 = vmatpush1.msra.mxu0 %v249
  %551 = vmatprep.subr.mxu0 %v266
  %552 = vmatpush1.msra.mxu0 %v265
  %553 = vmatprep.subr.mxu0 %v282
  %554 = vmatpush1.msra.mxu0 %v281
  %555 = vmatprep.subr.mxu0 %v298
  %556 = vmatpush1.msra.mxu0 %v297
  %557 = vmatprep.subr.mxu0 %v314
  %558 = vmatpush1.msra.mxu0 %v313
  %559 = vmatprep.subr.mxu0 %v330
  %560 = vmatpush1.msra.mxu0 %v329
  %561 = vmatprep.subr.mxu0 %v346
  %562 = vmatpush1.msra.mxu0 %v345
  %563 = vmatprep.subr.mxu0 %v362
  %564 = vmatpush1.msra.mxu0 %v361
  %565 = vmatprep.subr.mxu0 %v378
  %566 = vmatpush1.msra.mxu0 %v377
  %567 = vmatprep.subr.mxu0 %v394
  %568 = vmatpush1.msra.mxu0 %v393
  %569 = vmatprep.subr.mxu0 %v410
  %570 = vmatpush1.msra.mxu0 %v409
  %571 = vmatprep.subr.mxu0 %v426
  %572 = vmatpush1.msra.mxu0 %v425
  %573 = vmatprep.subr.mxu0 %v442
  %574 = vmatpush1.msra.mxu0 %v441
  %575 = vmatprep.subr.mxu0 0.0
  %576 = vmatpush1.msra.mxu0 0.0
  %577 = vmatprep.subr.mxu0 0.0
  %578 = vmatpush1.msra.mxu0 0.0
  %579 = vmatprep.subr.mxu0 0.0
  %580 = vmatpush1.msra.mxu0 0.0
  %581 = vmatprep.subr.mxu0 0.0
  %582 = vmatpush1.msra.mxu0 0.0
  %583 = vmatprep.subr.mxu0 0.0
  %584 = vmatpush1.msra.mxu0 0.0
  %585 = vmatprep.subr.mxu0 0.0
  %586 = vmatpush1.msra.mxu0 0.0
  %587 = vmatprep.subr.mxu0 0.0
  %588 = vmatpush1.msra.mxu0 0.0
  %589 = vmatprep.subr.mxu0 0.0
  %590 = vmatpush1.msra.mxu0 0.0
  %591 = vmatprep.subr.mxu0 0.0
  %592 = vmatpush1.msra.mxu0 0.0
  %593 = vmatprep.subr.mxu0 0.0
  %594 = vmatpush1.msra.mxu0 0.0
  %595 = vmatprep.subr.mxu0 0.0
  %596 = vmatpush1.msra.mxu0 0.0
  %597 = vmatprep.subr.mxu0 0.0
  %598 = vmatpush1.msra.mxu0 0.0
  %599 = vmatprep.subr.mxu0 0.0
  %600 = vmatpush1.msra.mxu0 0.0
  %601 = vmatprep.subr.mxu0 0.0
  %602 = vmatpush1.msra.mxu0 0.0
  %603 = vmatprep.mubr.f32.mxu0 %v457
  %604 = vmatmul.mubr.f32.gmra.mrb[0].mxu0 %v19
  %v605 = vpop.f32.mrb[0].mxu0
  %v606 = vadd.f32 0.0, %v605
  %v607 = vpop.f32.mrb[0].mxu0
  %v608 = vadd.f32 0.0, %v607
  %609 = vmatprep.mubr.f32.mxu0 %v460
  %610 = vmatmul.mubr.f32.gmra.mrb[0].mxu0 %v21
  %v611 = vpop.f32.mrb[0].mxu0
  %v612 = vadd.f32 0.0, %v611
  %v613 = vpop.f32.mrb[0].mxu0
  %v614 = vadd.f32 0.0, %v613
  %615 = vdwg.mxu0
  %616 = vmatprep.subr.mxu0 %v172
  %617 = vmatpush1.msra.mxu0 %v171
  %618 = vmatprep.subr.mxu0 %v188
  %619 = vmatpush1.msra.mxu0 %v187
  %620 = vmatprep.subr.mxu0 %v204
  %621 = vmatpush1.msra.mxu0 %v203
  %622 = vmatprep.subr.mxu0 %v220
  %623 = vmatpush1.msra.mxu0 %v219
  %624 = vmatprep.subr.mxu0 %v236
  %625 = vmatpush1.msra.mxu0 %v235
  %626 = vmatprep.subr.mxu0 %v252
  %627 = vmatpush1.msra.mxu0 %v251
  %628 = vmatprep.subr.mxu0 %v268
  %629 = vmatpush1.msra.mxu0 %v267
  %630 = vmatprep.subr.mxu0 %v284
  %631 = vmatpush1.msra.mxu0 %v283
  %632 = vmatprep.subr.mxu0 %v300
  %633 = vmatpush1.msra.mxu0 %v299
  %634 = vmatprep.subr.mxu0 %v316
  %635 = vmatpush1.msra.mxu0 %v315
  %636 = vmatprep.subr.mxu0 %v332
  %637 = vmatpush1.msra.mxu0 %v331
  %638 = vmatprep.subr.mxu0 %v348
  %639 = vmatpush1.msra.mxu0 %v347
  %640 = vmatprep.subr.mxu0 %v364
  %641 = vmatpush1.msra.mxu0 %v363
  %642 = vmatprep.subr.mxu0 %v380
  %643 = vmatpush1.msra.mxu0 %v379
  %644 = vmatprep.subr.mxu0 %v396
  %645 = vmatpush1.msra.mxu0 %v395
  %646 = vmatprep.subr.mxu0 %v412
  %647 = vmatpush1.msra.mxu0 %v411
  %648 = vmatprep.subr.mxu0 %v428
  %649 = vmatpush1.msra.mxu0 %v427
  %650 = vmatprep.subr.mxu0 %v444
  %651 = vmatpush1.msra.mxu0 %v443
  %652 = vmatprep.subr.mxu0 0.0
  %653 = vmatpush1.msra.mxu0 0.0
  %654 = vmatprep.subr.mxu0 0.0
  %655 = vmatpush1.msra.mxu0 0.0
  %656 = vmatprep.subr.mxu0 0.0
  %657 = vmatpush1.msra.mxu0 0.0
  %658 = vmatprep.subr.mxu0 0.0
  %659 = vmatpush1.msra.mxu0 0.0
  %660 = vmatprep.subr.mxu0 0.0
  %661 = vmatpush1.msra.mxu0 0.0
  %662 = vmatprep.subr.mxu0 0.0
  %663 = vmatpush1.msra.mxu0 0.0
  %664 = vmatprep.subr.mxu0 0.0
  %665 = vmatpush1.msra.mxu0 0.0
  %666 = vmatprep.subr.mxu0 0.0
  %667 = vmatpush1.msra.mxu0 0.0
  %668 = vmatprep.subr.mxu0 0.0
  %669 = vmatpush1.msra.mxu0 0.0
  %670 = vmatprep.subr.mxu0 0.0
  %671 = vmatpush1.msra.mxu0 0.0
  %672 = vmatprep.subr.mxu0 0.0
  %673 = vmatpush1.msra.mxu0 0.0
  %674 = vmatprep.subr.mxu0 0.0
  %675 = vmatpush1.msra.mxu0 0.0
  %676 = vmatprep.subr.mxu0 0.0
  %677 = vmatpush1.msra.mxu0 0.0
  %678 = vmatprep.subr.mxu0 0.0
  %679 = vmatpush1.msra.mxu0 0.0
  %680 = vmatprep.mubr.f32.mxu0 %v457
  %681 = vmatmul.mubr.f32.gmra.mrb[0].mxu0 %v19
  %v682 = vpop.f32.mrb[0].mxu0
  %v683 = vadd.f32 0.0, %v682
  %v684 = vpop.f32.mrb[0].mxu0
  %v685 = vadd.f32 0.0, %v684
  %686 = vmatprep.mubr.f32.mxu0 %v460
  %687 = vmatmul.mubr.f32.gmra.mrb[0].mxu0 %v21
  %v688 = vpop.f32.mrb[0].mxu0
  %v689 = vadd.f32 0.0, %v688
  %v690 = vpop.f32.mrb[0].mxu0
  %v691 = vadd.f32 0.0, %v690
  %692 = vdwg.mxu0
  %693 = vmatprep.subr.mxu0 %v174
  %694 = vmatpush1.msra.mxu0 %v173
  %695 = vmatprep.subr.mxu0 %v190
  %696 = vmatpush1.msra.mxu0 %v189
  %697 = vmatprep.subr.mxu0 %v206
  %698 = vmatpush1.msra.mxu0 %v205
  %699 = vmatprep.subr.mxu0 %v222
  %700 = vmatpush1.msra.mxu0 %v221
  %701 = vmatprep.subr.mxu0 %v238
  %702 = vmatpush1.msra.mxu0 %v237
  %703 = vmatprep.subr.mxu0 %v254
  %704 = vmatpush1.msra.mxu0 %v253
  %705 = vmatprep.subr.mxu0 %v270
  %706 = vmatpush1.msra.mxu0 %v269
  %707 = vmatprep.subr.mxu0 %v286
  %708 = vmatpush1.msra.mxu0 %v285
  %709 = vmatprep.subr.mxu0 %v302
  %710 = vmatpush1.msra.mxu0 %v301
  %711 = vmatprep.subr.mxu0 %v318
  %712 = vmatpush1.msra.mxu0 %v317
  %713 = vmatprep.subr.mxu0 %v334
  %714 = vmatpush1.msra.mxu0 %v333
  %715 = vmatprep.subr.mxu0 %v350
  %716 = vmatpush1.msra.mxu0 %v349
  %717 = vmatprep.subr.mxu0 %v366
  %718 = vmatpush1.msra.mxu0 %v365
  %719 = vmatprep.subr.mxu0 %v382
  %720 = vmatpush1.msra.mxu0 %v381
  %721 = vmatprep.subr.mxu0 %v398
  %722 = vmatpush1.msra.mxu0 %v397
  %723 = vmatprep.subr.mxu0 %v414
  %724 = vmatpush1.msra.mxu0 %v413
  %725 = vmatprep.subr.mxu0 %v430
  %726 = vmatpush1.msra.mxu0 %v429
  %727 = vmatprep.subr.mxu0 %v446
  %728 = vmatpush1.msra.mxu0 %v445
  %729 = vmatprep.subr.mxu0 0.0
  %730 = vmatpush1.msra.mxu0 0.0
  %731 = vmatprep.subr.mxu0 0.0
  %732 = vmatpush1.msra.mxu0 0.0
  %733 = vmatprep.subr.mxu0 0.0
  %734 = vmatpush1.msra.mxu0 0.0
  %735 = vmatprep.subr.mxu0 0.0
  %736 = vmatpush1.msra.mxu0 0.0
  %737 = vmatprep.subr.mxu0 0.0
  %738 = vmatpush1.msra.mxu0 0.0
  %739 = vmatprep.subr.mxu0 0.0
  %740 = vmatpush1.msra.mxu0 0.0
  %741 = vmatprep.subr.mxu0 0.0
  %742 = vmatpush1.msra.mxu0 0.0
  %743 = vmatprep.subr.mxu0 0.0
  %744 = vmatpush1.msra.mxu0 0.0
  %745 = vmatprep.subr.mxu0 0.0
  %746 = vmatpush1.msra.mxu0 0.0
  %747 = vmatprep.subr.mxu0 0.0
  %748 = vmatpush1.msra.mxu0 0.0
  %749 = vmatprep.subr.mxu0 0.0
  %750 = vmatpush1.msra.mxu0 0.0
  %751 = vmatprep.subr.mxu0 0.0
  %752 = vmatpush1.msra.mxu0 0.0
  %753 = vmatprep.subr.mxu0 0.0
  %754 = vmatpush1.msra.mxu0 0.0
  %755 = vmatprep.subr.mxu0 0.0
  %756 = vmatpush1.msra.mxu0 0.0
  %757 = vmatprep.mubr.f32.mxu0 %v457
  %758 = vmatmul.mubr.f32.gmra.mrb[0].mxu0 %v19
  %v759 = vpop.f32.mrb[0].mxu0
  %v760 = vadd.f32 0.0, %v759
  %v761 = vpop.f32.mrb[0].mxu0
  %v762 = vadd.f32 0.0, %v761
  %763 = vmatprep.mubr.f32.mxu0 %v460
  %764 = vmatmul.mubr.f32.gmra.mrb[0].mxu0 %v21
  %v765 = vpop.f32.mrb[0].mxu0
  %v766 = vadd.f32 0.0, %v765
  %v767 = vpop.f32.mrb[0].mxu0
  %v768 = vadd.f32 0.0, %v767
  %769 = vdwg.mxu0
  %770 = vmatprep.subr.mxu0 %v176
  %771 = vmatpush1.msra.mxu0 %v175
  %772 = vmatprep.subr.mxu0 %v192
  %773 = vmatpush1.msra.mxu0 %v191
  %774 = vmatprep.subr.mxu0 %v208
  %775 = vmatpush1.msra.mxu0 %v207
  %776 = vmatprep.subr.mxu0 %v224
  %777 = vmatpush1.msra.mxu0 %v223
  %778 = vmatprep.subr.mxu0 %v240
  %779 = vmatpush1.msra.mxu0 %v239
  %780 = vmatprep.subr.mxu0 %v256
  %781 = vmatpush1.msra.mxu0 %v255
  %782 = vmatprep.subr.mxu0 %v272
  %783 = vmatpush1.msra.mxu0 %v271
  %784 = vmatprep.subr.mxu0 %v288
  %785 = vmatpush1.msra.mxu0 %v287
  %786 = vmatprep.subr.mxu0 %v304
  %787 = vmatpush1.msra.mxu0 %v303
  %788 = vmatprep.subr.mxu0 %v320
  %789 = vmatpush1.msra.mxu0 %v319
  %790 = vmatprep.subr.mxu0 %v336
  %791 = vmatpush1.msra.mxu0 %v335
  %792 = vmatprep.subr.mxu0 %v352
  %793 = vmatpush1.msra.mxu0 %v351
  %794 = vmatprep.subr.mxu0 %v368
  %795 = vmatpush1.msra.mxu0 %v367
  %796 = vmatprep.subr.mxu0 %v384
  %797 = vmatpush1.msra.mxu0 %v383
  %798 = vmatprep.subr.mxu0 %v400
  %799 = vmatpush1.msra.mxu0 %v399
  %800 = vmatprep.subr.mxu0 %v416
  %801 = vmatpush1.msra.mxu0 %v415
  %802 = vmatprep.subr.mxu0 %v432
  %803 = vmatpush1.msra.mxu0 %v431
  %804 = vmatprep.subr.mxu0 %v448
  %805 = vmatpush1.msra.mxu0 %v447
  %806 = vmatprep.subr.mxu0 0.0
  %807 = vmatpush1.msra.mxu0 0.0
  %808 = vmatprep.subr.mxu0 0.0
  %809 = vmatpush1.msra.mxu0 0.0
  %810 = vmatprep.subr.mxu0 0.0
  %811 = vmatpush1.msra.mxu0 0.0
  %812 = vmatprep.subr.mxu0 0.0
  %813 = vmatpush1.msra.mxu0 0.0
  %814 = vmatprep.subr.mxu0 0.0
  %815 = vmatpush1.msra.mxu0 0.0
  %816 = vmatprep.subr.mxu0 0.0
  %817 = vmatpush1.msra.mxu0 0.0
  %818 = vmatprep.subr.mxu0 0.0
  %819 = vmatpush1.msra.mxu0 0.0
  %820 = vmatprep.subr.mxu0 0.0
  %821 = vmatpush1.msra.mxu0 0.0
  %822 = vmatprep.subr.mxu0 0.0
  %823 = vmatpush1.msra.mxu0 0.0
  %824 = vmatprep.subr.mxu0 0.0
  %825 = vmatpush1.msra.mxu0 0.0
  %826 = vmatprep.subr.mxu0 0.0
  %827 = vmatpush1.msra.mxu0 0.0
  %828 = vmatprep.subr.mxu0 0.0
  %829 = vmatpush1.msra.mxu0 0.0
  %830 = vmatprep.subr.mxu0 0.0
  %831 = vmatpush1.msra.mxu0 0.0
  %832 = vmatprep.subr.mxu0 0.0
  %833 = vmatpush1.msra.mxu0 0.0
  %834 = vmatprep.mubr.f32.mxu0 %v457
  %835 = vmatmul.mubr.f32.gmra.mrb[0].mxu0 %v19
  %v836 = vpop.f32.mrb[0].mxu0
  %v837 = vadd.f32 0.0, %v836
  %v838 = vpop.f32.mrb[0].mxu0
  %v839 = vadd.f32 0.0, %v838
  %840 = vmatprep.mubr.f32.mxu0 %v460
  %841 = vmatmul.mubr.f32.gmra.mrb[0].mxu0 %v21
  %v842 = vpop.f32.mrb[0].mxu0
  %v843 = vadd.f32 0.0, %v842
  %v844 = vpop.f32.mrb[0].mxu0
  %v845 = vadd.f32 0.0, %v844
  %846 = vdwg.mxu0
  %847 = vmatprep.subr.mxu0 %v178
  %848 = vmatpush1.msra.mxu0 %v177
  %849 = vmatprep.subr.mxu0 %v194
  %850 = vmatpush1.msra.mxu0 %v193
  %851 = vmatprep.subr.mxu0 %v210
  %852 = vmatpush1.msra.mxu0 %v209
  %853 = vmatprep.subr.mxu0 %v226
  %854 = vmatpush1.msra.mxu0 %v225
  %855 = vmatprep.subr.mxu0 %v242
  %856 = vmatpush1.msra.mxu0 %v241
  %857 = vmatprep.subr.mxu0 %v258
  %858 = vmatpush1.msra.mxu0 %v257
  %859 = vmatprep.subr.mxu0 %v274
  %860 = vmatpush1.msra.mxu0 %v273
  %861 = vmatprep.subr.mxu0 %v290
  %862 = vmatpush1.msra.mxu0 %v289
  %863 = vmatprep.subr.mxu0 %v306
  %864 = vmatpush1.msra.mxu0 %v305
  %865 = vmatprep.subr.mxu0 %v322
  %866 = vmatpush1.msra.mxu0 %v321
  %867 = vmatprep.subr.mxu0 %v338
  %868 = vmatpush1.msra.mxu0 %v337
  %869 = vmatprep.subr.mxu0 %v354
  %870 = vmatpush1.msra.mxu0 %v353
  %871 = vmatprep.subr.mxu0 %v370
  %872 = vmatpush1.msra.mxu0 %v369
  %873 = vmatprep.subr.mxu0 %v386
  %874 = vmatpush1.msra.mxu0 %v385
  %875 = vmatprep.subr.mxu0 %v402
  %876 = vmatpush1.msra.mxu0 %v401
  %877 = vmatprep.subr.mxu0 %v418
  %878 = vmatpush1.msra.mxu0 %v417
  %879 = vmatprep.subr.mxu0 %v434
  %880 = vmatpush1.msra.mxu0 %v433
  %881 = vmatprep.subr.mxu0 %v450
  %882 = vmatpush1.msra.mxu0 %v449
  %883 = vmatprep.subr.mxu0 0.0
  %884 = vmatpush1.msra.mxu0 0.0
  %885 = vmatprep.subr.mxu0 0.0
  %886 = vmatpush1.msra.mxu0 0.0
  %887 = vmatprep.subr.mxu0 0.0
  %888 = vmatpush1.msra.mxu0 0.0
  %889 = vmatprep.subr.mxu0 0.0
  %890 = vmatpush1.msra.mxu0 0.0
  %891 = vmatprep.subr.mxu0 0.0
  %892 = vmatpush1.msra.mxu0 0.0
  %893 = vmatprep.subr.mxu0 0.0
  %894 = vmatpush1.msra.mxu0 0.0
  %895 = vmatprep.subr.mxu0 0.0
  %896 = vmatpush1.msra.mxu0 0.0
  %897 = vmatprep.subr.mxu0 0.0
  %898 = vmatpush1.msra.mxu0 0.0
  %899 = vmatprep.subr.mxu0 0.0
  %900 = vmatpush1.msra.mxu0 0.0
  %901 = vmatprep.subr.mxu0 0.0
  %902 = vmatpush1.msra.mxu0 0.0
  %903 = vmatprep.subr.mxu0 0.0
  %904 = vmatpush1.msra.mxu0 0.0
  %905 = vmatprep.subr.mxu0 0.0
  %906 = vmatpush1.msra.mxu0 0.0
  %907 = vmatprep.subr.mxu0 0.0
  %908 = vmatpush1.msra.mxu0 0.0
  %909 = vmatprep.subr.mxu0 0.0
  %910 = vmatpush1.msra.mxu0 0.0
  %911 = vmatprep.mubr.f32.mxu0 %v457
  %912 = vmatmul.mubr.f32.gmra.mrb[0].mxu0 %v19
  %v913 = vpop.f32.mrb[0].mxu0
  %v914 = vadd.f32 0.0, %v913
  %v915 = vpop.f32.mrb[0].mxu0
  %v916 = vadd.f32 0.0, %v915
  %917 = vmatprep.mubr.f32.mxu0 %v460
  %918 = vmatmul.mubr.f32.gmra.mrb[0].mxu0 %v21
  %v919 = vpop.f32.mrb[0].mxu0
  %v920 = vadd.f32 0.0, %v919
  %v921 = vpop.f32.mrb[0].mxu0
  %v922 = vadd.f32 0.0, %v921
  %923 = vdwg.mxu0
  %924 = vmatprep.subr.mxu0 %v180
  %925 = vmatpush1.msra.mxu0 %v179
  %926 = vmatprep.subr.mxu0 %v196
  %927 = vmatpush1.msra.mxu0 %v195
  %928 = vmatprep.subr.mxu0 %v212
  %929 = vmatpush1.msra.mxu0 %v211
  %930 = vmatprep.subr.mxu0 %v228
  %931 = vmatpush1.msra.mxu0 %v227
  %932 = vmatprep.subr.mxu0 %v244
  %933 = vmatpush1.msra.mxu0 %v243
  %934 = vmatprep.subr.mxu0 %v260
  %935 = vmatpush1.msra.mxu0 %v259
  %936 = vmatprep.subr.mxu0 %v276
  %937 = vmatpush1.msra.mxu0 %v275
  %938 = vmatprep.subr.mxu0 %v292
  %939 = vmatpush1.msra.mxu0 %v291
  %940 = vmatprep.subr.mxu0 %v308
  %941 = vmatpush1.msra.mxu0 %v307
  %942 = vmatprep.subr.mxu0 %v324
  %943 = vmatpush1.msra.mxu0 %v323
  %944 = vmatprep.subr.mxu0 %v340
  %945 = vmatpush1.msra.mxu0 %v339
  %946 = vmatprep.subr.mxu0 %v356
  %947 = vmatpush1.msra.mxu0 %v355
  %948 = vmatprep.subr.mxu0 %v372
  %949 = vmatpush1.msra.mxu0 %v371
  %950 = vmatprep.subr.mxu0 %v388
  %951 = vmatpush1.msra.mxu0 %v387
  %952 = vmatprep.subr.mxu0 %v404
  %953 = vmatpush1.msra.mxu0 %v403
  %954 = vmatprep.subr.mxu0 %v420
  %955 = vmatpush1.msra.mxu0 %v419
  %956 = vmatprep.subr.mxu0 %v436
  %957 = vmatpush1.msra.mxu0 %v435
  %958 = vmatprep.subr.mxu0 %v452
  %959 = vmatpush1.msra.mxu0 %v451
  %960 = vmatprep.subr.mxu0 0.0
  %961 = vmatpush1.msra.mxu0 0.0
  %962 = vmatprep.subr.mxu0 0.0
  %963 = vmatpush1.msra.mxu0 0.0
  %964 = vmatprep.subr.mxu0 0.0
  %965 = vmatpush1.msra.mxu0 0.0
  %966 = vmatprep.subr.mxu0 0.0
  %967 = vmatpush1.msra.mxu0 0.0
  %968 = vmatprep.subr.mxu0 0.0
  %969 = vmatpush1.msra.mxu0 0.0
  %970 = vmatprep.subr.mxu0 0.0
  %971 = vmatpush1.msra.mxu0 0.0
  %972 = vmatprep.subr.mxu0 0.0
  %973 = vmatpush1.msra.mxu0 0.0
  %974 = vmatprep.subr.mxu0 0.0
  %975 = vmatpush1.msra.mxu0 0.0
  %976 = vmatprep.subr.mxu0 0.0
  %977 = vmatpush1.msra.mxu0 0.0
  %978 = vmatprep.subr.mxu0 0.0
  %979 = vmatpush1.msra.mxu0 0.0
  %980 = vmatprep.subr.mxu0 0.0
  %981 = vmatpush1.msra.mxu0 0.0
  %982 = vmatprep.subr.mxu0 0.0
  %983 = vmatpush1.msra.mxu0 0.0
  %984 = vmatprep.subr.mxu0 0.0
  %985 = vmatpush1.msra.mxu0 0.0
  %986 = vmatprep.subr.mxu0 0.0
  %987 = vmatpush1.msra.mxu0 0.0
  %988 = vmatprep.mubr.f32.mxu0 %v457
  %989 = vmatmul.mubr.f32.gmra.mrb[0].mxu0 %v19
  %v990 = vpop.f32.mrb[0].mxu0
  %v991 = vadd.f32 0.0, %v990
  %v992 = vpop.f32.mrb[0].mxu0
  %v993 = vadd.f32 0.0, %v992
  %994 = vmatprep.mubr.f32.mxu0 %v460
  %995 = vmatmul.mubr.f32.gmra.mrb[0].mxu0 %v21
  %v996 = vpop.f32.mrb[0].mxu0
  %v997 = vadd.f32 0.0, %v996
  %v998 = vpop.f32.mrb[0].mxu0
  %v999 = vadd.f32 0.0, %v998
  %1000 = vdwg.mxu0
  %1001 = vmatprep.subr.mxu0 %v182
  %1002 = vmatpush1.msra.mxu0 %v181
  %1003 = vmatprep.subr.mxu0 %v198
  %1004 = vmatpush1.msra.mxu0 %v197
  %1005 = vmatprep.subr.mxu0 %v214
  %1006 = vmatpush1.msra.mxu0 %v213
  %1007 = vmatprep.subr.mxu0 %v230
  %1008 = vmatpush1.msra.mxu0 %v229
  %1009 = vmatprep.subr.mxu0 %v246
  %1010 = vmatpush1.msra.mxu0 %v245
  %1011 = vmatprep.subr.mxu0 %v262
  %1012 = vmatpush1.msra.mxu0 %v261
  %1013 = vmatprep.subr.mxu0 %v278
  %1014 = vmatpush1.msra.mxu0 %v277
  %1015 = vmatprep.subr.mxu0 %v294
  %1016 = vmatpush1.msra.mxu0 %v293
  %1017 = vmatprep.subr.mxu0 %v310
  %1018 = vmatpush1.msra.mxu0 %v309
  %1019 = vmatprep.subr.mxu0 %v326
  %1020 = vmatpush1.msra.mxu0 %v325
  %1021 = vmatprep.subr.mxu0 %v342
  %1022 = vmatpush1.msra.mxu0 %v341
  %1023 = vmatprep.subr.mxu0 %v358
  %1024 = vmatpush1.msra.mxu0 %v357
  %1025 = vmatprep.subr.mxu0 %v374
  %1026 = vmatpush1.msra.mxu0 %v373
  %1027 = vmatprep.subr.mxu0 %v390
  %1028 = vmatpush1.msra.mxu0 %v389
  %1029 = vmatprep.subr.mxu0 %v406
  %1030 = vmatpush1.msra.mxu0 %v405
  %1031 = vmatprep.subr.mxu0 %v422
  %1032 = vmatpush1.msra.mxu0 %v421
  %1033 = vmatprep.subr.mxu0 %v438
  %1034 = vmatpush1.msra.mxu0 %v437
  %1035 = vmatprep.subr.mxu0 %v454
  %1036 = vmatpush1.msra.mxu0 %v453
  %1037 = vmatprep.subr.mxu0 0.0
  %1038 = vmatpush1.msra.mxu0 0.0
  %1039 = vmatprep.subr.mxu0 0.0
  %1040 = vmatpush1.msra.mxu0 0.0
  %1041 = vmatprep.subr.mxu0 0.0
  %1042 = vmatpush1.msra.mxu0 0.0
  %1043 = vmatprep.subr.mxu0 0.0
  %1044 = vmatpush1.msra.mxu0 0.0
  %1045 = vmatprep.subr.mxu0 0.0
  %1046 = vmatpush1.msra.mxu0 0.0
  %1047 = vmatprep.subr.mxu0 0.0
  %1048 = vmatpush1.msra.mxu0 0.0
  %1049 = vmatprep.subr.mxu0 0.0
  %1050 = vmatpush1.msra.mxu0 0.0
  %1051 = vmatprep.subr.mxu0 0.0
  %1052 = vmatpush1.msra.mxu0 0.0
  %1053 = vmatprep.subr.mxu0 0.0
  %1054 = vmatpush1.msra.mxu0 0.0
  %1055 = vmatprep.subr.mxu0 0.0
  %1056 = vmatpush1.msra.mxu0 0.0
  %1057 = vmatprep.subr.mxu0 0.0
  %1058 = vmatpush1.msra.mxu0 0.0
  %1059 = vmatprep.subr.mxu0 0.0
  %1060 = vmatpush1.msra.mxu0 0.0
  %1061 = vmatprep.subr.mxu0 0.0
  %1062 = vmatpush1.msra.mxu0 0.0
  %1063 = vmatprep.subr.mxu0 0.0
  %1064 = vmatpush1.msra.mxu0 0.0
  %1065 = vmatprep.mubr.f32.mxu0 %v457
  %1066 = vmatmul.mubr.f32.gmra.mrb[0].mxu0 %v19
  %v1067 = vpop.f32.mrb[0].mxu0
  %v1068 = vadd.f32 0.0, %v1067
  %v1069 = vpop.f32.mrb[0].mxu0
  %v1070 = vadd.f32 0.0, %v1069
  %1071 = vmatprep.mubr.f32.mxu0 %v460
  %1072 = vmatmul.mubr.f32.gmra.mrb[0].mxu0 %v21
  %v1073 = vpop.f32.mrb[0].mxu0
  %v1074 = vadd.f32 0.0, %v1073
  %v1075 = vpop.f32.mrb[0].mxu0
  %v1076 = vadd.f32 0.0, %v1075
  %1077 = vdwg.mxu0
  %v1078 = vld [vmem:[%s2] sm:$0xff]
  %v1079 = vld [vmem:[%s2 + $0x8] sm:$0xff]
  %v1080 = vld [vmem:[%s3] sm:$0xff]
  %v1081 = vld [vmem:[%s3 + $0x8] sm:$0xff]
  %v1082 = vadd.f32 %v529, %v531
  %v1083 = vadd.f32 %v1082, %v606
  %v1084 = vadd.f32 %v1083, %v608
  %v1085 = vadd.f32 %v1084, %v683
  %v1086 = vadd.f32 %v1085, %v685
  %v1087 = vadd.f32 %v1086, %v760
  %v1088 = vadd.f32 %v1087, %v762
  %v1089 = vadd.f32 %v1088, %v837
  %v1090 = vadd.f32 %v1089, %v839
  %v1091 = vadd.f32 %v1090, %v914
  %v1092 = vadd.f32 %v1091, %v916
  %v1093 = vadd.f32 %v1092, %v991
  %v1094 = vadd.f32 %v1093, %v993
  %v1095 = vadd.f32 %v1094, %v1068
  %v1096 = vadd.f32 %v1095, %v1070
  %1097 = vadd.xlane.f32.xlu0 %v1096
  %v1098 = vpop.xlane.xlu0 %1097
  %v1099 = vadd.f32 %v535, %v537
  %v1100 = vadd.f32 %v1099, %v612
  %v1101 = vadd.f32 %v1100, %v614
  %v1102 = vadd.f32 %v1101, %v689
  %v1103 = vadd.f32 %v1102, %v691
  %v1104 = vadd.f32 %v1103, %v766
  %v1105 = vadd.f32 %v1104, %v768
  %v1106 = vadd.f32 %v1105, %v843
  %v1107 = vadd.f32 %v1106, %v845
  %v1108 = vadd.f32 %v1107, %v920
  %v1109 = vadd.f32 %v1108, %v922
  %v1110 = vadd.f32 %v1109, %v997
  %v1111 = vadd.f32 %v1110, %v999
  %v1112 = vadd.f32 %v1111, %v1074
  %v1113 = vadd.f32 %v1112, %v1076
  %1114 = vadd.xlane.f32.xlu0 %v1113
  %v1115 = vpop.xlane.xlu0 %1114
  %v1116 = vrcp.pop 2048.0
  %v1117 = vmul.f32 %v1098, %v1116
  %v1118 = vmul.f32 %v1115, %v1116
  %v1119 = vsub.f32 %v529, %v1117
  %v1120 = vsub.f32 %v531, %v1117
  %v1121 = vsub.f32 %v606, %v1117
  %v1122 = vsub.f32 %v608, %v1117
  %v1123 = vsub.f32 %v683, %v1117
  %v1124 = vsub.f32 %v685, %v1117
  %v1125 = vsub.f32 %v760, %v1117
  %v1126 = vsub.f32 %v762, %v1117
  %v1127 = vsub.f32 %v837, %v1117
  %v1128 = vsub.f32 %v839, %v1117
  %v1129 = vsub.f32 %v914, %v1117
  %v1130 = vsub.f32 %v916, %v1117
  %v1131 = vsub.f32 %v991, %v1117
  %v1132 = vsub.f32 %v993, %v1117
  %v1133 = vsub.f32 %v1068, %v1117
  %v1134 = vsub.f32 %v1070, %v1117
  %v1135 = vsub.f32 %v535, %v1118
  %v1136 = vsub.f32 %v537, %v1118
  %v1137 = vsub.f32 %v612, %v1118
  %v1138 = vsub.f32 %v614, %v1118
  %v1139 = vsub.f32 %v689, %v1118
  %v1140 = vsub.f32 %v691, %v1118
  %v1141 = vsub.f32 %v766, %v1118
  %v1142 = vsub.f32 %v768, %v1118
  %v1143 = vsub.f32 %v843, %v1118
  %v1144 = vsub.f32 %v845, %v1118
  %v1145 = vsub.f32 %v920, %v1118
  %v1146 = vsub.f32 %v922, %v1118
  %v1147 = vsub.f32 %v997, %v1118
  %v1148 = vsub.f32 %v999, %v1118
  %v1149 = vsub.f32 %v1074, %v1118
  %v1150 = vsub.f32 %v1076, %v1118
  %v1151 = vmul.f32 %v1119, %v1119
  %v1152 = vmul.f32 %v1120, %v1120
  %v1153 = vmul.f32 %v1121, %v1121
  %v1154 = vmul.f32 %v1122, %v1122
  %v1155 = vmul.f32 %v1123, %v1123
  %v1156 = vmul.f32 %v1124, %v1124
  %v1157 = vmul.f32 %v1125, %v1125
  %v1158 = vmul.f32 %v1126, %v1126
  %v1159 = vmul.f32 %v1127, %v1127
  %v1160 = vmul.f32 %v1128, %v1128
  %v1161 = vmul.f32 %v1129, %v1129
  %v1162 = vmul.f32 %v1130, %v1130
  %v1163 = vmul.f32 %v1131, %v1131
  %v1164 = vmul.f32 %v1132, %v1132
  %v1165 = vmul.f32 %v1133, %v1133
  %v1166 = vmul.f32 %v1134, %v1134
  %v1167 = vmul.f32 %v1135, %v1135
  %v1168 = vmul.f32 %v1136, %v1136
  %v1169 = vmul.f32 %v1137, %v1137
  %v1170 = vmul.f32 %v1138, %v1138
  %v1171 = vmul.f32 %v1139, %v1139
  %v1172 = vmul.f32 %v1140, %v1140
  %v1173 = vmul.f32 %v1141, %v1141
  %v1174 = vmul.f32 %v1142, %v1142
  %v1175 = vmul.f32 %v1143, %v1143
  %v1176 = vmul.f32 %v1144, %v1144
  %v1177 = vmul.f32 %v1145, %v1145
  %v1178 = vmul.f32 %v1146, %v1146
  %v1179 = vmul.f32 %v1147, %v1147
  %v1180 = vmul.f32 %v1148, %v1148
  %v1181 = vmul.f32 %v1149, %v1149
  %v1182 = vmul.f32 %v1150, %v1150
  %v1183 = vadd.f32 %v1151, %v1152
  %v1184 = vadd.f32 %v1183, %v1153
  %v1185 = vadd.f32 %v1184, %v1154
  %v1186 = vadd.f32 %v1185, %v1155
  %v1187 = vadd.f32 %v1186, %v1156
  %v1188 = vadd.f32 %v1187, %v1157
  %v1189 = vadd.f32 %v1188, %v1158
  %v1190 = vadd.f32 %v1189, %v1159
  %v1191 = vadd.f32 %v1190, %v1160
  %v1192 = vadd.f32 %v1191, %v1161
  %v1193 = vadd.f32 %v1192, %v1162
  %v1194 = vadd.f32 %v1193, %v1163
  %v1195 = vadd.f32 %v1194, %v1164
  %v1196 = vadd.f32 %v1195, %v1165
  %v1197 = vadd.f32 %v1196, %v1166
  %1198 = vadd.xlane.f32.xlu0 %v1197
  %v1199 = vpop.xlane.xlu0 %1198
  %v1200 = vadd.f32 %v1167, %v1168
  %v1201 = vadd.f32 %v1200, %v1169
  %v1202 = vadd.f32 %v1201, %v1170
  %v1203 = vadd.f32 %v1202, %v1171
  %v1204 = vadd.f32 %v1203, %v1172
  %v1205 = vadd.f32 %v1204, %v1173
  %v1206 = vadd.f32 %v1205, %v1174
  %v1207 = vadd.f32 %v1206, %v1175
  %v1208 = vadd.f32 %v1207, %v1176
  %v1209 = vadd.f32 %v1208, %v1177
  %v1210 = vadd.f32 %v1209, %v1178
  %v1211 = vadd.f32 %v1210, %v1179
  %v1212 = vadd.f32 %v1211, %v1180
  %v1213 = vadd.f32 %v1212, %v1181
  %v1214 = vadd.f32 %v1213, %v1182
  %1215 = vadd.xlane.f32.xlu0 %v1214
  %v1216 = vpop.xlane.xlu0 %1215
  %v1217 = vmul.f32 %v1199, %v1116
  %v1218 = vmul.f32 %v1216, %v1116
  %v1219 = vadd.f32 %v1217, 1e-05
  %v1220 = vadd.f32 %v1218, 1e-05
  %v1221 = vrsqrt.pop %v1219
  %v1222 = vrsqrt.pop %v1220
  %v1223 = vmul.f32 %v1119, %v1221
  %v1224 = vmul.f32 %v1120, %v1221
  %v1225 = vmul.f32 %v1121, %v1221
  %v1226 = vmul.f32 %v1122, %v1221
  %v1227 = vmul.f32 %v1123, %v1221
  %v1228 = vmul.f32 %v1124, %v1221
  %v1229 = vmul.f32 %v1125, %v1221
  %v1230 = vmul.f32 %v1126, %v1221
  %v1231 = vmul.f32 %v1127, %v1221
  %v1232 = vmul.f32 %v1128, %v1221
  %v1233 = vmul.f32 %v1129, %v1221
  %v1234 = vmul.f32 %v1130, %v1221
  %v1235 = vmul.f32 %v1131, %v1221
  %v1236 = vmul.f32 %v1132, %v1221
  %v1237 = vmul.f32 %v1133, %v1221
  %v1238 = vmul.f32 %v1134, %v1221
  %v1239 = vmul.f32 %v1135, %v1222
  %v1240 = vmul.f32 %v1136, %v1222
  %v1241 = vmul.f32 %v1137, %v1222
  %v1242 = vmul.f32 %v1138, %v1222
  %v1243 = vmul.f32 %v1139, %v1222
  %v1244 = vmul.f32 %v1140, %v1222
  %v1245 = vmul.f32 %v1141, %v1222
  %v1246 = vmul.f32 %v1142, %v1222
  %v1247 = vmul.f32 %v1143, %v1222
  %v1248 = vmul.f32 %v1144, %v1222
  %v1249 = vmul.f32 %v1145, %v1222
  %v1250 = vmul.f32 %v1146, %v1222
  %v1251 = vmul.f32 %v1147, %v1222
  %v1252 = vmul.f32 %v1148, %v1222
  %v1253 = vmul.f32 %v1149, %v1222
  %v1254 = vmul.f32 %v1150, %v1222
  %1256 = vset.pattern.permute.xlu0 0
  %1257 = vperm.xlu0 %1256, %v1078
  %v1258 = vpop.permute.xlu0 %1257
  %1261 = vset.pattern.permute.xlu0 0
  %1262 = vperm.xlu0 %1261, %v1079
  %v1263 = vpop.permute.xlu0 %1262
  %v1265 = vmul.f32 %v1223, %v1258
  %v1266 = vmul.f32 %v1224, %v1258
  %v1267 = vmul.f32 %v1225, %v1258
  %v1268 = vmul.f32 %v1226, %v1258
  %v1269 = vmul.f32 %v1227, %v1258
  %v1270 = vmul.f32 %v1228, %v1258
  %v1271 = vmul.f32 %v1229, %v1258
  %v1272 = vmul.f32 %v1230, %v1258
  %v1273 = vmul.f32 %v1231, %v1258
  %v1274 = vmul.f32 %v1232, %v1258
  %v1275 = vmul.f32 %v1233, %v1258
  %v1276 = vmul.f32 %v1234, %v1258
  %v1277 = vmul.f32 %v1235, %v1258
  %v1278 = vmul.f32 %v1236, %v1258
  %v1279 = vmul.f32 %v1237, %v1258
  %v1280 = vmul.f32 %v1238, %v1258
  %v1281 = vmul.f32 %v1239, %v1263
  %v1282 = vmul.f32 %v1240, %v1263
  %v1283 = vmul.f32 %v1241, %v1263
  %v1284 = vmul.f32 %v1242, %v1263
  %v1285 = vmul.f32 %v1243, %v1263
  %v1286 = vmul.f32 %v1244, %v1263
  %v1287 = vmul.f32 %v1245, %v1263
  %v1288 = vmul.f32 %v1246, %v1263
  %v1289 = vmul.f32 %v1247, %v1263
  %v1290 = vmul.f32 %v1248, %v1263
  %v1291 = vmul.f32 %v1249, %v1263
  %v1292 = vmul.f32 %v1250, %v1263
  %v1293 = vmul.f32 %v1251, %v1263
  %v1294 = vmul.f32 %v1252, %v1263
  %v1295 = vmul.f32 %v1253, %v1263
  %v1296 = vmul.f32 %v1254, %v1263
  %1298 = vset.pattern.permute.xlu0 0
  %1299 = vperm.xlu0 %1298, %v1080
  %v1300 = vpop.permute.xlu0 %1299
  %1303 = vset.pattern.permute.xlu0 0
  %1304 = vperm.xlu0 %1303, %v1081
  %v1305 = vpop.permute.xlu0 %1304
  %v1307 = vadd.f32 %v1265, %v1300
  %v1308 = vadd.f32 %v1266, %v1300
  %v1309 = vadd.f32 %v1267, %v1300
  %v1310 = vadd.f32 %v1268, %v1300
  %v1311 = vadd.f32 %v1269, %v1300
  %v1312 = vadd.f32 %v1270, %v1300
  %v1313 = vadd.f32 %v1271, %v1300
  %v1314 = vadd.f32 %v1272, %v1300
  %v1315 = vadd.f32 %v1273, %v1300
  %v1316 = vadd.f32 %v1274, %v1300
  %v1317 = vadd.f32 %v1275, %v1300
  %v1318 = vadd.f32 %v1276, %v1300
  %v1319 = vadd.f32 %v1277, %v1300
  %v1320 = vadd.f32 %v1278, %v1300
  %v1321 = vadd.f32 %v1279, %v1300
  %v1322 = vadd.f32 %v1280, %v1300
  %v1323 = vadd.f32 %v1281, %v1305
  %v1324 = vadd.f32 %v1282, %v1305
  %v1325 = vadd.f32 %v1283, %v1305
  %v1326 = vadd.f32 %v1284, %v1305
  %v1327 = vadd.f32 %v1285, %v1305
  %v1328 = vadd.f32 %v1286, %v1305
  %v1329 = vadd.f32 %v1287, %v1305
  %v1330 = vadd.f32 %v1288, %v1305
  %v1331 = vadd.f32 %v1289, %v1305
  %v1332 = vadd.f32 %v1290, %v1305
  %v1333 = vadd.f32 %v1291, %v1305
  %v1334 = vadd.f32 %v1292, %v1305
  %v1335 = vadd.f32 %v1293, %v1305
  %v1336 = vadd.f32 %v1294, %v1305
  %v1337 = vadd.f32 %v1295, %v1305
  %v1338 = vadd.f32 %v1296, %v1305
  %v1339 = vmax.f32 %v1307, 0.0
  %v1340 = vmax.f32 %v1308, 0.0
  %v1341 = vmax.f32 %v1309, 0.0
  %v1342 = vmax.f32 %v1310, 0.0
  %v1343 = vmax.f32 %v1311, 0.0
  %v1344 = vmax.f32 %v1312, 0.0
  %v1345 = vmax.f32 %v1313, 0.0
  %v1346 = vmax.f32 %v1314, 0.0
  %v1347 = vmax.f32 %v1315, 0.0
  %v1348 = vmax.f32 %v1316, 0.0
  %v1349 = vmax.f32 %v1317, 0.0
  %v1350 = vmax.f32 %v1318, 0.0
  %v1351 = vmax.f32 %v1319, 0.0
  %v1352 = vmax.f32 %v1320, 0.0
  %v1353 = vmax.f32 %v1321, 0.0
  %v1354 = vmax.f32 %v1322, 0.0
  %v1355 = vmax.f32 %v1323, 0.0
  %v1356 = vmax.f32 %v1324, 0.0
  %v1357 = vmax.f32 %v1325, 0.0
  %v1358 = vmax.f32 %v1326, 0.0
  %v1359 = vmax.f32 %v1327, 0.0
  %v1360 = vmax.f32 %v1328, 0.0
  %v1361 = vmax.f32 %v1329, 0.0
  %v1362 = vmax.f32 %v1330, 0.0
  %v1363 = vmax.f32 %v1331, 0.0
  %v1364 = vmax.f32 %v1332, 0.0
  %v1365 = vmax.f32 %v1333, 0.0
  %v1366 = vmax.f32 %v1334, 0.0
  %v1367 = vmax.f32 %v1335, 0.0
  %v1368 = vmax.f32 %v1336, 0.0
  %v1369 = vmax.f32 %v1337, 0.0
  %v1370 = vmax.f32 %v1338, 0.0
  %1371 = vst [vmem:[%s4] sm:$0xff] %v1339
  %1372 = vst [vmem:[%s4 + $0x8] sm:$0xff] %v1340
  %1373 = vst [vmem:[%s4 + $0x10] sm:$0xff] %v1341
  %1374 = vst [vmem:[%s4 + $0x18] sm:$0xff] %v1342
  %1375 = vst [vmem:[%s4 + $0x20] sm:$0xff] %v1343
  %1376 = vst [vmem:[%s4 + $0x28] sm:$0xff] %v1344
  %1377 = vst [vmem:[%s4 + $0x30] sm:$0xff] %v1345
  %1378 = vst [vmem:[%s4 + $0x38] sm:$0xff] %v1346
  %1379 = vst [vmem:[%s4 + $0x40] sm:$0xff] %v1347
  %1380 = vst [vmem:[%s4 + $0x48] sm:$0xff] %v1348
  %1381 = vst [vmem:[%s4 + $0x50] sm:$0xff] %v1349
  %1382 = vst [vmem:[%s4 + $0x58] sm:$0xff] %v1350
  %1383 = vst [vmem:[%s4 + $0x60] sm:$0xff] %v1351
  %1384 = vst [vmem:[%s4 + $0x68] sm:$0xff] %v1352
  %1385 = vst [vmem:[%s4 + $0x70] sm:$0xff] %v1353
  %1386 = vst [vmem:[%s4 + $0x78] sm:$0xff] %v1354
  %1387 = vst [vmem:[%s4 + $0x80] sm:$0xff] %v1355
  %1388 = vst [vmem:[%s4 + $0x88] sm:$0xff] %v1356
  %1389 = vst [vmem:[%s4 + $0x90] sm:$0xff] %v1357
  %1390 = vst [vmem:[%s4 + $0x98] sm:$0xff] %v1358
  %1391 = vst [vmem:[%s4 + $0xa0] sm:$0xff] %v1359
  %1392 = vst [vmem:[%s4 + $0xa8] sm:$0xff] %v1360
  %1393 = vst [vmem:[%s4 + $0xb0] sm:$0xff] %v1361
  %1394 = vst [vmem:[%s4 + $0xb8] sm:$0xff] %v1362
  %1395 = vst [vmem:[%s4 + $0xc0] sm:$0xff] %v1363
  %1396 = vst [vmem:[%s4 + $0xc8] sm:$0xff] %v1364
  %1397 = vst [vmem:[%s4 + $0xd0] sm:$0xff] %v1365
  %1398 = vst [vmem:[%s4 + $0xd8] sm:$0xff] %v1366
  %1399 = vst [vmem:[%s4 + $0xe0] sm:$0xff] %v1367
  %1400 = vst [vmem:[%s4 + $0xe8] sm:$0xff] %v1368
  %1401 = vst [vmem:[%s4 + $0xf0] sm:$0xff] %v1369
  %1402 = vst [vmem:[%s4 + $0xf8] sm:$0xff] %v1370
  // Predicated region
  $region18: #{wide_resnet_forward.8} parent=0 // pred_check
    _
  $region19: #{wide_resnet_forward.8} parent=0 // pred_check_branch
    %1404 = sbr.rel (0) target = $region21
  $region20: #{wide_resnet_forward.8} parent=0 // pred_region
    _
  $region21: #{wide_resnet_forward.8} parent=0 // pred_fallthru
    _
  // Predicated region
  $region22: #{wide_resnet_forward.8} parent=0 // pred_check
    _
  $region23: #{wide_resnet_forward.8} parent=0 // pred_check_branch
    %1406 = sbr.rel (0) target = $region25
  $region24: #{wide_resnet_forward.8} parent=0 // pred_region
    _
  $region25: #{wide_resnet_forward.8} parent=0 // pred_fallthru
    _

// kernel: wide_resnet_forward.9
$region0: #{wide_resnet_forward.9}
  #allocation0 [shape = 'u32[]', space=smem, size = 0x4, offset = 0x4, fixed_abs, tag = 'smem constant byte address 0x4 - core index']
  #allocation1 [shape = 'u32[144,128]{1,0:T(1,128)}', space=vmem, size = 0x12000, scoped, tag = 'internal scratch']
  %s0 = inlined_call_operand.vmem [shape: bf16[16,144], index: 0, kind: input, shape index: {}]
  %s1 = inlined_call_operand.vmem [shape: bf16[144,2048], index: 1, kind: input, shape index: {}]
  %s2 = inlined_call_operand.vmem [shape: f32[16,2048], index: 2, kind: input, shape index: {}]
  %s3 = inlined_call_operand.vmem [shape: f32[16,1], index: 3, kind: input, shape index: {}]
  %s4 = inlined_call_operand.vmem [shape: f32[16,1], index: 4, kind: input, shape index: {}]
  %s5 = inlined_call_operand.vmem [shape: f32[16,2048], index: 5, kind: output, shape index: {}]
  %s6 = sld [smem:[#allocation0]]
  $region30: #{wide_resnet_forward.9} parent=0
    _
  %s8 = ssub.s32 1, %s6
  %s9 = scalar_select 0, %s8, %s6
  // Predicated region
  $region2: #{wide_resnet_forward.9} parent=0 // pred_check
    _
  $region3: #{wide_resnet_forward.9} parent=0 // pred_check_branch
    %11 = sbr.rel (0) target = $region5
  $region4: #{wide_resnet_forward.9} parent=0 // pred_region
    _
  $region5: #{wide_resnet_forward.9} parent=0 // pred_fallthru
    _
  // Predicated region
  $region6: #{wide_resnet_forward.9} parent=0 // pred_check
    _
  $region7: #{wide_resnet_forward.9} parent=0 // pred_check_branch
    %13 = sbr.rel (0) target = $region9
  $region8: #{wide_resnet_forward.9} parent=0 // pred_region
    _
  $region9: #{wide_resnet_forward.9} parent=0 // pred_fallthru
    _
  // Predicated region
  $region10: #{wide_resnet_forward.9} parent=0 // pred_check
    _
  $region11: #{wide_resnet_forward.9} parent=0 // pred_check_branch
    %15 = sbr.rel (0) target = $region13
  $region12: #{wide_resnet_forward.9} parent=0 // pred_region
    _
  $region13: #{wide_resnet_forward.9} parent=0 // pred_fallthru
    _
  // Predicated region
  $region14: #{wide_resnet_forward.9} parent=0 // pred_check
    _
  $region15: #{wide_resnet_forward.9} parent=0 // pred_check_branch
    %17 = sbr.rel (0) target = $region17
  $region16: #{wide_resnet_forward.9} parent=0 // pred_region
    _
  $region17: #{wide_resnet_forward.9} parent=0 // pred_fallthru
    _
  // Predicated region
  $region18: #{wide_resnet_forward.9} parent=0 // pred_check
    _
  $region19: #{wide_resnet_forward.9} parent=0 // pred_check_branch
    %19 = sbr.rel (0) target = $region21
  $region20: #{wide_resnet_forward.9} parent=0 // pred_region
    _
  $region21: #{wide_resnet_forward.9} parent=0 // pred_fallthru
    _
  %v20 = vld [vmem:[%s2] sm:$0xff]
  %v21 = vld [vmem:[%s2 + $0x8] sm:$0xff]
  %v22 = vld [vmem:[%s2 + $0x10] sm:$0xff]
  %v23 = vld [vmem:[%s2 + $0x18] sm:$0xff]
  %v24 = vld [vmem:[%s2 + $0x20] sm:$0xff]
  %v25 = vld [vmem:[%s2 + $0x28] sm:$0xff]
  %v26 = vld [vmem:[%s2 + $0x30] sm:$0xff]
  %v27 = vld [vmem:[%s2 + $0x38] sm:$0xff]
  %v28 = vld [vmem:[%s2 + $0x40] sm:$0xff]
  %v29 = vld [vmem:[%s2 + $0x48] sm:$0xff]
  %v30 = vld [vmem:[%s2 + $0x50] sm:$0xff]
  %v31 = vld [vmem:[%s2 + $0x58] sm:$0xff]
  %v32 = vld [vmem:[%s2 + $0x60] sm:$0xff]
  %v33 = vld [vmem:[%s2 + $0x68] sm:$0xff]
  %v34 = vld [vmem:[%s2 + $0x70] sm:$0xff]
  %v35 = vld [vmem:[%s2 + $0x78] sm:$0xff]
  %v36 = vld [vmem:[%s2 + $0x80] sm:$0xff]
  %v37 = vld [vmem:[%s2 + $0x88] sm:$0xff]
  %v38 = vld [vmem:[%s2 + $0x90] sm:$0xff]
  %v39 = vld [vmem:[%s2 + $0x98] sm:$0xff]
  %v40 = vld [vmem:[%s2 + $0xa0] sm:$0xff]
  %v41 = vld [vmem:[%s2 + $0xa8] sm:$0xff]
  %v42 = vld [vmem:[%s2 + $0xb0] sm:$0xff]
  %v43 = vld [vmem:[%s2 + $0xb8] sm:$0xff]
  %v44 = vld [vmem:[%s2 + $0xc0] sm:$0xff]
  %v45 = vld [vmem:[%s2 + $0xc8] sm:$0xff]
  %v46 = vld [vmem:[%s2 + $0xd0] sm:$0xff]
  %v47 = vld [vmem:[%s2 + $0xd8] sm:$0xff]
  %v48 = vld [vmem:[%s2 + $0xe0] sm:$0xff]
  %v49 = vld [vmem:[%s2 + $0xe8] sm:$0xff]
  %v50 = vld [vmem:[%s2 + $0xf0] sm:$0xff]
  %v51 = vld [vmem:[%s2 + $0xf8] sm:$0xff]
  %v52 = vld [vmem:[%s0] sm:$0xff]
  %v53 = vld [vmem:[%s0 + $0x8] sm:$0xff]
  %v54 = vunpack.c.l.bf16 %v52
  %v55 = vunpack.c.h.bf16 %v52
  %v56 = vunpack.c.l.bf16 %v53
  %v57 = vunpack.c.h.bf16 %v53
  %v58 = vld [vmem:[%s1] sm:$0xff]
  %v59 = vld [vmem:[%s1 + $0x8] sm:$0xff]
  %v60 = vld [vmem:[%s1 + $0x10] sm:$0xff]
  %v61 = vld [vmem:[%s1 + $0x18] sm:$0xff]
  %v62 = vld [vmem:[%s1 + $0x20] sm:$0xff]
  %v63 = vld [vmem:[%s1 + $0x28] sm:$0xff]
  %v64 = vld [vmem:[%s1 + $0x30] sm:$0xff]
  %v65 = vld [vmem:[%s1 + $0x38] sm:$0xff]
  %v66 = vld [vmem:[%s1 + $0x40] sm:$0xff]
  %v67 = vld [vmem:[%s1 + $0x48] sm:$0xff]
  %v68 = vld [vmem:[%s1 + $0x50] sm:$0xff]
  %v69 = vld [vmem:[%s1 + $0x58] sm:$0xff]
  %v70 = vld [vmem:[%s1 + $0x60] sm:$0xff]
  %v71 = vld [vmem:[%s1 + $0x68] sm:$0xff]
  %v72 = vld [vmem:[%s1 + $0x70] sm:$0xff]
  %v73 = vld [vmem:[%s1 + $0x78] sm:$0xff]
  %v74 = vld [vmem:[%s1 + $0x80] sm:$0xff]
  %v75 = vld [vmem:[%s1 + $0x88] sm:$0xff]
  %v76 = vld [vmem:[%s1 + $0x90] sm:$0xff]
  %v77 = vld [vmem:[%s1 + $0x98] sm:$0xff]
  %v78 = vld [vmem:[%s1 + $0xa0] sm:$0xff]
  %v79 = vld [vmem:[%s1 + $0xa8] sm:$0xff]
  %v80 = vld [vmem:[%s1 + $0xb0] sm:$0xff]
  %v81 = vld [vmem:[%s1 + $0xb8] sm:$0xff]
  %v82 = vld [vmem:[%s1 + $0xc0] sm:$0xff]
  %v83 = vld [vmem:[%s1 + $0xc8] sm:$0xff]
  %v84 = vld [vmem:[%s1 + $0xd0] sm:$0xff]
  %v85 = vld [vmem:[%s1 + $0xd8] sm:$0xff]
  %v86 = vld [vmem:[%s1 + $0xe0] sm:$0xff]
  %v87 = vld [vmem:[%s1 + $0xe8] sm:$0xff]
  %v88 = vld [vmem:[%s1 + $0xf0] sm:$0xff]
  %v89 = vld [vmem:[%s1 + $0xf8] sm:$0xff]
  %v90 = vld [vmem:[%s1 + $0x100] sm:$0xff]
  %v91 = vld [vmem:[%s1 + $0x108] sm:$0xff]
  %v92 = vld [vmem:[%s1 + $0x110] sm:$0xff]
  %v93 = vld [vmem:[%s1 + $0x118] sm:$0xff]
  %v94 = vld [vmem:[%s1 + $0x120] sm:$0xff]
  %v95 = vld [vmem:[%s1 + $0x128] sm:$0xff]
  %v96 = vld [vmem:[%s1 + $0x130] sm:$0xff]
  %v97 = vld [vmem:[%s1 + $0x138] sm:$0xff]
  %v98 = vld [vmem:[%s1 + $0x140] sm:$0xff]
  %v99 = vld [vmem:[%s1 + $0x148] sm:$0xff]
  %v100 = vld [vmem:[%s1 + $0x150] sm:$0xff]
  %v101 = vld [vmem:[%s1 + $0x158] sm:$0xff]
  %v102 = vld [vmem:[%s1 + $0x160] sm:$0xff]
  %v103 = vld [vmem:[%s1 + $0x168] sm:$0xff]
  %v104 = vld [vmem:[%s1 + $0x170] sm:$0xff]
  %v105 = vld [vmem:[%s1 + $0x178] sm:$0xff]
  %v106 = vld [vmem:[%s1 + $0x180] sm:$0xff]
  %v107 = vld [vmem:[%s1 + $0x188] sm:$0xff]
  %v108 = vld [vmem:[%s1 + $0x190] sm:$0xff]
  %v109 = vld [vmem:[%s1 + $0x198] sm:$0xff]
  %v110 = vld [vmem:[%s1 + $0x1a0] sm:$0xff]
  %v111 = vld [vmem:[%s1 + $0x1a8] sm:$0xff]
  %v112 = vld [vmem:[%s1 + $0x1b0] sm:$0xff]
  %v113 = vld [vmem:[%s1 + $0x1b8] sm:$0xff]
  %v114 = vld [vmem:[%s1 + $0x1c0] sm:$0xff]
  %v115 = vld [vmem:[%s1 + $0x1c8] sm:$0xff]
  %v116 = vld [vmem:[%s1 + $0x1d0] sm:$0xff]
  %v117 = vld [vmem:[%s1 + $0x1d8] sm:$0xff]
  %v118 = vld [vmem:[%s1 + $0x1e0] sm:$0xff]
  %v119 = vld [vmem:[%s1 + $0x1e8] sm:$0xff]
  %v120 = vld [vmem:[%s1 + $0x1f0] sm:$0xff]
  %v121 = vld [vmem:[%s1 + $0x1f8] sm:$0xff]
  %v122 = vld [vmem:[%s1 + $0x200] sm:$0xff]
  %v123 = vld [vmem:[%s1 + $0x208] sm:$0xff]
  %v124 = vld [vmem:[%s1 + $0x210] sm:$0xff]
  %v125 = vld [vmem:[%s1 + $0x218] sm:$0xff]
  %v126 = vld [vmem:[%s1 + $0x220] sm:$0xff]
  %v127 = vld [vmem:[%s1 + $0x228] sm:$0xff]
  %v128 = vld [vmem:[%s1 + $0x230] sm:$0xff]
  %v129 = vld [vmem:[%s1 + $0x238] sm:$0xff]
  %v130 = vld [vmem:[%s1 + $0x240] sm:$0xff]
  %v131 = vld [vmem:[%s1 + $0x248] sm:$0xff]
  %v132 = vld [vmem:[%s1 + $0x250] sm:$0xff]
  %v133 = vld [vmem:[%s1 + $0x258] sm:$0xff]
  %v134 = vld [vmem:[%s1 + $0x260] sm:$0xff]
  %v135 = vld [vmem:[%s1 + $0x268] sm:$0xff]
  %v136 = vld [vmem:[%s1 + $0x270] sm:$0xff]
  %v137 = vld [vmem:[%s1 + $0x278] sm:$0xff]
  %v138 = vld [vmem:[%s1 + $0x280] sm:$0xff]
  %v139 = vld [vmem:[%s1 + $0x288] sm:$0xff]
  %v140 = vld [vmem:[%s1 + $0x290] sm:$0xff]
  %v141 = vld [vmem:[%s1 + $0x298] sm:$0xff]
  %v142 = vld [vmem:[%s1 + $0x2a0] sm:$0xff]
  %v143 = vld [vmem:[%s1 + $0x2a8] sm:$0xff]
  %v144 = vld [vmem:[%s1 + $0x2b0] sm:$0xff]
  %v145 = vld [vmem:[%s1 + $0x2b8] sm:$0xff]
  %v146 = vld [vmem:[%s1 + $0x2c0] sm:$0xff]
  %v147 = vld [vmem:[%s1 + $0x2c8] sm:$0xff]
  %v148 = vld [vmem:[%s1 + $0x2d0] sm:$0xff]
  %v149 = vld [vmem:[%s1 + $0x2d8] sm:$0xff]
  %v150 = vld [vmem:[%s1 + $0x2e0] sm:$0xff]
  %v151 = vld [vmem:[%s1 + $0x2e8] sm:$0xff]
  %v152 = vld [vmem:[%s1 + $0x2f0] sm:$0xff]
  %v153 = vld [vmem:[%s1 + $0x2f8] sm:$0xff]
  %v154 = vld [vmem:[%s1 + $0x300] sm:$0xff]
  %v155 = vld [vmem:[%s1 + $0x308] sm:$0xff]
  %v156 = vld [vmem:[%s1 + $0x310] sm:$0xff]
  %v157 = vld [vmem:[%s1 + $0x318] sm:$0xff]
  %v158 = vld [vmem:[%s1 + $0x320] sm:$0xff]
  %v159 = vld [vmem:[%s1 + $0x328] sm:$0xff]
  %v160 = vld [vmem:[%s1 + $0x330] sm:$0xff]
  %v161 = vld [vmem:[%s1 + $0x338] sm:$0xff]
  %v162 = vld [vmem:[%s1 + $0x340] sm:$0xff]
  %v163 = vld [vmem:[%s1 + $0x348] sm:$0xff]
  %v164 = vld [vmem:[%s1 + $0x350] sm:$0xff]
  %v165 = vld [vmem:[%s1 + $0x358] sm:$0xff]
  %v166 = vld [vmem:[%s1 + $0x360] sm:$0xff]
  %v167 = vld [vmem:[%s1 + $0x368] sm:$0xff]
  %v168 = vld [vmem:[%s1 + $0x370] sm:$0xff]
  %v169 = vld [vmem:[%s1 + $0x378] sm:$0xff]
  %v170 = vld [vmem:[%s1 + $0x380] sm:$0xff]
  %v171 = vld [vmem:[%s1 + $0x388] sm:$0xff]
  %v172 = vld [vmem:[%s1 + $0x390] sm:$0xff]
  %v173 = vld [vmem:[%s1 + $0x398] sm:$0xff]
  %v174 = vld [vmem:[%s1 + $0x3a0] sm:$0xff]
  %v175 = vld [vmem:[%s1 + $0x3a8] sm:$0xff]
  %v176 = vld [vmem:[%s1 + $0x3b0] sm:$0xff]
  %v177 = vld [vmem:[%s1 + $0x3b8] sm:$0xff]
  %v178 = vld [vmem:[%s1 + $0x3c0] sm:$0xff]
  %v179 = vld [vmem:[%s1 + $0x3c8] sm:$0xff]
  %v180 = vld [vmem:[%s1 + $0x3d0] sm:$0xff]
  %v181 = vld [vmem:[%s1 + $0x3d8] sm:$0xff]
  %v182 = vld [vmem:[%s1 + $0x3e0] sm:$0xff]
  %v183 = vld [vmem:[%s1 + $0x3e8] sm:$0xff]
  %v184 = vld [vmem:[%s1 + $0x3f0] sm:$0xff]
  %v185 = vld [vmem:[%s1 + $0x3f8] sm:$0xff]
  %v186 = vld [vmem:[%s1 + $0x400] sm:$0xff]
  %v187 = vld [vmem:[%s1 + $0x408] sm:$0xff]
  %v188 = vld [vmem:[%s1 + $0x410] sm:$0xff]
  %v189 = vld [vmem:[%s1 + $0x418] sm:$0xff]
  %v190 = vld [vmem:[%s1 + $0x420] sm:$0xff]
  %v191 = vld [vmem:[%s1 + $0x428] sm:$0xff]
  %v192 = vld [vmem:[%s1 + $0x430] sm:$0xff]
  %v193 = vld [vmem:[%s1 + $0x438] sm:$0xff]
  %v194 = vld [vmem:[%s1 + $0x440] sm:$0xff]
  %v195 = vld [vmem:[%s1 + $0x448] sm:$0xff]
  %v196 = vld [vmem:[%s1 + $0x450] sm:$0xff]
  %v197 = vld [vmem:[%s1 + $0x458] sm:$0xff]
  %v198 = vld [vmem:[%s1 + $0x460] sm:$0xff]
  %v199 = vld [vmem:[%s1 + $0x468] sm:$0xff]
  %v200 = vld [vmem:[%s1 + $0x470] sm:$0xff]
  %v201 = vld [vmem:[%s1 + $0x478] sm:$0xff]
  %v202 = vunpack.c.l.bf16 %v58
  %v203 = vunpack.c.h.bf16 %v58
  %v204 = vunpack.c.l.bf16 %v59
  %v205 = vunpack.c.h.bf16 %v59
  %v206 = vunpack.c.l.bf16 %v60
  %v207 = vunpack.c.h.bf16 %v60
  %v208 = vunpack.c.l.bf16 %v61
  %v209 = vunpack.c.h.bf16 %v61
  %v210 = vunpack.c.l.bf16 %v62
  %v211 = vunpack.c.h.bf16 %v62
  %v212 = vunpack.c.l.bf16 %v63
  %v213 = vunpack.c.h.bf16 %v63
  %v214 = vunpack.c.l.bf16 %v64
  %v215 = vunpack.c.h.bf16 %v64
  %v216 = vunpack.c.l.bf16 %v65
  %v217 = vunpack.c.h.bf16 %v65
  %v218 = vunpack.c.l.bf16 %v66
  %v219 = vunpack.c.h.bf16 %v66
  %v220 = vunpack.c.l.bf16 %v67
  %v221 = vunpack.c.h.bf16 %v67
  %v222 = vunpack.c.l.bf16 %v68
  %v223 = vunpack.c.h.bf16 %v68
  %v224 = vunpack.c.l.bf16 %v69
  %v225 = vunpack.c.h.bf16 %v69
  %v226 = vunpack.c.l.bf16 %v70
  %v227 = vunpack.c.h.bf16 %v70
  %v228 = vunpack.c.l.bf16 %v71
  %v229 = vunpack.c.h.bf16 %v71
  %v230 = vunpack.c.l.bf16 %v72
  %v231 = vunpack.c.h.bf16 %v72
  %v232 = vunpack.c.l.bf16 %v73
  %v233 = vunpack.c.h.bf16 %v73
  %v234 = vunpack.c.l.bf16 %v74
  %v235 = vunpack.c.h.bf16 %v74
  %v236 = vunpack.c.l.bf16 %v75
  %v237 = vunpack.c.h.bf16 %v75
  %v238 = vunpack.c.l.bf16 %v76
  %v239 = vunpack.c.h.bf16 %v76
  %v240 = vunpack.c.l.bf16 %v77
  %v241 = vunpack.c.h.bf16 %v77
  %v242 = vunpack.c.l.bf16 %v78
  %v243 = vunpack.c.h.bf16 %v78
  %v244 = vunpack.c.l.bf16 %v79
  %v245 = vunpack.c.h.bf16 %v79
  %v246 = vunpack.c.l.bf16 %v80
  %v247 = vunpack.c.h.bf16 %v80
  %v248 = vunpack.c.l.bf16 %v81
  %v249 = vunpack.c.h.bf16 %v81
  %v250 = vunpack.c.l.bf16 %v82
  %v251 = vunpack.c.h.bf16 %v82
  %v252 = vunpack.c.l.bf16 %v83
  %v253 = vunpack.c.h.bf16 %v83
  %v254 = vunpack.c.l.bf16 %v84
  %v255 = vunpack.c.h.bf16 %v84
  %v256 = vunpack.c.l.bf16 %v85
  %v257 = vunpack.c.h.bf16 %v85
  %v258 = vunpack.c.l.bf16 %v86
  %v259 = vunpack.c.h.bf16 %v86
  %v260 = vunpack.c.l.bf16 %v87
  %v261 = vunpack.c.h.bf16 %v87
  %v262 = vunpack.c.l.bf16 %v88
  %v263 = vunpack.c.h.bf16 %v88
  %v264 = vunpack.c.l.bf16 %v89
  %v265 = vunpack.c.h.bf16 %v89
  %v266 = vunpack.c.l.bf16 %v90
  %v267 = vunpack.c.h.bf16 %v90
  %v268 = vunpack.c.l.bf16 %v91
  %v269 = vunpack.c.h.bf16 %v91
  %v270 = vunpack.c.l.bf16 %v92
  %v271 = vunpack.c.h.bf16 %v92
  %v272 = vunpack.c.l.bf16 %v93
  %v273 = vunpack.c.h.bf16 %v93
  %v274 = vunpack.c.l.bf16 %v94
  %v275 = vunpack.c.h.bf16 %v94
  %v276 = vunpack.c.l.bf16 %v95
  %v277 = vunpack.c.h.bf16 %v95
  %v278 = vunpack.c.l.bf16 %v96
  %v279 = vunpack.c.h.bf16 %v96
  %v280 = vunpack.c.l.bf16 %v97
  %v281 = vunpack.c.h.bf16 %v97
  %v282 = vunpack.c.l.bf16 %v98
  %v283 = vunpack.c.h.bf16 %v98
  %v284 = vunpack.c.l.bf16 %v99
  %v285 = vunpack.c.h.bf16 %v99
  %v286 = vunpack.c.l.bf16 %v100
  %v287 = vunpack.c.h.bf16 %v100
  %v288 = vunpack.c.l.bf16 %v101
  %v289 = vunpack.c.h.bf16 %v101
  %v290 = vunpack.c.l.bf16 %v102
  %v291 = vunpack.c.h.bf16 %v102
  %v292 = vunpack.c.l.bf16 %v103
  %v293 = vunpack.c.h.bf16 %v103
  %v294 = vunpack.c.l.bf16 %v104
  %v295 = vunpack.c.h.bf16 %v104
  %v296 = vunpack.c.l.bf16 %v105
  %v297 = vunpack.c.h.bf16 %v105
  %v298 = vunpack.c.l.bf16 %v106
  %v299 = vunpack.c.h.bf16 %v106
  %v300 = vunpack.c.l.bf16 %v107
  %v301 = vunpack.c.h.bf16 %v107
  %v302 = vunpack.c.l.bf16 %v108
  %v303 = vunpack.c.h.bf16 %v108
  %v304 = vunpack.c.l.bf16 %v109
  %v305 = vunpack.c.h.bf16 %v109
  %v306 = vunpack.c.l.bf16 %v110
  %v307 = vunpack.c.h.bf16 %v110
  %v308 = vunpack.c.l.bf16 %v111
  %v309 = vunpack.c.h.bf16 %v111
  %v310 = vunpack.c.l.bf16 %v112
  %v311 = vunpack.c.h.bf16 %v112
  %v312 = vunpack.c.l.bf16 %v113
  %v313 = vunpack.c.h.bf16 %v113
  %v314 = vunpack.c.l.bf16 %v114
  %v315 = vunpack.c.h.bf16 %v114
  %v316 = vunpack.c.l.bf16 %v115
  %v317 = vunpack.c.h.bf16 %v115
  %v318 = vunpack.c.l.bf16 %v116
  %v319 = vunpack.c.h.bf16 %v116
  %v320 = vunpack.c.l.bf16 %v117
  %v321 = vunpack.c.h.bf16 %v117
  %v322 = vunpack.c.l.bf16 %v118
  %v323 = vunpack.c.h.bf16 %v118
  %v324 = vunpack.c.l.bf16 %v119
  %v325 = vunpack.c.h.bf16 %v119
  %v326 = vunpack.c.l.bf16 %v120
  %v327 = vunpack.c.h.bf16 %v120
  %v328 = vunpack.c.l.bf16 %v121
  %v329 = vunpack.c.h.bf16 %v121
  %v330 = vunpack.c.l.bf16 %v122
  %v331 = vunpack.c.h.bf16 %v122
  %v332 = vunpack.c.l.bf16 %v123
  %v333 = vunpack.c.h.bf16 %v123
  %v334 = vunpack.c.l.bf16 %v124
  %v335 = vunpack.c.h.bf16 %v124
  %v336 = vunpack.c.l.bf16 %v125
  %v337 = vunpack.c.h.bf16 %v125
  %v338 = vunpack.c.l.bf16 %v126
  %v339 = vunpack.c.h.bf16 %v126
  %v340 = vunpack.c.l.bf16 %v127
  %v341 = vunpack.c.h.bf16 %v127
  %v342 = vunpack.c.l.bf16 %v128
  %v343 = vunpack.c.h.bf16 %v128
  %v344 = vunpack.c.l.bf16 %v129
  %v345 = vunpack.c.h.bf16 %v129
  %v346 = vunpack.c.l.bf16 %v130
  %v347 = vunpack.c.h.bf16 %v130
  %v348 = vunpack.c.l.bf16 %v131
  %v349 = vunpack.c.h.bf16 %v131
  %v350 = vunpack.c.l.bf16 %v132
  %v351 = vunpack.c.h.bf16 %v132
  %v352 = vunpack.c.l.bf16 %v133
  %v353 = vunpack.c.h.bf16 %v133
  %v354 = vunpack.c.l.bf16 %v134
  %v355 = vunpack.c.h.bf16 %v134
  %v356 = vunpack.c.l.bf16 %v135
  %v357 = vunpack.c.h.bf16 %v135
  %v358 = vunpack.c.l.bf16 %v136
  %v359 = vunpack.c.h.bf16 %v136
  %v360 = vunpack.c.l.bf16 %v137
  %v361 = vunpack.c.h.bf16 %v137
  %v362 = vunpack.c.l.bf16 %v138
  %v363 = vunpack.c.h.bf16 %v138
  %v364 = vunpack.c.l.bf16 %v139
  %v365 = vunpack.c.h.bf16 %v139
  %v366 = vunpack.c.l.bf16 %v140
  %v367 = vunpack.c.h.bf16 %v140
  %v368 = vunpack.c.l.bf16 %v141
  %v369 = vunpack.c.h.bf16 %v141
  %v370 = vunpack.c.l.bf16 %v142
  %v371 = vunpack.c.h.bf16 %v142
  %v372 = vunpack.c.l.bf16 %v143
  %v373 = vunpack.c.h.bf16 %v143
  %v374 = vunpack.c.l.bf16 %v144
  %v375 = vunpack.c.h.bf16 %v144
  %v376 = vunpack.c.l.bf16 %v145
  %v377 = vunpack.c.h.bf16 %v145
  %v378 = vunpack.c.l.bf16 %v146
  %v379 = vunpack.c.h.bf16 %v146
  %v380 = vunpack.c.l.bf16 %v147
  %v381 = vunpack.c.h.bf16 %v147
  %v382 = vunpack.c.l.bf16 %v148
  %v383 = vunpack.c.h.bf16 %v148
  %v384 = vunpack.c.l.bf16 %v149
  %v385 = vunpack.c.h.bf16 %v149
  %v386 = vunpack.c.l.bf16 %v150
  %v387 = vunpack.c.h.bf16 %v150
  %v388 = vunpack.c.l.bf16 %v151
  %v389 = vunpack.c.h.bf16 %v151
  %v390 = vunpack.c.l.bf16 %v152
  %v391 = vunpack.c.h.bf16 %v152
  %v392 = vunpack.c.l.bf16 %v153
  %v393 = vunpack.c.h.bf16 %v153
  %v394 = vunpack.c.l.bf16 %v154
  %v395 = vunpack.c.h.bf16 %v154
  %v396 = vunpack.c.l.bf16 %v155
  %v397 = vunpack.c.h.bf16 %v155
  %v398 = vunpack.c.l.bf16 %v156
  %v399 = vunpack.c.h.bf16 %v156
  %v400 = vunpack.c.l.bf16 %v157
  %v401 = vunpack.c.h.bf16 %v157
  %v402 = vunpack.c.l.bf16 %v158
  %v403 = vunpack.c.h.bf16 %v158
  %v404 = vunpack.c.l.bf16 %v159
  %v405 = vunpack.c.h.bf16 %v159
  %v406 = vunpack.c.l.bf16 %v160
  %v407 = vunpack.c.h.bf16 %v160
  %v408 = vunpack.c.l.bf16 %v161
  %v409 = vunpack.c.h.bf16 %v161
  %v410 = vunpack.c.l.bf16 %v162
  %v411 = vunpack.c.h.bf16 %v162
  %v412 = vunpack.c.l.bf16 %v163
  %v413 = vunpack.c.h.bf16 %v163
  %v414 = vunpack.c.l.bf16 %v164
  %v415 = vunpack.c.h.bf16 %v164
  %v416 = vunpack.c.l.bf16 %v165
  %v417 = vunpack.c.h.bf16 %v165
  %v418 = vunpack.c.l.bf16 %v166
  %v419 = vunpack.c.h.bf16 %v166
  %v420 = vunpack.c.l.bf16 %v167
  %v421 = vunpack.c.h.bf16 %v167
  %v422 = vunpack.c.l.bf16 %v168
  %v423 = vunpack.c.h.bf16 %v168
  %v424 = vunpack.c.l.bf16 %v169
  %v425 = vunpack.c.h.bf16 %v169
  %v426 = vunpack.c.l.bf16 %v170
  %v427 = vunpack.c.h.bf16 %v170
  %v428 = vunpack.c.l.bf16 %v171
  %v429 = vunpack.c.h.bf16 %v171
  %v430 = vunpack.c.l.bf16 %v172
  %v431 = vunpack.c.h.bf16 %v172
  %v432 = vunpack.c.l.bf16 %v173
  %v433 = vunpack.c.h.bf16 %v173
  %v434 = vunpack.c.l.bf16 %v174
  %v435 = vunpack.c.h.bf16 %v174
  %v436 = vunpack.c.l.bf16 %v175
  %v437 = vunpack.c.h.bf16 %v175
  %v438 = vunpack.c.l.bf16 %v176
  %v439 = vunpack.c.h.bf16 %v176
  %v440 = vunpack.c.l.bf16 %v177
  %v441 = vunpack.c.h.bf16 %v177
  %v442 = vunpack.c.l.bf16 %v178
  %v443 = vunpack.c.h.bf16 %v178
  %v444 = vunpack.c.l.bf16 %v179
  %v445 = vunpack.c.h.bf16 %v179
  %v446 = vunpack.c.l.bf16 %v180
  %v447 = vunpack.c.h.bf16 %v180
  %v448 = vunpack.c.l.bf16 %v181
  %v449 = vunpack.c.h.bf16 %v181
  %v450 = vunpack.c.l.bf16 %v182
  %v451 = vunpack.c.h.bf16 %v182
  %v452 = vunpack.c.l.bf16 %v183
  %v453 = vunpack.c.h.bf16 %v183
  %v454 = vunpack.c.l.bf16 %v184
  %v455 = vunpack.c.h.bf16 %v184
  %v456 = vunpack.c.l.bf16 %v185
  %v457 = vunpack.c.h.bf16 %v185
  %v458 = vunpack.c.l.bf16 %v186
  %v459 = vunpack.c.h.bf16 %v186
  %v460 = vunpack.c.l.bf16 %v187
  %v461 = vunpack.c.h.bf16 %v187
  %v462 = vunpack.c.l.bf16 %v188
  %v463 = vunpack.c.h.bf16 %v188
  %v464 = vunpack.c.l.bf16 %v189
  %v465 = vunpack.c.h.bf16 %v189
  %v466 = vunpack.c.l.bf16 %v190
  %v467 = vunpack.c.h.bf16 %v190
  %v468 = vunpack.c.l.bf16 %v191
  %v469 = vunpack.c.h.bf16 %v191
  %v470 = vunpack.c.l.bf16 %v192
  %v471 = vunpack.c.h.bf16 %v192
  %v472 = vunpack.c.l.bf16 %v193
  %v473 = vunpack.c.h.bf16 %v193
  %v474 = vunpack.c.l.bf16 %v194
  %v475 = vunpack.c.h.bf16 %v194
  %v476 = vunpack.c.l.bf16 %v195
  %v477 = vunpack.c.h.bf16 %v195
  %v478 = vunpack.c.l.bf16 %v196
  %v479 = vunpack.c.h.bf16 %v196
  %v480 = vunpack.c.l.bf16 %v197
  %v481 = vunpack.c.h.bf16 %v197
  %v482 = vunpack.c.l.bf16 %v198
  %v483 = vunpack.c.h.bf16 %v198
  %v484 = vunpack.c.l.bf16 %v199
  %v485 = vunpack.c.h.bf16 %v199
  %v486 = vunpack.c.l.bf16 %v200
  %v487 = vunpack.c.h.bf16 %v200
  %v488 = vunpack.c.l.bf16 %v201
  %v489 = vunpack.c.h.bf16 %v201
  %vm490 = vcmask 130048
  %v492 = vsel %vm490, %v55, 0
  %v495 = vsel %vm490, %v57, 0
  %497 = vmatprep.subr.mxu0 %v203
  %498 = vmatpush1.msra.mxu0 %v202
  %499 = vmatprep.subr.mxu0 %v219
  %500 = vmatpush1.msra.mxu0 %v218
  %501 = vmatprep.subr.mxu0 %v235
  %502 = vmatpush1.msra.mxu0 %v234
  %503 = vmatprep.subr.mxu0 %v251
  %504 = vmatpush1.msra.mxu0 %v250
  %505 = vmatprep.subr.mxu0 %v267
  %506 = vmatpush1.msra.mxu0 %v266
  %507 = vmatprep.subr.mxu0 %v283
  %508 = vmatpush1.msra.mxu0 %v282
  %509 = vmatprep.subr.mxu0 %v299
  %510 = vmatpush1.msra.mxu0 %v298
  %511 = vmatprep.subr.mxu0 %v315
  %512 = vmatpush1.msra.mxu0 %v314
  %513 = vmatprep.subr.mxu0 %v331
  %514 = vmatpush1.msra.mxu0 %v330
  %515 = vmatprep.subr.mxu0 %v347
  %516 = vmatpush1.msra.mxu0 %v346
  %517 = vmatprep.subr.mxu0 %v363
  %518 = vmatpush1.msra.mxu0 %v362
  %519 = vmatprep.subr.mxu0 %v379
  %520 = vmatpush1.msra.mxu0 %v378
  %521 = vmatprep.subr.mxu0 %v395
  %522 = vmatpush1.msra.mxu0 %v394
  %523 = vmatprep.subr.mxu0 %v411
  %524 = vmatpush1.msra.mxu0 %v410
  %525 = vmatprep.subr.mxu0 %v427
  %526 = vmatpush1.msra.mxu0 %v426
  %527 = vmatprep.subr.mxu0 %v443
  %528 = vmatpush1.msra.mxu0 %v442
  %529 = vmatprep.subr.mxu0 %v459
  %530 = vmatpush1.msra.mxu0 %v458
  %531 = vmatprep.subr.mxu0 %v475
  %532 = vmatpush1.msra.mxu0 %v474
  %533 = vmatprep.subr.mxu0 0.0
  %534 = vmatpush1.msra.mxu0 0.0
  %535 = vmatprep.subr.mxu0 0.0
  %536 = vmatpush1.msra.mxu0 0.0
  %537 = vmatprep.subr.mxu0 0.0
  %538 = vmatpush1.msra.mxu0 0.0
  %539 = vmatprep.subr.mxu0 0.0
  %540 = vmatpush1.msra.mxu0 0.0
  %541 = vmatprep.subr.mxu0 0.0
  %542 = vmatpush1.msra.mxu0 0.0
  %543 = vmatprep.subr.mxu0 0.0
  %544 = vmatpush1.msra.mxu0 0.0
  %545 = vmatprep.subr.mxu0 0.0
  %546 = vmatpush1.msra.mxu0 0.0
  %547 = vmatprep.subr.mxu0 0.0
  %548 = vmatpush1.msra.mxu0 0.0
  %549 = vmatprep.subr.mxu0 0.0
  %550 = vmatpush1.msra.mxu0 0.0
  %551 = vmatprep.subr.mxu0 0.0
  %552 = vmatpush1.msra.mxu0 0.0
  %553 = vmatprep.subr.mxu0 0.0
  %554 = vmatpush1.msra.mxu0 0.0
  %555 = vmatprep.subr.mxu0 0.0
  %556 = vmatpush1.msra.mxu0 0.0
  %557 = vmatprep.subr.mxu0 0.0
  %558 = vmatpush1.msra.mxu0 0.0
  %559 = vmatprep.subr.mxu0 0.0
  %560 = vmatpush1.msra.mxu0 0.0
  %561 = vmatprep.mubr.f32.mxu0 %v492
  %562 = vmatmul.mubr.f32.gmra.mrb[0].mxu0 %v54
  %v563 = vpop.f32.mrb[0].mxu0
  %v564 = vadd.f32 0.0, %v563
  %v565 = vpop.f32.mrb[0].mxu0
  %v566 = vadd.f32 0.0, %v565
  %567 = vmatprep.mubr.f32.mxu0 %v495
  %568 = vmatmul.mubr.f32.gmra.mrb[0].mxu0 %v56
  %v569 = vpop.f32.mrb[0].mxu0
  %v570 = vadd.f32 0.0, %v569
  %v571 = vpop.f32.mrb[0].mxu0
  %v572 = vadd.f32 0.0, %v571
  %573 = vdwg.mxu0
  %574 = vmatprep.subr.mxu0 %v205
  %575 = vmatpush1.msra.mxu0 %v204
  %576 = vmatprep.subr.mxu0 %v221
  %577 = vmatpush1.msra.mxu0 %v220
  %578 = vmatprep.subr.mxu0 %v237
  %579 = vmatpush1.msra.mxu0 %v236
  %580 = vmatprep.subr.mxu0 %v253
  %581 = vmatpush1.msra.mxu0 %v252
  %582 = vmatprep.subr.mxu0 %v269
  %583 = vmatpush1.msra.mxu0 %v268
  %584 = vmatprep.subr.mxu0 %v285
  %585 = vmatpush1.msra.mxu0 %v284
  %586 = vmatprep.subr.mxu0 %v301
  %587 = vmatpush1.msra.mxu0 %v300
  %588 = vmatprep.subr.mxu0 %v317
  %589 = vmatpush1.msra.mxu0 %v316
  %590 = vmatprep.subr.mxu0 %v333
  %591 = vmatpush1.msra.mxu0 %v332
  %592 = vmatprep.subr.mxu0 %v349
  %593 = vmatpush1.msra.mxu0 %v348
  %594 = vmatprep.subr.mxu0 %v365
  %595 = vmatpush1.msra.mxu0 %v364
  %596 = vmatprep.subr.mxu0 %v381
  %597 = vmatpush1.msra.mxu0 %v380
  %598 = vmatprep.subr.mxu0 %v397
  %599 = vmatpush1.msra.mxu0 %v396
  %600 = vmatprep.subr.mxu0 %v413
  %601 = vmatpush1.msra.mxu0 %v412
  %602 = vmatprep.subr.mxu0 %v429
  %603 = vmatpush1.msra.mxu0 %v428
  %604 = vmatprep.subr.mxu0 %v445
  %605 = vmatpush1.msra.mxu0 %v444
  %606 = vmatprep.subr.mxu0 %v461
  %607 = vmatpush1.msra.mxu0 %v460
  %608 = vmatprep.subr.mxu0 %v477
  %609 = vmatpush1.msra.mxu0 %v476
  %610 = vmatprep.subr.mxu0 0.0
  %611 = vmatpush1.msra.mxu0 0.0
  %612 = vmatprep.subr.mxu0 0.0
  %613 = vmatpush1.msra.mxu0 0.0
  %614 = vmatprep.subr.mxu0 0.0
  %615 = vmatpush1.msra.mxu0 0.0
  %616 = vmatprep.subr.mxu0 0.0
  %617 = vmatpush1.msra.mxu0 0.0
  %618 = vmatprep.subr.mxu0 0.0
  %619 = vmatpush1.msra.mxu0 0.0
  %620 = vmatprep.subr.mxu0 0.0
  %621 = vmatpush1.msra.mxu0 0.0
  %622 = vmatprep.subr.mxu0 0.0
  %623 = vmatpush1.msra.mxu0 0.0
  %624 = vmatprep.subr.mxu0 0.0
  %625 = vmatpush1.msra.mxu0 0.0
  %626 = vmatprep.subr.mxu0 0.0
  %627 = vmatpush1.msra.mxu0 0.0
  %628 = vmatprep.subr.mxu0 0.0
  %629 = vmatpush1.msra.mxu0 0.0
  %630 = vmatprep.subr.mxu0 0.0
  %631 = vmatpush1.msra.mxu0 0.0
  %632 = vmatprep.subr.mxu0 0.0
  %633 = vmatpush1.msra.mxu0 0.0
  %634 = vmatprep.subr.mxu0 0.0
  %635 = vmatpush1.msra.mxu0 0.0
  %636 = vmatprep.subr.mxu0 0.0
  %637 = vmatpush1.msra.mxu0 0.0
  %638 = vmatprep.mubr.f32.mxu0 %v492
  %639 = vmatmul.mubr.f32.gmra.mrb[0].mxu0 %v54
  %v640 = vpop.f32.mrb[0].mxu0
  %v641 = vadd.f32 0.0, %v640
  %v642 = vpop.f32.mrb[0].mxu0
  %v643 = vadd.f32 0.0, %v642
  %644 = vmatprep.mubr.f32.mxu0 %v495
  %645 = vmatmul.mubr.f32.gmra.mrb[0].mxu0 %v56
  %v646 = vpop.f32.mrb[0].mxu0
  %v647 = vadd.f32 0.0, %v646
  %v648 = vpop.f32.mrb[0].mxu0
  %v649 = vadd.f32 0.0, %v648
  %650 = vdwg.mxu0
  %651 = vmatprep.subr.mxu0 %v207
  %652 = vmatpush1.msra.mxu0 %v206
  %653 = vmatprep.subr.mxu0 %v223
  %654 = vmatpush1.msra.mxu0 %v222
  %655 = vmatprep.subr.mxu0 %v239
  %656 = vmatpush1.msra.mxu0 %v238
  %657 = vmatprep.subr.mxu0 %v255
  %658 = vmatpush1.msra.mxu0 %v254
  %659 = vmatprep.subr.mxu0 %v271
  %660 = vmatpush1.msra.mxu0 %v270
  %661 = vmatprep.subr.mxu0 %v287
  %662 = vmatpush1.msra.mxu0 %v286
  %663 = vmatprep.subr.mxu0 %v303
  %664 = vmatpush1.msra.mxu0 %v302
  %665 = vmatprep.subr.mxu0 %v319
  %666 = vmatpush1.msra.mxu0 %v318
  %667 = vmatprep.subr.mxu0 %v335
  %668 = vmatpush1.msra.mxu0 %v334
  %669 = vmatprep.subr.mxu0 %v351
  %670 = vmatpush1.msra.mxu0 %v350
  %671 = vmatprep.subr.mxu0 %v367
  %672 = vmatpush1.msra.mxu0 %v366
  %673 = vmatprep.subr.mxu0 %v383
  %674 = vmatpush1.msra.mxu0 %v382
  %675 = vmatprep.subr.mxu0 %v399
  %676 = vmatpush1.msra.mxu0 %v398
  %677 = vmatprep.subr.mxu0 %v415
  %678 = vmatpush1.msra.mxu0 %v414
  %679 = vmatprep.subr.mxu0 %v431
  %680 = vmatpush1.msra.mxu0 %v430
  %681 = vmatprep.subr.mxu0 %v447
  %682 = vmatpush1.msra.mxu0 %v446
  %683 = vmatprep.subr.mxu0 %v463
  %684 = vmatpush1.msra.mxu0 %v462
  %685 = vmatprep.subr.mxu0 %v479
  %686 = vmatpush1.msra.mxu0 %v478
  %687 = vmatprep.subr.mxu0 0.0
  %688 = vmatpush1.msra.mxu0 0.0
  %689 = vmatprep.subr.mxu0 0.0
  %690 = vmatpush1.msra.mxu0 0.0
  %691 = vmatprep.subr.mxu0 0.0
  %692 = vmatpush1.msra.mxu0 0.0
  %693 = vmatprep.subr.mxu0 0.0
  %694 = vmatpush1.msra.mxu0 0.0
  %695 = vmatprep.subr.mxu0 0.0
  %696 = vmatpush1.msra.mxu0 0.0
  %697 = vmatprep.subr.mxu0 0.0
  %698 = vmatpush1.msra.mxu0 0.0
  %699 = vmatprep.subr.mxu0 0.0
  %700 = vmatpush1.msra.mxu0 0.0
  %701 = vmatprep.subr.mxu0 0.0
  %702 = vmatpush1.msra.mxu0 0.0
  %703 = vmatprep.subr.mxu0 0.0
  %704 = vmatpush1.msra.mxu0 0.0
  %705 = vmatprep.subr.mxu0 0.0
  %706 = vmatpush1.msra.mxu0 0.0
  %707 = vmatprep.subr.mxu0 0.0
  %708 = vmatpush1.msra.mxu0 0.0
  %709 = vmatprep.subr.mxu0 0.0
  %710 = vmatpush1.msra.mxu0 0.0
  %711 = vmatprep.subr.mxu0 0.0
  %712 = vmatpush1.msra.mxu0 0.0
  %713 = vmatprep.subr.mxu0 0.0
  %714 = vmatpush1.msra.mxu0 0.0
  %715 = vmatprep.mubr.f32.mxu0 %v492
  %716 = vmatmul.mubr.f32.gmra.mrb[0].mxu0 %v54
  %v717 = vpop.f32.mrb[0].mxu0
  %v718 = vadd.f32 0.0, %v717
  %v719 = vpop.f32.mrb[0].mxu0
  %v720 = vadd.f32 0.0, %v719
  %721 = vmatprep.mubr.f32.mxu0 %v495
  %722 = vmatmul.mubr.f32.gmra.mrb[0].mxu0 %v56
  %v723 = vpop.f32.mrb[0].mxu0
  %v724 = vadd.f32 0.0, %v723
  %v725 = vpop.f32.mrb[0].mxu0
  %v726 = vadd.f32 0.0, %v725
  %727 = vdwg.mxu0
  %728 = vmatprep.subr.mxu0 %v209
  %729 = vmatpush1.msra.mxu0 %v208
  %730 = vmatprep.subr.mxu0 %v225
  %731 = vmatpush1.msra.mxu0 %v224
  %732 = vmatprep.subr.mxu0 %v241
  %733 = vmatpush1.msra.mxu0 %v240
  %734 = vmatprep.subr.mxu0 %v257
  %735 = vmatpush1.msra.mxu0 %v256
  %736 = vmatprep.subr.mxu0 %v273
  %737 = vmatpush1.msra.mxu0 %v272
  %738 = vmatprep.subr.mxu0 %v289
  %739 = vmatpush1.msra.mxu0 %v288
  %740 = vmatprep.subr.mxu0 %v305
  %741 = vmatpush1.msra.mxu0 %v304
  %742 = vmatprep.subr.mxu0 %v321
  %743 = vmatpush1.msra.mxu0 %v320
  %744 = vmatprep.subr.mxu0 %v337
  %745 = vmatpush1.msra.mxu0 %v336
  %746 = vmatprep.subr.mxu0 %v353
  %747 = vmatpush1.msra.mxu0 %v352
  %748 = vmatprep.subr.mxu0 %v369
  %749 = vmatpush1.msra.mxu0 %v368
  %750 = vmatprep.subr.mxu0 %v385
  %751 = vmatpush1.msra.mxu0 %v384
  %752 = vmatprep.subr.mxu0 %v401
  %753 = vmatpush1.msra.mxu0 %v400
  %754 = vmatprep.subr.mxu0 %v417
  %755 = vmatpush1.msra.mxu0 %v416
  %756 = vmatprep.subr.mxu0 %v433
  %757 = vmatpush1.msra.mxu0 %v432
  %758 = vmatprep.subr.mxu0 %v449
  %759 = vmatpush1.msra.mxu0 %v448
  %760 = vmatprep.subr.mxu0 %v465
  %761 = vmatpush1.msra.mxu0 %v464
  %762 = vmatprep.subr.mxu0 %v481
  %763 = vmatpush1.msra.mxu0 %v480
  %764 = vmatprep.subr.mxu0 0.0
  %765 = vmatpush1.msra.mxu0 0.0
  %766 = vmatprep.subr.mxu0 0.0
  %767 = vmatpush1.msra.mxu0 0.0
  %768 = vmatprep.subr.mxu0 0.0
  %769 = vmatpush1.msra.mxu0 0.0
  %770 = vmatprep.subr.mxu0 0.0
  %771 = vmatpush1.msra.mxu0 0.0
  %772 = vmatprep.subr.mxu0 0.0
  %773 = vmatpush1.msra.mxu0 0.0
  %774 = vmatprep.subr.mxu0 0.0
  %775 = vmatpush1.msra.mxu0 0.0
  %776 = vmatprep.subr.mxu0 0.0
  %777 = vmatpush1.msra.mxu0 0.0
  %778 = vmatprep.subr.mxu0 0.0
  %779 = vmatpush1.msra.mxu0 0.0
  %780 = vmatprep.subr.mxu0 0.0
  %781 = vmatpush1.msra.mxu0 0.0
  %782 = vmatprep.subr.mxu0 0.0
  %783 = vmatpush1.msra.mxu0 0.0
  %784 = vmatprep.subr.mxu0 0.0
  %785 = vmatpush1.msra.mxu0 0.0
  %786 = vmatprep.subr.mxu0 0.0
  %787 = vmatpush1.msra.mxu0 0.0
  %788 = vmatprep.subr.mxu0 0.0
  %789 = vmatpush1.msra.mxu0 0.0
  %790 = vmatprep.subr.mxu0 0.0
  %791 = vmatpush1.msra.mxu0 0.0
  %792 = vmatprep.mubr.f32.mxu0 %v492
  %793 = vmatmul.mubr.f32.gmra.mrb[0].mxu0 %v54
  %v794 = vpop.f32.mrb[0].mxu0
  %v795 = vadd.f32 0.0, %v794
  %v796 = vpop.f32.mrb[0].mxu0
  %v797 = vadd.f32 0.0, %v796
  %798 = vmatprep.mubr.f32.mxu0 %v495
  %799 = vmatmul.mubr.f32.gmra.mrb[0].mxu0 %v56
  %v800 = vpop.f32.mrb[0].mxu0
  %v801 = vadd.f32 0.0, %v800
  %v802 = vpop.f32.mrb[0].mxu0
  %v803 = vadd.f32 0.0, %v802
  %804 = vdwg.mxu0
  %805 = vmatprep.subr.mxu0 %v211
  %806 = vmatpush1.msra.mxu0 %v210
  %807 = vmatprep.subr.mxu0 %v227
  %808 = vmatpush1.msra.mxu0 %v226
  %809 = vmatprep.subr.mxu0 %v243
  %810 = vmatpush1.msra.mxu0 %v242
  %811 = vmatprep.subr.mxu0 %v259
  %812 = vmatpush1.msra.mxu0 %v258
  %813 = vmatprep.subr.mxu0 %v275
  %814 = vmatpush1.msra.mxu0 %v274
  %815 = vmatprep.subr.mxu0 %v291
  %816 = vmatpush1.msra.mxu0 %v290
  %817 = vmatprep.subr.mxu0 %v307
  %818 = vmatpush1.msra.mxu0 %v306
  %819 = vmatprep.subr.mxu0 %v323
  %820 = vmatpush1.msra.mxu0 %v322
  %821 = vmatprep.subr.mxu0 %v339
  %822 = vmatpush1.msra.mxu0 %v338
  %823 = vmatprep.subr.mxu0 %v355
  %824 = vmatpush1.msra.mxu0 %v354
  %825 = vmatprep.subr.mxu0 %v371
  %826 = vmatpush1.msra.mxu0 %v370
  %827 = vmatprep.subr.mxu0 %v387
  %828 = vmatpush1.msra.mxu0 %v386
  %829 = vmatprep.subr.mxu0 %v403
  %830 = vmatpush1.msra.mxu0 %v402
  %831 = vmatprep.subr.mxu0 %v419
  %832 = vmatpush1.msra.mxu0 %v418
  %833 = vmatprep.subr.mxu0 %v435
  %834 = vmatpush1.msra.mxu0 %v434
  %835 = vmatprep.subr.mxu0 %v451
  %836 = vmatpush1.msra.mxu0 %v450
  %837 = vmatprep.subr.mxu0 %v467
  %838 = vmatpush1.msra.mxu0 %v466
  %839 = vmatprep.subr.mxu0 %v483
  %840 = vmatpush1.msra.mxu0 %v482
  %841 = vmatprep.subr.mxu0 0.0
  %842 = vmatpush1.msra.mxu0 0.0
  %843 = vmatprep.subr.mxu0 0.0
  %844 = vmatpush1.msra.mxu0 0.0
  %845 = vmatprep.subr.mxu0 0.0
  %846 = vmatpush1.msra.mxu0 0.0
  %847 = vmatprep.subr.mxu0 0.0
  %848 = vmatpush1.msra.mxu0 0.0
  %849 = vmatprep.subr.mxu0 0.0
  %850 = vmatpush1.msra.mxu0 0.0
  %851 = vmatprep.subr.mxu0 0.0
  %852 = vmatpush1.msra.mxu0 0.0
  %853 = vmatprep.subr.mxu0 0.0
  %854 = vmatpush1.msra.mxu0 0.0
  %855 = vmatprep.subr.mxu0 0.0
  %856 = vmatpush1.msra.mxu0 0.0
  %857 = vmatprep.subr.mxu0 0.0
  %858 = vmatpush1.msra.mxu0 0.0
  %859 = vmatprep.subr.mxu0 0.0
  %860 = vmatpush1.msra.mxu0 0.0
  %861 = vmatprep.subr.mxu0 0.0
  %862 = vmatpush1.msra.mxu0 0.0
  %863 = vmatprep.subr.mxu0 0.0
  %864 = vmatpush1.msra.mxu0 0.0
  %865 = vmatprep.subr.mxu0 0.0
  %866 = vmatpush1.msra.mxu0 0.0
  %867 = vmatprep.subr.mxu0 0.0
  %868 = vmatpush1.msra.mxu0 0.0
  %869 = vmatprep.mubr.f32.mxu0 %v492
  %870 = vmatmul.mubr.f32.gmra.mrb[0].mxu0 %v54
  %v871 = vpop.f32.mrb[0].mxu0
  %v872 = vadd.f32 0.0, %v871
  %v873 = vpop.f32.mrb[0].mxu0
  %v874 = vadd.f32 0.0, %v873
  %875 = vmatprep.mubr.f32.mxu0 %v495
  %876 = vmatmul.mubr.f32.gmra.mrb[0].mxu0 %v56
  %v877 = vpop.f32.mrb[0].mxu0
  %v878 = vadd.f32 0.0, %v877
  %v879 = vpop.f32.mrb[0].mxu0
  %v880 = vadd.f32 0.0, %v879
  %881 = vdwg.mxu0
  %882 = vmatprep.subr.mxu0 %v213
  %883 = vmatpush1.msra.mxu0 %v212
  %884 = vmatprep.subr.mxu0 %v229
  %885 = vmatpush1.msra.mxu0 %v228
  %886 = vmatprep.subr.mxu0 %v245
  %887 = vmatpush1.msra.mxu0 %v244
  %888 = vmatprep.subr.mxu0 %v261
  %889 = vmatpush1.msra.mxu0 %v260
  %890 = vmatprep.subr.mxu0 %v277
  %891 = vmatpush1.msra.mxu0 %v276
  %892 = vmatprep.subr.mxu0 %v293
  %893 = vmatpush1.msra.mxu0 %v292
  %894 = vmatprep.subr.mxu0 %v309
  %895 = vmatpush1.msra.mxu0 %v308
  %896 = vmatprep.subr.mxu0 %v325
  %897 = vmatpush1.msra.mxu0 %v324
  %898 = vmatprep.subr.mxu0 %v341
  %899 = vmatpush1.msra.mxu0 %v340
  %900 = vmatprep.subr.mxu0 %v357
  %901 = vmatpush1.msra.mxu0 %v356
  %902 = vmatprep.subr.mxu0 %v373
  %903 = vmatpush1.msra.mxu0 %v372
  %904 = vmatprep.subr.mxu0 %v389
  %905 = vmatpush1.msra.mxu0 %v388
  %906 = vmatprep.subr.mxu0 %v405
  %907 = vmatpush1.msra.mxu0 %v404
  %908 = vmatprep.subr.mxu0 %v421
  %909 = vmatpush1.msra.mxu0 %v420
  %910 = vmatprep.subr.mxu0 %v437
  %911 = vmatpush1.msra.mxu0 %v436
  %912 = vmatprep.subr.mxu0 %v453
  %913 = vmatpush1.msra.mxu0 %v452
  %914 = vmatprep.subr.mxu0 %v469
  %915 = vmatpush1.msra.mxu0 %v468
  %916 = vmatprep.subr.mxu0 %v485
  %917 = vmatpush1.msra.mxu0 %v484
  %918 = vmatprep.subr.mxu0 0.0
  %919 = vmatpush1.msra.mxu0 0.0
  %920 = vmatprep.subr.mxu0 0.0
  %921 = vmatpush1.msra.mxu0 0.0
  %922 = vmatprep.subr.mxu0 0.0
  %923 = vmatpush1.msra.mxu0 0.0
  %924 = vmatprep.subr.mxu0 0.0
  %925 = vmatpush1.msra.mxu0 0.0
  %926 = vmatprep.subr.mxu0 0.0
  %927 = vmatpush1.msra.mxu0 0.0
  %928 = vmatprep.subr.mxu0 0.0
  %929 = vmatpush1.msra.mxu0 0.0
  %930 = vmatprep.subr.mxu0 0.0
  %931 = vmatpush1.msra.mxu0 0.0
  %932 = vmatprep.subr.mxu0 0.0
  %933 = vmatpush1.msra.mxu0 0.0
  %934 = vmatprep.subr.mxu0 0.0
  %935 = vmatpush1.msra.mxu0 0.0
  %936 = vmatprep.subr.mxu0 0.0
  %937 = vmatpush1.msra.mxu0 0.0
  %938 = vmatprep.subr.mxu0 0.0
  %939 = vmatpush1.msra.mxu0 0.0
  %940 = vmatprep.subr.mxu0 0.0
  %941 = vmatpush1.msra.mxu0 0.0
  %942 = vmatprep.subr.mxu0 0.0
  %943 = vmatpush1.msra.mxu0 0.0
  %944 = vmatprep.subr.mxu0 0.0
  %945 = vmatpush1.msra.mxu0 0.0
  %946 = vmatprep.mubr.f32.mxu0 %v492
  %947 = vmatmul.mubr.f32.gmra.mrb[0].mxu0 %v54
  %v948 = vpop.f32.mrb[0].mxu0
  %v949 = vadd.f32 0.0, %v948
  %v950 = vpop.f32.mrb[0].mxu0
  %v951 = vadd.f32 0.0, %v950
  %952 = vmatprep.mubr.f32.mxu0 %v495
  %953 = vmatmul.mubr.f32.gmra.mrb[0].mxu0 %v56
  %v954 = vpop.f32.mrb[0].mxu0
  %v955 = vadd.f32 0.0, %v954
  %v956 = vpop.f32.mrb[0].mxu0
  %v957 = vadd.f32 0.0, %v956
  %958 = vdwg.mxu0
  %959 = vmatprep.subr.mxu0 %v215
  %960 = vmatpush1.msra.mxu0 %v214
  %961 = vmatprep.subr.mxu0 %v231
  %962 = vmatpush1.msra.mxu0 %v230
  %963 = vmatprep.subr.mxu0 %v247
  %964 = vmatpush1.msra.mxu0 %v246
  %965 = vmatprep.subr.mxu0 %v263
  %966 = vmatpush1.msra.mxu0 %v262
  %967 = vmatprep.subr.mxu0 %v279
  %968 = vmatpush1.msra.mxu0 %v278
  %969 = vmatprep.subr.mxu0 %v295
  %970 = vmatpush1.msra.mxu0 %v294
  %971 = vmatprep.subr.mxu0 %v311
  %972 = vmatpush1.msra.mxu0 %v310
  %973 = vmatprep.subr.mxu0 %v327
  %974 = vmatpush1.msra.mxu0 %v326
  %975 = vmatprep.subr.mxu0 %v343
  %976 = vmatpush1.msra.mxu0 %v342
  %977 = vmatprep.subr.mxu0 %v359
  %978 = vmatpush1.msra.mxu0 %v358
  %979 = vmatprep.subr.mxu0 %v375
  %980 = vmatpush1.msra.mxu0 %v374
  %981 = vmatprep.subr.mxu0 %v391
  %982 = vmatpush1.msra.mxu0 %v390
  %983 = vmatprep.subr.mxu0 %v407
  %984 = vmatpush1.msra.mxu0 %v406
  %985 = vmatprep.subr.mxu0 %v423
  %986 = vmatpush1.msra.mxu0 %v422
  %987 = vmatprep.subr.mxu0 %v439
  %988 = vmatpush1.msra.mxu0 %v438
  %989 = vmatprep.subr.mxu0 %v455
  %990 = vmatpush1.msra.mxu0 %v454
  %991 = vmatprep.subr.mxu0 %v471
  %992 = vmatpush1.msra.mxu0 %v470
  %993 = vmatprep.subr.mxu0 %v487
  %994 = vmatpush1.msra.mxu0 %v486
  %995 = vmatprep.subr.mxu0 0.0
  %996 = vmatpush1.msra.mxu0 0.0
  %997 = vmatprep.subr.mxu0 0.0
  %998 = vmatpush1.msra.mxu0 0.0
  %999 = vmatprep.subr.mxu0 0.0
  %1000 = vmatpush1.msra.mxu0 0.0
  %1001 = vmatprep.subr.mxu0 0.0
  %1002 = vmatpush1.msra.mxu0 0.0
  %1003 = vmatprep.subr.mxu0 0.0
  %1004 = vmatpush1.msra.mxu0 0.0
  %1005 = vmatprep.subr.mxu0 0.0
  %1006 = vmatpush1.msra.mxu0 0.0
  %1007 = vmatprep.subr.mxu0 0.0
  %1008 = vmatpush1.msra.mxu0 0.0
  %1009 = vmatprep.subr.mxu0 0.0
  %1010 = vmatpush1.msra.mxu0 0.0
  %1011 = vmatprep.subr.mxu0 0.0
  %1012 = vmatpush1.msra.mxu0 0.0
  %1013 = vmatprep.subr.mxu0 0.0
  %1014 = vmatpush1.msra.mxu0 0.0
  %1015 = vmatprep.subr.mxu0 0.0
  %1016 = vmatpush1.msra.mxu0 0.0
  %1017 = vmatprep.subr.mxu0 0.0
  %1018 = vmatpush1.msra.mxu0 0.0
  %1019 = vmatprep.subr.mxu0 0.0
  %1020 = vmatpush1.msra.mxu0 0.0
  %1021 = vmatprep.subr.mxu0 0.0
  %1022 = vmatpush1.msra.mxu0 0.0
  %1023 = vmatprep.mubr.f32.mxu0 %v492
  %1024 = vmatmul.mubr.f32.gmra.mrb[0].mxu0 %v54
  %v1025 = vpop.f32.mrb[0].mxu0
  %v1026 = vadd.f32 0.0, %v1025
  %v1027 = vpop.f32.mrb[0].mxu0
  %v1028 = vadd.f32 0.0, %v1027
  %1029 = vmatprep.mubr.f32.mxu0 %v495
  %1030 = vmatmul.mubr.f32.gmra.mrb[0].mxu0 %v56
  %v1031 = vpop.f32.mrb[0].mxu0
  %v1032 = vadd.f32 0.0, %v1031
  %v1033 = vpop.f32.mrb[0].mxu0
  %v1034 = vadd.f32 0.0, %v1033
  %1035 = vdwg.mxu0
  %1036 = vmatprep.subr.mxu0 %v217
  %1037 = vmatpush1.msra.mxu0 %v216
  %1038 = vmatprep.subr.mxu0 %v233
  %1039 = vmatpush1.msra.mxu0 %v232
  %1040 = vmatprep.subr.mxu0 %v249
  %1041 = vmatpush1.msra.mxu0 %v248
  %1042 = vmatprep.subr.mxu0 %v265
  %1043 = vmatpush1.msra.mxu0 %v264
  %1044 = vmatprep.subr.mxu0 %v281
  %1045 = vmatpush1.msra.mxu0 %v280
  %1046 = vmatprep.subr.mxu0 %v297
  %1047 = vmatpush1.msra.mxu0 %v296
  %1048 = vmatprep.subr.mxu0 %v313
  %1049 = vmatpush1.msra.mxu0 %v312
  %1050 = vmatprep.subr.mxu0 %v329
  %1051 = vmatpush1.msra.mxu0 %v328
  %1052 = vmatprep.subr.mxu0 %v345
  %1053 = vmatpush1.msra.mxu0 %v344
  %1054 = vmatprep.subr.mxu0 %v361
  %1055 = vmatpush1.msra.mxu0 %v360
  %1056 = vmatprep.subr.mxu0 %v377
  %1057 = vmatpush1.msra.mxu0 %v376
  %1058 = vmatprep.subr.mxu0 %v393
  %1059 = vmatpush1.msra.mxu0 %v392
  %1060 = vmatprep.subr.mxu0 %v409
  %1061 = vmatpush1.msra.mxu0 %v408
  %1062 = vmatprep.subr.mxu0 %v425
  %1063 = vmatpush1.msra.mxu0 %v424
  %1064 = vmatprep.subr.mxu0 %v441
  %1065 = vmatpush1.msra.mxu0 %v440
  %1066 = vmatprep.subr.mxu0 %v457
  %1067 = vmatpush1.msra.mxu0 %v456
  %1068 = vmatprep.subr.mxu0 %v473
  %1069 = vmatpush1.msra.mxu0 %v472
  %1070 = vmatprep.subr.mxu0 %v489
  %1071 = vmatpush1.msra.mxu0 %v488
  %1072 = vmatprep.subr.mxu0 0.0
  %1073 = vmatpush1.msra.mxu0 0.0
  %1074 = vmatprep.subr.mxu0 0.0
  %1075 = vmatpush1.msra.mxu0 0.0
  %1076 = vmatprep.subr.mxu0 0.0
  %1077 = vmatpush1.msra.mxu0 0.0
  %1078 = vmatprep.subr.mxu0 0.0
  %1079 = vmatpush1.msra.mxu0 0.0
  %1080 = vmatprep.subr.mxu0 0.0
  %1081 = vmatpush1.msra.mxu0 0.0
  %1082 = vmatprep.subr.mxu0 0.0
  %1083 = vmatpush1.msra.mxu0 0.0
  %1084 = vmatprep.subr.mxu0 0.0
  %1085 = vmatpush1.msra.mxu0 0.0
  %1086 = vmatprep.subr.mxu0 0.0
  %1087 = vmatpush1.msra.mxu0 0.0
  %1088 = vmatprep.subr.mxu0 0.0
  %1089 = vmatpush1.msra.mxu0 0.0
  %1090 = vmatprep.subr.mxu0 0.0
  %1091 = vmatpush1.msra.mxu0 0.0
  %1092 = vmatprep.subr.mxu0 0.0
  %1093 = vmatpush1.msra.mxu0 0.0
  %1094 = vmatprep.subr.mxu0 0.0
  %1095 = vmatpush1.msra.mxu0 0.0
  %1096 = vmatprep.subr.mxu0 0.0
  %1097 = vmatpush1.msra.mxu0 0.0
  %1098 = vmatprep.subr.mxu0 0.0
  %1099 = vmatpush1.msra.mxu0 0.0
  %1100 = vmatprep.mubr.f32.mxu0 %v492
  %1101 = vmatmul.mubr.f32.gmra.mrb[0].mxu0 %v54
  %v1102 = vpop.f32.mrb[0].mxu0
  %v1103 = vadd.f32 0.0, %v1102
  %v1104 = vpop.f32.mrb[0].mxu0
  %v1105 = vadd.f32 0.0, %v1104
  %1106 = vmatprep.mubr.f32.mxu0 %v495
  %1107 = vmatmul.mubr.f32.gmra.mrb[0].mxu0 %v56
  %v1108 = vpop.f32.mrb[0].mxu0
  %v1109 = vadd.f32 0.0, %v1108
  %v1110 = vpop.f32.mrb[0].mxu0
  %v1111 = vadd.f32 0.0, %v1110
  %1112 = vdwg.mxu0
  %v1113 = vadd.f32 %v20, %v564
  %v1114 = vadd.f32 %v21, %v566
  %v1115 = vadd.f32 %v22, %v641
  %v1116 = vadd.f32 %v23, %v643
  %v1117 = vadd.f32 %v24, %v718
  %v1118 = vadd.f32 %v25, %v720
  %v1119 = vadd.f32 %v26, %v795
  %v1120 = vadd.f32 %v27, %v797
  %v1121 = vadd.f32 %v28, %v872
  %v1122 = vadd.f32 %v29, %v874
  %v1123 = vadd.f32 %v30, %v949
  %v1124 = vadd.f32 %v31, %v951
  %v1125 = vadd.f32 %v32, %v1026
  %v1126 = vadd.f32 %v33, %v1028
  %v1127 = vadd.f32 %v34, %v1103
  %v1128 = vadd.f32 %v35, %v1105
  %v1129 = vadd.f32 %v36, %v570
  %v1130 = vadd.f32 %v37, %v572
  %v1131 = vadd.f32 %v38, %v647
  %v1132 = vadd.f32 %v39, %v649
  %v1133 = vadd.f32 %v40, %v724
  %v1134 = vadd.f32 %v41, %v726
  %v1135 = vadd.f32 %v42, %v801
  %v1136 = vadd.f32 %v43, %v803
  %v1137 = vadd.f32 %v44, %v878
  %v1138 = vadd.f32 %v45, %v880
  %v1139 = vadd.f32 %v46, %v955
  %v1140 = vadd.f32 %v47, %v957
  %v1141 = vadd.f32 %v48, %v1032
  %v1142 = vadd.f32 %v49, %v1034
  %v1143 = vadd.f32 %v50, %v1109
  %v1144 = vadd.f32 %v51, %v1111
  %v1145 = vld [vmem:[%s3] sm:$0xff]
  %v1146 = vld [vmem:[%s3 + $0x8] sm:$0xff]
  %v1147 = vld [vmem:[%s4] sm:$0xff]
  %v1148 = vld [vmem:[%s4 + $0x8] sm:$0xff]
  %v1149 = vadd.f32 %v1113, %v1114
  %v1150 = vadd.f32 %v1149, %v1115
  %v1151 = vadd.f32 %v1150, %v1116
  %v1152 = vadd.f32 %v1151, %v1117
  %v1153 = vadd.f32 %v1152, %v1118
  %v1154 = vadd.f32 %v1153, %v1119
  %v1155 = vadd.f32 %v1154, %v1120
  %v1156 = vadd.f32 %v1155, %v1121
  %v1157 = vadd.f32 %v1156, %v1122
  %v1158 = vadd.f32 %v1157, %v1123
  %v1159 = vadd.f32 %v1158, %v1124
  %v1160 = vadd.f32 %v1159, %v1125
  %v1161 = vadd.f32 %v1160, %v1126
  %v1162 = vadd.f32 %v1161, %v1127
  %v1163 = vadd.f32 %v1162, %v1128
  %1164 = vadd.xlane.f32.xlu0 %v1163
  %v1165 = vpop.xlane.xlu0 %1164
  %v1166 = vadd.f32 %v1129, %v1130
  %v1167 = vadd.f32 %v1166, %v1131
  %v1168 = vadd.f32 %v1167, %v1132
  %v1169 = vadd.f32 %v1168, %v1133
  %v1170 = vadd.f32 %v1169, %v1134
  %v1171 = vadd.f32 %v1170, %v1135
  %v1172 = vadd.f32 %v1171, %v1136
  %v1173 = vadd.f32 %v1172, %v1137
  %v1174 = vadd.f32 %v1173, %v1138
  %v1175 = vadd.f32 %v1174, %v1139
  %v1176 = vadd.f32 %v1175, %v1140
  %v1177 = vadd.f32 %v1176, %v1141
  %v1178 = vadd.f32 %v1177, %v1142
  %v1179 = vadd.f32 %v1178, %v1143
  %v1180 = vadd.f32 %v1179, %v1144
  %1181 = vadd.xlane.f32.xlu0 %v1180
  %v1182 = vpop.xlane.xlu0 %1181
  %v1183 = vrcp.pop 2048.0
  %v1184 = vmul.f32 %v1165, %v1183
  %v1185 = vmul.f32 %v1182, %v1183
  %v1186 = vsub.f32 %v1113, %v1184
  %v1187 = vsub.f32 %v1114, %v1184
  %v1188 = vsub.f32 %v1115, %v1184
  %v1189 = vsub.f32 %v1116, %v1184
  %v1190 = vsub.f32 %v1117, %v1184
  %v1191 = vsub.f32 %v1118, %v1184
  %v1192 = vsub.f32 %v1119, %v1184
  %v1193 = vsub.f32 %v1120, %v1184
  %v1194 = vsub.f32 %v1121, %v1184
  %v1195 = vsub.f32 %v1122, %v1184
  %v1196 = vsub.f32 %v1123, %v1184
  %v1197 = vsub.f32 %v1124, %v1184
  %v1198 = vsub.f32 %v1125, %v1184
  %v1199 = vsub.f32 %v1126, %v1184
  %v1200 = vsub.f32 %v1127, %v1184
  %v1201 = vsub.f32 %v1128, %v1184
  %v1202 = vsub.f32 %v1129, %v1185
  %v1203 = vsub.f32 %v1130, %v1185
  %v1204 = vsub.f32 %v1131, %v1185
  %v1205 = vsub.f32 %v1132, %v1185
  %v1206 = vsub.f32 %v1133, %v1185
  %v1207 = vsub.f32 %v1134, %v1185
  %v1208 = vsub.f32 %v1135, %v1185
  %v1209 = vsub.f32 %v1136, %v1185
  %v1210 = vsub.f32 %v1137, %v1185
  %v1211 = vsub.f32 %v1138, %v1185
  %v1212 = vsub.f32 %v1139, %v1185
  %v1213 = vsub.f32 %v1140, %v1185
  %v1214 = vsub.f32 %v1141, %v1185
  %v1215 = vsub.f32 %v1142, %v1185
  %v1216 = vsub.f32 %v1143, %v1185
  %v1217 = vsub.f32 %v1144, %v1185
  %v1218 = vmul.f32 %v1186, %v1186
  %v1219 = vmul.f32 %v1187, %v1187
  %v1220 = vmul.f32 %v1188, %v1188
  %v1221 = vmul.f32 %v1189, %v1189
  %v1222 = vmul.f32 %v1190, %v1190
  %v1223 = vmul.f32 %v1191, %v1191
  %v1224 = vmul.f32 %v1192, %v1192
  %v1225 = vmul.f32 %v1193, %v1193
  %v1226 = vmul.f32 %v1194, %v1194
  %v1227 = vmul.f32 %v1195, %v1195
  %v1228 = vmul.f32 %v1196, %v1196
  %v1229 = vmul.f32 %v1197, %v1197
  %v1230 = vmul.f32 %v1198, %v1198
  %v1231 = vmul.f32 %v1199, %v1199
  %v1232 = vmul.f32 %v1200, %v1200
  %v1233 = vmul.f32 %v1201, %v1201
  %v1234 = vmul.f32 %v1202, %v1202
  %v1235 = vmul.f32 %v1203, %v1203
  %v1236 = vmul.f32 %v1204, %v1204
  %v1237 = vmul.f32 %v1205, %v1205
  %v1238 = vmul.f32 %v1206, %v1206
  %v1239 = vmul.f32 %v1207, %v1207
  %v1240 = vmul.f32 %v1208, %v1208
  %v1241 = vmul.f32 %v1209, %v1209
  %v1242 = vmul.f32 %v1210, %v1210
  %v1243 = vmul.f32 %v1211, %v1211
  %v1244 = vmul.f32 %v1212, %v1212
  %v1245 = vmul.f32 %v1213, %v1213
  %v1246 = vmul.f32 %v1214, %v1214
  %v1247 = vmul.f32 %v1215, %v1215
  %v1248 = vmul.f32 %v1216, %v1216
  %v1249 = vmul.f32 %v1217, %v1217
  %v1250 = vadd.f32 %v1218, %v1219
  %v1251 = vadd.f32 %v1250, %v1220
  %v1252 = vadd.f32 %v1251, %v1221
  %v1253 = vadd.f32 %v1252, %v1222
  %v1254 = vadd.f32 %v1253, %v1223
  %v1255 = vadd.f32 %v1254, %v1224
  %v1256 = vadd.f32 %v1255, %v1225
  %v1257 = vadd.f32 %v1256, %v1226
  %v1258 = vadd.f32 %v1257, %v1227
  %v1259 = vadd.f32 %v1258, %v1228
  %v1260 = vadd.f32 %v1259, %v1229
  %v1261 = vadd.f32 %v1260, %v1230
  %v1262 = vadd.f32 %v1261, %v1231
  %v1263 = vadd.f32 %v1262, %v1232
  %v1264 = vadd.f32 %v1263, %v1233
  %1265 = vadd.xlane.f32.xlu0 %v1264
  %v1266 = vpop.xlane.xlu0 %1265
  %v1267 = vadd.f32 %v1234, %v1235
  %v1268 = vadd.f32 %v1267, %v1236
  %v1269 = vadd.f32 %v1268, %v1237
  %v1270 = vadd.f32 %v1269, %v1238
  %v1271 = vadd.f32 %v1270, %v1239
  %v1272 = vadd.f32 %v1271, %v1240
  %v1273 = vadd.f32 %v1272, %v1241
  %v1274 = vadd.f32 %v1273, %v1242
  %v1275 = vadd.f32 %v1274, %v1243
  %v1276 = vadd.f32 %v1275, %v1244
  %v1277 = vadd.f32 %v1276, %v1245
  %v1278 = vadd.f32 %v1277, %v1246
  %v1279 = vadd.f32 %v1278, %v1247
  %v1280 = vadd.f32 %v1279, %v1248
  %v1281 = vadd.f32 %v1280, %v1249
  %1282 = vadd.xlane.f32.xlu0 %v1281
  %v1283 = vpop.xlane.xlu0 %1282
  %v1284 = vmul.f32 %v1266, %v1183
  %v1285 = vmul.f32 %v1283, %v1183
  %v1286 = vadd.f32 %v1284, 1e-05
  %v1287 = vadd.f32 %v1285, 1e-05
  %v1288 = vrsqrt.pop %v1286
  %v1289 = vrsqrt.pop %v1287
  %v1290 = vmul.f32 %v1186, %v1288
  %v1291 = vmul.f32 %v1187, %v1288
  %v1292 = vmul.f32 %v1188, %v1288
  %v1293 = vmul.f32 %v1189, %v1288
  %v1294 = vmul.f32 %v1190, %v1288
  %v1295 = vmul.f32 %v1191, %v1288
  %v1296 = vmul.f32 %v1192, %v1288
  %v1297 = vmul.f32 %v1193, %v1288
  %v1298 = vmul.f32 %v1194, %v1288
  %v1299 = vmul.f32 %v1195, %v1288
  %v1300 = vmul.f32 %v1196, %v1288
  %v1301 = vmul.f32 %v1197, %v1288
  %v1302 = vmul.f32 %v1198, %v1288
  %v1303 = vmul.f32 %v1199, %v1288
  %v1304 = vmul.f32 %v1200, %v1288
  %v1305 = vmul.f32 %v1201, %v1288
  %v1306 = vmul.f32 %v1202, %v1289
  %v1307 = vmul.f32 %v1203, %v1289
  %v1308 = vmul.f32 %v1204, %v1289
  %v1309 = vmul.f32 %v1205, %v1289
  %v1310 = vmul.f32 %v1206, %v1289
  %v1311 = vmul.f32 %v1207, %v1289
  %v1312 = vmul.f32 %v1208, %v1289
  %v1313 = vmul.f32 %v1209, %v1289
  %v1314 = vmul.f32 %v1210, %v1289
  %v1315 = vmul.f32 %v1211, %v1289
  %v1316 = vmul.f32 %v1212, %v1289
  %v1317 = vmul.f32 %v1213, %v1289
  %v1318 = vmul.f32 %v1214, %v1289
  %v1319 = vmul.f32 %v1215, %v1289
  %v1320 = vmul.f32 %v1216, %v1289
  %v1321 = vmul.f32 %v1217, %v1289
  %1323 = vset.pattern.permute.xlu0 0
  %1324 = vperm.xlu0 %1323, %v1145
  %v1325 = vpop.permute.xlu0 %1324
  %1328 = vset.pattern.permute.xlu0 0
  %1329 = vperm.xlu0 %1328, %v1146
  %v1330 = vpop.permute.xlu0 %1329
  %v1332 = vmul.f32 %v1290, %v1325
  %v1333 = vmul.f32 %v1291, %v1325
  %v1334 = vmul.f32 %v1292, %v1325
  %v1335 = vmul.f32 %v1293, %v1325
  %v1336 = vmul.f32 %v1294, %v1325
  %v1337 = vmul.f32 %v1295, %v1325
  %v1338 = vmul.f32 %v1296, %v1325
  %v1339 = vmul.f32 %v1297, %v1325
  %v1340 = vmul.f32 %v1298, %v1325
  %v1341 = vmul.f32 %v1299, %v1325
  %v1342 = vmul.f32 %v1300, %v1325
  %v1343 = vmul.f32 %v1301, %v1325
  %v1344 = vmul.f32 %v1302, %v1325
  %v1345 = vmul.f32 %v1303, %v1325
  %v1346 = vmul.f32 %v1304, %v1325
  %v1347 = vmul.f32 %v1305, %v1325
  %v1348 = vmul.f32 %v1306, %v1330
  %v1349 = vmul.f32 %v1307, %v1330
  %v1350 = vmul.f32 %v1308, %v1330
  %v1351 = vmul.f32 %v1309, %v1330
  %v1352 = vmul.f32 %v1310, %v1330
  %v1353 = vmul.f32 %v1311, %v1330
  %v1354 = vmul.f32 %v1312, %v1330
  %v1355 = vmul.f32 %v1313, %v1330
  %v1356 = vmul.f32 %v1314, %v1330
  %v1357 = vmul.f32 %v1315, %v1330
  %v1358 = vmul.f32 %v1316, %v1330
  %v1359 = vmul.f32 %v1317, %v1330
  %v1360 = vmul.f32 %v1318, %v1330
  %v1361 = vmul.f32 %v1319, %v1330
  %v1362 = vmul.f32 %v1320, %v1330
  %v1363 = vmul.f32 %v1321, %v1330
  %1365 = vset.pattern.permute.xlu0 0
  %1366 = vperm.xlu0 %1365, %v1147
  %v1367 = vpop.permute.xlu0 %1366
  %1370 = vset.pattern.permute.xlu0 0
  %1371 = vperm.xlu0 %1370, %v1148
  %v1372 = vpop.permute.xlu0 %1371
  %v1374 = vadd.f32 %v1332, %v1367
  %v1375 = vadd.f32 %v1333, %v1367
  %v1376 = vadd.f32 %v1334, %v1367
  %v1377 = vadd.f32 %v1335, %v1367
  %v1378 = vadd.f32 %v1336, %v1367
  %v1379 = vadd.f32 %v1337, %v1367
  %v1380 = vadd.f32 %v1338, %v1367
  %v1381 = vadd.f32 %v1339, %v1367
  %v1382 = vadd.f32 %v1340, %v1367
  %v1383 = vadd.f32 %v1341, %v1367
  %v1384 = vadd.f32 %v1342, %v1367
  %v1385 = vadd.f32 %v1343, %v1367
  %v1386 = vadd.f32 %v1344, %v1367
  %v1387 = vadd.f32 %v1345, %v1367
  %v1388 = vadd.f32 %v1346, %v1367
  %v1389 = vadd.f32 %v1347, %v1367
  %v1390 = vadd.f32 %v1348, %v1372
  %v1391 = vadd.f32 %v1349, %v1372
  %v1392 = vadd.f32 %v1350, %v1372
  %v1393 = vadd.f32 %v1351, %v1372
  %v1394 = vadd.f32 %v1352, %v1372
  %v1395 = vadd.f32 %v1353, %v1372
  %v1396 = vadd.f32 %v1354, %v1372
  %v1397 = vadd.f32 %v1355, %v1372
  %v1398 = vadd.f32 %v1356, %v1372
  %v1399 = vadd.f32 %v1357, %v1372
  %v1400 = vadd.f32 %v1358, %v1372
  %v1401 = vadd.f32 %v1359, %v1372
  %v1402 = vadd.f32 %v1360, %v1372
  %v1403 = vadd.f32 %v1361, %v1372
  %v1404 = vadd.f32 %v1362, %v1372
  %v1405 = vadd.f32 %v1363, %v1372
  %v1406 = vmax.f32 %v1374, 0.0
  %v1407 = vmax.f32 %v1375, 0.0
  %v1408 = vmax.f32 %v1376, 0.0
  %v1409 = vmax.f32 %v1377, 0.0
  %v1410 = vmax.f32 %v1378, 0.0
  %v1411 = vmax.f32 %v1379, 0.0
  %v1412 = vmax.f32 %v1380, 0.0
  %v1413 = vmax.f32 %v1381, 0.0
  %v1414 = vmax.f32 %v1382, 0.0
  %v1415 = vmax.f32 %v1383, 0.0
  %v1416 = vmax.f32 %v1384, 0.0
  %v1417 = vmax.f32 %v1385, 0.0
  %v1418 = vmax.f32 %v1386, 0.0
  %v1419 = vmax.f32 %v1387, 0.0
  %v1420 = vmax.f32 %v1388, 0.0
  %v1421 = vmax.f32 %v1389, 0.0
  %v1422 = vmax.f32 %v1390, 0.0
  %v1423 = vmax.f32 %v1391, 0.0
  %v1424 = vmax.f32 %v1392, 0.0
  %v1425 = vmax.f32 %v1393, 0.0
  %v1426 = vmax.f32 %v1394, 0.0
  %v1427 = vmax.f32 %v1395, 0.0
  %v1428 = vmax.f32 %v1396, 0.0
  %v1429 = vmax.f32 %v1397, 0.0
  %v1430 = vmax.f32 %v1398, 0.0
  %v1431 = vmax.f32 %v1399, 0.0
  %v1432 = vmax.f32 %v1400, 0.0
  %v1433 = vmax.f32 %v1401, 0.0
  %v1434 = vmax.f32 %v1402, 0.0
  %v1435 = vmax.f32 %v1403, 0.0
  %v1436 = vmax.f32 %v1404, 0.0
  %v1437 = vmax.f32 %v1405, 0.0
  %1438 = vst [vmem:[%s5] sm:$0xff] %v1406
  %1439 = vst [vmem:[%s5 + $0x8] sm:$0xff] %v1407
  %1440 = vst [vmem:[%s5 + $0x10] sm:$0xff] %v1408
  %1441 = vst [vmem:[%s5 + $0x18] sm:$0xff] %v1409
  %1442 = vst [vmem:[%s5 + $0x20] sm:$0xff] %v1410
  %1443 = vst [vmem:[%s5 + $0x28] sm:$0xff] %v1411
  %1444 = vst [vmem:[%s5 + $0x30] sm:$0xff] %v1412
  %1445 = vst [vmem:[%s5 + $0x38] sm:$0xff] %v1413
  %1446 = vst [vmem:[%s5 + $0x40] sm:$0xff] %v1414
  %1447 = vst [vmem:[%s5 + $0x48] sm:$0xff] %v1415
  %1448 = vst [vmem:[%s5 + $0x50] sm:$0xff] %v1416
  %1449 = vst [vmem:[%s5 + $0x58] sm:$0xff] %v1417
  %1450 = vst [vmem:[%s5 + $0x60] sm:$0xff] %v1418
  %1451 = vst [vmem:[%s5 + $0x68] sm:$0xff] %v1419
  %1452 = vst [vmem:[%s5 + $0x70] sm:$0xff] %v1420
  %1453 = vst [vmem:[%s5 + $0x78] sm:$0xff] %v1421
  %1454 = vst [vmem:[%s5 + $0x80] sm:$0xff] %v1422
  %1455 = vst [vmem:[%s5 + $0x88] sm:$0xff] %v1423
  %1456 = vst [vmem:[%s5 + $0x90] sm:$0xff] %v1424
  %1457 = vst [vmem:[%s5 + $0x98] sm:$0xff] %v1425
  %1458 = vst [vmem:[%s5 + $0xa0] sm:$0xff] %v1426
  %1459 = vst [vmem:[%s5 + $0xa8] sm:$0xff] %v1427
  %1460 = vst [vmem:[%s5 + $0xb0] sm:$0xff] %v1428
  %1461 = vst [vmem:[%s5 + $0xb8] sm:$0xff] %v1429
  %1462 = vst [vmem:[%s5 + $0xc0] sm:$0xff] %v1430
  %1463 = vst [vmem:[%s5 + $0xc8] sm:$0xff] %v1431
  %1464 = vst [vmem:[%s5 + $0xd0] sm:$0xff] %v1432
  %1465 = vst [vmem:[%s5 + $0xd8] sm:$0xff] %v1433
  %1466 = vst [vmem:[%s5 + $0xe0] sm:$0xff] %v1434
  %1467 = vst [vmem:[%s5 + $0xe8] sm:$0xff] %v1435
  %1468 = vst [vmem:[%s5 + $0xf0] sm:$0xff] %v1436
  %1469 = vst [vmem:[%s5 + $0xf8] sm:$0xff] %v1437
  // Predicated region
  $region22: #{wide_resnet_forward.9} parent=0 // pred_check
    _
  $region23: #{wide_resnet_forward.9} parent=0 // pred_check_branch
    %1471 = sbr.rel (0) target = $region25
  $region24: #{wide_resnet_forward.9} parent=0 // pred_region
    _
  $region25: #{wide_resnet_forward.9} parent=0 // pred_fallthru
    _
  // Predicated region
  $region26: #{wide_resnet_forward.9} parent=0 // pred_check
    _
  $region27: #{wide_resnet_forward.9} parent=0 // pred_check_branch
    %1473 = sbr.rel (0) target = $region29
  $region28: #{wide_resnet_forward.9} parent=0 // pred_region
    _
  $region29: #{wide_resnet_forward.9} parent=0 // pred_fallthru
    _

// kernel: wide_resnet_forward.10
$region0: #{wide_resnet_forward.10}
  #allocation0 [shape = 'u32[]', space=smem, size = 0x4, offset = 0x4, fixed_abs, tag = 'smem constant byte address 0x4 - core index']
  #allocation1 [shape = 'u32[144,128]{1,0:T(1,128)}', space=vmem, size = 0x12000, scoped, tag = 'internal scratch']
  %s0 = inlined_call_operand.vmem [shape: bf16[64,144], index: 0, kind: input, shape index: {}]
  %s1 = inlined_call_operand.vmem [shape: bf16[144,512], index: 1, kind: input, shape index: {}]
  %s2 = inlined_call_operand.vmem [shape: f32[32,1], index: 2, kind: input, shape index: {}]
  %s3 = inlined_call_operand.vmem [shape: f32[32,1], index: 3, kind: input, shape index: {}]
  %s4 = inlined_call_operand.vmem [shape: f32[32,512], index: 4, kind: output, shape index: {0}]
  %s5 = inlined_call_operand.vmem [shape: f32[32,512], index: 5, kind: output, shape index: {1}]
  %6 = xla_tuple %s4, %s5
  %s7 = sld [smem:[#allocation0]]
  $region34: #{wide_resnet_forward.10} parent=0
    _
  %s9 = ssub.s32 1, %s7
  %s10 = scalar_select 0, %s9, %s7
  // Predicated region
  $region2: #{wide_resnet_forward.10} parent=0 // pred_check
    _
  $region3: #{wide_resnet_forward.10} parent=0 // pred_check_branch
    %12 = sbr.rel (0) target = $region5
  $region4: #{wide_resnet_forward.10} parent=0 // pred_region
    _
  $region5: #{wide_resnet_forward.10} parent=0 // pred_fallthru
    _
  // Predicated region
  $region6: #{wide_resnet_forward.10} parent=0 // pred_check
    _
  $region7: #{wide_resnet_forward.10} parent=0 // pred_check_branch
    %14 = sbr.rel (0) target = $region9
  $region8: #{wide_resnet_forward.10} parent=0 // pred_region
    _
  $region9: #{wide_resnet_forward.10} parent=0 // pred_fallthru
    _
  // Predicated region
  $region10: #{wide_resnet_forward.10} parent=0 // pred_check
    _
  $region11: #{wide_resnet_forward.10} parent=0 // pred_check_branch
    %16 = sbr.rel (0) target = $region13
  $region12: #{wide_resnet_forward.10} parent=0 // pred_region
    _
  $region13: #{wide_resnet_forward.10} parent=0 // pred_fallthru
    _
  // Predicated region
  $region14: #{wide_resnet_forward.10} parent=0 // pred_check
    _
  $region15: #{wide_resnet_forward.10} parent=0 // pred_check_branch
    %18 = sbr.rel (0) target = $region17
  $region16: #{wide_resnet_forward.10} parent=0 // pred_region
    _
  $region17: #{wide_resnet_forward.10} parent=0 // pred_fallthru
    _
  %v19 = vld [vmem:[%s0] sm:$0xff]
  %v20 = vld [vmem:[%s0 + $0x8] sm:$0xff]
  %v21 = vld [vmem:[%s0 + $0x10] sm:$0xff]
  %v22 = vld [vmem:[%s0 + $0x18] sm:$0xff]
  %v23 = vld [vmem:[%s0 + $0x20] sm:$0xff]
  %v24 = vld [vmem:[%s0 + $0x28] sm:$0xff]
  %v25 = vld [vmem:[%s0 + $0x30] sm:$0xff]
  %v26 = vld [vmem:[%s0 + $0x38] sm:$0xff]
  %v27 = vunpack.c.l.bf16 %v19
  %v28 = vunpack.c.h.bf16 %v19
  %v29 = vunpack.c.l.bf16 %v20
  %v30 = vunpack.c.h.bf16 %v20
  %v31 = vunpack.c.l.bf16 %v21
  %v32 = vunpack.c.h.bf16 %v21
  %v33 = vunpack.c.l.bf16 %v22
  %v34 = vunpack.c.h.bf16 %v22
  %v35 = vunpack.c.l.bf16 %v23
  %v36 = vunpack.c.h.bf16 %v23
  %v37 = vunpack.c.l.bf16 %v24
  %v38 = vunpack.c.h.bf16 %v24
  %v39 = vunpack.c.l.bf16 %v25
  %v40 = vunpack.c.h.bf16 %v25
  %v41 = vunpack.c.l.bf16 %v26
  %v42 = vunpack.c.h.bf16 %v26
  %v43 = vld [vmem:[%s1] sm:$0xff]
  %v44 = vld [vmem:[%s1 + $0x8] sm:$0xff]
  %v45 = vld [vmem:[%s1 + $0x10] sm:$0xff]
  %v46 = vld [vmem:[%s1 + $0x18] sm:$0xff]
  %v47 = vld [vmem:[%s1 + $0x20] sm:$0xff]
  %v48 = vld [vmem:[%s1 + $0x28] sm:$0xff]
  %v49 = vld [vmem:[%s1 + $0x30] sm:$0xff]
  %v50 = vld [vmem:[%s1 + $0x38] sm:$0xff]
  %v51 = vld [vmem:[%s1 + $0x40] sm:$0xff]
  %v52 = vld [vmem:[%s1 + $0x48] sm:$0xff]
  %v53 = vld [vmem:[%s1 + $0x50] sm:$0xff]
  %v54 = vld [vmem:[%s1 + $0x58] sm:$0xff]
  %v55 = vld [vmem:[%s1 + $0x60] sm:$0xff]
  %v56 = vld [vmem:[%s1 + $0x68] sm:$0xff]
  %v57 = vld [vmem:[%s1 + $0x70] sm:$0xff]
  %v58 = vld [vmem:[%s1 + $0x78] sm:$0xff]
  %v59 = vld [vmem:[%s1 + $0x80] sm:$0xff]
  %v60 = vld [vmem:[%s1 + $0x88] sm:$0xff]
  %v61 = vld [vmem:[%s1 + $0x90] sm:$0xff]
  %v62 = vld [vmem:[%s1 + $0x98] sm:$0xff]
  %v63 = vld [vmem:[%s1 + $0xa0] sm:$0xff]
  %v64 = vld [vmem:[%s1 + $0xa8] sm:$0xff]
  %v65 = vld [vmem:[%s1 + $0xb0] sm:$0xff]
  %v66 = vld [vmem:[%s1 + $0xb8] sm:$0xff]
  %v67 = vld [vmem:[%s1 + $0xc0] sm:$0xff]
  %v68 = vld [vmem:[%s1 + $0xc8] sm:$0xff]
  %v69 = vld [vmem:[%s1 + $0xd0] sm:$0xff]
  %v70 = vld [vmem:[%s1 + $0xd8] sm:$0xff]
  %v71 = vld [vmem:[%s1 + $0xe0] sm:$0xff]
  %v72 = vld [vmem:[%s1 + $0xe8] sm:$0xff]
  %v73 = vld [vmem:[%s1 + $0xf0] sm:$0xff]
  %v74 = vld [vmem:[%s1 + $0xf8] sm:$0xff]
  %v75 = vld [vmem:[%s1 + $0x100] sm:$0xff]
  %v76 = vld [vmem:[%s1 + $0x108] sm:$0xff]
  %v77 = vld [vmem:[%s1 + $0x110] sm:$0xff]
  %v78 = vld [vmem:[%s1 + $0x118] sm:$0xff]
  %v79 = vunpack.c.l.bf16 %v43
  %v80 = vunpack.c.h.bf16 %v43
  %v81 = vunpack.c.l.bf16 %v44
  %v82 = vunpack.c.h.bf16 %v44
  %v83 = vunpack.c.l.bf16 %v45
  %v84 = vunpack.c.h.bf16 %v45
  %v85 = vunpack.c.l.bf16 %v46
  %v86 = vunpack.c.h.bf16 %v46
  %v87 = vunpack.c.l.bf16 %v47
  %v88 = vunpack.c.h.bf16 %v47
  %v89 = vunpack.c.l.bf16 %v48
  %v90 = vunpack.c.h.bf16 %v48
  %v91 = vunpack.c.l.bf16 %v49
  %v92 = vunpack.c.h.bf16 %v49
  %v93 = vunpack.c.l.bf16 %v50
  %v94 = vunpack.c.h.bf16 %v50
  %v95 = vunpack.c.l.bf16 %v51
  %v96 = vunpack.c.h.bf16 %v51
  %v97 = vunpack.c.l.bf16 %v52
  %v98 = vunpack.c.h.bf16 %v52
  %v99 = vunpack.c.l.bf16 %v53
  %v100 = vunpack.c.h.bf16 %v53
  %v101 = vunpack.c.l.bf16 %v54
  %v102 = vunpack.c.h.bf16 %v54
  %v103 = vunpack.c.l.bf16 %v55
  %v104 = vunpack.c.h.bf16 %v55
  %v105 = vunpack.c.l.bf16 %v56
  %v106 = vunpack.c.h.bf16 %v56
  %v107 = vunpack.c.l.bf16 %v57
  %v108 = vunpack.c.h.bf16 %v57
  %v109 = vunpack.c.l.bf16 %v58
  %v110 = vunpack.c.h.bf16 %v58
  %v111 = vunpack.c.l.bf16 %v59
  %v112 = vunpack.c.h.bf16 %v59
  %v113 = vunpack.c.l.bf16 %v60
  %v114 = vunpack.c.h.bf16 %v60
  %v115 = vunpack.c.l.bf16 %v61
  %v116 = vunpack.c.h.bf16 %v61
  %v117 = vunpack.c.l.bf16 %v62
  %v118 = vunpack.c.h.bf16 %v62
  %v119 = vunpack.c.l.bf16 %v63
  %v120 = vunpack.c.h.bf16 %v63
  %v121 = vunpack.c.l.bf16 %v64
  %v122 = vunpack.c.h.bf16 %v64
  %v123 = vunpack.c.l.bf16 %v65
  %v124 = vunpack.c.h.bf16 %v65
  %v125 = vunpack.c.l.bf16 %v66
  %v126 = vunpack.c.h.bf16 %v66
  %v127 = vunpack.c.l.bf16 %v67
  %v128 = vunpack.c.h.bf16 %v67
  %v129 = vunpack.c.l.bf16 %v68
  %v130 = vunpack.c.h.bf16 %v68
  %v131 = vunpack.c.l.bf16 %v69
  %v132 = vunpack.c.h.bf16 %v69
  %v133 = vunpack.c.l.bf16 %v70
  %v134 = vunpack.c.h.bf16 %v70
  %v135 = vunpack.c.l.bf16 %v71
  %v136 = vunpack.c.h.bf16 %v71
  %v137 = vunpack.c.l.bf16 %v72
  %v138 = vunpack.c.h.bf16 %v72
  %v139 = vunpack.c.l.bf16 %v73
  %v140 = vunpack.c.h.bf16 %v73
  %v141 = vunpack.c.l.bf16 %v74
  %v142 = vunpack.c.h.bf16 %v74
  %v143 = vunpack.c.l.bf16 %v75
  %v144 = vunpack.c.h.bf16 %v75
  %v145 = vunpack.c.l.bf16 %v76
  %v146 = vunpack.c.h.bf16 %v76
  %v147 = vunpack.c.l.bf16 %v77
  %v148 = vunpack.c.h.bf16 %v77
  %v149 = vunpack.c.l.bf16 %v78
  %v150 = vunpack.c.h.bf16 %v78
  %vm151 = vcmask 130048
  %v153 = vsel %vm151, %v28, 0
  %v156 = vsel %vm151, %v30, 0
  %v159 = vsel %vm151, %v32, 0
  %v162 = vsel %vm151, %v34, 0
  %v165 = vsel %vm151, %v36, 0
  %v168 = vsel %vm151, %v38, 0
  %v171 = vsel %vm151, %v40, 0
  %v174 = vsel %vm151, %v42, 0
  %176 = vmatprep.subr.mxu0 %v80
  %177 = vmatpush1.msra.mxu0 %v79
  %178 = vmatprep.subr.mxu0 %v84
  %179 = vmatpush1.msra.mxu0 %v83
  %180 = vmatprep.subr.mxu0 %v88
  %181 = vmatpush1.msra.mxu0 %v87
  %182 = vmatprep.subr.mxu0 %v92
  %183 = vmatpush1.msra.mxu0 %v91
  %184 = vmatprep.subr.mxu0 %v96
  %185 = vmatpush1.msra.mxu0 %v95
  %186 = vmatprep.subr.mxu0 %v100
  %187 = vmatpush1.msra.mxu0 %v99
  %188 = vmatprep.subr.mxu0 %v104
  %189 = vmatpush1.msra.mxu0 %v103
  %190 = vmatprep.subr.mxu0 %v108
  %191 = vmatpush1.msra.mxu0 %v107
  %192 = vmatprep.subr.mxu0 %v112
  %193 = vmatpush1.msra.mxu0 %v111
  %194 = vmatprep.subr.mxu0 %v116
  %195 = vmatpush1.msra.mxu0 %v115
  %196 = vmatprep.subr.mxu0 %v120
  %197 = vmatpush1.msra.mxu0 %v119
  %198 = vmatprep.subr.mxu0 %v124
  %199 = vmatpush1.msra.mxu0 %v123
  %200 = vmatprep.subr.mxu0 %v128
  %201 = vmatpush1.msra.mxu0 %v127
  %202 = vmatprep.subr.mxu0 %v132
  %203 = vmatpush1.msra.mxu0 %v131
  %204 = vmatprep.subr.mxu0 %v136
  %205 = vmatpush1.msra.mxu0 %v135
  %206 = vmatprep.subr.mxu0 %v140
  %207 = vmatpush1.msra.mxu0 %v139
  %208 = vmatprep.subr.mxu0 %v144
  %209 = vmatpush1.msra.mxu0 %v143
  %210 = vmatprep.subr.mxu0 %v148
  %211 = vmatpush1.msra.mxu0 %v147
  %212 = vmatprep.subr.mxu0 0.0
  %213 = vmatpush1.msra.mxu0 0.0
  %214 = vmatprep.subr.mxu0 0.0
  %215 = vmatpush1.msra.mxu0 0.0
  %216 = vmatprep.subr.mxu0 0.0
  %217 = vmatpush1.msra.mxu0 0.0
  %218 = vmatprep.subr.mxu0 0.0
  %219 = vmatpush1.msra.mxu0 0.0
  %220 = vmatprep.subr.mxu0 0.0
  %221 = vmatpush1.msra.mxu0 0.0
  %222 = vmatprep.subr.mxu0 0.0
  %223 = vmatpush1.msra.mxu0 0.0
  %224 = vmatprep.subr.mxu0 0.0
  %225 = vmatpush1.msra.mxu0 0.0
  %226 = vmatprep.subr.mxu0 0.0
  %227 = vmatpush1.msra.mxu0 0.0
  %228 = vmatprep.subr.mxu0 0.0
  %229 = vmatpush1.msra.mxu0 0.0
  %230 = vmatprep.subr.mxu0 0.0
  %231 = vmatpush1.msra.mxu0 0.0
  %232 = vmatprep.subr.mxu0 0.0
  %233 = vmatpush1.msra.mxu0 0.0
  %234 = vmatprep.subr.mxu0 0.0
  %235 = vmatpush1.msra.mxu0 0.0
  %236 = vmatprep.subr.mxu0 0.0
  %237 = vmatpush1.msra.mxu0 0.0
  %238 = vmatprep.subr.mxu0 0.0
  %239 = vmatpush1.msra.mxu0 0.0
  %240 = vmatprep.mubr.f32.mxu0 %v153
  %241 = vmatmul.mubr.f32.gmra.mrb[0].mxu0 %v27
  %v242 = vpop.f32.mrb[0].mxu0
  %v243 = vadd.f32 0.0, %v242
  %v244 = vpop.f32.mrb[0].mxu0
  %v245 = vadd.f32 0.0, %v244
  %246 = vmatprep.mubr.f32.mxu0 %v156
  %247 = vmatmul.mubr.f32.gmra.mrb[0].mxu0 %v29
  %v248 = vpop.f32.mrb[0].mxu0
  %v249 = vadd.f32 0.0, %v248
  %v250 = vpop.f32.mrb[0].mxu0
  %v251 = vadd.f32 0.0, %v250
  %252 = vmatprep.mubr.f32.mxu0 %v159
  %253 = vmatmul.mubr.f32.gmra.mrb[0].mxu0 %v31
  %v254 = vpop.f32.mrb[0].mxu0
  %v255 = vadd.f32 0.0, %v254
  %v256 = vpop.f32.mrb[0].mxu0
  %v257 = vadd.f32 0.0, %v256
  %258 = vmatprep.mubr.f32.mxu0 %v162
  %259 = vmatmul.mubr.f32.gmra.mrb[0].mxu0 %v33
  %v260 = vpop.f32.mrb[0].mxu0
  %v261 = vadd.f32 0.0, %v260
  %v262 = vpop.f32.mrb[0].mxu0
  %v263 = vadd.f32 0.0, %v262
  %264 = vmatprep.mubr.f32.mxu0 %v165
  %265 = vmatmul.mubr.f32.gmra.mrb[0].mxu0 %v35
  %v266 = vpop.f32.mrb[0].mxu0
  %v267 = vadd.f32 0.0, %v266
  %v268 = vpop.f32.mrb[0].mxu0
  %v269 = vadd.f32 0.0, %v268
  %270 = vmatprep.mubr.f32.mxu0 %v168
  %271 = vmatmul.mubr.f32.gmra.mrb[0].mxu0 %v37
  %v272 = vpop.f32.mrb[0].mxu0
  %v273 = vadd.f32 0.0, %v272
  %v274 = vpop.f32.mrb[0].mxu0
  %v275 = vadd.f32 0.0, %v274
  %276 = vmatprep.mubr.f32.mxu0 %v171
  %277 = vmatmul.mubr.f32.gmra.mrb[0].mxu0 %v39
  %v278 = vpop.f32.mrb[0].mxu0
  %v279 = vadd.f32 0.0, %v278
  %v280 = vpop.f32.mrb[0].mxu0
  %v281 = vadd.f32 0.0, %v280
  %282 = vmatprep.mubr.f32.mxu0 %v174
  %283 = vmatmul.mubr.f32.gmra.mrb[0].mxu0 %v41
  %v284 = vpop.f32.mrb[0].mxu0
  %v285 = vadd.f32 0.0, %v284
  %v286 = vpop.f32.mrb[0].mxu0
  %v287 = vadd.f32 0.0, %v286
  %288 = vdwg.mxu0
  %289 = vmatprep.subr.mxu0 %v82
  %290 = vmatpush1.msra.mxu0 %v81
  %291 = vmatprep.subr.mxu0 %v86
  %292 = vmatpush1.msra.mxu0 %v85
  %293 = vmatprep.subr.mxu0 %v90
  %294 = vmatpush1.msra.mxu0 %v89
  %295 = vmatprep.subr.mxu0 %v94
  %296 = vmatpush1.msra.mxu0 %v93
  %297 = vmatprep.subr.mxu0 %v98
  %298 = vmatpush1.msra.mxu0 %v97
  %299 = vmatprep.subr.mxu0 %v102
  %300 = vmatpush1.msra.mxu0 %v101
  %301 = vmatprep.subr.mxu0 %v106
  %302 = vmatpush1.msra.mxu0 %v105
  %303 = vmatprep.subr.mxu0 %v110
  %304 = vmatpush1.msra.mxu0 %v109
  %305 = vmatprep.subr.mxu0 %v114
  %306 = vmatpush1.msra.mxu0 %v113
  %307 = vmatprep.subr.mxu0 %v118
  %308 = vmatpush1.msra.mxu0 %v117
  %309 = vmatprep.subr.mxu0 %v122
  %310 = vmatpush1.msra.mxu0 %v121
  %311 = vmatprep.subr.mxu0 %v126
  %312 = vmatpush1.msra.mxu0 %v125
  %313 = vmatprep.subr.mxu0 %v130
  %314 = vmatpush1.msra.mxu0 %v129
  %315 = vmatprep.subr.mxu0 %v134
  %316 = vmatpush1.msra.mxu0 %v133
  %317 = vmatprep.subr.mxu0 %v138
  %318 = vmatpush1.msra.mxu0 %v137
  %319 = vmatprep.subr.mxu0 %v142
  %320 = vmatpush1.msra.mxu0 %v141
  %321 = vmatprep.subr.mxu0 %v146
  %322 = vmatpush1.msra.mxu0 %v145
  %323 = vmatprep.subr.mxu0 %v150
  %324 = vmatpush1.msra.mxu0 %v149
  %325 = vmatprep.subr.mxu0 0.0
  %326 = vmatpush1.msra.mxu0 0.0
  %327 = vmatprep.subr.mxu0 0.0
  %328 = vmatpush1.msra.mxu0 0.0
  %329 = vmatprep.subr.mxu0 0.0
  %330 = vmatpush1.msra.mxu0 0.0
  %331 = vmatprep.subr.mxu0 0.0
  %332 = vmatpush1.msra.mxu0 0.0
  %333 = vmatprep.subr.mxu0 0.0
  %334 = vmatpush1.msra.mxu0 0.0
  %335 = vmatprep.subr.mxu0 0.0
  %336 = vmatpush1.msra.mxu0 0.0
  %337 = vmatprep.subr.mxu0 0.0
  %338 = vmatpush1.msra.mxu0 0.0
  %339 = vmatprep.subr.mxu0 0.0
  %340 = vmatpush1.msra.mxu0 0.0
  %341 = vmatprep.subr.mxu0 0.0
  %342 = vmatpush1.msra.mxu0 0.0
  %343 = vmatprep.subr.mxu0 0.0
  %344 = vmatpush1.msra.mxu0 0.0
  %345 = vmatprep.subr.mxu0 0.0
  %346 = vmatpush1.msra.mxu0 0.0
  %347 = vmatprep.subr.mxu0 0.0
  %348 = vmatpush1.msra.mxu0 0.0
  %349 = vmatprep.subr.mxu0 0.0
  %350 = vmatpush1.msra.mxu0 0.0
  %351 = vmatprep.subr.mxu0 0.0
  %352 = vmatpush1.msra.mxu0 0.0
  %353 = vmatprep.mubr.f32.mxu0 %v153
  %354 = vmatmul.mubr.f32.gmra.mrb[0].mxu0 %v27
  %v355 = vpop.f32.mrb[0].mxu0
  %v356 = vadd.f32 0.0, %v355
  %v357 = vpop.f32.mrb[0].mxu0
  %v358 = vadd.f32 0.0, %v357
  %359 = vmatprep.mubr.f32.mxu0 %v156
  %360 = vmatmul.mubr.f32.gmra.mrb[0].mxu0 %v29
  %v361 = vpop.f32.mrb[0].mxu0
  %v362 = vadd.f32 0.0, %v361
  %v363 = vpop.f32.mrb[0].mxu0
  %v364 = vadd.f32 0.0, %v363
  %365 = vmatprep.mubr.f32.mxu0 %v159
  %366 = vmatmul.mubr.f32.gmra.mrb[0].mxu0 %v31
  %v367 = vpop.f32.mrb[0].mxu0
  %v368 = vadd.f32 0.0, %v367
  %v369 = vpop.f32.mrb[0].mxu0
  %v370 = vadd.f32 0.0, %v369
  %371 = vmatprep.mubr.f32.mxu0 %v162
  %372 = vmatmul.mubr.f32.gmra.mrb[0].mxu0 %v33
  %v373 = vpop.f32.mrb[0].mxu0
  %v374 = vadd.f32 0.0, %v373
  %v375 = vpop.f32.mrb[0].mxu0
  %v376 = vadd.f32 0.0, %v375
  %377 = vmatprep.mubr.f32.mxu0 %v165
  %378 = vmatmul.mubr.f32.gmra.mrb[0].mxu0 %v35
  %v379 = vpop.f32.mrb[0].mxu0
  %v380 = vadd.f32 0.0, %v379
  %v381 = vpop.f32.mrb[0].mxu0
  %v382 = vadd.f32 0.0, %v381
  %383 = vmatprep.mubr.f32.mxu0 %v168
  %384 = vmatmul.mubr.f32.gmra.mrb[0].mxu0 %v37
  %v385 = vpop.f32.mrb[0].mxu0
  %v386 = vadd.f32 0.0, %v385
  %v387 = vpop.f32.mrb[0].mxu0
  %v388 = vadd.f32 0.0, %v387
  %389 = vmatprep.mubr.f32.mxu0 %v171
  %390 = vmatmul.mubr.f32.gmra.mrb[0].mxu0 %v39
  %v391 = vpop.f32.mrb[0].mxu0
  %v392 = vadd.f32 0.0, %v391
  %v393 = vpop.f32.mrb[0].mxu0
  %v394 = vadd.f32 0.0, %v393
  %395 = vmatprep.mubr.f32.mxu0 %v174
  %396 = vmatmul.mubr.f32.gmra.mrb[0].mxu0 %v41
  %v397 = vpop.f32.mrb[0].mxu0
  %v398 = vadd.f32 0.0, %v397
  %v399 = vpop.f32.mrb[0].mxu0
  %v400 = vadd.f32 0.0, %v399
  %401 = vdwg.mxu0
  %402 = vst [vmem:[%s5] sm:$0xff] %v267
  %403 = vst [vmem:[%s5 + $0x8] sm:$0xff] %v269
  %404 = vst [vmem:[%s5 + $0x10] sm:$0xff] %v380
  %405 = vst [vmem:[%s5 + $0x18] sm:$0xff] %v382
  %406 = vst [vmem:[%s5 + $0x20] sm:$0xff] %v273
  %407 = vst [vmem:[%s5 + $0x28] sm:$0xff] %v275
  %408 = vst [vmem:[%s5 + $0x30] sm:$0xff] %v386
  %409 = vst [vmem:[%s5 + $0x38] sm:$0xff] %v388
  %410 = vst [vmem:[%s5 + $0x40] sm:$0xff] %v279
  %411 = vst [vmem:[%s5 + $0x48] sm:$0xff] %v281
  %412 = vst [vmem:[%s5 + $0x50] sm:$0xff] %v392
  %413 = vst [vmem:[%s5 + $0x58] sm:$0xff] %v394
  %414 = vst [vmem:[%s5 + $0x60] sm:$0xff] %v285
  %415 = vst [vmem:[%s5 + $0x68] sm:$0xff] %v287
  %416 = vst [vmem:[%s5 + $0x70] sm:$0xff] %v398
  %417 = vst [vmem:[%s5 + $0x78] sm:$0xff] %v400
  %v418 = vld [vmem:[%s2] sm:$0xff]
  %v419 = vld [vmem:[%s2 + $0x8] sm:$0xff]
  %v420 = vld [vmem:[%s2 + $0x10] sm:$0xff]
  %v421 = vld [vmem:[%s2 + $0x18] sm:$0xff]
  %v422 = vld [vmem:[%s3] sm:$0xff]
  %v423 = vld [vmem:[%s3 + $0x8] sm:$0xff]
  %v424 = vld [vmem:[%s3 + $0x10] sm:$0xff]
  %v425 = vld [vmem:[%s3 + $0x18] sm:$0xff]
  %v426 = vadd.f32 %v243, %v245
  %v427 = vadd.f32 %v426, %v356
  %v428 = vadd.f32 %v427, %v358
  %429 = vadd.xlane.f32.xlu0 %v428
  %v430 = vpop.xlane.xlu0 %429
  %v431 = vadd.f32 %v249, %v251
  %v432 = vadd.f32 %v431, %v362
  %v433 = vadd.f32 %v432, %v364
  %434 = vadd.xlane.f32.xlu0 %v433
  %v435 = vpop.xlane.xlu0 %434
  %v436 = vadd.f32 %v255, %v257
  %v437 = vadd.f32 %v436, %v368
  %v438 = vadd.f32 %v437, %v370
  %439 = vadd.xlane.f32.xlu0 %v438
  %v440 = vpop.xlane.xlu0 %439
  %v441 = vadd.f32 %v261, %v263
  %v442 = vadd.f32 %v441, %v374
  %v443 = vadd.f32 %v442, %v376
  %444 = vadd.xlane.f32.xlu0 %v443
  %v445 = vpop.xlane.xlu0 %444
  %v446 = vrcp.pop 512.0
  %v447 = vmul.f32 %v430, %v446
  %v448 = vmul.f32 %v435, %v446
  %v449 = vmul.f32 %v440, %v446
  %v450 = vmul.f32 %v445, %v446
  %v451 = vsub.f32 %v243, %v447
  %v452 = vsub.f32 %v245, %v447
  %v453 = vsub.f32 %v356, %v447
  %v454 = vsub.f32 %v358, %v447
  %v455 = vsub.f32 %v249, %v448
  %v456 = vsub.f32 %v251, %v448
  %v457 = vsub.f32 %v362, %v448
  %v458 = vsub.f32 %v364, %v448
  %v459 = vsub.f32 %v255, %v449
  %v460 = vsub.f32 %v257, %v449
  %v461 = vsub.f32 %v368, %v449
  %v462 = vsub.f32 %v370, %v449
  %v463 = vsub.f32 %v261, %v450
  %v464 = vsub.f32 %v263, %v450
  %v465 = vsub.f32 %v374, %v450
  %v466 = vsub.f32 %v376, %v450
  %v467 = vmul.f32 %v451, %v451
  %v468 = vmul.f32 %v452, %v452
  %v469 = vmul.f32 %v453, %v453
  %v470 = vmul.f32 %v454, %v454
  %v471 = vmul.f32 %v455, %v455
  %v472 = vmul.f32 %v456, %v456
  %v473 = vmul.f32 %v457, %v457
  %v474 = vmul.f32 %v458, %v458
  %v475 = vmul.f32 %v459, %v459
  %v476 = vmul.f32 %v460, %v460
  %v477 = vmul.f32 %v461, %v461
  %v478 = vmul.f32 %v462, %v462
  %v479 = vmul.f32 %v463, %v463
  %v480 = vmul.f32 %v464, %v464
  %v481 = vmul.f32 %v465, %v465
  %v482 = vmul.f32 %v466, %v466
  %v483 = vadd.f32 %v467, %v468
  %v484 = vadd.f32 %v483, %v469
  %v485 = vadd.f32 %v484, %v470
  %486 = vadd.xlane.f32.xlu0 %v485
  %v487 = vpop.xlane.xlu0 %486
  %v488 = vadd.f32 %v471, %v472
  %v489 = vadd.f32 %v488, %v473
  %v490 = vadd.f32 %v489, %v474
  %491 = vadd.xlane.f32.xlu0 %v490
  %v492 = vpop.xlane.xlu0 %491
  %v493 = vadd.f32 %v475, %v476
  %v494 = vadd.f32 %v493, %v477
  %v495 = vadd.f32 %v494, %v478
  %496 = vadd.xlane.f32.xlu0 %v495
  %v497 = vpop.xlane.xlu0 %496
  %v498 = vadd.f32 %v479, %v480
  %v499 = vadd.f32 %v498, %v481
  %v500 = vadd.f32 %v499, %v482
  %501 = vadd.xlane.f32.xlu0 %v500
  %v502 = vpop.xlane.xlu0 %501
  %v503 = vmul.f32 %v487, %v446
  %v504 = vmul.f32 %v492, %v446
  %v505 = vmul.f32 %v497, %v446
  %v506 = vmul.f32 %v502, %v446
  %v507 = vadd.f32 %v503, 1e-05
  %v508 = vadd.f32 %v504, 1e-05
  %v509 = vadd.f32 %v505, 1e-05
  %v510 = vadd.f32 %v506, 1e-05
  %v511 = vrsqrt.pop %v507
  %v512 = vrsqrt.pop %v508
  %v513 = vrsqrt.pop %v509
  %v514 = vrsqrt.pop %v510
  %v515 = vmul.f32 %v451, %v511
  %v516 = vmul.f32 %v452, %v511
  %v517 = vmul.f32 %v453, %v511
  %v518 = vmul.f32 %v454, %v511
  %v519 = vmul.f32 %v455, %v512
  %v520 = vmul.f32 %v456, %v512
  %v521 = vmul.f32 %v457, %v512
  %v522 = vmul.f32 %v458, %v512
  %v523 = vmul.f32 %v459, %v513
  %v524 = vmul.f32 %v460, %v513
  %v525 = vmul.f32 %v461, %v513
  %v526 = vmul.f32 %v462, %v513
  %v527 = vmul.f32 %v463, %v514
  %v528 = vmul.f32 %v464, %v514
  %v529 = vmul.f32 %v465, %v514
  %v530 = vmul.f32 %v466, %v514
  %532 = vset.pattern.permute.xlu0 0
  %533 = vperm.xlu0 %532, %v418
  %v534 = vpop.permute.xlu0 %533
  %537 = vset.pattern.permute.xlu0 0
  %538 = vperm.xlu0 %537, %v419
  %v539 = vpop.permute.xlu0 %538
  %542 = vset.pattern.permute.xlu0 0
  %543 = vperm.xlu0 %542, %v420
  %v544 = vpop.permute.xlu0 %543
  %547 = vset.pattern.permute.xlu0 0
  %548 = vperm.xlu0 %547, %v421
  %v549 = vpop.permute.xlu0 %548
  %v551 = vmul.f32 %v515, %v534
  %v552 = vmul.f32 %v516, %v534
  %v553 = vmul.f32 %v517, %v534
  %v554 = vmul.f32 %v518, %v534
  %v555 = vmul.f32 %v519, %v539
  %v556 = vmul.f32 %v520, %v539
  %v557 = vmul.f32 %v521, %v539
  %v558 = vmul.f32 %v522, %v539
  %v559 = vmul.f32 %v523, %v544
  %v560 = vmul.f32 %v524, %v544
  %v561 = vmul.f32 %v525, %v544
  %v562 = vmul.f32 %v526, %v544
  %v563 = vmul.f32 %v527, %v549
  %v564 = vmul.f32 %v528, %v549
  %v565 = vmul.f32 %v529, %v549
  %v566 = vmul.f32 %v530, %v549
  %568 = vset.pattern.permute.xlu0 0
  %569 = vperm.xlu0 %568, %v422
  %v570 = vpop.permute.xlu0 %569
  %573 = vset.pattern.permute.xlu0 0
  %574 = vperm.xlu0 %573, %v423
  %v575 = vpop.permute.xlu0 %574
  %578 = vset.pattern.permute.xlu0 0
  %579 = vperm.xlu0 %578, %v424
  %v580 = vpop.permute.xlu0 %579
  %583 = vset.pattern.permute.xlu0 0
  %584 = vperm.xlu0 %583, %v425
  %v585 = vpop.permute.xlu0 %584
  %v587 = vadd.f32 %v551, %v570
  %v588 = vadd.f32 %v552, %v570
  %v589 = vadd.f32 %v553, %v570
  %v590 = vadd.f32 %v554, %v570
  %v591 = vadd.f32 %v555, %v575
  %v592 = vadd.f32 %v556, %v575
  %v593 = vadd.f32 %v557, %v575
  %v594 = vadd.f32 %v558, %v575
  %v595 = vadd.f32 %v559, %v580
  %v596 = vadd.f32 %v560, %v580
  %v597 = vadd.f32 %v561, %v580
  %v598 = vadd.f32 %v562, %v580
  %v599 = vadd.f32 %v563, %v585
  %v600 = vadd.f32 %v564, %v585
  %v601 = vadd.f32 %v565, %v585
  %v602 = vadd.f32 %v566, %v585
  %v603 = vmax.f32 %v587, 0.0
  %v604 = vmax.f32 %v588, 0.0
  %v605 = vmax.f32 %v589, 0.0
  %v606 = vmax.f32 %v590, 0.0
  %v607 = vmax.f32 %v591, 0.0
  %v608 = vmax.f32 %v592, 0.0
  %v609 = vmax.f32 %v593, 0.0
  %v610 = vmax.f32 %v594, 0.0
  %v611 = vmax.f32 %v595, 0.0
  %v612 = vmax.f32 %v596, 0.0
  %v613 = vmax.f32 %v597, 0.0
  %v614 = vmax.f32 %v598, 0.0
  %v615 = vmax.f32 %v599, 0.0
  %v616 = vmax.f32 %v600, 0.0
  %v617 = vmax.f32 %v601, 0.0
  %v618 = vmax.f32 %v602, 0.0
  %619 = vst [vmem:[%s4] sm:$0xff] %v603
  %620 = vst [vmem:[%s4 + $0x8] sm:$0xff] %v604
  %621 = vst [vmem:[%s4 + $0x10] sm:$0xff] %v605
  %622 = vst [vmem:[%s4 + $0x18] sm:$0xff] %v606
  %623 = vst [vmem:[%s4 + $0x20] sm:$0xff] %v607
  %624 = vst [vmem:[%s4 + $0x28] sm:$0xff] %v608
  %625 = vst [vmem:[%s4 + $0x30] sm:$0xff] %v609
  %626 = vst [vmem:[%s4 + $0x38] sm:$0xff] %v610
  %627 = vst [vmem:[%s4 + $0x40] sm:$0xff] %v611
  %628 = vst [vmem:[%s4 + $0x48] sm:$0xff] %v612
  %629 = vst [vmem:[%s4 + $0x50] sm:$0xff] %v613
  %630 = vst [vmem:[%s4 + $0x58] sm:$0xff] %v614
  %631 = vst [vmem:[%s4 + $0x60] sm:$0xff] %v615
  %632 = vst [vmem:[%s4 + $0x68] sm:$0xff] %v616
  %633 = vst [vmem:[%s4 + $0x70] sm:$0xff] %v617
  %634 = vst [vmem:[%s4 + $0x78] sm:$0xff] %v618
  // Predicated region
  $region18: #{wide_resnet_forward.10} parent=0 // pred_check
    _
  $region19: #{wide_resnet_forward.10} parent=0 // pred_check_branch
    %636 = sbr.rel (0) target = $region21
  $region20: #{wide_resnet_forward.10} parent=0 // pred_region
    _
  $region21: #{wide_resnet_forward.10} parent=0 // pred_fallthru
    _
  // Predicated region
  $region22: #{wide_resnet_forward.10} parent=0 // pred_check
    _
  $region23: #{wide_resnet_forward.10} parent=0 // pred_check_branch
    %638 = sbr.rel (0) target = $region25
  $region24: #{wide_resnet_forward.10} parent=0 // pred_region
    _
  $region25: #{wide_resnet_forward.10} parent=0 // pred_fallthru
    _
  // Predicated region
  $region26: #{wide_resnet_forward.10} parent=0 // pred_check
    _
  $region27: #{wide_resnet_forward.10} parent=0 // pred_check_branch
    %640 = sbr.rel (0) target = $region29
  $region28: #{wide_resnet_forward.10} parent=0 // pred_region
    _
  $region29: #{wide_resnet_forward.10} parent=0 // pred_fallthru
    _
  // Predicated region
  $region30: #{wide_resnet_forward.10} parent=0 // pred_check
    _
  $region31: #{wide_resnet_forward.10} parent=0 // pred_check_branch
    %642 = sbr.rel (0) target = $region33
  $region32: #{wide_resnet_forward.10} parent=0 // pred_region
    _
  $region33: #{wide_resnet_forward.10} parent=0 // pred_fallthru
    _

// kernel: wide_resnet_forward.11
$region0: #{wide_resnet_forward.11}
  #allocation0 [shape = 'u32[]', space=smem, size = 0x4, offset = 0x4, fixed_abs, tag = 'smem constant byte address 0x4 - core index']
  #allocation1 [shape = 'u32[144,128]{1,0:T(1,128)}', space=vmem, size = 0x12000, scoped, tag = 'internal scratch']
  %s0 = inlined_call_operand.vmem [shape: bf16[32,288], index: 0, kind: input, shape index: {}]
  %s1 = inlined_call_operand.vmem [shape: bf16[288,512], index: 1, kind: input, shape index: {}]
  %s2 = inlined_call_operand.vmem [shape: f32[32,512], index: 2, kind: input, shape index: {}]
  %s3 = inlined_call_operand.vmem [shape: f32[32,1], index: 3, kind: input, shape index: {}]
  %s4 = inlined_call_operand.vmem [shape: f32[32,1], index: 4, kind: input, shape index: {}]
  %s5 = inlined_call_operand.vmem [shape: f32[32,512], index: 5, kind: output, shape index: {}]
  %s6 = sld [smem:[#allocation0]]
  $region30: #{wide_resnet_forward.11} parent=0
    _
  %s8 = ssub.s32 1, %s6
  %s9 = scalar_select 0, %s8, %s6
  // Predicated region
  $region2: #{wide_resnet_forward.11} parent=0 // pred_check
    _
  $region3: #{wide_resnet_forward.11} parent=0 // pred_check_branch
    %11 = sbr.rel (0) target = $region5
  $region4: #{wide_resnet_forward.11} parent=0 // pred_region
    _
  $region5: #{wide_resnet_forward.11} parent=0 // pred_fallthru
    _
  // Predicated region
  $region6: #{wide_resnet_forward.11} parent=0 // pred_check
    _
  $region7: #{wide_resnet_forward.11} parent=0 // pred_check_branch
    %13 = sbr.rel (0) target = $region9
  $region8: #{wide_resnet_forward.11} parent=0 // pred_region
    _
  $region9: #{wide_resnet_forward.11} parent=0 // pred_fallthru
    _
  // Predicated region
  $region10: #{wide_resnet_forward.11} parent=0 // pred_check
    _
  $region11: #{wide_resnet_forward.11} parent=0 // pred_check_branch
    %15 = sbr.rel (0) target = $region13
  $region12: #{wide_resnet_forward.11} parent=0 // pred_region
    _
  $region13: #{wide_resnet_forward.11} parent=0 // pred_fallthru
    _
  // Predicated region
  $region14: #{wide_resnet_forward.11} parent=0 // pred_check
    _
  $region15: #{wide_resnet_forward.11} parent=0 // pred_check_branch
    %17 = sbr.rel (0) target = $region17
  $region16: #{wide_resnet_forward.11} parent=0 // pred_region
    _
  $region17: #{wide_resnet_forward.11} parent=0 // pred_fallthru
    _
  // Predicated region
  $region18: #{wide_resnet_forward.11} parent=0 // pred_check
    _
  $region19: #{wide_resnet_forward.11} parent=0 // pred_check_branch
    %19 = sbr.rel (0) target = $region21
  $region20: #{wide_resnet_forward.11} parent=0 // pred_region
    _
  $region21: #{wide_resnet_forward.11} parent=0 // pred_fallthru
    _
  %v20 = vld [vmem:[%s2] sm:$0xff]
  %v21 = vld [vmem:[%s2 + $0x8] sm:$0xff]
  %v22 = vld [vmem:[%s2 + $0x10] sm:$0xff]
  %v23 = vld [vmem:[%s2 + $0x18] sm:$0xff]
  %v24 = vld [vmem:[%s2 + $0x20] sm:$0xff]
  %v25 = vld [vmem:[%s2 + $0x28] sm:$0xff]
  %v26 = vld [vmem:[%s2 + $0x30] sm:$0xff]
  %v27 = vld [vmem:[%s2 + $0x38] sm:$0xff]
  %v28 = vld [vmem:[%s2 + $0x40] sm:$0xff]
  %v29 = vld [vmem:[%s2 + $0x48] sm:$0xff]
  %v30 = vld [vmem:[%s2 + $0x50] sm:$0xff]
  %v31 = vld [vmem:[%s2 + $0x58] sm:$0xff]
  %v32 = vld [vmem:[%s2 + $0x60] sm:$0xff]
  %v33 = vld [vmem:[%s2 + $0x68] sm:$0xff]
  %v34 = vld [vmem:[%s2 + $0x70] sm:$0xff]
  %v35 = vld [vmem:[%s2 + $0x78] sm:$0xff]
  %v36 = vld [vmem:[%s0] sm:$0xff]
  %v37 = vld [vmem:[%s0 + $0x8] sm:$0xf]
  %v38 = vld [vmem:[%s0 + $0xc] sm:$0xff]
  %v39 = vld [vmem:[%s0 + $0x14] sm:$0xf]
  %v40 = vld [vmem:[%s0 + $0x18] sm:$0xff]
  %v41 = vld [vmem:[%s0 + $0x20] sm:$0xf]
  %v42 = vld [vmem:[%s0 + $0x24] sm:$0xff]
  %v43 = vld [vmem:[%s0 + $0x2c] sm:$0xf]
  %v44 = vunpack.c.l.bf16 %v36
  %v45 = vunpack.c.h.bf16 %v36
  %v46 = vunpack.c.l.bf16 %v37
  %v47 = vunpack.c.l.bf16 %v38
  %v48 = vunpack.c.h.bf16 %v38
  %v49 = vunpack.c.l.bf16 %v39
  %v50 = vunpack.c.l.bf16 %v40
  %v51 = vunpack.c.h.bf16 %v40
  %v52 = vunpack.c.l.bf16 %v41
  %v53 = vunpack.c.l.bf16 %v42
  %v54 = vunpack.c.h.bf16 %v42
  %v55 = vunpack.c.l.bf16 %v43
  %v56 = vld [vmem:[%s1] sm:$0xff]
  %v57 = vld [vmem:[%s1 + $0x8] sm:$0xff]
  %v58 = vld [vmem:[%s1 + $0x10] sm:$0xff]
  %v59 = vld [vmem:[%s1 + $0x18] sm:$0xff]
  %v60 = vld [vmem:[%s1 + $0x20] sm:$0xff]
  %v61 = vld [vmem:[%s1 + $0x28] sm:$0xff]
  %v62 = vld [vmem:[%s1 + $0x30] sm:$0xff]
  %v63 = vld [vmem:[%s1 + $0x38] sm:$0xff]
  %v64 = vld [vmem:[%s1 + $0x40] sm:$0xff]
  %v65 = vld [vmem:[%s1 + $0x48] sm:$0xff]
  %v66 = vld [vmem:[%s1 + $0x50] sm:$0xff]
  %v67 = vld [vmem:[%s1 + $0x58] sm:$0xff]
  %v68 = vld [vmem:[%s1 + $0x60] sm:$0xff]
  %v69 = vld [vmem:[%s1 + $0x68] sm:$0xff]
  %v70 = vld [vmem:[%s1 + $0x70] sm:$0xff]
  %v71 = vld [vmem:[%s1 + $0x78] sm:$0xff]
  %v72 = vld [vmem:[%s1 + $0x80] sm:$0xff]
  %v73 = vld [vmem:[%s1 + $0x88] sm:$0xff]
  %v74 = vld [vmem:[%s1 + $0x90] sm:$0xff]
  %v75 = vld [vmem:[%s1 + $0x98] sm:$0xff]
  %v76 = vld [vmem:[%s1 + $0xa0] sm:$0xff]
  %v77 = vld [vmem:[%s1 + $0xa8] sm:$0xff]
  %v78 = vld [vmem:[%s1 + $0xb0] sm:$0xff]
  %v79 = vld [vmem:[%s1 + $0xb8] sm:$0xff]
  %v80 = vld [vmem:[%s1 + $0xc0] sm:$0xff]
  %v81 = vld [vmem:[%s1 + $0xc8] sm:$0xff]
  %v82 = vld [vmem:[%s1 + $0xd0] sm:$0xff]
  %v83 = vld [vmem:[%s1 + $0xd8] sm:$0xff]
  %v84 = vld [vmem:[%s1 + $0xe0] sm:$0xff]
  %v85 = vld [vmem:[%s1 + $0xe8] sm:$0xff]
  %v86 = vld [vmem:[%s1 + $0xf0] sm:$0xff]
  %v87 = vld [vmem:[%s1 + $0xf8] sm:$0xff]
  %v88 = vld [vmem:[%s1 + $0x100] sm:$0xff]
  %v89 = vld [vmem:[%s1 + $0x108] sm:$0xff]
  %v90 = vld [vmem:[%s1 + $0x110] sm:$0xff]
  %v91 = vld [vmem:[%s1 + $0x118] sm:$0xff]
  %v92 = vld [vmem:[%s1 + $0x120] sm:$0xff]
  %v93 = vld [vmem:[%s1 + $0x128] sm:$0xff]
  %v94 = vld [vmem:[%s1 + $0x130] sm:$0xff]
  %v95 = vld [vmem:[%s1 + $0x138] sm:$0xff]
  %v96 = vld [vmem:[%s1 + $0x140] sm:$0xff]
  %v97 = vld [vmem:[%s1 + $0x148] sm:$0xff]
  %v98 = vld [vmem:[%s1 + $0x150] sm:$0xff]
  %v99 = vld [vmem:[%s1 + $0x158] sm:$0xff]
  %v100 = vld [vmem:[%s1 + $0x160] sm:$0xff]
  %v101 = vld [vmem:[%s1 + $0x168] sm:$0xff]
  %v102 = vld [vmem:[%s1 + $0x170] sm:$0xff]
  %v103 = vld [vmem:[%s1 + $0x178] sm:$0xff]
  %v104 = vld [vmem:[%s1 + $0x180] sm:$0xff]
  %v105 = vld [vmem:[%s1 + $0x188] sm:$0xff]
  %v106 = vld [vmem:[%s1 + $0x190] sm:$0xff]
  %v107 = vld [vmem:[%s1 + $0x198] sm:$0xff]
  %v108 = vld [vmem:[%s1 + $0x1a0] sm:$0xff]
  %v109 = vld [vmem:[%s1 + $0x1a8] sm:$0xff]
  %v110 = vld [vmem:[%s1 + $0x1b0] sm:$0xff]
  %v111 = vld [vmem:[%s1 + $0x1b8] sm:$0xff]
  %v112 = vld [vmem:[%s1 + $0x1c0] sm:$0xff]
  %v113 = vld [vmem:[%s1 + $0x1c8] sm:$0xff]
  %v114 = vld [vmem:[%s1 + $0x1d0] sm:$0xff]
  %v115 = vld [vmem:[%s1 + $0x1d8] sm:$0xff]
  %v116 = vld [vmem:[%s1 + $0x1e0] sm:$0xff]
  %v117 = vld [vmem:[%s1 + $0x1e8] sm:$0xff]
  %v118 = vld [vmem:[%s1 + $0x1f0] sm:$0xff]
  %v119 = vld [vmem:[%s1 + $0x1f8] sm:$0xff]
  %v120 = vld [vmem:[%s1 + $0x200] sm:$0xff]
  %v121 = vld [vmem:[%s1 + $0x208] sm:$0xff]
  %v122 = vld [vmem:[%s1 + $0x210] sm:$0xff]
  %v123 = vld [vmem:[%s1 + $0x218] sm:$0xff]
  %v124 = vld [vmem:[%s1 + $0x220] sm:$0xff]
  %v125 = vld [vmem:[%s1 + $0x228] sm:$0xff]
  %v126 = vld [vmem:[%s1 + $0x230] sm:$0xff]
  %v127 = vld [vmem:[%s1 + $0x238] sm:$0xff]
  %v128 = vunpack.c.l.bf16 %v56
  %v129 = vunpack.c.h.bf16 %v56
  %v130 = vunpack.c.l.bf16 %v57
  %v131 = vunpack.c.h.bf16 %v57
  %v132 = vunpack.c.l.bf16 %v58
  %v133 = vunpack.c.h.bf16 %v58
  %v134 = vunpack.c.l.bf16 %v59
  %v135 = vunpack.c.h.bf16 %v59
  %v136 = vunpack.c.l.bf16 %v60
  %v137 = vunpack.c.h.bf16 %v60
  %v138 = vunpack.c.l.bf16 %v61
  %v139 = vunpack.c.h.bf16 %v61
  %v140 = vunpack.c.l.bf16 %v62
  %v141 = vunpack.c.h.bf16 %v62
  %v142 = vunpack.c.l.bf16 %v63
  %v143 = vunpack.c.h.bf16 %v63
  %v144 = vunpack.c.l.bf16 %v64
  %v145 = vunpack.c.h.bf16 %v64
  %v146 = vunpack.c.l.bf16 %v65
  %v147 = vunpack.c.h.bf16 %v65
  %v148 = vunpack.c.l.bf16 %v66
  %v149 = vunpack.c.h.bf16 %v66
  %v150 = vunpack.c.l.bf16 %v67
  %v151 = vunpack.c.h.bf16 %v67
  %v152 = vunpack.c.l.bf16 %v68
  %v153 = vunpack.c.h.bf16 %v68
  %v154 = vunpack.c.l.bf16 %v69
  %v155 = vunpack.c.h.bf16 %v69
  %v156 = vunpack.c.l.bf16 %v70
  %v157 = vunpack.c.h.bf16 %v70
  %v158 = vunpack.c.l.bf16 %v71
  %v159 = vunpack.c.h.bf16 %v71
  %v160 = vunpack.c.l.bf16 %v72
  %v161 = vunpack.c.h.bf16 %v72
  %v162 = vunpack.c.l.bf16 %v73
  %v163 = vunpack.c.h.bf16 %v73
  %v164 = vunpack.c.l.bf16 %v74
  %v165 = vunpack.c.h.bf16 %v74
  %v166 = vunpack.c.l.bf16 %v75
  %v167 = vunpack.c.h.bf16 %v75
  %v168 = vunpack.c.l.bf16 %v76
  %v169 = vunpack.c.h.bf16 %v76
  %v170 = vunpack.c.l.bf16 %v77
  %v171 = vunpack.c.h.bf16 %v77
  %v172 = vunpack.c.l.bf16 %v78
  %v173 = vunpack.c.h.bf16 %v78
  %v174 = vunpack.c.l.bf16 %v79
  %v175 = vunpack.c.h.bf16 %v79
  %v176 = vunpack.c.l.bf16 %v80
  %v177 = vunpack.c.h.bf16 %v80
  %v178 = vunpack.c.l.bf16 %v81
  %v179 = vunpack.c.h.bf16 %v81
  %v180 = vunpack.c.l.bf16 %v82
  %v181 = vunpack.c.h.bf16 %v82
  %v182 = vunpack.c.l.bf16 %v83
  %v183 = vunpack.c.h.bf16 %v83
  %v184 = vunpack.c.l.bf16 %v84
  %v185 = vunpack.c.h.bf16 %v84
  %v186 = vunpack.c.l.bf16 %v85
  %v187 = vunpack.c.h.bf16 %v85
  %v188 = vunpack.c.l.bf16 %v86
  %v189 = vunpack.c.h.bf16 %v86
  %v190 = vunpack.c.l.bf16 %v87
  %v191 = vunpack.c.h.bf16 %v87
  %v192 = vunpack.c.l.bf16 %v88
  %v193 = vunpack.c.h.bf16 %v88
  %v194 = vunpack.c.l.bf16 %v89
  %v195 = vunpack.c.h.bf16 %v89
  %v196 = vunpack.c.l.bf16 %v90
  %v197 = vunpack.c.h.bf16 %v90
  %v198 = vunpack.c.l.bf16 %v91
  %v199 = vunpack.c.h.bf16 %v91
  %v200 = vunpack.c.l.bf16 %v92
  %v201 = vunpack.c.h.bf16 %v92
  %v202 = vunpack.c.l.bf16 %v93
  %v203 = vunpack.c.h.bf16 %v93
  %v204 = vunpack.c.l.bf16 %v94
  %v205 = vunpack.c.h.bf16 %v94
  %v206 = vunpack.c.l.bf16 %v95
  %v207 = vunpack.c.h.bf16 %v95
  %v208 = vunpack.c.l.bf16 %v96
  %v209 = vunpack.c.h.bf16 %v96
  %v210 = vunpack.c.l.bf16 %v97
  %v211 = vunpack.c.h.bf16 %v97
  %v212 = vunpack.c.l.bf16 %v98
  %v213 = vunpack.c.h.bf16 %v98
  %v214 = vunpack.c.l.bf16 %v99
  %v215 = vunpack.c.h.bf16 %v99
  %v216 = vunpack.c.l.bf16 %v100
  %v217 = vunpack.c.h.bf16 %v100
  %v218 = vunpack.c.l.bf16 %v101
  %v219 = vunpack.c.h.bf16 %v101
  %v220 = vunpack.c.l.bf16 %v102
  %v221 = vunpack.c.h.bf16 %v102
  %v222 = vunpack.c.l.bf16 %v103
  %v223 = vunpack.c.h.bf16 %v103
  %v224 = vunpack.c.l.bf16 %v104
  %v225 = vunpack.c.h.bf16 %v104
  %v226 = vunpack.c.l.bf16 %v105
  %v227 = vunpack.c.h.bf16 %v105
  %v228 = vunpack.c.l.bf16 %v106
  %v229 = vunpack.c.h.bf16 %v106
  %v230 = vunpack.c.l.bf16 %v107
  %v231 = vunpack.c.h.bf16 %v107
  %v232 = vunpack.c.l.bf16 %v108
  %v233 = vunpack.c.h.bf16 %v108
  %v234 = vunpack.c.l.bf16 %v109
  %v235 = vunpack.c.h.bf16 %v109
  %v236 = vunpack.c.l.bf16 %v110
  %v237 = vunpack.c.h.bf16 %v110
  %v238 = vunpack.c.l.bf16 %v111
  %v239 = vunpack.c.h.bf16 %v111
  %v240 = vunpack.c.l.bf16 %v112
  %v241 = vunpack.c.h.bf16 %v112
  %v242 = vunpack.c.l.bf16 %v113
  %v243 = vunpack.c.h.bf16 %v113
  %v244 = vunpack.c.l.bf16 %v114
  %v245 = vunpack.c.h.bf16 %v114
  %v246 = vunpack.c.l.bf16 %v115
  %v247 = vunpack.c.h.bf16 %v115
  %v248 = vunpack.c.l.bf16 %v116
  %v249 = vunpack.c.h.bf16 %v116
  %v250 = vunpack.c.l.bf16 %v117
  %v251 = vunpack.c.h.bf16 %v117
  %v252 = vunpack.c.l.bf16 %v118
  %v253 = vunpack.c.h.bf16 %v118
  %v254 = vunpack.c.l.bf16 %v119
  %v255 = vunpack.c.h.bf16 %v119
  %v256 = vunpack.c.l.bf16 %v120
  %v257 = vunpack.c.h.bf16 %v120
  %v258 = vunpack.c.l.bf16 %v121
  %v259 = vunpack.c.h.bf16 %v121
  %v260 = vunpack.c.l.bf16 %v122
  %v261 = vunpack.c.h.bf16 %v122
  %v262 = vunpack.c.l.bf16 %v123
  %v263 = vunpack.c.h.bf16 %v123
  %v264 = vunpack.c.l.bf16 %v124
  %v265 = vunpack.c.h.bf16 %v124
  %v266 = vunpack.c.l.bf16 %v125
  %v267 = vunpack.c.h.bf16 %v125
  %v268 = vunpack.c.l.bf16 %v126
  %v269 = vunpack.c.h.bf16 %v126
  %v270 = vunpack.c.l.bf16 %v127
  %v271 = vunpack.c.h.bf16 %v127
  %vm272 = vcmask 261120
  %v274 = vsel %vm272, %v46, 0
  %v277 = vsel %vm272, %v49, 0
  %v280 = vsel %vm272, %v52, 0
  %v283 = vsel %vm272, %v55, 0
  %285 = vmatprep.subr.mxu0 %v129
  %286 = vmatpush1.msra.mxu0 %v128
  %287 = vmatprep.subr.mxu0 %v133
  %288 = vmatpush1.msra.mxu0 %v132
  %289 = vmatprep.subr.mxu0 %v137
  %290 = vmatpush1.msra.mxu0 %v136
  %291 = vmatprep.subr.mxu0 %v141
  %292 = vmatpush1.msra.mxu0 %v140
  %293 = vmatprep.subr.mxu0 %v145
  %294 = vmatpush1.msra.mxu0 %v144
  %295 = vmatprep.subr.mxu0 %v149
  %296 = vmatpush1.msra.mxu0 %v148
  %297 = vmatprep.subr.mxu0 %v153
  %298 = vmatpush1.msra.mxu0 %v152
  %299 = vmatprep.subr.mxu0 %v157
  %300 = vmatpush1.msra.mxu0 %v156
  %301 = vmatprep.subr.mxu0 %v161
  %302 = vmatpush1.msra.mxu0 %v160
  %303 = vmatprep.subr.mxu0 %v165
  %304 = vmatpush1.msra.mxu0 %v164
  %305 = vmatprep.subr.mxu0 %v169
  %306 = vmatpush1.msra.mxu0 %v168
  %307 = vmatprep.subr.mxu0 %v173
  %308 = vmatpush1.msra.mxu0 %v172
  %309 = vmatprep.subr.mxu0 %v177
  %310 = vmatpush1.msra.mxu0 %v176
  %311 = vmatprep.subr.mxu0 %v181
  %312 = vmatpush1.msra.mxu0 %v180
  %313 = vmatprep.subr.mxu0 %v185
  %314 = vmatpush1.msra.mxu0 %v184
  %315 = vmatprep.subr.mxu0 %v189
  %316 = vmatpush1.msra.mxu0 %v188
  %317 = vmatprep.subr.mxu0 %v193
  %318 = vmatpush1.msra.mxu0 %v192
  %319 = vmatprep.subr.mxu0 %v197
  %320 = vmatpush1.msra.mxu0 %v196
  %321 = vmatprep.subr.mxu0 %v201
  %322 = vmatpush1.msra.mxu0 %v200
  %323 = vmatprep.subr.mxu0 %v205
  %324 = vmatpush1.msra.mxu0 %v204
  %325 = vmatprep.subr.mxu0 %v209
  %326 = vmatpush1.msra.mxu0 %v208
  %327 = vmatprep.subr.mxu0 %v213
  %328 = vmatpush1.msra.mxu0 %v212
  %329 = vmatprep.subr.mxu0 %v217
  %330 = vmatpush1.msra.mxu0 %v216
  %331 = vmatprep.subr.mxu0 %v221
  %332 = vmatpush1.msra.mxu0 %v220
  %333 = vmatprep.subr.mxu0 %v225
  %334 = vmatpush1.msra.mxu0 %v224
  %335 = vmatprep.subr.mxu0 %v229
  %336 = vmatpush1.msra.mxu0 %v228
  %337 = vmatprep.subr.mxu0 %v233
  %338 = vmatpush1.msra.mxu0 %v232
  %339 = vmatprep.subr.mxu0 %v237
  %340 = vmatpush1.msra.mxu0 %v236
  %341 = vmatprep.subr.mxu0 %v241
  %342 = vmatpush1.msra.mxu0 %v240
  %343 = vmatprep.subr.mxu0 %v245
  %344 = vmatpush1.msra.mxu0 %v244
  %345 = vmatprep.subr.mxu0 %v249
  %346 = vmatpush1.msra.mxu0 %v248
  %347 = vmatprep.subr.mxu0 %v253
  %348 = vmatpush1.msra.mxu0 %v252
  %349 = vmatprep.mubr.f32.mxu0 %v45
  %350 = vmatmul.mubr.f32.gmra.mrb[0].mxu0 %v44
  %v351 = vpop.f32.mrb[0].mxu0
  %v352 = vadd.f32 0.0, %v351
  %v353 = vpop.f32.mrb[0].mxu0
  %v354 = vadd.f32 0.0, %v353
  %355 = vmatprep.mubr.f32.mxu0 %v48
  %356 = vmatmul.mubr.f32.gmra.mrb[0].mxu0 %v47
  %v357 = vpop.f32.mrb[0].mxu0
  %v358 = vadd.f32 0.0, %v357
  %v359 = vpop.f32.mrb[0].mxu0
  %v360 = vadd.f32 0.0, %v359
  %361 = vmatprep.mubr.f32.mxu0 %v51
  %362 = vmatmul.mubr.f32.gmra.mrb[0].mxu0 %v50
  %v363 = vpop.f32.mrb[0].mxu0
  %v364 = vadd.f32 0.0, %v363
  %v365 = vpop.f32.mrb[0].mxu0
  %v366 = vadd.f32 0.0, %v365
  %367 = vmatprep.mubr.f32.mxu0 %v54
  %368 = vmatmul.mubr.f32.gmra.mrb[0].mxu0 %v53
  %v369 = vpop.f32.mrb[0].mxu0
  %v370 = vadd.f32 0.0, %v369
  %v371 = vpop.f32.mrb[0].mxu0
  %v372 = vadd.f32 0.0, %v371
  %373 = vdwg.mxu0
  %374 = vmatprep.subr.mxu0 %v257
  %375 = vmatpush1.msra.mxu0 %v256
  %376 = vmatprep.subr.mxu0 %v261
  %377 = vmatpush1.msra.mxu0 %v260
  %378 = vmatprep.subr.mxu0 %v265
  %379 = vmatpush1.msra.mxu0 %v264
  %380 = vmatprep.subr.mxu0 %v269
  %381 = vmatpush1.msra.mxu0 %v268
  %382 = vmatprep.subr.mxu0 0.0
  %383 = vmatpush1.msra.mxu0 0.0
  %384 = vmatprep.subr.mxu0 0.0
  %385 = vmatpush1.msra.mxu0 0.0
  %386 = vmatprep.subr.mxu0 0.0
  %387 = vmatpush1.msra.mxu0 0.0
  %388 = vmatprep.subr.mxu0 0.0
  %389 = vmatpush1.msra.mxu0 0.0
  %390 = vmatprep.subr.mxu0 0.0
  %391 = vmatpush1.msra.mxu0 0.0
  %392 = vmatprep.subr.mxu0 0.0
  %393 = vmatpush1.msra.mxu0 0.0
  %394 = vmatprep.subr.mxu0 0.0
  %395 = vmatpush1.msra.mxu0 0.0
  %396 = vmatprep.subr.mxu0 0.0
  %397 = vmatpush1.msra.mxu0 0.0
  %398 = vmatprep.subr.mxu0 0.0
  %399 = vmatpush1.msra.mxu0 0.0
  %400 = vmatprep.subr.mxu0 0.0
  %401 = vmatpush1.msra.mxu0 0.0
  %402 = vmatprep.subr.mxu0 0.0
  %403 = vmatpush1.msra.mxu0 0.0
  %404 = vmatprep.subr.mxu0 0.0
  %405 = vmatpush1.msra.mxu0 0.0
  %406 = vmatprep.subr.mxu0 0.0
  %407 = vmatpush1.msra.mxu0 0.0
  %408 = vmatprep.subr.mxu0 0.0
  %409 = vmatpush1.msra.mxu0 0.0
  %410 = vmatprep.subr.mxu0 0.0
  %411 = vmatpush1.msra.mxu0 0.0
  %412 = vmatprep.subr.mxu0 0.0
  %413 = vmatpush1.msra.mxu0 0.0
  %414 = vmatprep.subr.mxu0 0.0
  %415 = vmatpush1.msra.mxu0 0.0
  %416 = vmatprep.subr.mxu0 0.0
  %417 = vmatpush1.msra.mxu0 0.0
  %418 = vmatprep.subr.mxu0 0.0
  %419 = vmatpush1.msra.mxu0 0.0
  %420 = vmatprep.subr.mxu0 0.0
  %421 = vmatpush1.msra.mxu0 0.0
  %422 = vmatprep.subr.mxu0 0.0
  %423 = vmatpush1.msra.mxu0 0.0
  %424 = vmatprep.subr.mxu0 0.0
  %425 = vmatpush1.msra.mxu0 0.0
  %426 = vmatprep.subr.mxu0 0.0
  %427 = vmatpush1.msra.mxu0 0.0
  %428 = vmatprep.subr.mxu0 0.0
  %429 = vmatpush1.msra.mxu0 0.0
  %430 = vmatprep.subr.mxu0 0.0
  %431 = vmatpush1.msra.mxu0 0.0
  %432 = vmatprep.subr.mxu0 0.0
  %433 = vmatpush1.msra.mxu0 0.0
  %434 = vmatprep.subr.mxu0 0.0
  %435 = vmatpush1.msra.mxu0 0.0
  %436 = vmatprep.subr.mxu0 0.0
  %437 = vmatpush1.msra.mxu0 0.0
  %438 = vmatprep.mubr.f32.mxu0 0.0
  %439 = vmatmul.mubr.f32.gmra.mrb[0].mxu0 %v274
  %v440 = vpop.f32.mrb[0].mxu0
  %v441 = vadd.f32 %v352, %v440
  %v442 = vpop.f32.mrb[0].mxu0
  %v443 = vadd.f32 %v354, %v442
  %444 = vmatprep.mubr.f32.mxu0 0.0
  %445 = vmatmul.mubr.f32.gmra.mrb[0].mxu0 %v277
  %v446 = vpop.f32.mrb[0].mxu0
  %v447 = vadd.f32 %v358, %v446
  %v448 = vpop.f32.mrb[0].mxu0
  %v449 = vadd.f32 %v360, %v448
  %450 = vmatprep.mubr.f32.mxu0 0.0
  %451 = vmatmul.mubr.f32.gmra.mrb[0].mxu0 %v280
  %v452 = vpop.f32.mrb[0].mxu0
  %v453 = vadd.f32 %v364, %v452
  %v454 = vpop.f32.mrb[0].mxu0
  %v455 = vadd.f32 %v366, %v454
  %456 = vmatprep.mubr.f32.mxu0 0.0
  %457 = vmatmul.mubr.f32.gmra.mrb[0].mxu0 %v283
  %v458 = vpop.f32.mrb[0].mxu0
  %v459 = vadd.f32 %v370, %v458
  %v460 = vpop.f32.mrb[0].mxu0
  %v461 = vadd.f32 %v372, %v460
  %462 = vdwg.mxu0
  %463 = vmatprep.subr.mxu0 %v131
  %464 = vmatpush1.msra.mxu0 %v130
  %465 = vmatprep.subr.mxu0 %v135
  %466 = vmatpush1.msra.mxu0 %v134
  %467 = vmatprep.subr.mxu0 %v139
  %468 = vmatpush1.msra.mxu0 %v138
  %469 = vmatprep.subr.mxu0 %v143
  %470 = vmatpush1.msra.mxu0 %v142
  %471 = vmatprep.subr.mxu0 %v147
  %472 = vmatpush1.msra.mxu0 %v146
  %473 = vmatprep.subr.mxu0 %v151
  %474 = vmatpush1.msra.mxu0 %v150
  %475 = vmatprep.subr.mxu0 %v155
  %476 = vmatpush1.msra.mxu0 %v154
  %477 = vmatprep.subr.mxu0 %v159
  %478 = vmatpush1.msra.mxu0 %v158
  %479 = vmatprep.subr.mxu0 %v163
  %480 = vmatpush1.msra.mxu0 %v162
  %481 = vmatprep.subr.mxu0 %v167
  %482 = vmatpush1.msra.mxu0 %v166
  %483 = vmatprep.subr.mxu0 %v171
  %484 = vmatpush1.msra.mxu0 %v170
  %485 = vmatprep.subr.mxu0 %v175
  %486 = vmatpush1.msra.mxu0 %v174
  %487 = vmatprep.subr.mxu0 %v179
  %488 = vmatpush1.msra.mxu0 %v178
  %489 = vmatprep.subr.mxu0 %v183
  %490 = vmatpush1.msra.mxu0 %v182
  %491 = vmatprep.subr.mxu0 %v187
  %492 = vmatpush1.msra.mxu0 %v186
  %493 = vmatprep.subr.mxu0 %v191
  %494 = vmatpush1.msra.mxu0 %v190
  %495 = vmatprep.subr.mxu0 %v195
  %496 = vmatpush1.msra.mxu0 %v194
  %497 = vmatprep.subr.mxu0 %v199
  %498 = vmatpush1.msra.mxu0 %v198
  %499 = vmatprep.subr.mxu0 %v203
  %500 = vmatpush1.msra.mxu0 %v202
  %501 = vmatprep.subr.mxu0 %v207
  %502 = vmatpush1.msra.mxu0 %v206
  %503 = vmatprep.subr.mxu0 %v211
  %504 = vmatpush1.msra.mxu0 %v210
  %505 = vmatprep.subr.mxu0 %v215
  %506 = vmatpush1.msra.mxu0 %v214
  %507 = vmatprep.subr.mxu0 %v219
  %508 = vmatpush1.msra.mxu0 %v218
  %509 = vmatprep.subr.mxu0 %v223
  %510 = vmatpush1.msra.mxu0 %v222
  %511 = vmatprep.subr.mxu0 %v227
  %512 = vmatpush1.msra.mxu0 %v226
  %513 = vmatprep.subr.mxu0 %v231
  %514 = vmatpush1.msra.mxu0 %v230
  %515 = vmatprep.subr.mxu0 %v235
  %516 = vmatpush1.msra.mxu0 %v234
  %517 = vmatprep.subr.mxu0 %v239
  %518 = vmatpush1.msra.mxu0 %v238
  %519 = vmatprep.subr.mxu0 %v243
  %520 = vmatpush1.msra.mxu0 %v242
  %521 = vmatprep.subr.mxu0 %v247
  %522 = vmatpush1.msra.mxu0 %v246
  %523 = vmatprep.subr.mxu0 %v251
  %524 = vmatpush1.msra.mxu0 %v250
  %525 = vmatprep.subr.mxu0 %v255
  %526 = vmatpush1.msra.mxu0 %v254
  %527 = vmatprep.mubr.f32.mxu0 %v45
  %528 = vmatmul.mubr.f32.gmra.mrb[0].mxu0 %v44
  %v529 = vpop.f32.mrb[0].mxu0
  %v530 = vadd.f32 0.0, %v529
  %v531 = vpop.f32.mrb[0].mxu0
  %v532 = vadd.f32 0.0, %v531
  %533 = vmatprep.mubr.f32.mxu0 %v48
  %534 = vmatmul.mubr.f32.gmra.mrb[0].mxu0 %v47
  %v535 = vpop.f32.mrb[0].mxu0
  %v536 = vadd.f32 0.0, %v535
  %v537 = vpop.f32.mrb[0].mxu0
  %v538 = vadd.f32 0.0, %v537
  %539 = vmatprep.mubr.f32.mxu0 %v51
  %540 = vmatmul.mubr.f32.gmra.mrb[0].mxu0 %v50
  %v541 = vpop.f32.mrb[0].mxu0
  %v542 = vadd.f32 0.0, %v541
  %v543 = vpop.f32.mrb[0].mxu0
  %v544 = vadd.f32 0.0, %v543
  %545 = vmatprep.mubr.f32.mxu0 %v54
  %546 = vmatmul.mubr.f32.gmra.mrb[0].mxu0 %v53
  %v547 = vpop.f32.mrb[0].mxu0
  %v548 = vadd.f32 0.0, %v547
  %v549 = vpop.f32.mrb[0].mxu0
  %v550 = vadd.f32 0.0, %v549
  %551 = vdwg.mxu0
  %552 = vmatprep.subr.mxu0 %v259
  %553 = vmatpush1.msra.mxu0 %v258
  %554 = vmatprep.subr.mxu0 %v263
  %555 = vmatpush1.msra.mxu0 %v262
  %556 = vmatprep.subr.mxu0 %v267
  %557 = vmatpush1.msra.mxu0 %v266
  %558 = vmatprep.subr.mxu0 %v271
  %559 = vmatpush1.msra.mxu0 %v270
  %560 = vmatprep.subr.mxu0 0.0
  %561 = vmatpush1.msra.mxu0 0.0
  %562 = vmatprep.subr.mxu0 0.0
  %563 = vmatpush1.msra.mxu0 0.0
  %564 = vmatprep.subr.mxu0 0.0
  %565 = vmatpush1.msra.mxu0 0.0
  %566 = vmatprep.subr.mxu0 0.0
  %567 = vmatpush1.msra.mxu0 0.0
  %568 = vmatprep.subr.mxu0 0.0
  %569 = vmatpush1.msra.mxu0 0.0
  %570 = vmatprep.subr.mxu0 0.0
  %571 = vmatpush1.msra.mxu0 0.0
  %572 = vmatprep.subr.mxu0 0.0
  %573 = vmatpush1.msra.mxu0 0.0
  %574 = vmatprep.subr.mxu0 0.0
  %575 = vmatpush1.msra.mxu0 0.0
  %576 = vmatprep.subr.mxu0 0.0
  %577 = vmatpush1.msra.mxu0 0.0
  %578 = vmatprep.subr.mxu0 0.0
  %579 = vmatpush1.msra.mxu0 0.0
  %580 = vmatprep.subr.mxu0 0.0
  %581 = vmatpush1.msra.mxu0 0.0
  %582 = vmatprep.subr.mxu0 0.0
  %583 = vmatpush1.msra.mxu0 0.0
  %584 = vmatprep.subr.mxu0 0.0
  %585 = vmatpush1.msra.mxu0 0.0
  %586 = vmatprep.subr.mxu0 0.0
  %587 = vmatpush1.msra.mxu0 0.0
  %588 = vmatprep.subr.mxu0 0.0
  %589 = vmatpush1.msra.mxu0 0.0
  %590 = vmatprep.subr.mxu0 0.0
  %591 = vmatpush1.msra.mxu0 0.0
  %592 = vmatprep.subr.mxu0 0.0
  %593 = vmatpush1.msra.mxu0 0.0
  %594 = vmatprep.subr.mxu0 0.0
  %595 = vmatpush1.msra.mxu0 0.0
  %596 = vmatprep.subr.mxu0 0.0
  %597 = vmatpush1.msra.mxu0 0.0
  %598 = vmatprep.subr.mxu0 0.0
  %599 = vmatpush1.msra.mxu0 0.0
  %600 = vmatprep.subr.mxu0 0.0
  %601 = vmatpush1.msra.mxu0 0.0
  %602 = vmatprep.subr.mxu0 0.0
  %603 = vmatpush1.msra.mxu0 0.0
  %604 = vmatprep.subr.mxu0 0.0
  %605 = vmatpush1.msra.mxu0 0.0
  %606 = vmatprep.subr.mxu0 0.0
  %607 = vmatpush1.msra.mxu0 0.0
  %608 = vmatprep.subr.mxu0 0.0
  %609 = vmatpush1.msra.mxu0 0.0
  %610 = vmatprep.subr.mxu0 0.0
  %611 = vmatpush1.msra.mxu0 0.0
  %612 = vmatprep.subr.mxu0 0.0
  %613 = vmatpush1.msra.mxu0 0.0
  %614 = vmatprep.subr.mxu0 0.0
  %615 = vmatpush1.msra.mxu0 0.0
  %616 = vmatprep.mubr.f32.mxu0 0.0
  %617 = vmatmul.mubr.f32.gmra.mrb[0].mxu0 %v274
  %v618 = vpop.f32.mrb[0].mxu0
  %v619 = vadd.f32 %v530, %v618
  %v620 = vpop.f32.mrb[0].mxu0
  %v621 = vadd.f32 %v532, %v620
  %622 = vmatprep.mubr.f32.mxu0 0.0
  %623 = vmatmul.mubr.f32.gmra.mrb[0].mxu0 %v277
  %v624 = vpop.f32.mrb[0].mxu0
  %v625 = vadd.f32 %v536, %v624
  %v626 = vpop.f32.mrb[0].mxu0
  %v627 = vadd.f32 %v538, %v626
  %628 = vmatprep.mubr.f32.mxu0 0.0
  %629 = vmatmul.mubr.f32.gmra.mrb[0].mxu0 %v280
  %v630 = vpop.f32.mrb[0].mxu0
  %v631 = vadd.f32 %v542, %v630
  %v632 = vpop.f32.mrb[0].mxu0
  %v633 = vadd.f32 %v544, %v632
  %634 = vmatprep.mubr.f32.mxu0 0.0
  %635 = vmatmul.mubr.f32.gmra.mrb[0].mxu0 %v283
  %v636 = vpop.f32.mrb[0].mxu0
  %v637 = vadd.f32 %v548, %v636
  %v638 = vpop.f32.mrb[0].mxu0
  %v639 = vadd.f32 %v550, %v638
  %640 = vdwg.mxu0
  %v641 = vadd.f32 %v20, %v441
  %v642 = vadd.f32 %v21, %v443
  %v643 = vadd.f32 %v22, %v619
  %v644 = vadd.f32 %v23, %v621
  %v645 = vadd.f32 %v24, %v447
  %v646 = vadd.f32 %v25, %v449
  %v647 = vadd.f32 %v26, %v625
  %v648 = vadd.f32 %v27, %v627
  %v649 = vadd.f32 %v28, %v453
  %v650 = vadd.f32 %v29, %v455
  %v651 = vadd.f32 %v30, %v631
  %v652 = vadd.f32 %v31, %v633
  %v653 = vadd.f32 %v32, %v459
  %v654 = vadd.f32 %v33, %v461
  %v655 = vadd.f32 %v34, %v637
  %v656 = vadd.f32 %v35, %v639
  %v657 = vld [vmem:[%s3] sm:$0xff]
  %v658 = vld [vmem:[%s3 + $0x8] sm:$0xff]
  %v659 = vld [vmem:[%s3 + $0x10] sm:$0xff]
  %v660 = vld [vmem:[%s3 + $0x18] sm:$0xff]
  %v661 = vld [vmem:[%s4] sm:$0xff]
  %v662 = vld [vmem:[%s4 + $0x8] sm:$0xff]
  %v663 = vld [vmem:[%s4 + $0x10] sm:$0xff]
  %v664 = vld [vmem:[%s4 + $0x18] sm:$0xff]
  %v665 = vadd.f32 %v641, %v642
  %v666 = vadd.f32 %v665, %v643
  %v667 = vadd.f32 %v666, %v644
  %668 = vadd.xlane.f32.xlu0 %v667
  %v669 = vpop.xlane.xlu0 %668
  %v670 = vadd.f32 %v645, %v646
  %v671 = vadd.f32 %v670, %v647
  %v672 = vadd.f32 %v671, %v648
  %673 = vadd.xlane.f32.xlu0 %v672
  %v674 = vpop.xlane.xlu0 %673
  %v675 = vadd.f32 %v649, %v650
  %v676 = vadd.f32 %v675, %v651
  %v677 = vadd.f32 %v676, %v652
  %678 = vadd.xlane.f32.xlu0 %v677
  %v679 = vpop.xlane.xlu0 %678
  %v680 = vadd.f32 %v653, %v654
  %v681 = vadd.f32 %v680, %v655
  %v682 = vadd.f32 %v681, %v656
  %683 = vadd.xlane.f32.xlu0 %v682
  %v684 = vpop.xlane.xlu0 %683
  %v685 = vrcp.pop 512.0
  %v686 = vmul.f32 %v669, %v685
  %v687 = vmul.f32 %v674, %v685
  %v688 = vmul.f32 %v679, %v685
  %v689 = vmul.f32 %v684, %v685
  %v690 = vsub.f32 %v641, %v686
  %v691 = vsub.f32 %v642, %v686
  %v692 = vsub.f32 %v643, %v686
  %v693 = vsub.f32 %v644, %v686
  %v694 = vsub.f32 %v645, %v687
  %v695 = vsub.f32 %v646, %v687
  %v696 = vsub.f32 %v647, %v687
  %v697 = vsub.f32 %v648, %v687
  %v698 = vsub.f32 %v649, %v688
  %v699 = vsub.f32 %v650, %v688
  %v700 = vsub.f32 %v651, %v688
  %v701 = vsub.f32 %v652, %v688
  %v702 = vsub.f32 %v653, %v689
  %v703 = vsub.f32 %v654, %v689
  %v704 = vsub.f32 %v655, %v689
  %v705 = vsub.f32 %v656, %v689
  %v706 = vmul.f32 %v690, %v690
  %v707 = vmul.f32 %v691, %v691
  %v708 = vmul.f32 %v692, %v692
  %v709 = vmul.f32 %v693, %v693
  %v710 = vmul.f32 %v694, %v694
  %v711 = vmul.f32 %v695, %v695
  %v712 = vmul.f32 %v696, %v696
  %v713 = vmul.f32 %v697, %v697
  %v714 = vmul.f32 %v698, %v698
  %v715 = vmul.f32 %v699, %v699
  %v716 = vmul.f32 %v700, %v700
  %v717 = vmul.f32 %v701, %v701
  %v718 = vmul.f32 %v702, %v702
  %v719 = vmul.f32 %v703, %v703
  %v720 = vmul.f32 %v704, %v704
  %v721 = vmul.f32 %v705, %v705
  %v722 = vadd.f32 %v706, %v707
  %v723 = vadd.f32 %v722, %v708
  %v724 = vadd.f32 %v723, %v709
  %725 = vadd.xlane.f32.xlu0 %v724
  %v726 = vpop.xlane.xlu0 %725
  %v727 = vadd.f32 %v710, %v711
  %v728 = vadd.f32 %v727, %v712
  %v729 = vadd.f32 %v728, %v713
  %730 = vadd.xlane.f32.xlu0 %v729
  %v731 = vpop.xlane.xlu0 %730
  %v732 = vadd.f32 %v714, %v715
  %v733 = vadd.f32 %v732, %v716
  %v734 = vadd.f32 %v733, %v717
  %735 = vadd.xlane.f32.xlu0 %v734
  %v736 = vpop.xlane.xlu0 %735
  %v737 = vadd.f32 %v718, %v719
  %v738 = vadd.f32 %v737, %v720
  %v739 = vadd.f32 %v738, %v721
  %740 = vadd.xlane.f32.xlu0 %v739
  %v741 = vpop.xlane.xlu0 %740
  %v742 = vmul.f32 %v726, %v685
  %v743 = vmul.f32 %v731, %v685
  %v744 = vmul.f32 %v736, %v685
  %v745 = vmul.f32 %v741, %v685
  %v746 = vadd.f32 %v742, 1e-05
  %v747 = vadd.f32 %v743, 1e-05
  %v748 = vadd.f32 %v744, 1e-05
  %v749 = vadd.f32 %v745, 1e-05
  %v750 = vrsqrt.pop %v746
  %v751 = vrsqrt.pop %v747
  %v752 = vrsqrt.pop %v748
  %v753 = vrsqrt.pop %v749
  %v754 = vmul.f32 %v690, %v750
  %v755 = vmul.f32 %v691, %v750
  %v756 = vmul.f32 %v692, %v750
  %v757 = vmul.f32 %v693, %v750
  %v758 = vmul.f32 %v694, %v751
  %v759 = vmul.f32 %v695, %v751
  %v760 = vmul.f32 %v696, %v751
  %v761 = vmul.f32 %v697, %v751
  %v762 = vmul.f32 %v698, %v752
  %v763 = vmul.f32 %v699, %v752
  %v764 = vmul.f32 %v700, %v752
  %v765 = vmul.f32 %v701, %v752
  %v766 = vmul.f32 %v702, %v753
  %v767 = vmul.f32 %v703, %v753
  %v768 = vmul.f32 %v704, %v753
  %v769 = vmul.f32 %v705, %v753
  %771 = vset.pattern.permute.xlu0 0
  %772 = vperm.xlu0 %771, %v657
  %v773 = vpop.permute.xlu0 %772
  %776 = vset.pattern.permute.xlu0 0
  %777 = vperm.xlu0 %776, %v658
  %v778 = vpop.permute.xlu0 %777
  %781 = vset.pattern.permute.xlu0 0
  %782 = vperm.xlu0 %781, %v659
  %v783 = vpop.permute.xlu0 %782
  %786 = vset.pattern.permute.xlu0 0
  %787 = vperm.xlu0 %786, %v660
  %v788 = vpop.permute.xlu0 %787
  %v790 = vmul.f32 %v754, %v773
  %v791 = vmul.f32 %v755, %v773
  %v792 = vmul.f32 %v756, %v773
  %v793 = vmul.f32 %v757, %v773
  %v794 = vmul.f32 %v758, %v778
  %v795 = vmul.f32 %v759, %v778
  %v796 = vmul.f32 %v760, %v778
  %v797 = vmul.f32 %v761, %v778
  %v798 = vmul.f32 %v762, %v783
  %v799 = vmul.f32 %v763, %v783
  %v800 = vmul.f32 %v764, %v783
  %v801 = vmul.f32 %v765, %v783
  %v802 = vmul.f32 %v766, %v788
  %v803 = vmul.f32 %v767, %v788
  %v804 = vmul.f32 %v768, %v788
  %v805 = vmul.f32 %v769, %v788
  %807 = vset.pattern.permute.xlu0 0
  %808 = vperm.xlu0 %807, %v661
  %v809 = vpop.permute.xlu0 %808
  %812 = vset.pattern.permute.xlu0 0
  %813 = vperm.xlu0 %812, %v662
  %v814 = vpop.permute.xlu0 %813
  %817 = vset.pattern.permute.xlu0 0
  %818 = vperm.xlu0 %817, %v663
  %v819 = vpop.permute.xlu0 %818
  %822 = vset.pattern.permute.xlu0 0
  %823 = vperm.xlu0 %822, %v664
  %v824 = vpop.permute.xlu0 %823
  %v826 = vadd.f32 %v790, %v809
  %v827 = vadd.f32 %v791, %v809
  %v828 = vadd.f32 %v792, %v809
  %v829 = vadd.f32 %v793, %v809
  %v830 = vadd.f32 %v794, %v814
  %v831 = vadd.f32 %v795, %v814
  %v832 = vadd.f32 %v796, %v814
  %v833 = vadd.f32 %v797, %v814
  %v834 = vadd.f32 %v798, %v819
  %v835 = vadd.f32 %v799, %v819
  %v836 = vadd.f32 %v800, %v819
  %v837 = vadd.f32 %v801, %v819
  %v838 = vadd.f32 %v802, %v824
  %v839 = vadd.f32 %v803, %v824
  %v840 = vadd.f32 %v804, %v824
  %v841 = vadd.f32 %v805, %v824
  %v842 = vmax.f32 %v826, 0.0
  %v843 = vmax.f32 %v827, 0.0
  %v844 = vmax.f32 %v828, 0.0
  %v845 = vmax.f32 %v829, 0.0
  %v846 = vmax.f32 %v830, 0.0
  %v847 = vmax.f32 %v831, 0.0
  %v848 = vmax.f32 %v832, 0.0
  %v849 = vmax.f32 %v833, 0.0
  %v850 = vmax.f32 %v834, 0.0
  %v851 = vmax.f32 %v835, 0.0
  %v852 = vmax.f32 %v836, 0.0
  %v853 = vmax.f32 %v837, 0.0
  %v854 = vmax.f32 %v838, 0.0
  %v855 = vmax.f32 %v839, 0.0
  %v856 = vmax.f32 %v840, 0.0
  %v857 = vmax.f32 %v841, 0.0
  %858 = vst [vmem:[%s5] sm:$0xff] %v842
  %859 = vst [vmem:[%s5 + $0x8] sm:$0xff] %v843
  %860 = vst [vmem:[%s5 + $0x10] sm:$0xff] %v844
  %861 = vst [vmem:[%s5 + $0x18] sm:$0xff] %v845
  %862 = vst [vmem:[%s5 + $0x20] sm:$0xff] %v846
  %863 = vst [vmem:[%s5 + $0x28] sm:$0xff] %v847
  %864 = vst [vmem:[%s5 + $0x30] sm:$0xff] %v848
  %865 = vst [vmem:[%s5 + $0x38] sm:$0xff] %v849
  %866 = vst [vmem:[%s5 + $0x40] sm:$0xff] %v850
  %867 = vst [vmem:[%s5 + $0x48] sm:$0xff] %v851
  %868 = vst [vmem:[%s5 + $0x50] sm:$0xff] %v852
  %869 = vst [vmem:[%s5 + $0x58] sm:$0xff] %v853
  %870 = vst [vmem:[%s5 + $0x60] sm:$0xff] %v854
  %871 = vst [vmem:[%s5 + $0x68] sm:$0xff] %v855
  %872 = vst [vmem:[%s5 + $0x70] sm:$0xff] %v856
  %873 = vst [vmem:[%s5 + $0x78] sm:$0xff] %v857
  // Predicated region
  $region22: #{wide_resnet_forward.11} parent=0 // pred_check
    _
  $region23: #{wide_resnet_forward.11} parent=0 // pred_check_branch
    %875 = sbr.rel (0) target = $region25
  $region24: #{wide_resnet_forward.11} parent=0 // pred_region
    _
  $region25: #{wide_resnet_forward.11} parent=0 // pred_fallthru
    _
  // Predicated region
  $region26: #{wide_resnet_forward.11} parent=0 // pred_check
    _
  $region27: #{wide_resnet_forward.11} parent=0 // pred_check_branch
    %877 = sbr.rel (0) target = $region29
  $region28: #{wide_resnet_forward.11} parent=0 // pred_region
    _
  $region29: #{wide_resnet_forward.11} parent=0 // pred_fallthru
    _

// kernel: wide_resnet_forward.12
$region0: #{wide_resnet_forward.12}
  #allocation0 [shape = 'u32[]', space=smem, size = 0x4, offset = 0x4, fixed_abs, tag = 'smem constant byte address 0x4 - core index']
  #allocation1 [shape = 'u32[144,128]{1,0:T(1,128)}', space=vmem, size = 0x12000, scoped, tag = 'internal scratch']
  %s0 = inlined_call_operand.vmem [shape: bf16[128,288], index: 0, kind: input, shape index: {}]
  %s1 = inlined_call_operand.vmem [shape: bf16[288,128], index: 1, kind: input, shape index: {}]
  %s2 = inlined_call_operand.vmem [shape: f32[64,1], index: 2, kind: input, shape index: {}]
  %s3 = inlined_call_operand.vmem [shape: f32[64,1], index: 3, kind: input, shape index: {}]
  %s4 = inlined_call_operand.vmem [shape: f32[64,128], index: 4, kind: output, shape index: {0}]
  %s5 = inlined_call_operand.vmem [shape: f32[64,128], index: 5, kind: output, shape index: {1}]
  %6 = xla_tuple %s4, %s5
  %s7 = sld [smem:[#allocation0]]
  $region34: #{wide_resnet_forward.12} parent=0
    _
  %s9 = ssub.s32 1, %s7
  %s10 = scalar_select 0, %s9, %s7
  // Predicated region
  $region2: #{wide_resnet_forward.12} parent=0 // pred_check
    _
  $region3: #{wide_resnet_forward.12} parent=0 // pred_check_branch
    %12 = sbr.rel (0) target = $region5
  $region4: #{wide_resnet_forward.12} parent=0 // pred_region
    _
  $region5: #{wide_resnet_forward.12} parent=0 // pred_fallthru
    _
  // Predicated region
  $region6: #{wide_resnet_forward.12} parent=0 // pred_check
    _
  $region7: #{wide_resnet_forward.12} parent=0 // pred_check_branch
    %14 = sbr.rel (0) target = $region9
  $region8: #{wide_resnet_forward.12} parent=0 // pred_region
    _
  $region9: #{wide_resnet_forward.12} parent=0 // pred_fallthru
    _
  // Predicated region
  $region10: #{wide_resnet_forward.12} parent=0 // pred_check
    _
  $region11: #{wide_resnet_forward.12} parent=0 // pred_check_branch
    %16 = sbr.rel (0) target = $region13
  $region12: #{wide_resnet_forward.12} parent=0 // pred_region
    _
  $region13: #{wide_resnet_forward.12} parent=0 // pred_fallthru
    _
  // Predicated region
  $region14: #{wide_resnet_forward.12} parent=0 // pred_check
    _
  $region15: #{wide_resnet_forward.12} parent=0 // pred_check_branch
    %18 = sbr.rel (0) target = $region17
  $region16: #{wide_resnet_forward.12} parent=0 // pred_region
    _
  $region17: #{wide_resnet_forward.12} parent=0 // pred_fallthru
    _
  %v19 = vld [vmem:[%s0] sm:$0xff]
  %v20 = vld [vmem:[%s0 + $0x8] sm:$0xf]
  %v21 = vld [vmem:[%s0 + $0xc] sm:$0xff]
  %v22 = vld [vmem:[%s0 + $0x14] sm:$0xf]
  %v23 = vld [vmem:[%s0 + $0x18] sm:$0xff]
  %v24 = vld [vmem:[%s0 + $0x20] sm:$0xf]
  %v25 = vld [vmem:[%s0 + $0x24] sm:$0xff]
  %v26 = vld [vmem:[%s0 + $0x2c] sm:$0xf]
  %v27 = vld [vmem:[%s0 + $0x30] sm:$0xff]
  %v28 = vld [vmem:[%s0 + $0x38] sm:$0xf]
  %v29 = vld [vmem:[%s0 + $0x3c] sm:$0xff]
  %v30 = vld [vmem:[%s0 + $0x44] sm:$0xf]
  %v31 = vld [vmem:[%s0 + $0x48] sm:$0xff]
  %v32 = vld [vmem:[%s0 + $0x50] sm:$0xf]
  %v33 = vld [vmem:[%s0 + $0x54] sm:$0xff]
  %v34 = vld [vmem:[%s0 + $0x5c] sm:$0xf]
  %v35 = vld [vmem:[%s0 + $0x60] sm:$0xff]
  %v36 = vld [vmem:[%s0 + $0x68] sm:$0xf]
  %v37 = vld [vmem:[%s0 + $0x6c] sm:$0xff]
  %v38 = vld [vmem:[%s0 + $0x74] sm:$0xf]
  %v39 = vld [vmem:[%s0 + $0x78] sm:$0xff]
  %v40 = vld [vmem:[%s0 + $0x80] sm:$0xf]
  %v41 = vld [vmem:[%s0 + $0x84] sm:$0xff]
  %v42 = vld [vmem:[%s0 + $0x8c] sm:$0xf]
  %v43 = vld [vmem:[%s0 + $0x90] sm:$0xff]
  %v44 = vld [vmem:[%s0 + $0x98] sm:$0xf]
  %v45 = vld [vmem:[%s0 + $0x9c] sm:$0xff]
  %v46 = vld [vmem:[%s0 + $0xa4] sm:$0xf]
  %v47 = vld [vmem:[%s0 + $0xa8] sm:$0xff]
  %v48 = vld [vmem:[%s0 + $0xb0] sm:$0xf]
  %v49 = vld [vmem:[%s0 + $0xb4] sm:$0xff]
  %v50 = vld [vmem:[%s0 + $0xbc] sm:$0xf]
  %v51 = vunpack.c.l.bf16 %v19
  %v52 = vunpack.c.h.bf16 %v19
  %v53 = vunpack.c.l.bf16 %v20
  %v54 = vunpack.c.l.bf16 %v21
  %v55 = vunpack.c.h.bf16 %v21
  %v56 = vunpack.c.l.bf16 %v22
  %v57 = vunpack.c.l.bf16 %v23
  %v58 = vunpack.c.h.bf16 %v23
  %v59 = vunpack.c.l.bf16 %v24
  %v60 = vunpack.c.l.bf16 %v25
  %v61 = vunpack.c.h.bf16 %v25
  %v62 = vunpack.c.l.bf16 %v26
  %v63 = vunpack.c.l.bf16 %v27
  %v64 = vunpack.c.h.bf16 %v27
  %v65 = vunpack.c.l.bf16 %v28
  %v66 = vunpack.c.l.bf16 %v29
  %v67 = vunpack.c.h.bf16 %v29
  %v68 = vunpack.c.l.bf16 %v30
  %v69 = vunpack.c.l.bf16 %v31
  %v70 = vunpack.c.h.bf16 %v31
  %v71 = vunpack.c.l.bf16 %v32
  %v72 = vunpack.c.l.bf16 %v33
  %v73 = vunpack.c.h.bf16 %v33
  %v74 = vunpack.c.l.bf16 %v34
  %v75 = vunpack.c.l.bf16 %v35
  %v76 = vunpack.c.h.bf16 %v35
  %v77 = vunpack.c.l.bf16 %v36
  %v78 = vunpack.c.l.bf16 %v37
  %v79 = vunpack.c.h.bf16 %v37
  %v80 = vunpack.c.l.bf16 %v38
  %v81 = vunpack.c.l.bf16 %v39
  %v82 = vunpack.c.h.bf16 %v39
  %v83 = vunpack.c.l.bf16 %v40
  %v84 = vunpack.c.l.bf16 %v41
  %v85 = vunpack.c.h.bf16 %v41
  %v86 = vunpack.c.l.bf16 %v42
  %v87 = vunpack.c.l.bf16 %v43
  %v88 = vunpack.c.h.bf16 %v43
  %v89 = vunpack.c.l.bf16 %v44
  %v90 = vunpack.c.l.bf16 %v45
  %v91 = vunpack.c.h.bf16 %v45
  %v92 = vunpack.c.l.bf16 %v46
  %v93 = vunpack.c.l.bf16 %v47
  %v94 = vunpack.c.h.bf16 %v47
  %v95 = vunpack.c.l.bf16 %v48
  %v96 = vunpack.c.l.bf16 %v49
  %v97 = vunpack.c.h.bf16 %v49
  %v98 = vunpack.c.l.bf16 %v50
  %v99 = vld [vmem:[%s1] sm:$0xf]
  %v100 = vld [vmem:[%s1 + $0x4] sm:$0xf]
  %v101 = vld [vmem:[%s1 + $0x8] sm:$0xf]
  %v102 = vld [vmem:[%s1 + $0xc] sm:$0xf]
  %v103 = vld [vmem:[%s1 + $0x10] sm:$0xf]
  %v104 = vld [vmem:[%s1 + $0x14] sm:$0xf]
  %v105 = vld [vmem:[%s1 + $0x18] sm:$0xf]
  %v106 = vld [vmem:[%s1 + $0x1c] sm:$0xf]
  %v107 = vld [vmem:[%s1 + $0x20] sm:$0xf]
  %v108 = vld [vmem:[%s1 + $0x24] sm:$0xf]
  %v109 = vld [vmem:[%s1 + $0x28] sm:$0xf]
  %v110 = vld [vmem:[%s1 + $0x2c] sm:$0xf]
  %v111 = vld [vmem:[%s1 + $0x30] sm:$0xf]
  %v112 = vld [vmem:[%s1 + $0x34] sm:$0xf]
  %v113 = vld [vmem:[%s1 + $0x38] sm:$0xf]
  %v114 = vld [vmem:[%s1 + $0x3c] sm:$0xf]
  %v115 = vld [vmem:[%s1 + $0x40] sm:$0xf]
  %v116 = vld [vmem:[%s1 + $0x44] sm:$0xf]
  %v117 = vld [vmem:[%s1 + $0x48] sm:$0xf]
  %v118 = vld [vmem:[%s1 + $0x4c] sm:$0xf]
  %v119 = vld [vmem:[%s1 + $0x50] sm:$0xf]
  %v120 = vld [vmem:[%s1 + $0x54] sm:$0xf]
  %v121 = vld [vmem:[%s1 + $0x58] sm:$0xf]
  %v122 = vld [vmem:[%s1 + $0x5c] sm:$0xf]
  %v123 = vld [vmem:[%s1 + $0x60] sm:$0xf]
  %v124 = vld [vmem:[%s1 + $0x64] sm:$0xf]
  %v125 = vld [vmem:[%s1 + $0x68] sm:$0xf]
  %v126 = vld [vmem:[%s1 + $0x6c] sm:$0xf]
  %v127 = vld [vmem:[%s1 + $0x70] sm:$0xf]
  %v128 = vld [vmem:[%s1 + $0x74] sm:$0xf]
  %v129 = vld [vmem:[%s1 + $0x78] sm:$0xf]
  %v130 = vld [vmem:[%s1 + $0x7c] sm:$0xf]
  %v131 = vld [vmem:[%s1 + $0x80] sm:$0xf]
  %v132 = vld [vmem:[%s1 + $0x84] sm:$0xf]
  %v133 = vld [vmem:[%s1 + $0x88] sm:$0xf]
  %v134 = vld [vmem:[%s1 + $0x8c] sm:$0xf]
  %v135 = vunpack.c.l.bf16 %v99
  %v136 = vunpack.c.l.bf16 %v100
  %v137 = vunpack.c.l.bf16 %v101
  %v138 = vunpack.c.l.bf16 %v102
  %v139 = vunpack.c.l.bf16 %v103
  %v140 = vunpack.c.l.bf16 %v104
  %v141 = vunpack.c.l.bf16 %v105
  %v142 = vunpack.c.l.bf16 %v106
  %v143 = vunpack.c.l.bf16 %v107
  %v144 = vunpack.c.l.bf16 %v108
  %v145 = vunpack.c.l.bf16 %v109
  %v146 = vunpack.c.l.bf16 %v110
  %v147 = vunpack.c.l.bf16 %v111
  %v148 = vunpack.c.l.bf16 %v112
  %v149 = vunpack.c.l.bf16 %v113
  %v150 = vunpack.c.l.bf16 %v114
  %v151 = vunpack.c.l.bf16 %v115
  %v152 = vunpack.c.l.bf16 %v116
  %v153 = vunpack.c.l.bf16 %v117
  %v154 = vunpack.c.l.bf16 %v118
  %v155 = vunpack.c.l.bf16 %v119
  %v156 = vunpack.c.l.bf16 %v120
  %v157 = vunpack.c.l.bf16 %v121
  %v158 = vunpack.c.l.bf16 %v122
  %v159 = vunpack.c.l.bf16 %v123
  %v160 = vunpack.c.l.bf16 %v124
  %v161 = vunpack.c.l.bf16 %v125
  %v162 = vunpack.c.l.bf16 %v126
  %v163 = vunpack.c.l.bf16 %v127
  %v164 = vunpack.c.l.bf16 %v128
  %v165 = vunpack.c.l.bf16 %v129
  %v166 = vunpack.c.l.bf16 %v130
  %v167 = vunpack.c.l.bf16 %v131
  %v168 = vunpack.c.l.bf16 %v132
  %v169 = vunpack.c.l.bf16 %v133
  %v170 = vunpack.c.l.bf16 %v134
  %vm171 = vcmask 261120
  %v173 = vsel %vm171, %v53, 0
  %v176 = vsel %vm171, %v56, 0
  %v179 = vsel %vm171, %v59, 0
  %v182 = vsel %vm171, %v62, 0
  %v185 = vsel %vm171, %v65, 0
  %v188 = vsel %vm171, %v68, 0
  %v191 = vsel %vm171, %v71, 0
  %v194 = vsel %vm171, %v74, 0
  %v197 = vsel %vm171, %v77, 0
  %v200 = vsel %vm171, %v80, 0
  %v203 = vsel %vm171, %v83, 0
  %v206 = vsel %vm171, %v86, 0
  %v209 = vsel %vm171, %v89, 0
  %v212 = vsel %vm171, %v92, 0
  %v215 = vsel %vm171, %v95, 0
  %v218 = vsel %vm171, %v98, 0
  %220 = vmatprep.subr.mxu0 0.0
  %221 = vmatpush1.msra.mxu0 %v135
  %222 = vmatprep.subr.mxu0 0.0
  %223 = vmatpush1.msra.mxu0 %v136
  %224 = vmatprep.subr.mxu0 0.0
  %225 = vmatpush1.msra.mxu0 %v137
  %226 = vmatprep.subr.mxu0 0.0
  %227 = vmatpush1.msra.mxu0 %v138
  %228 = vmatprep.subr.mxu0 0.0
  %229 = vmatpush1.msra.mxu0 %v139
  %230 = vmatprep.subr.mxu0 0.0
  %231 = vmatpush1.msra.mxu0 %v140
  %232 = vmatprep.subr.mxu0 0.0
  %233 = vmatpush1.msra.mxu0 %v141
  %234 = vmatprep.subr.mxu0 0.0
  %235 = vmatpush1.msra.mxu0 %v142
  %236 = vmatprep.subr.mxu0 0.0
  %237 = vmatpush1.msra.mxu0 %v143
  %238 = vmatprep.subr.mxu0 0.0
  %239 = vmatpush1.msra.mxu0 %v144
  %240 = vmatprep.subr.mxu0 0.0
  %241 = vmatpush1.msra.mxu0 %v145
  %242 = vmatprep.subr.mxu0 0.0
  %243 = vmatpush1.msra.mxu0 %v146
  %244 = vmatprep.subr.mxu0 0.0
  %245 = vmatpush1.msra.mxu0 %v147
  %246 = vmatprep.subr.mxu0 0.0
  %247 = vmatpush1.msra.mxu0 %v148
  %248 = vmatprep.subr.mxu0 0.0
  %249 = vmatpush1.msra.mxu0 %v149
  %250 = vmatprep.subr.mxu0 0.0
  %251 = vmatpush1.msra.mxu0 %v150
  %252 = vmatprep.subr.mxu0 0.0
  %253 = vmatpush1.msra.mxu0 %v151
  %254 = vmatprep.subr.mxu0 0.0
  %255 = vmatpush1.msra.mxu0 %v152
  %256 = vmatprep.subr.mxu0 0.0
  %257 = vmatpush1.msra.mxu0 %v153
  %258 = vmatprep.subr.mxu0 0.0
  %259 = vmatpush1.msra.mxu0 %v154
  %260 = vmatprep.subr.mxu0 0.0
  %261 = vmatpush1.msra.mxu0 %v155
  %262 = vmatprep.subr.mxu0 0.0
  %263 = vmatpush1.msra.mxu0 %v156
  %264 = vmatprep.subr.mxu0 0.0
  %265 = vmatpush1.msra.mxu0 %v157
  %266 = vmatprep.subr.mxu0 0.0
  %267 = vmatpush1.msra.mxu0 %v158
  %268 = vmatprep.subr.mxu0 0.0
  %269 = vmatpush1.msra.mxu0 %v159
  %270 = vmatprep.subr.mxu0 0.0
  %271 = vmatpush1.msra.mxu0 %v160
  %272 = vmatprep.subr.mxu0 0.0
  %273 = vmatpush1.msra.mxu0 %v161
  %274 = vmatprep.subr.mxu0 0.0
  %275 = vmatpush1.msra.mxu0 %v162
  %276 = vmatprep.subr.mxu0 0.0
  %277 = vmatpush1.msra.mxu0 %v163
  %278 = vmatprep.subr.mxu0 0.0
  %279 = vmatpush1.msra.mxu0 %v164
  %280 = vmatprep.subr.mxu0 0.0
  %281 = vmatpush1.msra.mxu0 %v165
  %282 = vmatprep.subr.mxu0 0.0
  %283 = vmatpush1.msra.mxu0 %v166
  %284 = vmatprep.mubr.f32.mxu0 %v52
  %285 = vmatmul.mubr.f32.gmra.mrb[0].mxu0 %v51
  %v286 = vpop.f32.mrb[0].mxu0
  %v287 = vadd.f32 0.0, %v286
  %v288 = vpop.f32.mrb[0].mxu0
  %289 = vmatprep.mubr.f32.mxu0 %v55
  %290 = vmatmul.mubr.f32.gmra.mrb[0].mxu0 %v54
  %v291 = vpop.f32.mrb[0].mxu0
  %v292 = vadd.f32 0.0, %v291
  %v293 = vpop.f32.mrb[0].mxu0
  %294 = vmatprep.mubr.f32.mxu0 %v58
  %295 = vmatmul.mubr.f32.gmra.mrb[0].mxu0 %v57
  %v296 = vpop.f32.mrb[0].mxu0
  %v297 = vadd.f32 0.0, %v296
  %v298 = vpop.f32.mrb[0].mxu0
  %299 = vmatprep.mubr.f32.mxu0 %v61
  %300 = vmatmul.mubr.f32.gmra.mrb[0].mxu0 %v60
  %v301 = vpop.f32.mrb[0].mxu0
  %v302 = vadd.f32 0.0, %v301
  %v303 = vpop.f32.mrb[0].mxu0
  %304 = vmatprep.mubr.f32.mxu0 %v64
  %305 = vmatmul.mubr.f32.gmra.mrb[0].mxu0 %v63
  %v306 = vpop.f32.mrb[0].mxu0
  %v307 = vadd.f32 0.0, %v306
  %v308 = vpop.f32.mrb[0].mxu0
  %309 = vmatprep.mubr.f32.mxu0 %v67
  %310 = vmatmul.mubr.f32.gmra.mrb[0].mxu0 %v66
  %v311 = vpop.f32.mrb[0].mxu0
  %v312 = vadd.f32 0.0, %v311
  %v313 = vpop.f32.mrb[0].mxu0
  %314 = vmatprep.mubr.f32.mxu0 %v70
  %315 = vmatmul.mubr.f32.gmra.mrb[0].mxu0 %v69
  %v316 = vpop.f32.mrb[0].mxu0
  %v317 = vadd.f32 0.0, %v316
  %v318 = vpop.f32.mrb[0].mxu0
  %319 = vmatprep.mubr.f32.mxu0 %v73
  %320 = vmatmul.mubr.f32.gmra.mrb[0].mxu0 %v72
  %v321 = vpop.f32.mrb[0].mxu0
  %v322 = vadd.f32 0.0, %v321
  %v323 = vpop.f32.mrb[0].mxu0
  %324 = vmatprep.mubr.f32.mxu0 %v76
  %325 = vmatmul.mubr.f32.gmra.mrb[0].mxu0 %v75
  %v326 = vpop.f32.mrb[0].mxu0
  %v327 = vadd.f32 0.0, %v326
  %v328 = vpop.f32.mrb[0].mxu0
  %329 = vmatprep.mubr.f32.mxu0 %v79
  %330 = vmatmul.mubr.f32.gmra.mrb[0].mxu0 %v78
  %v331 = vpop.f32.mrb[0].mxu0
  %v332 = vadd.f32 0.0, %v331
  %v333 = vpop.f32.mrb[0].mxu0
  %334 = vmatprep.mubr.f32.mxu0 %v82
  %335 = vmatmul.mubr.f32.gmra.mrb[0].mxu0 %v81
  %v336 = vpop.f32.mrb[0].mxu0
  %v337 = vadd.f32 0.0, %v336
  %v338 = vpop.f32.mrb[0].mxu0
  %339 = vmatprep.mubr.f32.mxu0 %v85
  %340 = vmatmul.mubr.f32.gmra.mrb[0].mxu0 %v84
  %v341 = vpop.f32.mrb[0].mxu0
  %v342 = vadd.f32 0.0, %v341
  %v343 = vpop.f32.mrb[0].mxu0
  %344 = vmatprep.mubr.f32.mxu0 %v88
  %345 = vmatmul.mubr.f32.gmra.mrb[0].mxu0 %v87
  %v346 = vpop.f32.mrb[0].mxu0
  %v347 = vadd.f32 0.0, %v346
  %v348 = vpop.f32.mrb[0].mxu0
  %349 = vmatprep.mubr.f32.mxu0 %v91
  %350 = vmatmul.mubr.f32.gmra.mrb[0].mxu0 %v90
  %v351 = vpop.f32.mrb[0].mxu0
  %v352 = vadd.f32 0.0, %v351
  %v353 = vpop.f32.mrb[0].mxu0
  %354 = vmatprep.mubr.f32.mxu0 %v94
  %355 = vmatmul.mubr.f32.gmra.mrb[0].mxu0 %v93
  %v356 = vpop.f32.mrb[0].mxu0
  %v357 = vadd.f32 0.0, %v356
  %v358 = vpop.f32.mrb[0].mxu0
  %359 = vmatprep.mubr.f32.mxu0 %v97
  %360 = vmatmul.mubr.f32.gmra.mrb[0].mxu0 %v96
  %v361 = vpop.f32.mrb[0].mxu0
  %v362 = vadd.f32 0.0, %v361
  %v363 = vpop.f32.mrb[0].mxu0
  %364 = vdwg.mxu0
  %365 = vmatprep.subr.mxu0 0.0
  %366 = vmatpush1.msra.mxu0 %v167
  %367 = vmatprep.subr.mxu0 0.0
  %368 = vmatpush1.msra.mxu0 %v168
  %369 = vmatprep.subr.mxu0 0.0
  %370 = vmatpush1.msra.mxu0 %v169
  %371 = vmatprep.subr.mxu0 0.0
  %372 = vmatpush1.msra.mxu0 %v170
  %373 = vmatprep.subr.mxu0 0.0
  %374 = vmatpush1.msra.mxu0 0.0
  %375 = vmatprep.subr.mxu0 0.0
  %376 = vmatpush1.msra.mxu0 0.0
  %377 = vmatprep.subr.mxu0 0.0
  %378 = vmatpush1.msra.mxu0 0.0
  %379 = vmatprep.subr.mxu0 0.0
  %380 = vmatpush1.msra.mxu0 0.0
  %381 = vmatprep.subr.mxu0 0.0
  %382 = vmatpush1.msra.mxu0 0.0
  %383 = vmatprep.subr.mxu0 0.0
  %384 = vmatpush1.msra.mxu0 0.0
  %385 = vmatprep.subr.mxu0 0.0
  %386 = vmatpush1.msra.mxu0 0.0
  %387 = vmatprep.subr.mxu0 0.0
  %388 = vmatpush1.msra.mxu0 0.0
  %389 = vmatprep.subr.mxu0 0.0
  %390 = vmatpush1.msra.mxu0 0.0
  %391 = vmatprep.subr.mxu0 0.0
  %392 = vmatpush1.msra.mxu0 0.0
  %393 = vmatprep.subr.mxu0 0.0
  %394 = vmatpush1.msra.mxu0 0.0
  %395 = vmatprep.subr.mxu0 0.0
  %396 = vmatpush1.msra.mxu0 0.0
  %397 = vmatprep.subr.mxu0 0.0
  %398 = vmatpush1.msra.mxu0 0.0
  %399 = vmatprep.subr.mxu0 0.0
  %400 = vmatpush1.msra.mxu0 0.0
  %401 = vmatprep.subr.mxu0 0.0
  %402 = vmatpush1.msra.mxu0 0.0
  %403 = vmatprep.subr.mxu0 0.0
  %404 = vmatpush1.msra.mxu0 0.0
  %405 = vmatprep.subr.mxu0 0.0
  %406 = vmatpush1.msra.mxu0 0.0
  %407 = vmatprep.subr.mxu0 0.0
  %408 = vmatpush1.msra.mxu0 0.0
  %409 = vmatprep.subr.mxu0 0.0
  %410 = vmatpush1.msra.mxu0 0.0
  %411 = vmatprep.subr.mxu0 0.0
  %412 = vmatpush1.msra.mxu0 0.0
  %413 = vmatprep.subr.mxu0 0.0
  %414 = vmatpush1.msra.mxu0 0.0
  %415 = vmatprep.subr.mxu0 0.0
  %416 = vmatpush1.msra.mxu0 0.0
  %417 = vmatprep.subr.mxu0 0.0
  %418 = vmatpush1.msra.mxu0 0.0
  %419 = vmatprep.subr.mxu0 0.0
  %420 = vmatpush1.msra.mxu0 0.0
  %421 = vmatprep.subr.mxu0 0.0
  %422 = vmatpush1.msra.mxu0 0.0
  %423 = vmatprep.subr.mxu0 0.0
  %424 = vmatpush1.msra.mxu0 0.0
  %425 = vmatprep.subr.mxu0 0.0
  %426 = vmatpush1.msra.mxu0 0.0
  %427 = vmatprep.subr.mxu0 0.0
  %428 = vmatpush1.msra.mxu0 0.0
  %429 = vmatprep.mubr.f32.mxu0 0.0
  %430 = vmatmul.mubr.f32.gmra.mrb[0].mxu0 %v173
  %v431 = vpop.f32.mrb[0].mxu0
  %v432 = vadd.f32 %v287, %v431
  %v433 = vpop.f32.mrb[0].mxu0
  %434 = vmatprep.mubr.f32.mxu0 0.0
  %435 = vmatmul.mubr.f32.gmra.mrb[0].mxu0 %v176
  %v436 = vpop.f32.mrb[0].mxu0
  %v437 = vadd.f32 %v292, %v436
  %v438 = vpop.f32.mrb[0].mxu0
  %439 = vmatprep.mubr.f32.mxu0 0.0
  %440 = vmatmul.mubr.f32.gmra.mrb[0].mxu0 %v179
  %v441 = vpop.f32.mrb[0].mxu0
  %v442 = vadd.f32 %v297, %v441
  %v443 = vpop.f32.mrb[0].mxu0
  %444 = vmatprep.mubr.f32.mxu0 0.0
  %445 = vmatmul.mubr.f32.gmra.mrb[0].mxu0 %v182
  %v446 = vpop.f32.mrb[0].mxu0
  %v447 = vadd.f32 %v302, %v446
  %v448 = vpop.f32.mrb[0].mxu0
  %449 = vmatprep.mubr.f32.mxu0 0.0
  %450 = vmatmul.mubr.f32.gmra.mrb[0].mxu0 %v185
  %v451 = vpop.f32.mrb[0].mxu0
  %v452 = vadd.f32 %v307, %v451
  %v453 = vpop.f32.mrb[0].mxu0
  %454 = vmatprep.mubr.f32.mxu0 0.0
  %455 = vmatmul.mubr.f32.gmra.mrb[0].mxu0 %v188
  %v456 = vpop.f32.mrb[0].mxu0
  %v457 = vadd.f32 %v312, %v456
  %v458 = vpop.f32.mrb[0].mxu0
  %459 = vmatprep.mubr.f32.mxu0 0.0
  %460 = vmatmul.mubr.f32.gmra.mrb[0].mxu0 %v191
  %v461 = vpop.f32.mrb[0].mxu0
  %v462 = vadd.f32 %v317, %v461
  %v463 = vpop.f32.mrb[0].mxu0
  %464 = vmatprep.mubr.f32.mxu0 0.0
  %465 = vmatmul.mubr.f32.gmra.mrb[0].mxu0 %v194
  %v466 = vpop.f32.mrb[0].mxu0
  %v467 = vadd.f32 %v322, %v466
  %v468 = vpop.f32.mrb[0].mxu0
  %469 = vmatprep.mubr.f32.mxu0 0.0
  %470 = vmatmul.mubr.f32.gmra.mrb[0].mxu0 %v197
  %v471 = vpop.f32.mrb[0].mxu0
  %v472 = vadd.f32 %v327, %v471
  %v473 = vpop.f32.mrb[0].mxu0
  %474 = vmatprep.mubr.f32.mxu0 0.0
  %475 = vmatmul.mubr.f32.gmra.mrb[0].mxu0 %v200
  %v476 = vpop.f32.mrb[0].mxu0
  %v477 = vadd.f32 %v332, %v476
  %v478 = vpop.f32.mrb[0].mxu0
  %479 = vmatprep.mubr.f32.mxu0 0.0
  %480 = vmatmul.mubr.f32.gmra.mrb[0].mxu0 %v203
  %v481 = vpop.f32.mrb[0].mxu0
  %v482 = vadd.f32 %v337, %v481
  %v483 = vpop.f32.mrb[0].mxu0
  %484 = vmatprep.mubr.f32.mxu0 0.0
  %485 = vmatmul.mubr.f32.gmra.mrb[0].mxu0 %v206
  %v486 = vpop.f32.mrb[0].mxu0
  %v487 = vadd.f32 %v342, %v486
  %v488 = vpop.f32.mrb[0].mxu0
  %489 = vmatprep.mubr.f32.mxu0 0.0
  %490 = vmatmul.mubr.f32.gmra.mrb[0].mxu0 %v209
  %v491 = vpop.f32.mrb[0].mxu0
  %v492 = vadd.f32 %v347, %v491
  %v493 = vpop.f32.mrb[0].mxu0
  %494 = vmatprep.mubr.f32.mxu0 0.0
  %495 = vmatmul.mubr.f32.gmra.mrb[0].mxu0 %v212
  %v496 = vpop.f32.mrb[0].mxu0
  %v497 = vadd.f32 %v352, %v496
  %v498 = vpop.f32.mrb[0].mxu0
  %499 = vmatprep.mubr.f32.mxu0 0.0
  %500 = vmatmul.mubr.f32.gmra.mrb[0].mxu0 %v215
  %v501 = vpop.f32.mrb[0].mxu0
  %v502 = vadd.f32 %v357, %v501
  %v503 = vpop.f32.mrb[0].mxu0
  %504 = vmatprep.mubr.f32.mxu0 0.0
  %505 = vmatmul.mubr.f32.gmra.mrb[0].mxu0 %v218
  %v506 = vpop.f32.mrb[0].mxu0
  %v507 = vadd.f32 %v362, %v506
  %v508 = vpop.f32.mrb[0].mxu0
  %509 = vdwg.mxu0
  %510 = vst [vmem:[%s5] sm:$0xff] %v472
  %511 = vst [vmem:[%s5 + $0x8] sm:$0xff] %v477
  %512 = vst [vmem:[%s5 + $0x10] sm:$0xff] %v482
  %513 = vst [vmem:[%s5 + $0x18] sm:$0xff] %v487
  %514 = vst [vmem:[%s5 + $0x20] sm:$0xff] %v492
  %515 = vst [vmem:[%s5 + $0x28] sm:$0xff] %v497
  %516 = vst [vmem:[%s5 + $0x30] sm:$0xff] %v502
  %517 = vst [vmem:[%s5 + $0x38] sm:$0xff] %v507
  %v518 = vld [vmem:[%s2] sm:$0xff]
  %v519 = vld [vmem:[%s2 + $0x8] sm:$0xff]
  %v520 = vld [vmem:[%s2 + $0x10] sm:$0xff]
  %v521 = vld [vmem:[%s2 + $0x18] sm:$0xff]
  %v522 = vld [vmem:[%s2 + $0x20] sm:$0xff]
  %v523 = vld [vmem:[%s2 + $0x28] sm:$0xff]
  %v524 = vld [vmem:[%s2 + $0x30] sm:$0xff]
  %v525 = vld [vmem:[%s2 + $0x38] sm:$0xff]
  %v526 = vld [vmem:[%s3] sm:$0xff]
  %v527 = vld [vmem:[%s3 + $0x8] sm:$0xff]
  %v528 = vld [vmem:[%s3 + $0x10] sm:$0xff]
  %v529 = vld [vmem:[%s3 + $0x18] sm:$0xff]
  %v530 = vld [vmem:[%s3 + $0x20] sm:$0xff]
  %v531 = vld [vmem:[%s3 + $0x28] sm:$0xff]
  %v532 = vld [vmem:[%s3 + $0x30] sm:$0xff]
  %v533 = vld [vmem:[%s3 + $0x38] sm:$0xff]
  %534 = vadd.xlane.f32.xlu0 %v432
  %v535 = vpop.xlane.xlu0 %534
  %536 = vadd.xlane.f32.xlu0 %v437
  %v537 = vpop.xlane.xlu0 %536
  %538 = vadd.xlane.f32.xlu0 %v442
  %v539 = vpop.xlane.xlu0 %538
  %540 = vadd.xlane.f32.xlu0 %v447
  %v541 = vpop.xlane.xlu0 %540
  %542 = vadd.xlane.f32.xlu0 %v452
  %v543 = vpop.xlane.xlu0 %542
  %544 = vadd.xlane.f32.xlu0 %v457
  %v545 = vpop.xlane.xlu0 %544
  %546 = vadd.xlane.f32.xlu0 %v462
  %v547 = vpop.xlane.xlu0 %546
  %548 = vadd.xlane.f32.xlu0 %v467
  %v549 = vpop.xlane.xlu0 %548
  %v550 = vrcp.pop 128.0
  %v551 = vmul.f32 %v535, %v550
  %v552 = vmul.f32 %v537, %v550
  %v553 = vmul.f32 %v539, %v550
  %v554 = vmul.f32 %v541, %v550
  %v555 = vmul.f32 %v543, %v550
  %v556 = vmul.f32 %v545, %v550
  %v557 = vmul.f32 %v547, %v550
  %v558 = vmul.f32 %v549, %v550
  %v559 = vsub.f32 %v432, %v551
  %v560 = vsub.f32 %v437, %v552
  %v561 = vsub.f32 %v442, %v553
  %v562 = vsub.f32 %v447, %v554
  %v563 = vsub.f32 %v452, %v555
  %v564 = vsub.f32 %v457, %v556
  %v565 = vsub.f32 %v462, %v557
  %v566 = vsub.f32 %v467, %v558
  %v567 = vmul.f32 %v559, %v559
  %v568 = vmul.f32 %v560, %v560
  %v569 = vmul.f32 %v561, %v561
  %v570 = vmul.f32 %v562, %v562
  %v571 = vmul.f32 %v563, %v563
  %v572 = vmul.f32 %v564, %v564
  %v573 = vmul.f32 %v565, %v565
  %v574 = vmul.f32 %v566, %v566
  %575 = vadd.xlane.f32.xlu0 %v567
  %v576 = vpop.xlane.xlu0 %575
  %577 = vadd.xlane.f32.xlu0 %v568
  %v578 = vpop.xlane.xlu0 %577
  %579 = vadd.xlane.f32.xlu0 %v569
  %v580 = vpop.xlane.xlu0 %579
  %581 = vadd.xlane.f32.xlu0 %v570
  %v582 = vpop.xlane.xlu0 %581
  %583 = vadd.xlane.f32.xlu0 %v571
  %v584 = vpop.xlane.xlu0 %583
  %585 = vadd.xlane.f32.xlu0 %v572
  %v586 = vpop.xlane.xlu0 %585
  %587 = vadd.xlane.f32.xlu0 %v573
  %v588 = vpop.xlane.xlu0 %587
  %589 = vadd.xlane.f32.xlu0 %v574
  %v590 = vpop.xlane.xlu0 %589
  %v591 = vmul.f32 %v576, %v550
  %v592 = vmul.f32 %v578, %v550
  %v593 = vmul.f32 %v580, %v550
  %v594 = vmul.f32 %v582, %v550
  %v595 = vmul.f32 %v584, %v550
  %v596 = vmul.f32 %v586, %v550
  %v597 = vmul.f32 %v588, %v550
  %v598 = vmul.f32 %v590, %v550
  %v599 = vadd.f32 %v591, 1e-05
  %v600 = vadd.f32 %v592, 1e-05
  %v601 = vadd.f32 %v593, 1e-05
  %v602 = vadd.f32 %v594, 1e-05
  %v603 = vadd.f32 %v595, 1e-05
  %v604 = vadd.f32 %v596, 1e-05
  %v605 = vadd.f32 %v597, 1e-05
  %v606 = vadd.f32 %v598, 1e-05
  %v607 = vrsqrt.pop %v599
  %v608 = vrsqrt.pop %v600
  %v609 = vrsqrt.pop %v601
  %v610 = vrsqrt.pop %v602
  %v611 = vrsqrt.pop %v603
  %v612 = vrsqrt.pop %v604
  %v613 = vrsqrt.pop %v605
  %v614 = vrsqrt.pop %v606
  %v615 = vmul.f32 %v559, %v607
  %v616 = vmul.f32 %v560, %v608
  %v617 = vmul.f32 %v561, %v609
  %v618 = vmul.f32 %v562, %v610
  %v619 = vmul.f32 %v563, %v611
  %v620 = vmul.f32 %v564, %v612
  %v621 = vmul.f32 %v565, %v613
  %v622 = vmul.f32 %v566, %v614
  %624 = vset.pattern.permute.xlu0 0
  %625 = vperm.xlu0 %624, %v518
  %v626 = vpop.permute.xlu0 %625
  %629 = vset.pattern.permute.xlu0 0
  %630 = vperm.xlu0 %629, %v519
  %v631 = vpop.permute.xlu0 %630
  %634 = vset.pattern.permute.xlu0 0
  %635 = vperm.xlu0 %634, %v520
  %v636 = vpop.permute.xlu0 %635
  %639 = vset.pattern.permute.xlu0 0
  %640 = vperm.xlu0 %639, %v521
  %v641 = vpop.permute.xlu0 %640
  %644 = vset.pattern.permute.xlu0 0
  %645 = vperm.xlu0 %644, %v522
  %v646 = vpop.permute.xlu0 %645
  %649 = vset.pattern.permute.xlu0 0
  %650 = vperm.xlu0 %649, %v523
  %v651 = vpop.permute.xlu0 %650
  %654 = vset.pattern.permute.xlu0 0
  %655 = vperm.xlu0 %654, %v524
  %v656 = vpop.permute.xlu0 %655
  %659 = vset.pattern.permute.xlu0 0
  %660 = vperm.xlu0 %659, %v525
  %v661 = vpop.permute.xlu0 %660
  %v663 = vmul.f32 %v615, %v626
  %v664 = vmul.f32 %v616, %v631
  %v665 = vmul.f32 %v617, %v636
  %v666 = vmul.f32 %v618, %v641
  %v667 = vmul.f32 %v619, %v646
  %v668 = vmul.f32 %v620, %v651
  %v669 = vmul.f32 %v621, %v656
  %v670 = vmul.f32 %v622, %v661
  %672 = vset.pattern.permute.xlu0 0
  %673 = vperm.xlu0 %672, %v526
  %v674 = vpop.permute.xlu0 %673
  %677 = vset.pattern.permute.xlu0 0
  %678 = vperm.xlu0 %677, %v527
  %v679 = vpop.permute.xlu0 %678
  %682 = vset.pattern.permute.xlu0 0
  %683 = vperm.xlu0 %682, %v528
  %v684 = vpop.permute.xlu0 %683
  %687 = vset.pattern.permute.xlu0 0
  %688 = vperm.xlu0 %687, %v529
  %v689 = vpop.permute.xlu0 %688
  %692 = vset.pattern.permute.xlu0 0
  %693 = vperm.xlu0 %692, %v530
  %v694 = vpop.permute.xlu0 %693
  %697 = vset.pattern.permute.xlu0 0
  %698 = vperm.xlu0 %697, %v531
  %v699 = vpop.permute.xlu0 %698
  %702 = vset.pattern.permute.xlu0 0
  %703 = vperm.xlu0 %702, %v532
  %v704 = vpop.permute.xlu0 %703
  %707 = vset.pattern.permute.xlu0 0
  %708 = vperm.xlu0 %707, %v533
  %v709 = vpop.permute.xlu0 %708
  %v711 = vadd.f32 %v663, %v674
  %v712 = vadd.f32 %v664, %v679
  %v713 = vadd.f32 %v665, %v684
  %v714 = vadd.f32 %v666, %v689
  %v715 = vadd.f32 %v667, %v694
  %v716 = vadd.f32 %v668, %v699
  %v717 = vadd.f32 %v669, %v704
  %v718 = vadd.f32 %v670, %v709
  %v719 = vmax.f32 %v711, 0.0
  %v720 = vmax.f32 %v712, 0.0
  %v721 = vmax.f32 %v713, 0.0
  %v722 = vmax.f32 %v714, 0.0
  %v723 = vmax.f32 %v715, 0.0
  %v724 = vmax.f32 %v716, 0.0
  %v725 = vmax.f32 %v717, 0.0
  %v726 = vmax.f32 %v718, 0.0
  %727 = vst [vmem:[%s4] sm:$0xff] %v719
  %728 = vst [vmem:[%s4 + $0x8] sm:$0xff] %v720
  %729 = vst [vmem:[%s4 + $0x10] sm:$0xff] %v721
  %730 = vst [vmem:[%s4 + $0x18] sm:$0xff] %v722
  %731 = vst [vmem:[%s4 + $0x20] sm:$0xff] %v723
  %732 = vst [vmem:[%s4 + $0x28] sm:$0xff] %v724
  %733 = vst [vmem:[%s4 + $0x30] sm:$0xff] %v725
  %734 = vst [vmem:[%s4 + $0x38] sm:$0xff] %v726
  // Predicated region
  $region18: #{wide_resnet_forward.12} parent=0 // pred_check
    _
  $region19: #{wide_resnet_forward.12} parent=0 // pred_check_branch
    %736 = sbr.rel (0) target = $region21
  $region20: #{wide_resnet_forward.12} parent=0 // pred_region
    _
  $region21: #{wide_resnet_forward.12} parent=0 // pred_fallthru
    _
  // Predicated region
  $region22: #{wide_resnet_forward.12} parent=0 // pred_check
    _
  $region23: #{wide_resnet_forward.12} parent=0 // pred_check_branch
    %738 = sbr.rel (0) target = $region25
  $region24: #{wide_resnet_forward.12} parent=0 // pred_region
    _
  $region25: #{wide_resnet_forward.12} parent=0 // pred_fallthru
    _
  // Predicated region
  $region26: #{wide_resnet_forward.12} parent=0 // pred_check
    _
  $region27: #{wide_resnet_forward.12} parent=0 // pred_check_branch
    %740 = sbr.rel (0) target = $region29
  $region28: #{wide_resnet_forward.12} parent=0 // pred_region
    _
  $region29: #{wide_resnet_forward.12} parent=0 // pred_fallthru
    _
  // Predicated region
  $region30: #{wide_resnet_forward.12} parent=0 // pred_check
    _
  $region31: #{wide_resnet_forward.12} parent=0 // pred_check_branch
    %742 = sbr.rel (0) target = $region33
  $region32: #{wide_resnet_forward.12} parent=0 // pred_region
    _
  $region33: #{wide_resnet_forward.12} parent=0 // pred_fallthru
    _

// kernel: wide_resnet_forward.13
$region0: #{wide_resnet_forward.13}
  #allocation0 [shape = 'u32[]', space=smem, size = 0x4, offset = 0x4, fixed_abs, tag = 'smem constant byte address 0x4 - core index']
  #allocation1 [shape = 'u32[144,128]{1,0:T(1,128)}', space=vmem, size = 0x12000, scoped, tag = 'internal scratch']
  %s0 = inlined_call_operand.vmem [shape: bf16[64,576], index: 0, kind: input, shape index: {}]
  %s1 = inlined_call_operand.vmem [shape: bf16[576,128], index: 1, kind: input, shape index: {}]
  %s2 = inlined_call_operand.vmem [shape: f32[64,128], index: 2, kind: input, shape index: {}]
  %s3 = inlined_call_operand.vmem [shape: f32[64,1], index: 3, kind: input, shape index: {}]
  %s4 = inlined_call_operand.vmem [shape: f32[64,1], index: 4, kind: input, shape index: {}]
  %s5 = inlined_call_operand.vmem [shape: f32[128,2], index: 5, kind: input, shape index: {}]
  %s6 = inlined_call_operand.vmem [shape: f32[10,64], index: 6, kind: input, shape index: {}]
  %s7 = inlined_call_operand.vmem [shape: f32[10,1], index: 7, kind: input, shape index: {}]
  %s8 = inlined_call_operand.vmem [shape: f32[10,2], index: 8, kind: output, shape index: {}]
  %s9 = sld [smem:[#allocation0]]
  $region42: #{wide_resnet_forward.13} parent=0
    _
  %s11 = ssub.s32 1, %s9
  %s12 = scalar_select 0, %s11, %s9
  // Predicated region
  $region2: #{wide_resnet_forward.13} parent=0 // pred_check
    _
  $region3: #{wide_resnet_forward.13} parent=0 // pred_check_branch
    %14 = sbr.rel (0) target = $region5
  $region4: #{wide_resnet_forward.13} parent=0 // pred_region
    _
  $region5: #{wide_resnet_forward.13} parent=0 // pred_fallthru
    _
  // Predicated region
  $region6: #{wide_resnet_forward.13} parent=0 // pred_check
    _
  $region7: #{wide_resnet_forward.13} parent=0 // pred_check_branch
    %16 = sbr.rel (0) target = $region9
  $region8: #{wide_resnet_forward.13} parent=0 // pred_region
    _
  $region9: #{wide_resnet_forward.13} parent=0 // pred_fallthru
    _
  // Predicated region
  $region10: #{wide_resnet_forward.13} parent=0 // pred_check
    _
  $region11: #{wide_resnet_forward.13} parent=0 // pred_check_branch
    %18 = sbr.rel (0) target = $region13
  $region12: #{wide_resnet_forward.13} parent=0 // pred_region
    _
  $region13: #{wide_resnet_forward.13} parent=0 // pred_fallthru
    _
  // Predicated region
  $region14: #{wide_resnet_forward.13} parent=0 // pred_check
    _
  $region15: #{wide_resnet_forward.13} parent=0 // pred_check_branch
    %20 = sbr.rel (0) target = $region17
  $region16: #{wide_resnet_forward.13} parent=0 // pred_region
    _
  $region17: #{wide_resnet_forward.13} parent=0 // pred_fallthru
    _
  // Predicated region
  $region18: #{wide_resnet_forward.13} parent=0 // pred_check
    _
  $region19: #{wide_resnet_forward.13} parent=0 // pred_check_branch
    %22 = sbr.rel (0) target = $region21
  $region20: #{wide_resnet_forward.13} parent=0 // pred_region
    _
  $region21: #{wide_resnet_forward.13} parent=0 // pred_fallthru
    _
  // Predicated region
  $region22: #{wide_resnet_forward.13} parent=0 // pred_check
    _
  $region23: #{wide_resnet_forward.13} parent=0 // pred_check_branch
    %24 = sbr.rel (0) target = $region25
  $region24: #{wide_resnet_forward.13} parent=0 // pred_region
    _
  $region25: #{wide_resnet_forward.13} parent=0 // pred_fallthru
    _
  // Predicated region
  $region26: #{wide_resnet_forward.13} parent=0 // pred_check
    _
  $region27: #{wide_resnet_forward.13} parent=0 // pred_check_branch
    %26 = sbr.rel (0) target = $region29
  $region28: #{wide_resnet_forward.13} parent=0 // pred_region
    _
  $region29: #{wide_resnet_forward.13} parent=0 // pred_fallthru
    _
  // Predicated region
  $region30: #{wide_resnet_forward.13} parent=0 // pred_check
    _
  $region31: #{wide_resnet_forward.13} parent=0 // pred_check_branch
    %28 = sbr.rel (0) target = $region33
  $region32: #{wide_resnet_forward.13} parent=0 // pred_region
    _
  $region33: #{wide_resnet_forward.13} parent=0 // pred_fallthru
    _
  %v29 = vld [vmem:[%s2] sm:$0xff]
  %v30 = vld [vmem:[%s2 + $0x8] sm:$0xff]
  %v31 = vld [vmem:[%s2 + $0x10] sm:$0xff]
  %v32 = vld [vmem:[%s2 + $0x18] sm:$0xff]
  %v33 = vld [vmem:[%s2 + $0x20] sm:$0xff]
  %v34 = vld [vmem:[%s2 + $0x28] sm:$0xff]
  %v35 = vld [vmem:[%s2 + $0x30] sm:$0xff]
  %v36 = vld [vmem:[%s2 + $0x38] sm:$0xff]
  %v37 = vld [vmem:[%s0] sm:$0xff]
  %v38 = vld [vmem:[%s0 + $0x8] sm:$0xff]
  %v39 = vld [vmem:[%s0 + $0x10] sm:$0xf]
  %v40 = vld [vmem:[%s0 + $0x14] sm:$0xff]
  %v41 = vld [vmem:[%s0 + $0x1c] sm:$0xff]
  %v42 = vld [vmem:[%s0 + $0x24] sm:$0xf]
  %v43 = vld [vmem:[%s0 + $0x28] sm:$0xff]
  %v44 = vld [vmem:[%s0 + $0x30] sm:$0xff]
  %v45 = vld [vmem:[%s0 + $0x38] sm:$0xf]
  %v46 = vld [vmem:[%s0 + $0x3c] sm:$0xff]
  %v47 = vld [vmem:[%s0 + $0x44] sm:$0xff]
  %v48 = vld [vmem:[%s0 + $0x4c] sm:$0xf]
  %v49 = vld [vmem:[%s0 + $0x50] sm:$0xff]
  %v50 = vld [vmem:[%s0 + $0x58] sm:$0xff]
  %v51 = vld [vmem:[%s0 + $0x60] sm:$0xf]
  %v52 = vld [vmem:[%s0 + $0x64] sm:$0xff]
  %v53 = vld [vmem:[%s0 + $0x6c] sm:$0xff]
  %v54 = vld [vmem:[%s0 + $0x74] sm:$0xf]
  %v55 = vld [vmem:[%s0 + $0x78] sm:$0xff]
  %v56 = vld [vmem:[%s0 + $0x80] sm:$0xff]
  %v57 = vld [vmem:[%s0 + $0x88] sm:$0xf]
  %v58 = vld [vmem:[%s0 + $0x8c] sm:$0xff]
  %v59 = vld [vmem:[%s0 + $0x94] sm:$0xff]
  %v60 = vld [vmem:[%s0 + $0x9c] sm:$0xf]
  %v61 = vunpack.c.l.bf16 %v37
  %v62 = vunpack.c.h.bf16 %v37
  %v63 = vunpack.c.l.bf16 %v38
  %v64 = vunpack.c.h.bf16 %v38
  %v65 = vunpack.c.l.bf16 %v39
  %v66 = vunpack.c.l.bf16 %v40
  %v67 = vunpack.c.h.bf16 %v40
  %v68 = vunpack.c.l.bf16 %v41
  %v69 = vunpack.c.h.bf16 %v41
  %v70 = vunpack.c.l.bf16 %v42
  %v71 = vunpack.c.l.bf16 %v43
  %v72 = vunpack.c.h.bf16 %v43
  %v73 = vunpack.c.l.bf16 %v44
  %v74 = vunpack.c.h.bf16 %v44
  %v75 = vunpack.c.l.bf16 %v45
  %v76 = vunpack.c.l.bf16 %v46
  %v77 = vunpack.c.h.bf16 %v46
  %v78 = vunpack.c.l.bf16 %v47
  %v79 = vunpack.c.h.bf16 %v47
  %v80 = vunpack.c.l.bf16 %v48
  %v81 = vunpack.c.l.bf16 %v49
  %v82 = vunpack.c.h.bf16 %v49
  %v83 = vunpack.c.l.bf16 %v50
  %v84 = vunpack.c.h.bf16 %v50
  %v85 = vunpack.c.l.bf16 %v51
  %v86 = vunpack.c.l.bf16 %v52
  %v87 = vunpack.c.h.bf16 %v52
  %v88 = vunpack.c.l.bf16 %v53
  %v89 = vunpack.c.h.bf16 %v53
  %v90 = vunpack.c.l.bf16 %v54
  %v91 = vunpack.c.l.bf16 %v55
  %v92 = vunpack.c.h.bf16 %v55
  %v93 = vunpack.c.l.bf16 %v56
  %v94 = vunpack.c.h.bf16 %v56
  %v95 = vunpack.c.l.bf16 %v57
  %v96 = vunpack.c.l.bf16 %v58
  %v97 = vunpack.c.h.bf16 %v58
  %v98 = vunpack.c.l.bf16 %v59
  %v99 = vunpack.c.h.bf16 %v59
  %v100 = vunpack.c.l.bf16 %v60
  %v101 = vld [vmem:[%s1] sm:$0xf]
  %v102 = vld [vmem:[%s1 + $0x4] sm:$0xf]
  %v103 = vld [vmem:[%s1 + $0x8] sm:$0xf]
  %v104 = vld [vmem:[%s1 + $0xc] sm:$0xf]
  %v105 = vld [vmem:[%s1 + $0x10] sm:$0xf]
  %v106 = vld [vmem:[%s1 + $0x14] sm:$0xf]
  %v107 = vld [vmem:[%s1 + $0x18] sm:$0xf]
  %v108 = vld [vmem:[%s1 + $0x1c] sm:$0xf]
  %v109 = vld [vmem:[%s1 + $0x20] sm:$0xf]
  %v110 = vld [vmem:[%s1 + $0x24] sm:$0xf]
  %v111 = vld [vmem:[%s1 + $0x28] sm:$0xf]
  %v112 = vld [vmem:[%s1 + $0x2c] sm:$0xf]
  %v113 = vld [vmem:[%s1 + $0x30] sm:$0xf]
  %v114 = vld [vmem:[%s1 + $0x34] sm:$0xf]
  %v115 = vld [vmem:[%s1 + $0x38] sm:$0xf]
  %v116 = vld [vmem:[%s1 + $0x3c] sm:$0xf]
  %v117 = vld [vmem:[%s1 + $0x40] sm:$0xf]
  %v118 = vld [vmem:[%s1 + $0x44] sm:$0xf]
  %v119 = vld [vmem:[%s1 + $0x48] sm:$0xf]
  %v120 = vld [vmem:[%s1 + $0x4c] sm:$0xf]
  %v121 = vld [vmem:[%s1 + $0x50] sm:$0xf]
  %v122 = vld [vmem:[%s1 + $0x54] sm:$0xf]
  %v123 = vld [vmem:[%s1 + $0x58] sm:$0xf]
  %v124 = vld [vmem:[%s1 + $0x5c] sm:$0xf]
  %v125 = vld [vmem:[%s1 + $0x60] sm:$0xf]
  %v126 = vld [vmem:[%s1 + $0x64] sm:$0xf]
  %v127 = vld [vmem:[%s1 + $0x68] sm:$0xf]
  %v128 = vld [vmem:[%s1 + $0x6c] sm:$0xf]
  %v129 = vld [vmem:[%s1 + $0x70] sm:$0xf]
  %v130 = vld [vmem:[%s1 + $0x74] sm:$0xf]
  %v131 = vld [vmem:[%s1 + $0x78] sm:$0xf]
  %v132 = vld [vmem:[%s1 + $0x7c] sm:$0xf]
  %v133 = vld [vmem:[%s1 + $0x80] sm:$0xf]
  %v134 = vld [vmem:[%s1 + $0x84] sm:$0xf]
  %v135 = vld [vmem:[%s1 + $0x88] sm:$0xf]
  %v136 = vld [vmem:[%s1 + $0x8c] sm:$0xf]
  %v137 = vld [vmem:[%s1 + $0x90] sm:$0xf]
  %v138 = vld [vmem:[%s1 + $0x94] sm:$0xf]
  %v139 = vld [vmem:[%s1 + $0x98] sm:$0xf]
  %v140 = vld [vmem:[%s1 + $0x9c] sm:$0xf]
  %v141 = vld [vmem:[%s1 + $0xa0] sm:$0xf]
  %v142 = vld [vmem:[%s1 + $0xa4] sm:$0xf]
  %v143 = vld [vmem:[%s1 + $0xa8] sm:$0xf]
  %v144 = vld [vmem:[%s1 + $0xac] sm:$0xf]
  %v145 = vld [vmem:[%s1 + $0xb0] sm:$0xf]
  %v146 = vld [vmem:[%s1 + $0xb4] sm:$0xf]
  %v147 = vld [vmem:[%s1 + $0xb8] sm:$0xf]
  %v148 = vld [vmem:[%s1 + $0xbc] sm:$0xf]
  %v149 = vld [vmem:[%s1 + $0xc0] sm:$0xf]
  %v150 = vld [vmem:[%s1 + $0xc4] sm:$0xf]
  %v151 = vld [vmem:[%s1 + $0xc8] sm:$0xf]
  %v152 = vld [vmem:[%s1 + $0xcc] sm:$0xf]
  %v153 = vld [vmem:[%s1 + $0xd0] sm:$0xf]
  %v154 = vld [vmem:[%s1 + $0xd4] sm:$0xf]
  %v155 = vld [vmem:[%s1 + $0xd8] sm:$0xf]
  %v156 = vld [vmem:[%s1 + $0xdc] sm:$0xf]
  %v157 = vld [vmem:[%s1 + $0xe0] sm:$0xf]
  %v158 = vld [vmem:[%s1 + $0xe4] sm:$0xf]
  %v159 = vld [vmem:[%s1 + $0xe8] sm:$0xf]
  %v160 = vld [vmem:[%s1 + $0xec] sm:$0xf]
  %v161 = vld [vmem:[%s1 + $0xf0] sm:$0xf]
  %v162 = vld [vmem:[%s1 + $0xf4] sm:$0xf]
  %v163 = vld [vmem:[%s1 + $0xf8] sm:$0xf]
  %v164 = vld [vmem:[%s1 + $0xfc] sm:$0xf]
  %v165 = vld [vmem:[%s1 + $0x100] sm:$0xf]
  %v166 = vld [vmem:[%s1 + $0x104] sm:$0xf]
  %v167 = vld [vmem:[%s1 + $0x108] sm:$0xf]
  %v168 = vld [vmem:[%s1 + $0x10c] sm:$0xf]
  %v169 = vld [vmem:[%s1 + $0x110] sm:$0xf]
  %v170 = vld [vmem:[%s1 + $0x114] sm:$0xf]
  %v171 = vld [vmem:[%s1 + $0x118] sm:$0xf]
  %v172 = vld [vmem:[%s1 + $0x11c] sm:$0xf]
  %v173 = vunpack.c.l.bf16 %v101
  %v174 = vunpack.c.l.bf16 %v102
  %v175 = vunpack.c.l.bf16 %v103
  %v176 = vunpack.c.l.bf16 %v104
  %v177 = vunpack.c.l.bf16 %v105
  %v178 = vunpack.c.l.bf16 %v106
  %v179 = vunpack.c.l.bf16 %v107
  %v180 = vunpack.c.l.bf16 %v108
  %v181 = vunpack.c.l.bf16 %v109
  %v182 = vunpack.c.l.bf16 %v110
  %v183 = vunpack.c.l.bf16 %v111
  %v184 = vunpack.c.l.bf16 %v112
  %v185 = vunpack.c.l.bf16 %v113
  %v186 = vunpack.c.l.bf16 %v114
  %v187 = vunpack.c.l.bf16 %v115
  %v188 = vunpack.c.l.bf16 %v116
  %v189 = vunpack.c.l.bf16 %v117
  %v190 = vunpack.c.l.bf16 %v118
  %v191 = vunpack.c.l.bf16 %v119
  %v192 = vunpack.c.l.bf16 %v120
  %v193 = vunpack.c.l.bf16 %v121
  %v194 = vunpack.c.l.bf16 %v122
  %v195 = vunpack.c.l.bf16 %v123
  %v196 = vunpack.c.l.bf16 %v124
  %v197 = vunpack.c.l.bf16 %v125
  %v198 = vunpack.c.l.bf16 %v126
  %v199 = vunpack.c.l.bf16 %v127
  %v200 = vunpack.c.l.bf16 %v128
  %v201 = vunpack.c.l.bf16 %v129
  %v202 = vunpack.c.l.bf16 %v130
  %v203 = vunpack.c.l.bf16 %v131
  %v204 = vunpack.c.l.bf16 %v132
  %v205 = vunpack.c.l.bf16 %v133
  %v206 = vunpack.c.l.bf16 %v134
  %v207 = vunpack.c.l.bf16 %v135
  %v208 = vunpack.c.l.bf16 %v136
  %v209 = vunpack.c.l.bf16 %v137
  %v210 = vunpack.c.l.bf16 %v138
  %v211 = vunpack.c.l.bf16 %v139
  %v212 = vunpack.c.l.bf16 %v140
  %v213 = vunpack.c.l.bf16 %v141
  %v214 = vunpack.c.l.bf16 %v142
  %v215 = vunpack.c.l.bf16 %v143
  %v216 = vunpack.c.l.bf16 %v144
  %v217 = vunpack.c.l.bf16 %v145
  %v218 = vunpack.c.l.bf16 %v146
  %v219 = vunpack.c.l.bf16 %v147
  %v220 = vunpack.c.l.bf16 %v148
  %v221 = vunpack.c.l.bf16 %v149
  %v222 = vunpack.c.l.bf16 %v150
  %v223 = vunpack.c.l.bf16 %v151
  %v224 = vunpack.c.l.bf16 %v152
  %v225 = vunpack.c.l.bf16 %v153
  %v226 = vunpack.c.l.bf16 %v154
  %v227 = vunpack.c.l.bf16 %v155
  %v228 = vunpack.c.l.bf16 %v156
  %v229 = vunpack.c.l.bf16 %v157
  %v230 = vunpack.c.l.bf16 %v158
  %v231 = vunpack.c.l.bf16 %v159
  %v232 = vunpack.c.l.bf16 %v160
  %v233 = vunpack.c.l.bf16 %v161
  %v234 = vunpack.c.l.bf16 %v162
  %v235 = vunpack.c.l.bf16 %v163
  %v236 = vunpack.c.l.bf16 %v164
  %v237 = vunpack.c.l.bf16 %v165
  %v238 = vunpack.c.l.bf16 %v166
  %v239 = vunpack.c.l.bf16 %v167
  %v240 = vunpack.c.l.bf16 %v168
  %v241 = vunpack.c.l.bf16 %v169
  %v242 = vunpack.c.l.bf16 %v170
  %v243 = vunpack.c.l.bf16 %v171
  %v244 = vunpack.c.l.bf16 %v172
  %vm245 = vcmask 523264
  %v247 = vsel %vm245, %v65, 0
  %v250 = vsel %vm245, %v70, 0
  %v253 = vsel %vm245, %v75, 0
  %v256 = vsel %vm245, %v80, 0
  %v259 = vsel %vm245, %v85, 0
  %v262 = vsel %vm245, %v90, 0
  %v265 = vsel %vm245, %v95, 0
  %v268 = vsel %vm245, %v100, 0
  %270 = vmatprep.subr.mxu0 0.0
  %271 = vmatpush1.msra.mxu0 %v173
  %272 = vmatprep.subr.mxu0 0.0
  %273 = vmatpush1.msra.mxu0 %v174
  %274 = vmatprep.subr.mxu0 0.0
  %275 = vmatpush1.msra.mxu0 %v175
  %276 = vmatprep.subr.mxu0 0.0
  %277 = vmatpush1.msra.mxu0 %v176
  %278 = vmatprep.subr.mxu0 0.0
  %279 = vmatpush1.msra.mxu0 %v177
  %280 = vmatprep.subr.mxu0 0.0
  %281 = vmatpush1.msra.mxu0 %v178
  %282 = vmatprep.subr.mxu0 0.0
  %283 = vmatpush1.msra.mxu0 %v179
  %284 = vmatprep.subr.mxu0 0.0
  %285 = vmatpush1.msra.mxu0 %v180
  %286 = vmatprep.subr.mxu0 0.0
  %287 = vmatpush1.msra.mxu0 %v181
  %288 = vmatprep.subr.mxu0 0.0
  %289 = vmatpush1.msra.mxu0 %v182
  %290 = vmatprep.subr.mxu0 0.0
  %291 = vmatpush1.msra.mxu0 %v183
  %292 = vmatprep.subr.mxu0 0.0
  %293 = vmatpush1.msra.mxu0 %v184
  %294 = vmatprep.subr.mxu0 0.0
  %295 = vmatpush1.msra.mxu0 %v185
  %296 = vmatprep.subr.mxu0 0.0
  %297 = vmatpush1.msra.mxu0 %v186
  %298 = vmatprep.subr.mxu0 0.0
  %299 = vmatpush1.msra.mxu0 %v187
  %300 = vmatprep.subr.mxu0 0.0
  %301 = vmatpush1.msra.mxu0 %v188
  %302 = vmatprep.subr.mxu0 0.0
  %303 = vmatpush1.msra.mxu0 %v189
  %304 = vmatprep.subr.mxu0 0.0
  %305 = vmatpush1.msra.mxu0 %v190
  %306 = vmatprep.subr.mxu0 0.0
  %307 = vmatpush1.msra.mxu0 %v191
  %308 = vmatprep.subr.mxu0 0.0
  %309 = vmatpush1.msra.mxu0 %v192
  %310 = vmatprep.subr.mxu0 0.0
  %311 = vmatpush1.msra.mxu0 %v193
  %312 = vmatprep.subr.mxu0 0.0
  %313 = vmatpush1.msra.mxu0 %v194
  %314 = vmatprep.subr.mxu0 0.0
  %315 = vmatpush1.msra.mxu0 %v195
  %316 = vmatprep.subr.mxu0 0.0
  %317 = vmatpush1.msra.mxu0 %v196
  %318 = vmatprep.subr.mxu0 0.0
  %319 = vmatpush1.msra.mxu0 %v197
  %320 = vmatprep.subr.mxu0 0.0
  %321 = vmatpush1.msra.mxu0 %v198
  %322 = vmatprep.subr.mxu0 0.0
  %323 = vmatpush1.msra.mxu0 %v199
  %324 = vmatprep.subr.mxu0 0.0
  %325 = vmatpush1.msra.mxu0 %v200
  %326 = vmatprep.subr.mxu0 0.0
  %327 = vmatpush1.msra.mxu0 %v201
  %328 = vmatprep.subr.mxu0 0.0
  %329 = vmatpush1.msra.mxu0 %v202
  %330 = vmatprep.subr.mxu0 0.0
  %331 = vmatpush1.msra.mxu0 %v203
  %332 = vmatprep.subr.mxu0 0.0
  %333 = vmatpush1.msra.mxu0 %v204
  %334 = vmatprep.mubr.f32.mxu0 %v62
  %335 = vmatmul.mubr.f32.gmra.mrb[0].mxu0 %v61
  %v336 = vpop.f32.mrb[0].mxu0
  %v337 = vadd.f32 0.0, %v336
  %v338 = vpop.f32.mrb[0].mxu0
  %339 = vmatprep.mubr.f32.mxu0 %v67
  %340 = vmatmul.mubr.f32.gmra.mrb[0].mxu0 %v66
  %v341 = vpop.f32.mrb[0].mxu0
  %v342 = vadd.f32 0.0, %v341
  %v343 = vpop.f32.mrb[0].mxu0
  %344 = vmatprep.mubr.f32.mxu0 %v72
  %345 = vmatmul.mubr.f32.gmra.mrb[0].mxu0 %v71
  %v346 = vpop.f32.mrb[0].mxu0
  %v347 = vadd.f32 0.0, %v346
  %v348 = vpop.f32.mrb[0].mxu0
  %349 = vmatprep.mubr.f32.mxu0 %v77
  %350 = vmatmul.mubr.f32.gmra.mrb[0].mxu0 %v76
  %v351 = vpop.f32.mrb[0].mxu0
  %v352 = vadd.f32 0.0, %v351
  %v353 = vpop.f32.mrb[0].mxu0
  %354 = vmatprep.mubr.f32.mxu0 %v82
  %355 = vmatmul.mubr.f32.gmra.mrb[0].mxu0 %v81
  %v356 = vpop.f32.mrb[0].mxu0
  %v357 = vadd.f32 0.0, %v356
  %v358 = vpop.f32.mrb[0].mxu0
  %359 = vmatprep.mubr.f32.mxu0 %v87
  %360 = vmatmul.mubr.f32.gmra.mrb[0].mxu0 %v86
  %v361 = vpop.f32.mrb[0].mxu0
  %v362 = vadd.f32 0.0, %v361
  %v363 = vpop.f32.mrb[0].mxu0
  %364 = vmatprep.mubr.f32.mxu0 %v92
  %365 = vmatmul.mubr.f32.gmra.mrb[0].mxu0 %v91
  %v366 = vpop.f32.mrb[0].mxu0
  %v367 = vadd.f32 0.0, %v366
  %v368 = vpop.f32.mrb[0].mxu0
  %369 = vmatprep.mubr.f32.mxu0 %v97
  %370 = vmatmul.mubr.f32.gmra.mrb[0].mxu0 %v96
  %v371 = vpop.f32.mrb[0].mxu0
  %v372 = vadd.f32 0.0, %v371
  %v373 = vpop.f32.mrb[0].mxu0
  %374 = vdwg.mxu0
  %375 = vmatprep.subr.mxu0 0.0
  %376 = vmatpush1.msra.mxu0 %v205
  %377 = vmatprep.subr.mxu0 0.0
  %378 = vmatpush1.msra.mxu0 %v206
  %379 = vmatprep.subr.mxu0 0.0
  %380 = vmatpush1.msra.mxu0 %v207
  %381 = vmatprep.subr.mxu0 0.0
  %382 = vmatpush1.msra.mxu0 %v208
  %383 = vmatprep.subr.mxu0 0.0
  %384 = vmatpush1.msra.mxu0 %v209
  %385 = vmatprep.subr.mxu0 0.0
  %386 = vmatpush1.msra.mxu0 %v210
  %387 = vmatprep.subr.mxu0 0.0
  %388 = vmatpush1.msra.mxu0 %v211
  %389 = vmatprep.subr.mxu0 0.0
  %390 = vmatpush1.msra.mxu0 %v212
  %391 = vmatprep.subr.mxu0 0.0
  %392 = vmatpush1.msra.mxu0 %v213
  %393 = vmatprep.subr.mxu0 0.0
  %394 = vmatpush1.msra.mxu0 %v214
  %395 = vmatprep.subr.mxu0 0.0
  %396 = vmatpush1.msra.mxu0 %v215
  %397 = vmatprep.subr.mxu0 0.0
  %398 = vmatpush1.msra.mxu0 %v216
  %399 = vmatprep.subr.mxu0 0.0
  %400 = vmatpush1.msra.mxu0 %v217
  %401 = vmatprep.subr.mxu0 0.0
  %402 = vmatpush1.msra.mxu0 %v218
  %403 = vmatprep.subr.mxu0 0.0
  %404 = vmatpush1.msra.mxu0 %v219
  %405 = vmatprep.subr.mxu0 0.0
  %406 = vmatpush1.msra.mxu0 %v220
  %407 = vmatprep.subr.mxu0 0.0
  %408 = vmatpush1.msra.mxu0 %v221
  %409 = vmatprep.subr.mxu0 0.0
  %410 = vmatpush1.msra.mxu0 %v222
  %411 = vmatprep.subr.mxu0 0.0
  %412 = vmatpush1.msra.mxu0 %v223
  %413 = vmatprep.subr.mxu0 0.0
  %414 = vmatpush1.msra.mxu0 %v224
  %415 = vmatprep.subr.mxu0 0.0
  %416 = vmatpush1.msra.mxu0 %v225
  %417 = vmatprep.subr.mxu0 0.0
  %418 = vmatpush1.msra.mxu0 %v226
  %419 = vmatprep.subr.mxu0 0.0
  %420 = vmatpush1.msra.mxu0 %v227
  %421 = vmatprep.subr.mxu0 0.0
  %422 = vmatpush1.msra.mxu0 %v228
  %423 = vmatprep.subr.mxu0 0.0
  %424 = vmatpush1.msra.mxu0 %v229
  %425 = vmatprep.subr.mxu0 0.0
  %426 = vmatpush1.msra.mxu0 %v230
  %427 = vmatprep.subr.mxu0 0.0
  %428 = vmatpush1.msra.mxu0 %v231
  %429 = vmatprep.subr.mxu0 0.0
  %430 = vmatpush1.msra.mxu0 %v232
  %431 = vmatprep.subr.mxu0 0.0
  %432 = vmatpush1.msra.mxu0 %v233
  %433 = vmatprep.subr.mxu0 0.0
  %434 = vmatpush1.msra.mxu0 %v234
  %435 = vmatprep.subr.mxu0 0.0
  %436 = vmatpush1.msra.mxu0 %v235
  %437 = vmatprep.subr.mxu0 0.0
  %438 = vmatpush1.msra.mxu0 %v236
  %439 = vmatprep.mubr.f32.mxu0 %v64
  %440 = vmatmul.mubr.f32.gmra.mrb[0].mxu0 %v63
  %v441 = vpop.f32.mrb[0].mxu0
  %v442 = vadd.f32 %v337, %v441
  %v443 = vpop.f32.mrb[0].mxu0
  %444 = vmatprep.mubr.f32.mxu0 %v69
  %445 = vmatmul.mubr.f32.gmra.mrb[0].mxu0 %v68
  %v446 = vpop.f32.mrb[0].mxu0
  %v447 = vadd.f32 %v342, %v446
  %v448 = vpop.f32.mrb[0].mxu0
  %449 = vmatprep.mubr.f32.mxu0 %v74
  %450 = vmatmul.mubr.f32.gmra.mrb[0].mxu0 %v73
  %v451 = vpop.f32.mrb[0].mxu0
  %v452 = vadd.f32 %v347, %v451
  %v453 = vpop.f32.mrb[0].mxu0
  %454 = vmatprep.mubr.f32.mxu0 %v79
  %455 = vmatmul.mubr.f32.gmra.mrb[0].mxu0 %v78
  %v456 = vpop.f32.mrb[0].mxu0
  %v457 = vadd.f32 %v352, %v456
  %v458 = vpop.f32.mrb[0].mxu0
  %459 = vmatprep.mubr.f32.mxu0 %v84
  %460 = vmatmul.mubr.f32.gmra.mrb[0].mxu0 %v83
  %v461 = vpop.f32.mrb[0].mxu0
  %v462 = vadd.f32 %v357, %v461
  %v463 = vpop.f32.mrb[0].mxu0
  %464 = vmatprep.mubr.f32.mxu0 %v89
  %465 = vmatmul.mubr.f32.gmra.mrb[0].mxu0 %v88
  %v466 = vpop.f32.mrb[0].mxu0
  %v467 = vadd.f32 %v362, %v466
  %v468 = vpop.f32.mrb[0].mxu0
  %469 = vmatprep.mubr.f32.mxu0 %v94
  %470 = vmatmul.mubr.f32.gmra.mrb[0].mxu0 %v93
  %v471 = vpop.f32.mrb[0].mxu0
  %v472 = vadd.f32 %v367, %v471
  %v473 = vpop.f32.mrb[0].mxu0
  %474 = vmatprep.mubr.f32.mxu0 %v99
  %475 = vmatmul.mubr.f32.gmra.mrb[0].mxu0 %v98
  %v476 = vpop.f32.mrb[0].mxu0
  %v477 = vadd.f32 %v372, %v476
  %v478 = vpop.f32.mrb[0].mxu0
  %479 = vdwg.mxu0
  %480 = vmatprep.subr.mxu0 0.0
  %481 = vmatpush1.msra.mxu0 %v237
  %482 = vmatprep.subr.mxu0 0.0
  %483 = vmatpush1.msra.mxu0 %v238
  %484 = vmatprep.subr.mxu0 0.0
  %485 = vmatpush1.msra.mxu0 %v239
  %486 = vmatprep.subr.mxu0 0.0
  %487 = vmatpush1.msra.mxu0 %v240
  %488 = vmatprep.subr.mxu0 0.0
  %489 = vmatpush1.msra.mxu0 %v241
  %490 = vmatprep.subr.mxu0 0.0
  %491 = vmatpush1.msra.mxu0 %v242
  %492 = vmatprep.subr.mxu0 0.0
  %493 = vmatpush1.msra.mxu0 %v243
  %494 = vmatprep.subr.mxu0 0.0
  %495 = vmatpush1.msra.mxu0 %v244
  %496 = vmatprep.subr.mxu0 0.0
  %497 = vmatpush1.msra.mxu0 0.0
  %498 = vmatprep.subr.mxu0 0.0
  %499 = vmatpush1.msra.mxu0 0.0
  %500 = vmatprep.subr.mxu0 0.0
  %501 = vmatpush1.msra.mxu0 0.0
  %502 = vmatprep.subr.mxu0 0.0
  %503 = vmatpush1.msra.mxu0 0.0
  %504 = vmatprep.subr.mxu0 0.0
  %505 = vmatpush1.msra.mxu0 0.0
  %506 = vmatprep.subr.mxu0 0.0
  %507 = vmatpush1.msra.mxu0 0.0
  %508 = vmatprep.subr.mxu0 0.0
  %509 = vmatpush1.msra.mxu0 0.0
  %510 = vmatprep.subr.mxu0 0.0
  %511 = vmatpush1.msra.mxu0 0.0
  %512 = vmatprep.subr.mxu0 0.0
  %513 = vmatpush1.msra.mxu0 0.0
  %514 = vmatprep.subr.mxu0 0.0
  %515 = vmatpush1.msra.mxu0 0.0
  %516 = vmatprep.subr.mxu0 0.0
  %517 = vmatpush1.msra.mxu0 0.0
  %518 = vmatprep.subr.mxu0 0.0
  %519 = vmatpush1.msra.mxu0 0.0
  %520 = vmatprep.subr.mxu0 0.0
  %521 = vmatpush1.msra.mxu0 0.0
  %522 = vmatprep.subr.mxu0 0.0
  %523 = vmatpush1.msra.mxu0 0.0
  %524 = vmatprep.subr.mxu0 0.0
  %525 = vmatpush1.msra.mxu0 0.0
  %526 = vmatprep.subr.mxu0 0.0
  %527 = vmatpush1.msra.mxu0 0.0
  %528 = vmatprep.subr.mxu0 0.0
  %529 = vmatpush1.msra.mxu0 0.0
  %530 = vmatprep.subr.mxu0 0.0
  %531 = vmatpush1.msra.mxu0 0.0
  %532 = vmatprep.subr.mxu0 0.0
  %533 = vmatpush1.msra.mxu0 0.0
  %534 = vmatprep.subr.mxu0 0.0
  %535 = vmatpush1.msra.mxu0 0.0
  %536 = vmatprep.subr.mxu0 0.0
  %537 = vmatpush1.msra.mxu0 0.0
  %538 = vmatprep.subr.mxu0 0.0
  %539 = vmatpush1.msra.mxu0 0.0
  %540 = vmatprep.subr.mxu0 0.0
  %541 = vmatpush1.msra.mxu0 0.0
  %542 = vmatprep.subr.mxu0 0.0
  %543 = vmatpush1.msra.mxu0 0.0
  %544 = vmatprep.mubr.f32.mxu0 0.0
  %545 = vmatmul.mubr.f32.gmra.mrb[0].mxu0 %v247
  %v546 = vpop.f32.mrb[0].mxu0
  %v547 = vadd.f32 %v442, %v546
  %v548 = vpop.f32.mrb[0].mxu0
  %549 = vmatprep.mubr.f32.mxu0 0.0
  %550 = vmatmul.mubr.f32.gmra.mrb[0].mxu0 %v250
  %v551 = vpop.f32.mrb[0].mxu0
  %v552 = vadd.f32 %v447, %v551
  %v553 = vpop.f32.mrb[0].mxu0
  %554 = vmatprep.mubr.f32.mxu0 0.0
  %555 = vmatmul.mubr.f32.gmra.mrb[0].mxu0 %v253
  %v556 = vpop.f32.mrb[0].mxu0
  %v557 = vadd.f32 %v452, %v556
  %v558 = vpop.f32.mrb[0].mxu0
  %559 = vmatprep.mubr.f32.mxu0 0.0
  %560 = vmatmul.mubr.f32.gmra.mrb[0].mxu0 %v256
  %v561 = vpop.f32.mrb[0].mxu0
  %v562 = vadd.f32 %v457, %v561
  %v563 = vpop.f32.mrb[0].mxu0
  %564 = vmatprep.mubr.f32.mxu0 0.0
  %565 = vmatmul.mubr.f32.gmra.mrb[0].mxu0 %v259
  %v566 = vpop.f32.mrb[0].mxu0
  %v567 = vadd.f32 %v462, %v566
  %v568 = vpop.f32.mrb[0].mxu0
  %569 = vmatprep.mubr.f32.mxu0 0.0
  %570 = vmatmul.mubr.f32.gmra.mrb[0].mxu0 %v262
  %v571 = vpop.f32.mrb[0].mxu0
  %v572 = vadd.f32 %v467, %v571
  %v573 = vpop.f32.mrb[0].mxu0
  %574 = vmatprep.mubr.f32.mxu0 0.0
  %575 = vmatmul.mubr.f32.gmra.mrb[0].mxu0 %v265
  %v576 = vpop.f32.mrb[0].mxu0
  %v577 = vadd.f32 %v472, %v576
  %v578 = vpop.f32.mrb[0].mxu0
  %579 = vmatprep.mubr.f32.mxu0 0.0
  %580 = vmatmul.mubr.f32.gmra.mrb[0].mxu0 %v268
  %v581 = vpop.f32.mrb[0].mxu0
  %v582 = vadd.f32 %v477, %v581
  %v583 = vpop.f32.mrb[0].mxu0
  %584 = vdwg.mxu0
  %v585 = vadd.f32 %v29, %v547
  %v586 = vadd.f32 %v30, %v552
  %v587 = vadd.f32 %v31, %v557
  %v588 = vadd.f32 %v32, %v562
  %v589 = vadd.f32 %v33, %v567
  %v590 = vadd.f32 %v34, %v572
  %v591 = vadd.f32 %v35, %v577
  %v592 = vadd.f32 %v36, %v582
  %v593 = vld [vmem:[%s3] sm:$0xff]
  %v594 = vld [vmem:[%s3 + $0x8] sm:$0xff]
  %v595 = vld [vmem:[%s3 + $0x10] sm:$0xff]
  %v596 = vld [vmem:[%s3 + $0x18] sm:$0xff]
  %v597 = vld [vmem:[%s3 + $0x20] sm:$0xff]
  %v598 = vld [vmem:[%s3 + $0x28] sm:$0xff]
  %v599 = vld [vmem:[%s3 + $0x30] sm:$0xff]
  %v600 = vld [vmem:[%s3 + $0x38] sm:$0xff]
  %v601 = vld [vmem:[%s4] sm:$0xff]
  %v602 = vld [vmem:[%s4 + $0x8] sm:$0xff]
  %v603 = vld [vmem:[%s4 + $0x10] sm:$0xff]
  %v604 = vld [vmem:[%s4 + $0x18] sm:$0xff]
  %v605 = vld [vmem:[%s4 + $0x20] sm:$0xff]
  %v606 = vld [vmem:[%s4 + $0x28] sm:$0xff]
  %v607 = vld [vmem:[%s4 + $0x30] sm:$0xff]
  %v608 = vld [vmem:[%s4 + $0x38] sm:$0xff]
  %609 = vadd.xlane.f32.xlu0 %v585
  %v610 = vpop.xlane.xlu0 %609
  %611 = vadd.xlane.f32.xlu0 %v586
  %v612 = vpop.xlane.xlu0 %611
  %613 = vadd.xlane.f32.xlu0 %v587
  %v614 = vpop.xlane.xlu0 %613
  %615 = vadd.xlane.f32.xlu0 %v588
  %v616 = vpop.xlane.xlu0 %615
  %617 = vadd.xlane.f32.xlu0 %v589
  %v618 = vpop.xlane.xlu0 %617
  %619 = vadd.xlane.f32.xlu0 %v590
  %v620 = vpop.xlane.xlu0 %619
  %621 = vadd.xlane.f32.xlu0 %v591
  %v622 = vpop.xlane.xlu0 %621
  %623 = vadd.xlane.f32.xlu0 %v592
  %v624 = vpop.xlane.xlu0 %623
  %v625 = vrcp.pop 128.0
  %v626 = vmul.f32 %v610, %v625
  %v627 = vmul.f32 %v612, %v625
  %v628 = vmul.f32 %v614, %v625
  %v629 = vmul.f32 %v616, %v625
  %v630 = vmul.f32 %v618, %v625
  %v631 = vmul.f32 %v620, %v625
  %v632 = vmul.f32 %v622, %v625
  %v633 = vmul.f32 %v624, %v625
  %v634 = vsub.f32 %v585, %v626
  %v635 = vsub.f32 %v586, %v627
  %v636 = vsub.f32 %v587, %v628
  %v637 = vsub.f32 %v588, %v629
  %v638 = vsub.f32 %v589, %v630
  %v639 = vsub.f32 %v590, %v631
  %v640 = vsub.f32 %v591, %v632
  %v641 = vsub.f32 %v592, %v633
  %v642 = vmul.f32 %v634, %v634
  %v643 = vmul.f32 %v635, %v635
  %v644 = vmul.f32 %v636, %v636
  %v645 = vmul.f32 %v637, %v637
  %v646 = vmul.f32 %v638, %v638
  %v647 = vmul.f32 %v639, %v639
  %v648 = vmul.f32 %v640, %v640
  %v649 = vmul.f32 %v641, %v641
  %650 = vadd.xlane.f32.xlu0 %v642
  %v651 = vpop.xlane.xlu0 %650
  %652 = vadd.xlane.f32.xlu0 %v643
  %v653 = vpop.xlane.xlu0 %652
  %654 = vadd.xlane.f32.xlu0 %v644
  %v655 = vpop.xlane.xlu0 %654
  %656 = vadd.xlane.f32.xlu0 %v645
  %v657 = vpop.xlane.xlu0 %656
  %658 = vadd.xlane.f32.xlu0 %v646
  %v659 = vpop.xlane.xlu0 %658
  %660 = vadd.xlane.f32.xlu0 %v647
  %v661 = vpop.xlane.xlu0 %660
  %662 = vadd.xlane.f32.xlu0 %v648
  %v663 = vpop.xlane.xlu0 %662
  %664 = vadd.xlane.f32.xlu0 %v649
  %v665 = vpop.xlane.xlu0 %664
  %v666 = vmul.f32 %v651, %v625
  %v667 = vmul.f32 %v653, %v625
  %v668 = vmul.f32 %v655, %v625
  %v669 = vmul.f32 %v657, %v625
  %v670 = vmul.f32 %v659, %v625
  %v671 = vmul.f32 %v661, %v625
  %v672 = vmul.f32 %v663, %v625
  %v673 = vmul.f32 %v665, %v625
  %v674 = vadd.f32 %v666, 1e-05
  %v675 = vadd.f32 %v667, 1e-05
  %v676 = vadd.f32 %v668, 1e-05
  %v677 = vadd.f32 %v669, 1e-05
  %v678 = vadd.f32 %v670, 1e-05
  %v679 = vadd.f32 %v671, 1e-05
  %v680 = vadd.f32 %v672, 1e-05
  %v681 = vadd.f32 %v673, 1e-05
  %v682 = vrsqrt.pop %v674
  %v683 = vrsqrt.pop %v675
  %v684 = vrsqrt.pop %v676
  %v685 = vrsqrt.pop %v677
  %v686 = vrsqrt.pop %v678
  %v687 = vrsqrt.pop %v679
  %v688 = vrsqrt.pop %v680
  %v689 = vrsqrt.pop %v681
  %v690 = vmul.f32 %v634, %v682
  %v691 = vmul.f32 %v635, %v683
  %v692 = vmul.f32 %v636, %v684
  %v693 = vmul.f32 %v637, %v685
  %v694 = vmul.f32 %v638, %v686
  %v695 = vmul.f32 %v639, %v687
  %v696 = vmul.f32 %v640, %v688
  %v697 = vmul.f32 %v641, %v689
  %699 = vset.pattern.permute.xlu0 0
  %700 = vperm.xlu0 %699, %v593
  %v701 = vpop.permute.xlu0 %700
  %704 = vset.pattern.permute.xlu0 0
  %705 = vperm.xlu0 %704, %v594
  %v706 = vpop.permute.xlu0 %705
  %709 = vset.pattern.permute.xlu0 0
  %710 = vperm.xlu0 %709, %v595
  %v711 = vpop.permute.xlu0 %710
  %714 = vset.pattern.permute.xlu0 0
  %715 = vperm.xlu0 %714, %v596
  %v716 = vpop.permute.xlu0 %715
  %719 = vset.pattern.permute.xlu0 0
  %720 = vperm.xlu0 %719, %v597
  %v721 = vpop.permute.xlu0 %720
  %724 = vset.pattern.permute.xlu0 0
  %725 = vperm.xlu0 %724, %v598
  %v726 = vpop.permute.xlu0 %725
  %729 = vset.pattern.permute.xlu0 0
  %730 = vperm.xlu0 %729, %v599
  %v731 = vpop.permute.xlu0 %730
  %734 = vset.pattern.permute.xlu0 0
  %735 = vperm.xlu0 %734, %v600
  %v736 = vpop.permute.xlu0 %735
  %v738 = vmul.f32 %v690, %v701
  %v739 = vmul.f32 %v691, %v706
  %v740 = vmul.f32 %v692, %v711
  %v741 = vmul.f32 %v693, %v716
  %v742 = vmul.f32 %v694, %v721
  %v743 = vmul.f32 %v695, %v726
  %v744 = vmul.f32 %v696, %v731
  %v745 = vmul.f32 %v697, %v736
  %747 = vset.pattern.permute.xlu0 0
  %748 = vperm.xlu0 %747, %v601
  %v749 = vpop.permute.xlu0 %748
  %752 = vset.pattern.permute.xlu0 0
  %753 = vperm.xlu0 %752, %v602
  %v754 = vpop.permute.xlu0 %753
  %757 = vset.pattern.permute.xlu0 0
  %758 = vperm.xlu0 %757, %v603
  %v759 = vpop.permute.xlu0 %758
  %762 = vset.pattern.permute.xlu0 0
  %763 = vperm.xlu0 %762, %v604
  %v764 = vpop.permute.xlu0 %763
  %767 = vset.pattern.permute.xlu0 0
  %768 = vperm.xlu0 %767, %v605
  %v769 = vpop.permute.xlu0 %768
  %772 = vset.pattern.permute.xlu0 0
  %773 = vperm.xlu0 %772, %v606
  %v774 = vpop.permute.xlu0 %773
  %777 = vset.pattern.permute.xlu0 0
  %778 = vperm.xlu0 %777, %v607
  %v779 = vpop.permute.xlu0 %778
  %782 = vset.pattern.permute.xlu0 0
  %783 = vperm.xlu0 %782, %v608
  %v784 = vpop.permute.xlu0 %783
  %v786 = vadd.f32 %v738, %v749
  %v787 = vadd.f32 %v739, %v754
  %v788 = vadd.f32 %v740, %v759
  %v789 = vadd.f32 %v741, %v764
  %v790 = vadd.f32 %v742, %v769
  %v791 = vadd.f32 %v743, %v774
  %v792 = vadd.f32 %v744, %v779
  %v793 = vadd.f32 %v745, %v784
  %v794 = vmax.f32 %v786, 0.0
  %v795 = vmax.f32 %v787, 0.0
  %v796 = vmax.f32 %v788, 0.0
  %v797 = vmax.f32 %v789, 0.0
  %v798 = vmax.f32 %v790, 0.0
  %v799 = vmax.f32 %v791, 0.0
  %v800 = vmax.f32 %v792, 0.0
  %v801 = vmax.f32 %v793, 0.0
  %v802 = vld [vmem:[%s5] sm:$0xff]
  %v803 = vld [vmem:[%s5 + $0x8] sm:$0xff]
  %v804 = vld [vmem:[%s5 + $0x10] sm:$0xff]
  %v805 = vld [vmem:[%s5 + $0x18] sm:$0xff]
  %v806 = vld [vmem:[%s5 + $0x20] sm:$0xff]
  %v807 = vld [vmem:[%s5 + $0x28] sm:$0xff]
  %v808 = vld [vmem:[%s5 + $0x30] sm:$0xff]
  %v809 = vld [vmem:[%s5 + $0x38] sm:$0xff]
  %v810 = vld [vmem:[%s5 + $0x40] sm:$0xff]
  %v811 = vld [vmem:[%s5 + $0x48] sm:$0xff]
  %v812 = vld [vmem:[%s5 + $0x50] sm:$0xff]
  %v813 = vld [vmem:[%s5 + $0x58] sm:$0xff]
  %v814 = vld [vmem:[%s5 + $0x60] sm:$0xff]
  %v815 = vld [vmem:[%s5 + $0x68] sm:$0xff]
  %v816 = vld [vmem:[%s5 + $0x70] sm:$0xff]
  %v817 = vld [vmem:[%s5 + $0x78] sm:$0xff]
  %818 = vmatprep.subr.mxu0 0.0
  %819 = vmatpush1.msra.mxu0 %v802
  %820 = vmatprep.subr.mxu0 0.0
  %821 = vmatpush1.msra.mxu0 %v803
  %822 = vmatprep.subr.mxu0 0.0
  %823 = vmatpush1.msra.mxu0 %v804
  %824 = vmatprep.subr.mxu0 0.0
  %825 = vmatpush1.msra.mxu0 %v805
  %826 = vmatprep.subr.mxu0 0.0
  %827 = vmatpush1.msra.mxu0 %v806
  %828 = vmatprep.subr.mxu0 0.0
  %829 = vmatpush1.msra.mxu0 %v807
  %830 = vmatprep.subr.mxu0 0.0
  %831 = vmatpush1.msra.mxu0 %v808
  %832 = vmatprep.subr.mxu0 0.0
  %833 = vmatpush1.msra.mxu0 %v809
  %834 = vmatprep.subr.mxu0 0.0
  %835 = vmatpush1.msra.mxu0 %v810
  %836 = vmatprep.subr.mxu0 0.0
  %837 = vmatpush1.msra.mxu0 %v811
  %838 = vmatprep.subr.mxu0 0.0
  %839 = vmatpush1.msra.mxu0 %v812
  %840 = vmatprep.subr.mxu0 0.0
  %841 = vmatpush1.msra.mxu0 %v813
  %842 = vmatprep.subr.mxu0 0.0
  %843 = vmatpush1.msra.mxu0 %v814
  %844 = vmatprep.subr.mxu0 0.0
  %845 = vmatpush1.msra.mxu0 %v815
  %846 = vmatprep.subr.mxu0 0.0
  %847 = vmatpush1.msra.mxu0 %v816
  %848 = vmatprep.subr.mxu0 0.0
  %849 = vmatpush1.msra.mxu0 %v817
  %850 = vmatprep.subr.mxu0 0.0
  %851 = vmatpush1.msra.mxu0 0.0
  %852 = vmatprep.subr.mxu0 0.0
  %853 = vmatpush1.msra.mxu0 0.0
  %854 = vmatprep.subr.mxu0 0.0
  %855 = vmatpush1.msra.mxu0 0.0
  %856 = vmatprep.subr.mxu0 0.0
  %857 = vmatpush1.msra.mxu0 0.0
  %858 = vmatprep.subr.mxu0 0.0
  %859 = vmatpush1.msra.mxu0 0.0
  %860 = vmatprep.subr.mxu0 0.0
  %861 = vmatpush1.msra.mxu0 0.0
  %862 = vmatprep.subr.mxu0 0.0
  %863 = vmatpush1.msra.mxu0 0.0
  %864 = vmatprep.subr.mxu0 0.0
  %865 = vmatpush1.msra.mxu0 0.0
  %866 = vmatprep.subr.mxu0 0.0
  %867 = vmatpush1.msra.mxu0 0.0
  %868 = vmatprep.subr.mxu0 0.0
  %869 = vmatpush1.msra.mxu0 0.0
  %870 = vmatprep.subr.mxu0 0.0
  %871 = vmatpush1.msra.mxu0 0.0
  %872 = vmatprep.subr.mxu0 0.0
  %873 = vmatpush1.msra.mxu0 0.0
  %874 = vmatprep.subr.mxu0 0.0
  %875 = vmatpush1.msra.mxu0 0.0
  %876 = vmatprep.subr.mxu0 0.0
  %877 = vmatpush1.msra.mxu0 0.0
  %878 = vmatprep.subr.mxu0 0.0
  %879 = vmatpush1.msra.mxu0 0.0
  %880 = vmatprep.subr.mxu0 0.0
  %881 = vmatpush1.msra.mxu0 0.0
  %882 = vmatprep.mubr.f32.mxu0 0.0
  %883 = vmatmul.mubr.f32.gmra.mrb[0].mxu0 %v794
  %v884 = vpop.f32.mrb[0].mxu0
  %v885 = vadd.f32 0.0, %v884
  %v886 = vpop.f32.mrb[0].mxu0
  %887 = vmatprep.mubr.f32.mxu0 0.0
  %888 = vmatmul.mubr.f32.gmra.mrb[0].mxu0 %v795
  %v889 = vpop.f32.mrb[0].mxu0
  %v890 = vadd.f32 0.0, %v889
  %v891 = vpop.f32.mrb[0].mxu0
  %892 = vmatprep.mubr.f32.mxu0 0.0
  %893 = vmatmul.mubr.f32.gmra.mrb[0].mxu0 %v796
  %v894 = vpop.f32.mrb[0].mxu0
  %v895 = vadd.f32 0.0, %v894
  %v896 = vpop.f32.mrb[0].mxu0
  %897 = vmatprep.mubr.f32.mxu0 0.0
  %898 = vmatmul.mubr.f32.gmra.mrb[0].mxu0 %v797
  %v899 = vpop.f32.mrb[0].mxu0
  %v900 = vadd.f32 0.0, %v899
  %v901 = vpop.f32.mrb[0].mxu0
  %902 = vmatprep.mubr.f32.mxu0 0.0
  %903 = vmatmul.mubr.f32.gmra.mrb[0].mxu0 %v798
  %v904 = vpop.f32.mrb[0].mxu0
  %v905 = vadd.f32 0.0, %v904
  %v906 = vpop.f32.mrb[0].mxu0
  %907 = vmatprep.mubr.f32.mxu0 0.0
  %908 = vmatmul.mubr.f32.gmra.mrb[0].mxu0 %v799
  %v909 = vpop.f32.mrb[0].mxu0
  %v910 = vadd.f32 0.0, %v909
  %v911 = vpop.f32.mrb[0].mxu0
  %912 = vmatprep.mubr.f32.mxu0 0.0
  %913 = vmatmul.mubr.f32.gmra.mrb[0].mxu0 %v800
  %v914 = vpop.f32.mrb[0].mxu0
  %v915 = vadd.f32 0.0, %v914
  %v916 = vpop.f32.mrb[0].mxu0
  %917 = vmatprep.mubr.f32.mxu0 0.0
  %918 = vmatmul.mubr.f32.gmra.mrb[0].mxu0 %v801
  %v919 = vpop.f32.mrb[0].mxu0
  %v920 = vadd.f32 0.0, %v919
  %v921 = vpop.f32.mrb[0].mxu0
  %922 = vdwg.mxu0
  %v923 = vld [vmem:[%s6] sm:$0xff]
  %v924 = vld [vmem:[%s6 + $0x8] sm:$0x3]
  %v925 = vld [vmem:[%s7] sm:$0xff]
  %v926 = vld [vmem:[%s7 + $0x8] sm:$0x3]
  %928 = vset.pattern.permute.xlu0 0
  %929 = vperm.xlu0 %928, %v925
  %v930 = vpop.permute.xlu0 %929
  %933 = vset.pattern.permute.xlu0 0
  %934 = vperm.xlu0 %933, %v926
  %v935 = vpop.permute.xlu0 %934
  %v938 = vsel %vm245, %v923, 0
  %v941 = vsel %vm245, %v924, 0
  %943 = vmatprep.subr.mxu0 0.0
  %944 = vmatpush1.msra.mxu0 %v885
  %945 = vmatprep.subr.mxu0 0.0
  %946 = vmatpush1.msra.mxu0 %v890
  %947 = vmatprep.subr.mxu0 0.0
  %948 = vmatpush1.msra.mxu0 %v895
  %949 = vmatprep.subr.mxu0 0.0
  %950 = vmatpush1.msra.mxu0 %v900
  %951 = vmatprep.subr.mxu0 0.0
  %952 = vmatpush1.msra.mxu0 %v905
  %953 = vmatprep.subr.mxu0 0.0
  %954 = vmatpush1.msra.mxu0 %v910
  %955 = vmatprep.subr.mxu0 0.0
  %956 = vmatpush1.msra.mxu0 %v915
  %957 = vmatprep.subr.mxu0 0.0
  %958 = vmatpush1.msra.mxu0 %v920
  %959 = vmatprep.subr.mxu0 0.0
  %960 = vmatpush1.msra.mxu0 0.0
  %961 = vmatprep.subr.mxu0 0.0
  %962 = vmatpush1.msra.mxu0 0.0
  %963 = vmatprep.subr.mxu0 0.0
  %964 = vmatpush1.msra.mxu0 0.0
  %965 = vmatprep.subr.mxu0 0.0
  %966 = vmatpush1.msra.mxu0 0.0
  %967 = vmatprep.subr.mxu0 0.0
  %968 = vmatpush1.msra.mxu0 0.0
  %969 = vmatprep.subr.mxu0 0.0
  %970 = vmatpush1.msra.mxu0 0.0
  %971 = vmatprep.subr.mxu0 0.0
  %972 = vmatpush1.msra.mxu0 0.0
  %973 = vmatprep.subr.mxu0 0.0
  %974 = vmatpush1.msra.mxu0 0.0
  %975 = vmatprep.subr.mxu0 0.0
  %976 = vmatpush1.msra.mxu0 0.0
  %977 = vmatprep.subr.mxu0 0.0
  %978 = vmatpush1.msra.mxu0 0.0
  %979 = vmatprep.subr.mxu0 0.0
  %980 = vmatpush1.msra.mxu0 0.0
  %981 = vmatprep.subr.mxu0 0.0
  %982 = vmatpush1.msra.mxu0 0.0
  %983 = vmatprep.subr.mxu0 0.0
  %984 = vmatpush1.msra.mxu0 0.0
  %985 = vmatprep.subr.mxu0 0.0
  %986 = vmatpush1.msra.mxu0 0.0
  %987 = vmatprep.subr.mxu0 0.0
  %988 = vmatpush1.msra.mxu0 0.0
  %989 = vmatprep.subr.mxu0 0.0
  %990 = vmatpush1.msra.mxu0 0.0
  %991 = vmatprep.subr.mxu0 0.0
  %992 = vmatpush1.msra.mxu0 0.0
  %993 = vmatprep.subr.mxu0 0.0
  %994 = vmatpush1.msra.mxu0 0.0
  %995 = vmatprep.subr.mxu0 0.0
  %996 = vmatpush1.msra.mxu0 0.0
  %997 = vmatprep.subr.mxu0 0.0
  %998 = vmatpush1.msra.mxu0 0.0
  %999 = vmatprep.subr.mxu0 0.0
  %1000 = vmatpush1.msra.mxu0 0.0
  %1001 = vmatprep.subr.mxu0 0.0
  %1002 = vmatpush1.msra.mxu0 0.0
  %1003 = vmatprep.subr.mxu0 0.0
  %1004 = vmatpush1.msra.mxu0 0.0
  %1005 = vmatprep.subr.mxu0 0.0
  %1006 = vmatpush1.msra.mxu0 0.0
  %1007 = vmatprep.mubr.f32.mxu0 0.0
  %1008 = vmatmul.mubr.f32.gmra.mrb[0].mxu0 %v938
  %v1009 = vpop.f32.mrb[0].mxu0
  %v1010 = vadd.f32 %v930, %v1009
  %v1011 = vpop.f32.mrb[0].mxu0
  %1012 = vmatprep.mubr.f32.mxu0 0.0
  %1013 = vmatmul.mubr.f32.gmra.mrb[0].mxu0 %v941
  %v1014 = vpop.f32.mrb[0].mxu0
  %v1015 = vadd.f32 %v935, %v1014
  %v1016 = vpop.f32.mrb[0].mxu0
  %1017 = vdwg.mxu0
  %vm1018 = vcmask 15360
  %1019 = vst.msk [vmem:[%s8] sm:$0xff] %vm1018, %v1010
  %vm1020 = vcmask 9216
  %1021 = vst.msk [vmem:[%s8 + $0x8] sm:$0x3] %vm1020, %v1015
  // Predicated region
  $region34: #{wide_resnet_forward.13} parent=0 // pred_check
    _
  $region35: #{wide_resnet_forward.13} parent=0 // pred_check_branch
    %1023 = sbr.rel (0) target = $region37
  $region36: #{wide_resnet_forward.13} parent=0 // pred_region
    _
  $region37: #{wide_resnet_forward.13} parent=0 // pred_fallthru
    _
  // Predicated region
  $region38: #{wide_resnet_forward.13} parent=0 // pred_check
    _
  $region39: #{wide_resnet_forward.13} parent=0 // pred_check_branch
    %1025 = sbr.rel (0) target = $region41
  $region40: #{wide_resnet_forward.13} parent=0 // pred_region
    _
  $region41: #{wide_resnet_forward.13} parent=0 // pred_fallthru
    _

</llo_original>
